<compile_context>
chip_gen: v7x
topology: tpu7x:2x2x1
jax: 0.10.0
libtpu: 0.0.40
codegen_flags: <defaults>
</compile_context>

<pallas_src>
import jax
import jax.numpy as jnp
import numpy as np
from jax.experimental import pallas as pl
from jax.experimental.pallas import tpu as pltpu


def _build_kernel(num_heads, t_q, t_k, kq_dim, value_dim, latent_dim, with_p):
    H, Tq, Tk, KQ, VD, LD = num_heads, t_q, t_k, kq_dim, value_dim, latent_dim

    def kernel(qk_ref, v_ref, wqk_ref, bqk_ref, wo_ref, bo_ref, *outs):
        # qk_ref : (B, Tq+Tk, KQ)   query rows then key rows, per batch element
        # v_ref  : (B, Tk, VD)
        # wqk_ref: (KQ, 2*H*KQ)     [ Wq(all heads, scale folded) | Wk(all heads) ]
        # bqk_ref: (1, 2*H*KQ) f32  wo_ref: (H, VD, LD)   bo_ref: (1, LD) f32
        # out_ref: (Tq, B*LD)       p_ref: (Tq, B*H*Tk)   acc_ref: (B*Tq, LD) f32 scratch
        if with_p:
            out_ref, p_ref, acc_ref = outs
        else:
            out_ref, acc_ref = outs
            p_ref = None
        B = qk_ref.shape[0]
        mxu_dt = qk_ref.dtype

        # --- fused Q/K projection: one wide MXU pass for all heads -------------------
        qk2 = qk_ref[...].reshape(B * (Tq + Tk), KQ)
        h_all = jnp.dot(qk2, wqk_ref[...], preferred_element_type=jnp.float32)
        h_all = (h_all + bqk_ref[...]).reshape(B, Tq + Tk, 2 * H * KQ)

        # --- per-head scores (scale already folded into Wq/bq), stacked softmax ------
        s_heads = []
        for h in range(H):
            qh = h_all[:, :Tq, h * KQ:(h + 1) * KQ].astype(mxu_dt)          # (B,Tq,KQ)
            kh = h_all[:, Tq:, (H + h) * KQ:(H + h + 1) * KQ].astype(mxu_dt)  # (B,Tk,KQ)
            s_heads.append(jnp.einsum('bqd,bkd->bqk', qh, kh,
                                      preferred_element_type=jnp.float32))
        s = jnp.stack(s_heads, axis=0)                       # (H, B, Tq, Tk)
        m = jnp.max(s, axis=-1, keepdims=True)
        e = jnp.exp(s - m)
        p = e / jnp.sum(e, axis=-1, keepdims=True)           # exact: rows sum to 1

        # --- context + output projection, accumulated in a VMEM scratch --------------
        v = v_ref[...]
        acc_ref[...] = jnp.broadcast_to(bo_ref[...], (B * Tq, LD))
        for h in range(H):
            ctx = jnp.einsum('bqk,bkd->bqd', p[h].astype(v.dtype), v,
                             preferred_element_type=jnp.float32)            # (B,Tq,VD)
            acc_ref[...] += jnp.dot(ctx.reshape(B * Tq, VD).astype(wo_ref.dtype),
                                    wo_ref[h], preferred_element_type=jnp.float32)

        # --- lane-dense output blocks -------------------------------------------------
        # Natural (8, LD) / (Tq, Tk) tiles are placed at static lane offsets inside a
        # 256-lane-wide block, so the writeback DMA reads a dense VMEM buffer (no
        # narrow-strided writeback); the wrapper undoes the layout.
        for b in range(B):
            out_ref[:, b * LD:(b + 1) * LD] = acc_ref[b * Tq:(b + 1) * Tq, :]
        if p_ref is not None:
            for b in range(B):
                for h in range(H):
                    off = (b * H + h) * Tk
                    p_ref[:, off:off + Tk] = p[h, b]

    return kernel


def multi_head_attention(value, key, query, params, num_heads, kq_dim, value_dim,
                         latent_dim, *, batch_block=16, mxu_dtype=jnp.float32,
                         return_p_attn=True, expand_p_attn=False):
    N, T, _ = value.shape
    Nq, Tq, _ = query.shape
    Nk, Tk, _ = key.shape
    assert N == Nq == Nk, "kernel implements the equal-batch (broadcast-trivial) case"
    assert T == Tk, "value sequence length must match key sequence length"

    # Large batch block -> 128+ MXU rows, but keep >= 2 grid steps when possible so both
    # v7x TensorCores get work under dimension_semantics=("parallel",).
    B_blk = min(batch_block, N)
    if B_blk == N and N > 1 and N % 2 == 0:
        B_blk = N // 2
    assert N % B_blk == 0, "batch must be divisible by the batch block"
    # lane-dense out/p blocks need a multiple of 128 lanes (or a single full block)
    assert (B_blk * latent_dim) % 128 == 0 or B_blk == N
    if return_p_attn:
        assert (B_blk * num_heads * Tk) % 128 == 0 or B_blk == N

    wq, bq, wk, bk, wo, bo = params
    scale = 1.0 / float(np.sqrt(kq_dim))
    # Fused projection weight: [ Wq^T * scale | Wk^T ]  (scale folded into the constant)
    wqk = jnp.concatenate([wq.T * scale, wk.T], axis=1).astype(mxu_dtype)   # (KQ, 2*H*KQ)
    bqk = jnp.concatenate([bq * scale, bk]).reshape(1, 2 * num_heads * kq_dim)
    bqk = bqk.astype(jnp.float32)
    wo_ph = jnp.transpose(wo.reshape(latent_dim, num_heads, value_dim),
                          (1, 2, 0)).astype(mxu_dtype)                      # (H, VD, LD)
    bo2 = bo.reshape(1, latent_dim).astype(jnp.float32)

    # Stack query and key rows per batch element so the kernel does one fused dot.
    qk_cat = jnp.concatenate([query, key], axis=1).astype(mxu_dtype)        # (N,Tq+Tk,KQ)
    v_cast = value.astype(mxu_dtype)

    kernel = _build_kernel(num_heads, Tq, Tk, kq_dim, value_dim, latent_dim,
                           return_p_attn)

    in_specs = [
        pl.BlockSpec((B_blk, Tq + Tk, kq_dim), lambda n: (n, 0, 0)),   # stacked q/k
        pl.BlockSpec((B_blk, Tk, value_dim), lambda n: (n, 0, 0)),     # value
        pl.BlockSpec(wqk.shape, lambda n: (0, 0)),                     # fused Wqk
        pl.BlockSpec(bqk.shape, lambda n: (0, 0)),                     # fused bias
        pl.BlockSpec(wo_ph.shape, lambda n: (0, 0, 0)),                # Wo per head
        pl.BlockSpec(bo2.shape, lambda n: (0, 0)),                     # bo
    ]
    out_shapes = [jax.ShapeDtypeStruct((Tq, N * latent_dim), jnp.float32)]
    out_specs = [pl.BlockSpec((Tq, B_blk * latent_dim), lambda n: (0, n))]
    if return_p_attn:
        out_shapes.append(jax.ShapeDtypeStruct((Tq, N * num_heads * Tk), jnp.float32))
        out_specs.append(pl.BlockSpec((Tq, B_blk * num_heads * Tk), lambda n: (0, n)))

    grid_spec = pltpu.PrefetchScalarGridSpec(
        num_scalar_prefetch=0,
        grid=(N // B_blk,),
        in_specs=in_specs,
        out_specs=out_specs,
        scratch_shapes=[pltpu.VMEM((B_blk * Tq, latent_dim), jnp.float32)],
    )

    res = pl.pallas_call(
        kernel,
        out_shape=tuple(out_shapes),
        grid_spec=grid_spec,
        compiler_params=pltpu.CompilerParams(dimension_semantics=("parallel",)),
    )(qk_cat, v_cast, wqk, bqk, wo_ph, bo2)

    out_flat = res[0]
    out_rep = jnp.transpose(out_flat.reshape(Tq, N, latent_dim), (1, 0, 2))   # (N,Tq,LD)
    if not return_p_attn:
        return out_rep

    p_flat = res[1]
    p_attn = jnp.transpose(p_flat.reshape(Tq, N, num_heads, Tk), (1, 2, 0, 3))  # (N,H,Tq,Tk)
    if expand_p_attn:
        # module parity: torch repeats the scores value_dim times before softmax; the
        # repeated copies are identical, so this is a plain broadcast.
        p_attn = jnp.broadcast_to(p_attn[..., None],
                                  (N, num_heads, Tq, Tk, value_dim))
    return out_rep, p_attn


def reference(value, key, query, params, num_heads, kq_dim, value_dim, latent_dim):
    """Pure-JAX replica of the PyTorch forward (mask=None); returns compact p."""
    wq, bq, wk, bk, wo, bo = params
    N, T, _ = value.shape
    Nq, Tq, _ = query.shape
    hq = (query.reshape(-1, kq_dim) @ wq.T + bq).reshape(Nq, Tq, num_heads, kq_dim)
    hq = jnp.transpose(hq, (0, 2, 1, 3))
    hk = (key.reshape(-1, kq_dim) @ wk.T + bk).reshape(N, T, num_heads, kq_dim)
    hk = jnp.transpose(hk, (0, 2, 1, 3))
    scores = jnp.einsum('nhqd,nhkd->nhqk', hq, hk) / np.sqrt(kq_dim)
    p = jax.nn.softmax(scores, axis=-1)          # == torch p_attn[..., 0] (any vd copy)
    ctx = jnp.einsum('nhqk,nkd->nhqd', p, value)
    out = jnp.transpose(ctx, (0, 2, 1, 3)).reshape(N, Tq, num_heads * value_dim)
    out = out @ wo.T + bo
    return out, p


if __name__ == "__main__":
    N, T = 32, 8            # batch, sequence length (T == T_q == T_k)
    kq_dim = 16
    num_heads = 2
    value_dim = 16
    latent_dim = 16         # attn_out expects latent_dim == value_dim

    key0 = jax.random.PRNGKey(0)
    ks = jax.random.split(key0, 9)
    query = jax.random.normal(ks[0], (N, T, kq_dim), jnp.float32)
    key_in = jax.random.normal(ks[1], (N, T, kq_dim), jnp.float32)
    value = jax.random.normal(ks[2], (N, T, value_dim), jnp.float32)

    # PyTorch nn.Linear layout: weight (out, in), bias (out,)
    wq = 0.1 * jax.random.normal(ks[3], (num_heads * kq_dim, kq_dim), jnp.float32)
    bq = 0.1 * jax.random.normal(ks[4], (num_heads * kq_dim,), jnp.float32)
    wk = 0.1 * jax.random.normal(ks[5], (num_heads * kq_dim, kq_dim), jnp.float32)
    bk = 0.1 * jax.random.normal(ks[6], (num_heads * kq_dim,), jnp.float32)
    wo = 0.1 * jax.random.normal(ks[7], (latent_dim, num_heads * value_dim), jnp.float32)
    bo = 0.1 * jax.random.normal(ks[8], (latent_dim,), jnp.float32)
    params = (wq, bq, wk, bk, wo, bo)

    # f32 path (v5e-friendly): exact softmax, tight tolerance.
    out_rep, p_attn = multi_head_attention(value, key_in, query, params, num_heads,
                                           kq_dim, value_dim, latent_dim)
    jax.block_until_ready((out_rep, p_attn))

    ref_out, ref_p = reference(value, key_in, query, params, num_heads, kq_dim,
                               value_dim, latent_dim)
    assert out_rep.shape == (N, T, latent_dim)
    assert p_attn.shape == (N, num_heads, T, T)
    assert np.allclose(np.asarray(out_rep), np.asarray(ref_out), atol=1e-4, rtol=1e-4)
    assert np.allclose(np.asarray(p_attn), np.asarray(ref_p), atol=1e-4, rtol=1e-4)

    # bf16 MXU-operand path (v6e/v7x): f32 accumulation + f32 softmax, looser tolerance.
    out_bf, p_bf = multi_head_attention(value, key_in, query, params, num_heads,
                                        kq_dim, value_dim, latent_dim,
                                        mxu_dtype=jnp.bfloat16)
    jax.block_until_ready((out_bf, p_bf))
    assert np.allclose(np.asarray(out_bf), np.asarray(ref_out), atol=2e-2, rtol=2e-2)
    assert np.allclose(np.asarray(p_bf), np.asarray(ref_p), atol=2e-2, rtol=2e-2)

    print("KERNEL_OK")
</pallas_src>

<mosaic_0001>
module attributes {stable_mosaic.version = 11 : i64} {
  func.func @kernel(%arg0: i32, %arg1: memref<16x16x16xf32, #tpu.memory_space<vmem>>, %arg2: memref<16x8x16xf32, #tpu.memory_space<vmem>>, %arg3: memref<16x64xf32, #tpu.memory_space<vmem>>, %arg4: memref<1x64xf32, #tpu.memory_space<vmem>>, %arg5: memref<2x16x16xf32, #tpu.memory_space<vmem>>, %arg6: memref<1x16xf32, #tpu.memory_space<vmem>>, %arg7: memref<8x256xf32, #tpu.memory_space<vmem>>, %arg8: memref<8x256xf32, #tpu.memory_space<vmem>>, %arg9: memref<128x16xf32, #tpu.memory_space<vmem>>) attributes {dimension_semantics = [#tpu.dimension_semantics<parallel>], iteration_bounds = array<i64: 2>, scalar_prefetch = 0 : i64, scratch_operands = 1 : i64, tpu.core_type = #tpu.core_type<tc>, window_params = [{transform_indices = @transform_0, window_bounds = array<i64: 16, 16, 16>}, {transform_indices = @transform_1, window_bounds = array<i64: 16, 8, 16>}, {pipeline_mode = #tpu.pipeline_mode<synchronous>, transform_indices = @transform_2, window_bounds = array<i64: 16, 64>}, {pipeline_mode = #tpu.pipeline_mode<synchronous>, transform_indices = @transform_3, window_bounds = array<i64: 1, 64>}, {pipeline_mode = #tpu.pipeline_mode<synchronous>, transform_indices = @transform_4, window_bounds = array<i64: 2, 16, 16>}, {pipeline_mode = #tpu.pipeline_mode<synchronous>, transform_indices = @transform_5, window_bounds = array<i64: 1, 16>}, {transform_indices = @transform_6, window_bounds = array<i64: 8, 256>}, {transform_indices = @transform_7, window_bounds = array<i64: 8, 256>}]} {
    %c0 = arith.constant 0 : index
    %c0_0 = arith.constant 0 : index
    %c0_1 = arith.constant 0 : index
    %0 = vector.load %arg1[%c0, %c0_0, %c0_1] : memref<16x16x16xf32, #tpu.memory_space<vmem>>, vector<16x16x16xf32>
    %1 = vector.shape_cast %0 : vector<16x16x16xf32> to vector<256x16xf32>
    %c0_2 = arith.constant 0 : index
    %c0_3 = arith.constant 0 : index
    %2 = vector.load %arg3[%c0_2, %c0_3] : memref<16x64xf32, #tpu.memory_space<vmem>>, vector<16x64xf32>
    %cst = arith.constant dense<0.000000e+00> : vector<256x64xf32>
    %3 = tpu.matmul %1, %2, %cst {dimension_numbers = #tpu.dot_dimension_numbers<[1], [0], [0], [1], [0, 0, 1, 1], [], []>} : vector<256x16xf32>, vector<16x64xf32>, vector<256x64xf32> -> vector<256x64xf32>
    %c0_4 = arith.constant 0 : index
    %c0_5 = arith.constant 0 : index
    %4 = vector.load %arg4[%c0_4, %c0_5] : memref<1x64xf32, #tpu.memory_space<vmem>>, vector<1x64xf32>
    %5 = vector.broadcast %4 : vector<1x64xf32> to vector<256x64xf32>
    %6 = arith.addf %3, %5 : vector<256x64xf32>
    %7 = vector.shape_cast %6 : vector<256x64xf32> to vector<16x16x64xf32>
    %8 = vector.extract_strided_slice %7 {offsets = [0, 0, 0], sizes = [16, 8, 16], strides = [1, 1, 1]} : vector<16x16x64xf32> to vector<16x8x16xf32>
    %9 = vector.extract_strided_slice %7 {offsets = [0, 8, 32], sizes = [16, 8, 16], strides = [1, 1, 1]} : vector<16x16x64xf32> to vector<16x8x16xf32>
    "tpu.trace_start"() <{level = 10 : i32, message = "bqd,bkd->bqk"}> : () -> ()
    %cst_6 = arith.constant dense<0.000000e+00> : vector<16x8x8xf32>
    %10 = tpu.matmul %8, %9, %cst_6 {dimension_numbers = #tpu.dot_dimension_numbers<[2], [2], [1], [1], [0, 0, 0, 1, 1, 1], [0], [0]>} : vector<16x8x16xf32>, vector<16x8x16xf32>, vector<16x8x8xf32> -> vector<16x8x8xf32>
    "tpu.trace_stop"() : () -> ()
    %11 = vector.extract_strided_slice %7 {offsets = [0, 0, 16], sizes = [16, 8, 16], strides = [1, 1, 1]} : vector<16x16x64xf32> to vector<16x8x16xf32>
    %12 = vector.extract_strided_slice %7 {offsets = [0, 8, 48], sizes = [16, 8, 16], strides = [1, 1, 1]} : vector<16x16x64xf32> to vector<16x8x16xf32>
    "tpu.trace_start"() <{level = 10 : i32, message = "bqd,bkd->bqk"}> : () -> ()
    %cst_7 = arith.constant dense<0.000000e+00> : vector<16x8x8xf32>
    %13 = tpu.matmul %11, %12, %cst_7 {dimension_numbers = #tpu.dot_dimension_numbers<[2], [2], [1], [1], [0, 0, 0, 1, 1, 1], [0], [0]>} : vector<16x8x16xf32>, vector<16x8x16xf32>, vector<16x8x8xf32> -> vector<16x8x8xf32>
    "tpu.trace_stop"() : () -> ()
    %14 = vector.shape_cast %10 : vector<16x8x8xf32> to vector<1x16x8x8xf32>
    %15 = vector.shape_cast %13 : vector<16x8x8xf32> to vector<1x16x8x8xf32>
    %16 = tpu.concatenate %14, %15 in 0 : vector<1x16x8x8xf32>, vector<1x16x8x8xf32> -> vector<2x16x8x8xf32>
    %cst_8 = arith.constant dense<0xFF800000> : vector<2x16x8xf32>
    %17 = vector.multi_reduction <maximumf>, %16, %cst_8 [3] : vector<2x16x8x8xf32> to vector<2x16x8xf32>
    %18 = vector.shape_cast %17 : vector<2x16x8xf32> to vector<2x16x8x1xf32>
    %19 = vector.broadcast %18 : vector<2x16x8x1xf32> to vector<2x16x8x8xf32>
    %20 = arith.subf %16, %19 : vector<2x16x8x8xf32>
    %21 = math.exp %20 : vector<2x16x8x8xf32>
    %cst_9 = arith.constant dense<0.000000e+00> : vector<2x16x8xf32>
    %22 = vector.multi_reduction <add>, %21, %cst_9 [3] : vector<2x16x8x8xf32> to vector<2x16x8xf32>
    %23 = vector.shape_cast %22 : vector<2x16x8xf32> to vector<2x16x8x1xf32>
    %24 = vector.broadcast %23 : vector<2x16x8x1xf32> to vector<2x16x8x8xf32>
    %25 = arith.divf %21, %24 : vector<2x16x8x8xf32>
    %c0_10 = arith.constant 0 : index
    %c0_11 = arith.constant 0 : index
    %c0_12 = arith.constant 0 : index
    %26 = vector.load %arg2[%c0_10, %c0_11, %c0_12] : memref<16x8x16xf32, #tpu.memory_space<vmem>>, vector<16x8x16xf32>
    %c0_13 = arith.constant 0 : index
    %c0_14 = arith.constant 0 : index
    %27 = vector.load %arg6[%c0_13, %c0_14] : memref<1x16xf32, #tpu.memory_space<vmem>>, vector<1x16xf32>
    %28 = vector.shape_cast %27 : vector<1x16xf32> to vector<1x16xf32>
    %29 = vector.broadcast %28 : vector<1x16xf32> to vector<128x16xf32>
    %c0_15 = arith.constant 0 : index
    %c0_16 = arith.constant 0 : index
    %30 = vector.load %arg9[%c0_15, %c0_16] : memref<128x16xf32, #tpu.memory_space<vmem>>, vector<128x16xf32>
    tpu.vector_store %arg9[%c0_15, %c0_16], %29 {strides = array<i32>} : memref<128x16xf32, #tpu.memory_space<vmem>>, vector<128x16xf32>,
    %31 = vector.extract_strided_slice %25 {offsets = [0, 0, 0, 0], sizes = [1, 16, 8, 8], strides = [1, 1, 1, 1]} : vector<2x16x8x8xf32> to vector<1x16x8x8xf32>
    %32 = vector.shape_cast %31 : vector<1x16x8x8xf32> to vector<16x8x8xf32>
    "tpu.trace_start"() <{level = 10 : i32, message = "bqk,bkd->bqd"}> : () -> ()
    %cst_17 = arith.constant dense<0.000000e+00> : vector<16x8x16xf32>
    %33 = tpu.matmul %32, %26, %cst_17 {dimension_numbers = #tpu.dot_dimension_numbers<[2], [1], [1], [2], [0, 0, 0, 1, 1, 2], [0], [0]>} : vector<16x8x8xf32>, vector<16x8x16xf32>, vector<16x8x16xf32> -> vector<16x8x16xf32>
    "tpu.trace_stop"() : () -> ()
    %c0_18 = arith.constant 0 : index
    %c0_19 = arith.constant 0 : index
    %34 = vector.load %arg9[%c0_18, %c0_19] : memref<128x16xf32, #tpu.memory_space<vmem>>, vector<128x16xf32>
    %35 = vector.shape_cast %33 : vector<16x8x16xf32> to vector<128x16xf32>
    %c0_20 = arith.constant 0 : index
    %c0_21 = arith.constant 0 : index
    %c0_22 = arith.constant 0 : index
    %36 = vector.load %arg5[%c0_20, %c0_21, %c0_22] : memref<2x16x16xf32, #tpu.memory_space<vmem>>, vector<1x16x16xf32>
    %37 = vector.shape_cast %36 : vector<1x16x16xf32> to vector<16x16xf32>
    %cst_23 = arith.constant dense<0.000000e+00> : vector<128x16xf32>
    %38 = tpu.matmul %35, %37, %cst_23 {dimension_numbers = #tpu.dot_dimension_numbers<[1], [0], [0], [1], [0, 0, 1, 1], [], []>} : vector<128x16xf32>, vector<16x16xf32>, vector<128x16xf32> -> vector<128x16xf32>
    %39 = arith.addf %34, %38 : vector<128x16xf32>
    %c0_24 = arith.constant 0 : index
    %c0_25 = arith.constant 0 : index
    %40 = vector.load %arg9[%c0_24, %c0_25] : memref<128x16xf32, #tpu.memory_space<vmem>>, vector<128x16xf32>
    tpu.vector_store %arg9[%c0_24, %c0_25], %39 {strides = array<i32>} : memref<128x16xf32, #tpu.memory_space<vmem>>, vector<128x16xf32>,
    %41 = vector.extract_strided_slice %25 {offsets = [1, 0, 0, 0], sizes = [1, 16, 8, 8], strides = [1, 1, 1, 1]} : vector<2x16x8x8xf32> to vector<1x16x8x8xf32>
    %42 = vector.shape_cast %41 : vector<1x16x8x8xf32> to vector<16x8x8xf32>
    "tpu.trace_start"() <{level = 10 : i32, message = "bqk,bkd->bqd"}> : () -> ()
    %cst_26 = arith.constant dense<0.000000e+00> : vector<16x8x16xf32>
    %43 = tpu.matmul %42, %26, %cst_26 {dimension_numbers = #tpu.dot_dimension_numbers<[2], [1], [1], [2], [0, 0, 0, 1, 1, 2], [0], [0]>} : vector<16x8x8xf32>, vector<16x8x16xf32>, vector<16x8x16xf32> -> vector<16x8x16xf32>
    "tpu.trace_stop"() : () -> ()
    %c0_27 = arith.constant 0 : index
    %c0_28 = arith.constant 0 : index
    %44 = vector.load %arg9[%c0_27, %c0_28] : memref<128x16xf32, #tpu.memory_space<vmem>>, vector<128x16xf32>
    %45 = vector.shape_cast %43 : vector<16x8x16xf32> to vector<128x16xf32>
    %c1 = arith.constant 1 : index
    %c0_29 = arith.constant 0 : index
    %c0_30 = arith.constant 0 : index
    %46 = vector.load %arg5[%c1, %c0_29, %c0_30] : memref<2x16x16xf32, #tpu.memory_space<vmem>>, vector<1x16x16xf32>
    %47 = vector.shape_cast %46 : vector<1x16x16xf32> to vector<16x16xf32>
    %cst_31 = arith.constant dense<0.000000e+00> : vector<128x16xf32>
    %48 = tpu.matmul %45, %47, %cst_31 {dimension_numbers = #tpu.dot_dimension_numbers<[1], [0], [0], [1], [0, 0, 1, 1], [], []>} : vector<128x16xf32>, vector<16x16xf32>, vector<128x16xf32> -> vector<128x16xf32>
    %49 = arith.addf %44, %48 : vector<128x16xf32>
    %c0_32 = arith.constant 0 : index
    %c0_33 = arith.constant 0 : index
    %50 = vector.load %arg9[%c0_32, %c0_33] : memref<128x16xf32, #tpu.memory_space<vmem>>, vector<128x16xf32>
    tpu.vector_store %arg9[%c0_32, %c0_33], %49 {strides = array<i32>} : memref<128x16xf32, #tpu.memory_space<vmem>>, vector<128x16xf32>,
    %c0_34 = arith.constant 0 : index
    %c0_35 = arith.constant 0 : index
    %51 = vector.load %arg9[%c0_34, %c0_35] : memref<128x16xf32, #tpu.memory_space<vmem>>, vector<8x16xf32>
    %c0_36 = arith.constant 0 : index
    %c0_37 = arith.constant 0 : index
    %52 = vector.load %arg7[%c0_36, %c0_37] : memref<8x256xf32, #tpu.memory_space<vmem>>, vector<8x16xf32>
    tpu.vector_store %arg7[%c0_36, %c0_37], %51 {strides = array<i32>} : memref<8x256xf32, #tpu.memory_space<vmem>>, vector<8x16xf32>,
    %c8 = arith.constant 8 : index
    %c0_38 = arith.constant 0 : index
    %53 = vector.load %arg9[%c8, %c0_38] : memref<128x16xf32, #tpu.memory_space<vmem>>, vector<8x16xf32>
    %c0_39 = arith.constant 0 : index
    %c16 = arith.constant 16 : index
    %54 = vector.load %arg7[%c0_39, %c16] : memref<8x256xf32, #tpu.memory_space<vmem>>, vector<8x16xf32>
    tpu.vector_store %arg7[%c0_39, %c16], %53 {strides = array<i32>} : memref<8x256xf32, #tpu.memory_space<vmem>>, vector<8x16xf32>,
    %c16_40 = arith.constant 16 : index
    %c0_41 = arith.constant 0 : index
    %55 = vector.load %arg9[%c16_40, %c0_41] : memref<128x16xf32, #tpu.memory_space<vmem>>, vector<8x16xf32>
    %c0_42 = arith.constant 0 : index
    %c32 = arith.constant 32 : index
    %56 = vector.load %arg7[%c0_42, %c32] : memref<8x256xf32, #tpu.memory_space<vmem>>, vector<8x16xf32>
    tpu.vector_store %arg7[%c0_42, %c32], %55 {strides = array<i32>} : memref<8x256xf32, #tpu.memory_space<vmem>>, vector<8x16xf32>,
    %c24 = arith.constant 24 : index
    %c0_43 = arith.constant 0 : index
    %57 = vector.load %arg9[%c24, %c0_43] : memref<128x16xf32, #tpu.memory_space<vmem>>, vector<8x16xf32>
    %c0_44 = arith.constant 0 : index
    %c48 = arith.constant 48 : index
    %58 = vector.load %arg7[%c0_44, %c48] : memref<8x256xf32, #tpu.memory_space<vmem>>, vector<8x16xf32>
    tpu.vector_store %arg7[%c0_44, %c48], %57 {strides = array<i32>} : memref<8x256xf32, #tpu.memory_space<vmem>>, vector<8x16xf32>,
    %c32_45 = arith.constant 32 : index
    %c0_46 = arith.constant 0 : index
    %59 = vector.load %arg9[%c32_45, %c0_46] : memref<128x16xf32, #tpu.memory_space<vmem>>, vector<8x16xf32>
    %c0_47 = arith.constant 0 : index
    %c64 = arith.constant 64 : index
    %60 = vector.load %arg7[%c0_47, %c64] : memref<8x256xf32, #tpu.memory_space<vmem>>, vector<8x16xf32>
    tpu.vector_store %arg7[%c0_47, %c64], %59 {strides = array<i32>} : memref<8x256xf32, #tpu.memory_space<vmem>>, vector<8x16xf32>,
    %c40 = arith.constant 40 : index
    %c0_48 = arith.constant 0 : index
    %61 = vector.load %arg9[%c40, %c0_48] : memref<128x16xf32, #tpu.memory_space<vmem>>, vector<8x16xf32>
    %c0_49 = arith.constant 0 : index
    %c80 = arith.constant 80 : index
    %62 = vector.load %arg7[%c0_49, %c80] : memref<8x256xf32, #tpu.memory_space<vmem>>, vector<8x16xf32>
    tpu.vector_store %arg7[%c0_49, %c80], %61 {strides = array<i32>} : memref<8x256xf32, #tpu.memory_space<vmem>>, vector<8x16xf32>,
    %c48_50 = arith.constant 48 : index
    %c0_51 = arith.constant 0 : index
    %63 = vector.load %arg9[%c48_50, %c0_51] : memref<128x16xf32, #tpu.memory_space<vmem>>, vector<8x16xf32>
    %c0_52 = arith.constant 0 : index
    %c96 = arith.constant 96 : index
    %64 = vector.load %arg7[%c0_52, %c96] : memref<8x256xf32, #tpu.memory_space<vmem>>, vector<8x16xf32>
    tpu.vector_store %arg7[%c0_52, %c96], %63 {strides = array<i32>} : memref<8x256xf32, #tpu.memory_space<vmem>>, vector<8x16xf32>,
    %c56 = arith.constant 56 : index
    %c0_53 = arith.constant 0 : index
    %65 = vector.load %arg9[%c56, %c0_53] : memref<128x16xf32, #tpu.memory_space<vmem>>, vector<8x16xf32>
    %c0_54 = arith.constant 0 : index
    %c112 = arith.constant 112 : index
    %66 = vector.load %arg7[%c0_54, %c112] : memref<8x256xf32, #tpu.memory_space<vmem>>, vector<8x16xf32>
    tpu.vector_store %arg7[%c0_54, %c112], %65 {strides = array<i32>} : memref<8x256xf32, #tpu.memory_space<vmem>>, vector<8x16xf32>,
    %c64_55 = arith.constant 64 : index
    %c0_56 = arith.constant 0 : index
    %67 = vector.load %arg9[%c64_55, %c0_56] : memref<128x16xf32, #tpu.memory_space<vmem>>, vector<8x16xf32>
    %c0_57 = arith.constant 0 : index
    %c128 = arith.constant 128 : index
    %68 = vector.load %arg7[%c0_57, %c128] : memref<8x256xf32, #tpu.memory_space<vmem>>, vector<8x16xf32>
    tpu.vector_store %arg7[%c0_57, %c128], %67 {strides = array<i32>} : memref<8x256xf32, #tpu.memory_space<vmem>>, vector<8x16xf32>,
    %c72 = arith.constant 72 : index
    %c0_58 = arith.constant 0 : index
    %69 = vector.load %arg9[%c72, %c0_58] : memref<128x16xf32, #tpu.memory_space<vmem>>, vector<8x16xf32>
    %c0_59 = arith.constant 0 : index
    %c144 = arith.constant 144 : index
    %70 = vector.load %arg7[%c0_59, %c144] : memref<8x256xf32, #tpu.memory_space<vmem>>, vector<8x16xf32>
    tpu.vector_store %arg7[%c0_59, %c144], %69 {strides = array<i32>} : memref<8x256xf32, #tpu.memory_space<vmem>>, vector<8x16xf32>,
    %c80_60 = arith.constant 80 : index
    %c0_61 = arith.constant 0 : index
    %71 = vector.load %arg9[%c80_60, %c0_61] : memref<128x16xf32, #tpu.memory_space<vmem>>, vector<8x16xf32>
    %c0_62 = arith.constant 0 : index
    %c160 = arith.constant 160 : index
    %72 = vector.load %arg7[%c0_62, %c160] : memref<8x256xf32, #tpu.memory_space<vmem>>, vector<8x16xf32>
    tpu.vector_store %arg7[%c0_62, %c160], %71 {strides = array<i32>} : memref<8x256xf32, #tpu.memory_space<vmem>>, vector<8x16xf32>,
    %c88 = arith.constant 88 : index
    %c0_63 = arith.constant 0 : index
    %73 = vector.load %arg9[%c88, %c0_63] : memref<128x16xf32, #tpu.memory_space<vmem>>, vector<8x16xf32>
    %c0_64 = arith.constant 0 : index
    %c176 = arith.constant 176 : index
    %74 = vector.load %arg7[%c0_64, %c176] : memref<8x256xf32, #tpu.memory_space<vmem>>, vector<8x16xf32>
    tpu.vector_store %arg7[%c0_64, %c176], %73 {strides = array<i32>} : memref<8x256xf32, #tpu.memory_space<vmem>>, vector<8x16xf32>,
    %c96_65 = arith.constant 96 : index
    %c0_66 = arith.constant 0 : index
    %75 = vector.load %arg9[%c96_65, %c0_66] : memref<128x16xf32, #tpu.memory_space<vmem>>, vector<8x16xf32>
    %c0_67 = arith.constant 0 : index
    %c192 = arith.constant 192 : index
    %76 = vector.load %arg7[%c0_67, %c192] : memref<8x256xf32, #tpu.memory_space<vmem>>, vector<8x16xf32>
    tpu.vector_store %arg7[%c0_67, %c192], %75 {strides = array<i32>} : memref<8x256xf32, #tpu.memory_space<vmem>>, vector<8x16xf32>,
    %c104 = arith.constant 104 : index
    %c0_68 = arith.constant 0 : index
    %77 = vector.load %arg9[%c104, %c0_68] : memref<128x16xf32, #tpu.memory_space<vmem>>, vector<8x16xf32>
    %c0_69 = arith.constant 0 : index
    %c208 = arith.constant 208 : index
    %78 = vector.load %arg7[%c0_69, %c208] : memref<8x256xf32, #tpu.memory_space<vmem>>, vector<8x16xf32>
    tpu.vector_store %arg7[%c0_69, %c208], %77 {strides = array<i32>} : memref<8x256xf32, #tpu.memory_space<vmem>>, vector<8x16xf32>,
    %c112_70 = arith.constant 112 : index
    %c0_71 = arith.constant 0 : index
    %79 = vector.load %arg9[%c112_70, %c0_71] : memref<128x16xf32, #tpu.memory_space<vmem>>, vector<8x16xf32>
    %c0_72 = arith.constant 0 : index
    %c224 = arith.constant 224 : index
    %80 = vector.load %arg7[%c0_72, %c224] : memref<8x256xf32, #tpu.memory_space<vmem>>, vector<8x16xf32>
    tpu.vector_store %arg7[%c0_72, %c224], %79 {strides = array<i32>} : memref<8x256xf32, #tpu.memory_space<vmem>>, vector<8x16xf32>,
    %c120 = arith.constant 120 : index
    %c0_73 = arith.constant 0 : index
    %81 = vector.load %arg9[%c120, %c0_73] : memref<128x16xf32, #tpu.memory_space<vmem>>, vector<8x16xf32>
    %c0_74 = arith.constant 0 : index
    %c240 = arith.constant 240 : index
    %82 = vector.load %arg7[%c0_74, %c240] : memref<8x256xf32, #tpu.memory_space<vmem>>, vector<8x16xf32>
    tpu.vector_store %arg7[%c0_74, %c240], %81 {strides = array<i32>} : memref<8x256xf32, #tpu.memory_space<vmem>>, vector<8x16xf32>,
    %83 = vector.extract_strided_slice %25 {offsets = [0, 0, 0, 0], sizes = [1, 1, 8, 8], strides = [1, 1, 1, 1]} : vector<2x16x8x8xf32> to vector<1x1x8x8xf32>
    %84 = vector.shape_cast %83 : vector<1x1x8x8xf32> to vector<8x8xf32>
    %c0_75 = arith.constant 0 : index
    %c0_76 = arith.constant 0 : index
    %85 = vector.load %arg8[%c0_75, %c0_76] : memref<8x256xf32, #tpu.memory_space<vmem>>, vector<8x8xf32>
    tpu.vector_store %arg8[%c0_75, %c0_76], %84 {strides = array<i32>} : memref<8x256xf32, #tpu.memory_space<vmem>>, vector<8x8xf32>,
    %86 = vector.extract_strided_slice %25 {offsets = [1, 0, 0, 0], sizes = [1, 1, 8, 8], strides = [1, 1, 1, 1]} : vector<2x16x8x8xf32> to vector<1x1x8x8xf32>
    %87 = vector.shape_cast %86 : vector<1x1x8x8xf32> to vector<8x8xf32>
    %c0_77 = arith.constant 0 : index
    %c8_78 = arith.constant 8 : index
    %88 = vector.load %arg8[%c0_77, %c8_78] : memref<8x256xf32, #tpu.memory_space<vmem>>, vector<8x8xf32>
    tpu.vector_store %arg8[%c0_77, %c8_78], %87 {strides = array<i32>} : memref<8x256xf32, #tpu.memory_space<vmem>>, vector<8x8xf32>,
    %89 = vector.extract_strided_slice %25 {offsets = [0, 1, 0, 0], sizes = [1, 1, 8, 8], strides = [1, 1, 1, 1]} : vector<2x16x8x8xf32> to vector<1x1x8x8xf32>
    %90 = vector.shape_cast %89 : vector<1x1x8x8xf32> to vector<8x8xf32>
    %c0_79 = arith.constant 0 : index
    %c16_80 = arith.constant 16 : index
    %91 = vector.load %arg8[%c0_79, %c16_80] : memref<8x256xf32, #tpu.memory_space<vmem>>, vector<8x8xf32>
    tpu.vector_store %arg8[%c0_79, %c16_80], %90 {strides = array<i32>} : memref<8x256xf32, #tpu.memory_space<vmem>>, vector<8x8xf32>,
    %92 = vector.extract_strided_slice %25 {offsets = [1, 1, 0, 0], sizes = [1, 1, 8, 8], strides = [1, 1, 1, 1]} : vector<2x16x8x8xf32> to vector<1x1x8x8xf32>
    %93 = vector.shape_cast %92 : vector<1x1x8x8xf32> to vector<8x8xf32>
    %c0_81 = arith.constant 0 : index
    %c24_82 = arith.constant 24 : index
    %94 = vector.load %arg8[%c0_81, %c24_82] : memref<8x256xf32, #tpu.memory_space<vmem>>, vector<8x8xf32>
    tpu.vector_store %arg8[%c0_81, %c24_82], %93 {strides = array<i32>} : memref<8x256xf32, #tpu.memory_space<vmem>>, vector<8x8xf32>,
    %95 = vector.extract_strided_slice %25 {offsets = [0, 2, 0, 0], sizes = [1, 1, 8, 8], strides = [1, 1, 1, 1]} : vector<2x16x8x8xf32> to vector<1x1x8x8xf32>
    %96 = vector.shape_cast %95 : vector<1x1x8x8xf32> to vector<8x8xf32>
    %c0_83 = arith.constant 0 : index
    %c32_84 = arith.constant 32 : index
    %97 = vector.load %arg8[%c0_83, %c32_84] : memref<8x256xf32, #tpu.memory_space<vmem>>, vector<8x8xf32>
    tpu.vector_store %arg8[%c0_83, %c32_84], %96 {strides = array<i32>} : memref<8x256xf32, #tpu.memory_space<vmem>>, vector<8x8xf32>,
    %98 = vector.extract_strided_slice %25 {offsets = [1, 2, 0, 0], sizes = [1, 1, 8, 8], strides = [1, 1, 1, 1]} : vector<2x16x8x8xf32> to vector<1x1x8x8xf32>
    %99 = vector.shape_cast %98 : vector<1x1x8x8xf32> to vector<8x8xf32>
    %c0_85 = arith.constant 0 : index
    %c40_86 = arith.constant 40 : index
    %100 = vector.load %arg8[%c0_85, %c40_86] : memref<8x256xf32, #tpu.memory_space<vmem>>, vector<8x8xf32>
    tpu.vector_store %arg8[%c0_85, %c40_86], %99 {strides = array<i32>} : memref<8x256xf32, #tpu.memory_space<vmem>>, vector<8x8xf32>,
    %101 = vector.extract_strided_slice %25 {offsets = [0, 3, 0, 0], sizes = [1, 1, 8, 8], strides = [1, 1, 1, 1]} : vector<2x16x8x8xf32> to vector<1x1x8x8xf32>
    %102 = vector.shape_cast %101 : vector<1x1x8x8xf32> to vector<8x8xf32>
    %c0_87 = arith.constant 0 : index
    %c48_88 = arith.constant 48 : index
    %103 = vector.load %arg8[%c0_87, %c48_88] : memref<8x256xf32, #tpu.memory_space<vmem>>, vector<8x8xf32>
    tpu.vector_store %arg8[%c0_87, %c48_88], %102 {strides = array<i32>} : memref<8x256xf32, #tpu.memory_space<vmem>>, vector<8x8xf32>,
    %104 = vector.extract_strided_slice %25 {offsets = [1, 3, 0, 0], sizes = [1, 1, 8, 8], strides = [1, 1, 1, 1]} : vector<2x16x8x8xf32> to vector<1x1x8x8xf32>
    %105 = vector.shape_cast %104 : vector<1x1x8x8xf32> to vector<8x8xf32>
    %c0_89 = arith.constant 0 : index
    %c56_90 = arith.constant 56 : index
    %106 = vector.load %arg8[%c0_89, %c56_90] : memref<8x256xf32, #tpu.memory_space<vmem>>, vector<8x8xf32>
    tpu.vector_store %arg8[%c0_89, %c56_90], %105 {strides = array<i32>} : memref<8x256xf32, #tpu.memory_space<vmem>>, vector<8x8xf32>,
    %107 = vector.extract_strided_slice %25 {offsets = [0, 4, 0, 0], sizes = [1, 1, 8, 8], strides = [1, 1, 1, 1]} : vector<2x16x8x8xf32> to vector<1x1x8x8xf32>
    %108 = vector.shape_cast %107 : vector<1x1x8x8xf32> to vector<8x8xf32>
    %c0_91 = arith.constant 0 : index
    %c64_92 = arith.constant 64 : index
    %109 = vector.load %arg8[%c0_91, %c64_92] : memref<8x256xf32, #tpu.memory_space<vmem>>, vector<8x8xf32>
    tpu.vector_store %arg8[%c0_91, %c64_92], %108 {strides = array<i32>} : memref<8x256xf32, #tpu.memory_space<vmem>>, vector<8x8xf32>,
    %110 = vector.extract_strided_slice %25 {offsets = [1, 4, 0, 0], sizes = [1, 1, 8, 8], strides = [1, 1, 1, 1]} : vector<2x16x8x8xf32> to vector<1x1x8x8xf32>
    %111 = vector.shape_cast %110 : vector<1x1x8x8xf32> to vector<8x8xf32>
    %c0_93 = arith.constant 0 : index
    %c72_94 = arith.constant 72 : index
    %112 = vector.load %arg8[%c0_93, %c72_94] : memref<8x256xf32, #tpu.memory_space<vmem>>, vector<8x8xf32>
    tpu.vector_store %arg8[%c0_93, %c72_94], %111 {strides = array<i32>} : memref<8x256xf32, #tpu.memory_space<vmem>>, vector<8x8xf32>,
    %113 = vector.extract_strided_slice %25 {offsets = [0, 5, 0, 0], sizes = [1, 1, 8, 8], strides = [1, 1, 1, 1]} : vector<2x16x8x8xf32> to vector<1x1x8x8xf32>
    %114 = vector.shape_cast %113 : vector<1x1x8x8xf32> to vector<8x8xf32>
    %c0_95 = arith.constant 0 : index
    %c80_96 = arith.constant 80 : index
    %115 = vector.load %arg8[%c0_95, %c80_96] : memref<8x256xf32, #tpu.memory_space<vmem>>, vector<8x8xf32>
    tpu.vector_store %arg8[%c0_95, %c80_96], %114 {strides = array<i32>} : memref<8x256xf32, #tpu.memory_space<vmem>>, vector<8x8xf32>,
    %116 = vector.extract_strided_slice %25 {offsets = [1, 5, 0, 0], sizes = [1, 1, 8, 8], strides = [1, 1, 1, 1]} : vector<2x16x8x8xf32> to vector<1x1x8x8xf32>
    %117 = vector.shape_cast %116 : vector<1x1x8x8xf32> to vector<8x8xf32>
    %c0_97 = arith.constant 0 : index
    %c88_98 = arith.constant 88 : index
    %118 = vector.load %arg8[%c0_97, %c88_98] : memref<8x256xf32, #tpu.memory_space<vmem>>, vector<8x8xf32>
    tpu.vector_store %arg8[%c0_97, %c88_98], %117 {strides = array<i32>} : memref<8x256xf32, #tpu.memory_space<vmem>>, vector<8x8xf32>,
    %119 = vector.extract_strided_slice %25 {offsets = [0, 6, 0, 0], sizes = [1, 1, 8, 8], strides = [1, 1, 1, 1]} : vector<2x16x8x8xf32> to vector<1x1x8x8xf32>
    %120 = vector.shape_cast %119 : vector<1x1x8x8xf32> to vector<8x8xf32>
    %c0_99 = arith.constant 0 : index
    %c96_100 = arith.constant 96 : index
    %121 = vector.load %arg8[%c0_99, %c96_100] : memref<8x256xf32, #tpu.memory_space<vmem>>, vector<8x8xf32>
    tpu.vector_store %arg8[%c0_99, %c96_100], %120 {strides = array<i32>} : memref<8x256xf32, #tpu.memory_space<vmem>>, vector<8x8xf32>,
    %122 = vector.extract_strided_slice %25 {offsets = [1, 6, 0, 0], sizes = [1, 1, 8, 8], strides = [1, 1, 1, 1]} : vector<2x16x8x8xf32> to vector<1x1x8x8xf32>
    %123 = vector.shape_cast %122 : vector<1x1x8x8xf32> to vector<8x8xf32>
    %c0_101 = arith.constant 0 : index
    %c104_102 = arith.constant 104 : index
    %124 = vector.load %arg8[%c0_101, %c104_102] : memref<8x256xf32, #tpu.memory_space<vmem>>, vector<8x8xf32>
    tpu.vector_store %arg8[%c0_101, %c104_102], %123 {strides = array<i32>} : memref<8x256xf32, #tpu.memory_space<vmem>>, vector<8x8xf32>,
    %125 = vector.extract_strided_slice %25 {offsets = [0, 7, 0, 0], sizes = [1, 1, 8, 8], strides = [1, 1, 1, 1]} : vector<2x16x8x8xf32> to vector<1x1x8x8xf32>
    %126 = vector.shape_cast %125 : vector<1x1x8x8xf32> to vector<8x8xf32>
    %c0_103 = arith.constant 0 : index
    %c112_104 = arith.constant 112 : index
    %127 = vector.load %arg8[%c0_103, %c112_104] : memref<8x256xf32, #tpu.memory_space<vmem>>, vector<8x8xf32>
    tpu.vector_store %arg8[%c0_103, %c112_104], %126 {strides = array<i32>} : memref<8x256xf32, #tpu.memory_space<vmem>>, vector<8x8xf32>,
    %128 = vector.extract_strided_slice %25 {offsets = [1, 7, 0, 0], sizes = [1, 1, 8, 8], strides = [1, 1, 1, 1]} : vector<2x16x8x8xf32> to vector<1x1x8x8xf32>
    %129 = vector.shape_cast %128 : vector<1x1x8x8xf32> to vector<8x8xf32>
    %c0_105 = arith.constant 0 : index
    %c120_106 = arith.constant 120 : index
    %130 = vector.load %arg8[%c0_105, %c120_106] : memref<8x256xf32, #tpu.memory_space<vmem>>, vector<8x8xf32>
    tpu.vector_store %arg8[%c0_105, %c120_106], %129 {strides = array<i32>} : memref<8x256xf32, #tpu.memory_space<vmem>>, vector<8x8xf32>,
    %131 = vector.extract_strided_slice %25 {offsets = [0, 8, 0, 0], sizes = [1, 1, 8, 8], strides = [1, 1, 1, 1]} : vector<2x16x8x8xf32> to vector<1x1x8x8xf32>
    %132 = vector.shape_cast %131 : vector<1x1x8x8xf32> to vector<8x8xf32>
    %c0_107 = arith.constant 0 : index
    %c128_108 = arith.constant 128 : index
    %133 = vector.load %arg8[%c0_107, %c128_108] : memref<8x256xf32, #tpu.memory_space<vmem>>, vector<8x8xf32>
    tpu.vector_store %arg8[%c0_107, %c128_108], %132 {strides = array<i32>} : memref<8x256xf32, #tpu.memory_space<vmem>>, vector<8x8xf32>,
    %134 = vector.extract_strided_slice %25 {offsets = [1, 8, 0, 0], sizes = [1, 1, 8, 8], strides = [1, 1, 1, 1]} : vector<2x16x8x8xf32> to vector<1x1x8x8xf32>
    %135 = vector.shape_cast %134 : vector<1x1x8x8xf32> to vector<8x8xf32>
    %c0_109 = arith.constant 0 : index
    %c136 = arith.constant 136 : index
    %136 = vector.load %arg8[%c0_109, %c136] : memref<8x256xf32, #tpu.memory_space<vmem>>, vector<8x8xf32>
    tpu.vector_store %arg8[%c0_109, %c136], %135 {strides = array<i32>} : memref<8x256xf32, #tpu.memory_space<vmem>>, vector<8x8xf32>,
    %137 = vector.extract_strided_slice %25 {offsets = [0, 9, 0, 0], sizes = [1, 1, 8, 8], strides = [1, 1, 1, 1]} : vector<2x16x8x8xf32> to vector<1x1x8x8xf32>
    %138 = vector.shape_cast %137 : vector<1x1x8x8xf32> to vector<8x8xf32>
    %c0_110 = arith.constant 0 : index
    %c144_111 = arith.constant 144 : index
    %139 = vector.load %arg8[%c0_110, %c144_111] : memref<8x256xf32, #tpu.memory_space<vmem>>, vector<8x8xf32>
    tpu.vector_store %arg8[%c0_110, %c144_111], %138 {strides = array<i32>} : memref<8x256xf32, #tpu.memory_space<vmem>>, vector<8x8xf32>,
    %140 = vector.extract_strided_slice %25 {offsets = [1, 9, 0, 0], sizes = [1, 1, 8, 8], strides = [1, 1, 1, 1]} : vector<2x16x8x8xf32> to vector<1x1x8x8xf32>
    %141 = vector.shape_cast %140 : vector<1x1x8x8xf32> to vector<8x8xf32>
    %c0_112 = arith.constant 0 : index
    %c152 = arith.constant 152 : index
    %142 = vector.load %arg8[%c0_112, %c152] : memref<8x256xf32, #tpu.memory_space<vmem>>, vector<8x8xf32>
    tpu.vector_store %arg8[%c0_112, %c152], %141 {strides = array<i32>} : memref<8x256xf32, #tpu.memory_space<vmem>>, vector<8x8xf32>,
    %143 = vector.extract_strided_slice %25 {offsets = [0, 10, 0, 0], sizes = [1, 1, 8, 8], strides = [1, 1, 1, 1]} : vector<2x16x8x8xf32> to vector<1x1x8x8xf32>
    %144 = vector.shape_cast %143 : vector<1x1x8x8xf32> to vector<8x8xf32>
    %c0_113 = arith.constant 0 : index
    %c160_114 = arith.constant 160 : index
    %145 = vector.load %arg8[%c0_113, %c160_114] : memref<8x256xf32, #tpu.memory_space<vmem>>, vector<8x8xf32>
    tpu.vector_store %arg8[%c0_113, %c160_114], %144 {strides = array<i32>} : memref<8x256xf32, #tpu.memory_space<vmem>>, vector<8x8xf32>,
    %146 = vector.extract_strided_slice %25 {offsets = [1, 10, 0, 0], sizes = [1, 1, 8, 8], strides = [1, 1, 1, 1]} : vector<2x16x8x8xf32> to vector<1x1x8x8xf32>
    %147 = vector.shape_cast %146 : vector<1x1x8x8xf32> to vector<8x8xf32>
    %c0_115 = arith.constant 0 : index
    %c168 = arith.constant 168 : index
    %148 = vector.load %arg8[%c0_115, %c168] : memref<8x256xf32, #tpu.memory_space<vmem>>, vector<8x8xf32>
    tpu.vector_store %arg8[%c0_115, %c168], %147 {strides = array<i32>} : memref<8x256xf32, #tpu.memory_space<vmem>>, vector<8x8xf32>,
    %149 = vector.extract_strided_slice %25 {offsets = [0, 11, 0, 0], sizes = [1, 1, 8, 8], strides = [1, 1, 1, 1]} : vector<2x16x8x8xf32> to vector<1x1x8x8xf32>
    %150 = vector.shape_cast %149 : vector<1x1x8x8xf32> to vector<8x8xf32>
    %c0_116 = arith.constant 0 : index
    %c176_117 = arith.constant 176 : index
    %151 = vector.load %arg8[%c0_116, %c176_117] : memref<8x256xf32, #tpu.memory_space<vmem>>, vector<8x8xf32>
    tpu.vector_store %arg8[%c0_116, %c176_117], %150 {strides = array<i32>} : memref<8x256xf32, #tpu.memory_space<vmem>>, vector<8x8xf32>,
    %152 = vector.extract_strided_slice %25 {offsets = [1, 11, 0, 0], sizes = [1, 1, 8, 8], strides = [1, 1, 1, 1]} : vector<2x16x8x8xf32> to vector<1x1x8x8xf32>
    %153 = vector.shape_cast %152 : vector<1x1x8x8xf32> to vector<8x8xf32>
    %c0_118 = arith.constant 0 : index
    %c184 = arith.constant 184 : index
    %154 = vector.load %arg8[%c0_118, %c184] : memref<8x256xf32, #tpu.memory_space<vmem>>, vector<8x8xf32>
    tpu.vector_store %arg8[%c0_118, %c184], %153 {strides = array<i32>} : memref<8x256xf32, #tpu.memory_space<vmem>>, vector<8x8xf32>,
    %155 = vector.extract_strided_slice %25 {offsets = [0, 12, 0, 0], sizes = [1, 1, 8, 8], strides = [1, 1, 1, 1]} : vector<2x16x8x8xf32> to vector<1x1x8x8xf32>
    %156 = vector.shape_cast %155 : vector<1x1x8x8xf32> to vector<8x8xf32>
    %c0_119 = arith.constant 0 : index
    %c192_120 = arith.constant 192 : index
    %157 = vector.load %arg8[%c0_119, %c192_120] : memref<8x256xf32, #tpu.memory_space<vmem>>, vector<8x8xf32>
    tpu.vector_store %arg8[%c0_119, %c192_120], %156 {strides = array<i32>} : memref<8x256xf32, #tpu.memory_space<vmem>>, vector<8x8xf32>,
    %158 = vector.extract_strided_slice %25 {offsets = [1, 12, 0, 0], sizes = [1, 1, 8, 8], strides = [1, 1, 1, 1]} : vector<2x16x8x8xf32> to vector<1x1x8x8xf32>
    %159 = vector.shape_cast %158 : vector<1x1x8x8xf32> to vector<8x8xf32>
    %c0_121 = arith.constant 0 : index
    %c200 = arith.constant 200 : index
    %160 = vector.load %arg8[%c0_121, %c200] : memref<8x256xf32, #tpu.memory_space<vmem>>, vector<8x8xf32>
    tpu.vector_store %arg8[%c0_121, %c200], %159 {strides = array<i32>} : memref<8x256xf32, #tpu.memory_space<vmem>>, vector<8x8xf32>,
    %161 = vector.extract_strided_slice %25 {offsets = [0, 13, 0, 0], sizes = [1, 1, 8, 8], strides = [1, 1, 1, 1]} : vector<2x16x8x8xf32> to vector<1x1x8x8xf32>
    %162 = vector.shape_cast %161 : vector<1x1x8x8xf32> to vector<8x8xf32>
    %c0_122 = arith.constant 0 : index
    %c208_123 = arith.constant 208 : index
    %163 = vector.load %arg8[%c0_122, %c208_123] : memref<8x256xf32, #tpu.memory_space<vmem>>, vector<8x8xf32>
    tpu.vector_store %arg8[%c0_122, %c208_123], %162 {strides = array<i32>} : memref<8x256xf32, #tpu.memory_space<vmem>>, vector<8x8xf32>,
    %164 = vector.extract_strided_slice %25 {offsets = [1, 13, 0, 0], sizes = [1, 1, 8, 8], strides = [1, 1, 1, 1]} : vector<2x16x8x8xf32> to vector<1x1x8x8xf32>
    %165 = vector.shape_cast %164 : vector<1x1x8x8xf32> to vector<8x8xf32>
    %c0_124 = arith.constant 0 : index
    %c216 = arith.constant 216 : index
    %166 = vector.load %arg8[%c0_124, %c216] : memref<8x256xf32, #tpu.memory_space<vmem>>, vector<8x8xf32>
    tpu.vector_store %arg8[%c0_124, %c216], %165 {strides = array<i32>} : memref<8x256xf32, #tpu.memory_space<vmem>>, vector<8x8xf32>,
    %167 = vector.extract_strided_slice %25 {offsets = [0, 14, 0, 0], sizes = [1, 1, 8, 8], strides = [1, 1, 1, 1]} : vector<2x16x8x8xf32> to vector<1x1x8x8xf32>
    %168 = vector.shape_cast %167 : vector<1x1x8x8xf32> to vector<8x8xf32>
    %c0_125 = arith.constant 0 : index
    %c224_126 = arith.constant 224 : index
    %169 = vector.load %arg8[%c0_125, %c224_126] : memref<8x256xf32, #tpu.memory_space<vmem>>, vector<8x8xf32>
    tpu.vector_store %arg8[%c0_125, %c224_126], %168 {strides = array<i32>} : memref<8x256xf32, #tpu.memory_space<vmem>>, vector<8x8xf32>,
    %170 = vector.extract_strided_slice %25 {offsets = [1, 14, 0, 0], sizes = [1, 1, 8, 8], strides = [1, 1, 1, 1]} : vector<2x16x8x8xf32> to vector<1x1x8x8xf32>
    %171 = vector.shape_cast %170 : vector<1x1x8x8xf32> to vector<8x8xf32>
    %c0_127 = arith.constant 0 : index
    %c232 = arith.constant 232 : index
    %172 = vector.load %arg8[%c0_127, %c232] : memref<8x256xf32, #tpu.memory_space<vmem>>, vector<8x8xf32>
    tpu.vector_store %arg8[%c0_127, %c232], %171 {strides = array<i32>} : memref<8x256xf32, #tpu.memory_space<vmem>>, vector<8x8xf32>,
    %173 = vector.extract_strided_slice %25 {offsets = [0, 15, 0, 0], sizes = [1, 1, 8, 8], strides = [1, 1, 1, 1]} : vector<2x16x8x8xf32> to vector<1x1x8x8xf32>
    %174 = vector.shape_cast %173 : vector<1x1x8x8xf32> to vector<8x8xf32>
    %c0_128 = arith.constant 0 : index
    %c240_129 = arith.constant 240 : index
    %175 = vector.load %arg8[%c0_128, %c240_129] : memref<8x256xf32, #tpu.memory_space<vmem>>, vector<8x8xf32>
    tpu.vector_store %arg8[%c0_128, %c240_129], %174 {strides = array<i32>} : memref<8x256xf32, #tpu.memory_space<vmem>>, vector<8x8xf32>,
    %176 = vector.extract_strided_slice %25 {offsets = [1, 15, 0, 0], sizes = [1, 1, 8, 8], strides = [1, 1, 1, 1]} : vector<2x16x8x8xf32> to vector<1x1x8x8xf32>
    %177 = vector.shape_cast %176 : vector<1x1x8x8xf32> to vector<8x8xf32>
    %c0_130 = arith.constant 0 : index
    %c248 = arith.constant 248 : index
    %178 = vector.load %arg8[%c0_130, %c248] : memref<8x256xf32, #tpu.memory_space<vmem>>, vector<8x8xf32>
    tpu.vector_store %arg8[%c0_130, %c248], %177 {strides = array<i32>} : memref<8x256xf32, #tpu.memory_space<vmem>>, vector<8x8xf32>,
    return
  }
  func.func @transform_0(%arg0: i32) -> (i32, i32, i32) {
    %c0_i32 = arith.constant 0 : i32
    %c0_i32_0 = arith.constant 0 : i32
    %c0_i32_1 = arith.constant 0 : i32
    return %arg0, %c0_i32, %c0_i32_0 : i32, i32, i32
  }
  func.func @transform_1(%arg0: i32) -> (i32, i32, i32) {
    %c0_i32 = arith.constant 0 : i32
    %c0_i32_0 = arith.constant 0 : i32
    %c0_i32_1 = arith.constant 0 : i32
    return %arg0, %c0_i32, %c0_i32_0 : i32, i32, i32
  }
  func.func @transform_2(%arg0: i32) -> (i32, i32) {
    %c0_i32 = arith.constant 0 : i32
    %c0_i32_0 = arith.constant 0 : i32
    %c0_i32_1 = arith.constant 0 : i32
    return %c0_i32, %c0_i32_0 : i32, i32
  }
  func.func @transform_3(%arg0: i32) -> (i32, i32) {
    %c0_i32 = arith.constant 0 : i32
    %c0_i32_0 = arith.constant 0 : i32
    %c0_i32_1 = arith.constant 0 : i32
    return %c0_i32, %c0_i32_0 : i32, i32
  }
  func.func @transform_4(%arg0: i32) -> (i32, i32, i32) {
    %c0_i32 = arith.constant 0 : i32
    %c0_i32_0 = arith.constant 0 : i32
    %c0_i32_1 = arith.constant 0 : i32
    %c0_i32_2 = arith.constant 0 : i32
    return %c0_i32, %c0_i32_0, %c0_i32_1 : i32, i32, i32
  }
  func.func @transform_5(%arg0: i32) -> (i32, i32) {
    %c0_i32 = arith.constant 0 : i32
    %c0_i32_0 = arith.constant 0 : i32
    %c0_i32_1 = arith.constant 0 : i32
    return %c0_i32, %c0_i32_0 : i32, i32
  }
  func.func @transform_6(%arg0: i32) -> (i32, i32) {
    %c0_i32 = arith.constant 0 : i32
    %c0_i32_0 = arith.constant 0 : i32
    return %c0_i32, %arg0 : i32, i32
  }
  func.func @transform_7(%arg0: i32) -> (i32, i32) {
    %c0_i32 = arith.constant 0 : i32
    %c0_i32_0 = arith.constant 0 : i32
    return %c0_i32, %arg0 : i32, i32
  }
}

</mosaic_0001>

<llo_original>
// kernel: tpu_custom_call.1
$region0: #{tpu_custom_call.1}
  #allocation0 [shape = 'u32[]', space=smem, size = 0x4, offset = 0x4, fixed_abs, tag = 'smem constant byte address 0x4 - core index']
  #allocation1 [shape = 'u32[144,128]{1,0:T(1,128)}', space=vmem, size = 0x12000, scoped, tag = 'internal scratch']
  #allocation2 [shape = 'f32[128,16]{1,0:T(8,128)}', space=vmem, size = 0x10000, scoped, tag = 'scratch operand']
  %s0 = inlined_call_operand.vmem [shape: f32[32,16,16], index: 0, kind: input, shape index: {}]
  %s1 = inlined_call_operand.vmem [shape: f32[32,8,16], index: 1, kind: input, shape index: {}]
  %s2 = inlined_call_operand.vmem [shape: f32[16,64], index: 2, kind: input, shape index: {}]
  %s3 = inlined_call_operand.vmem [shape: f32[1,64], index: 3, kind: input, shape index: {}]
  %s4 = inlined_call_operand.vmem [shape: f32[2,16,16], index: 4, kind: input, shape index: {}]
  %s5 = inlined_call_operand.vmem [shape: f32[1,16], index: 5, kind: input, shape index: {}]
  %s6 = inlined_call_operand.hbm [shape: f32[8,512], index: 6, kind: output, shape index: {0}]
  %s7 = inlined_call_operand.hbm [shape: f32[8,512], index: 7, kind: output, shape index: {1}]
  %8 = xla_tuple %s6, %s7
  %s9 = sld [smem:[#allocation0]]
  $region65: #{tpu_custom_call.1} parent=0
    _
  %s11 = ssub.s32 1, %s9
  %s12 = scalar_select 0, %s11, %s9
  $region1: #{tpu_custom_call.1} parent=0
    #allocation3 [shape = 'u8[16384]{0}', space=vmem, size = 0x4000, scoped, tag = 'output window, operand 0']
    #allocation4 [shape = 's32[2]{0}', space=sflag, size = 0x8, scoped, tag = 'scoped memory for tpu_custom_call.1']
    #allocation5 [shape = 'u8[16384]{0}', space=vmem, size = 0x4000, scoped, tag = 'output window, operand 1']
    #allocation6 [shape = 's32[2]{0}', space=sflag, size = 0x8, scoped, tag = 'scoped memory for tpu_custom_call.1']
    %13 = vsyncpa [#allocation4], 0
    %s14 = scalar_lea.sflag [#allocation4], 1
    %15 = vsyncpa %s14, 0
    %16 = vsyncpa [#allocation6], 0
    %s17 = scalar_lea.sflag [#allocation6], 1
    %18 = vsyncpa %s17, 0
    loop: start=0, step=1, limit=4
    $region2: #{tpu_custom_call.1} parent=1 // loop_pre_header
      _
    $region3: #{tpu_custom_call.1} parent=1 // loop_header
      %s20 = sphi 0, %s24
      %p21 = scmp.ge.s32.totalorder %s20, 4
      %s30 = sphi 0, %s32
      %s33 = sphi 0, %s30
      %s34 = sphi 0, %s33
      %s50 = sphi 0, %s34
      %s56 = sphi 0, %s58
      %s59 = sphi 0, %s56
      %s60 = sphi 0, %s59
      %s76 = sphi 0, %s60
      %s80 = sphi 0, %s80
      %s82 = sphi 0, %s80
      %s83 = sphi 0, %s82
      %s97 = sphi 0, %s83
      %s101 = sphi 0, %s101
      %s103 = sphi 0, %s101
      %s104 = sphi 0, %s103
      %s118 = sphi 0, %s104
      %s122 = sphi 0, %s122
      %s124 = sphi 0, %s122
      %s125 = sphi 0, %s124
      %s139 = sphi 0, %s125
      %s143 = sphi 0, %s143
      %s145 = sphi 0, %s143
      %s146 = sphi 0, %s145
      %s160 = sphi 0, %s146
      %s166 = sphi 0, %s168
      %s169 = sphi 0, %s166
      %s170 = sphi 0, %s169
      %s186 = sphi 0, %s170
      %s192 = sphi 0, %s194
      %s195 = sphi 0, %s192
      %s196 = sphi 0, %s195
      %s212 = sphi 0, %s196
    $region4: #{tpu_custom_call.1} parent=1 // loop_header_branch
      %23 = sbr.rel (%p21) target = $region8
    $region5: #{tpu_custom_call.1} parent=1 // loop_body
      %s25 = ssub.s32 %s20, 1
      %s26 = ssub.s32 %s20, 2
      %s27 = sadd.s32 %s20, 1
      %s28 = ssub.s32 %s20, %s27
      %p29 = scmp.eq.s32.totalorder %s28, 0
      %s31 = sadd.s32 %s30, 1
      %s32 = scalar_select %p29, %s30, %s31
      %p35 = pneg %p29
      %p36 = scmp.eq.s32.totalorder %s20, 1
      %p37 = por %p35, %p36
      %p38 = scmp.ne.s32.totalorder %s30, %s33
      %p39 = scmp.eq.s32.totalorder %s20, 0
      %p40 = por %p38, %p39
      %p41 = scmp.ne.s32.totalorder %s30, %s33
      %p42 = scmp.eq.s32.totalorder %s25, 1
      %p43 = por %p41, %p42
      %p44 = scmp.ne.s32.totalorder %s33, %s34
      %p45 = scmp.eq.s32.totalorder %s25, 0
      %p46 = por %p44, %p45
      %p47 = scmp.ne.s32.totalorder %s33, %s34
      %p48 = scmp.eq.s32.totalorder %s26, 1
      %p49 = por %p47, %p48
      %p51 = scmp.ne.s32.totalorder %s34, %s50
      %p52 = scmp.eq.s32.totalorder %s26, 0
      %p53 = por %p51, %p52
      %s54 = ssub.s32 %s20, %s27
      %p55 = scmp.eq.s32.totalorder %s54, 0
      %s57 = sadd.s32 %s56, 1
      %s58 = scalar_select %p55, %s56, %s57
      %p61 = pneg %p55
      %p62 = scmp.eq.s32.totalorder %s20, 1
      %p63 = por %p61, %p62
      %p64 = scmp.ne.s32.totalorder %s56, %s59
      %p65 = scmp.eq.s32.totalorder %s20, 0
      %p66 = por %p64, %p65
      %p67 = scmp.ne.s32.totalorder %s56, %s59
      %p68 = scmp.eq.s32.totalorder %s25, 1
      %p69 = por %p67, %p68
      %p70 = scmp.ne.s32.totalorder %s59, %s60
      %p71 = scmp.eq.s32.totalorder %s25, 0
      %p72 = por %p70, %p71
      %p73 = scmp.ne.s32.totalorder %s59, %s60
      %p74 = scmp.eq.s32.totalorder %s26, 1
      %p75 = por %p73, %p74
      %p77 = scmp.ne.s32.totalorder %s60, %s76
      %p78 = scmp.eq.s32.totalorder %s26, 0
      %p79 = por %p77, %p78
      %s81 = sadd.s32 %s80, 1
      %p84 = scmp.eq.s32.totalorder %s20, 1
      %p85 = scmp.ne.s32.totalorder %s80, %s82
      %p86 = scmp.eq.s32.totalorder %s20, 0
      %p87 = por %p85, %p86
      %p88 = scmp.ne.s32.totalorder %s80, %s82
      %p89 = scmp.eq.s32.totalorder %s25, 1
      %p90 = por %p88, %p89
      %p91 = scmp.ne.s32.totalorder %s82, %s83
      %p92 = scmp.eq.s32.totalorder %s25, 0
      %p93 = por %p91, %p92
      %p94 = scmp.ne.s32.totalorder %s82, %s83
      %p95 = scmp.eq.s32.totalorder %s26, 1
      %p96 = por %p94, %p95
      %p98 = scmp.ne.s32.totalorder %s83, %s97
      %p99 = scmp.eq.s32.totalorder %s26, 0
      %p100 = por %p98, %p99
      %s102 = sadd.s32 %s101, 1
      %p105 = scmp.eq.s32.totalorder %s20, 1
      %p106 = scmp.ne.s32.totalorder %s101, %s103
      %p107 = scmp.eq.s32.totalorder %s20, 0
      %p108 = por %p106, %p107
      %p109 = scmp.ne.s32.totalorder %s101, %s103
      %p110 = scmp.eq.s32.totalorder %s25, 1
      %p111 = por %p109, %p110
      %p112 = scmp.ne.s32.totalorder %s103, %s104
      %p113 = scmp.eq.s32.totalorder %s25, 0
      %p114 = por %p112, %p113
      %p115 = scmp.ne.s32.totalorder %s103, %s104
      %p116 = scmp.eq.s32.totalorder %s26, 1
      %p117 = por %p115, %p116
      %p119 = scmp.ne.s32.totalorder %s104, %s118
      %p120 = scmp.eq.s32.totalorder %s26, 0
      %p121 = por %p119, %p120
      %s123 = sadd.s32 %s122, 1
      %p126 = scmp.eq.s32.totalorder %s20, 1
      %p127 = scmp.ne.s32.totalorder %s122, %s124
      %p128 = scmp.eq.s32.totalorder %s20, 0
      %p129 = por %p127, %p128
      %p130 = scmp.ne.s32.totalorder %s122, %s124
      %p131 = scmp.eq.s32.totalorder %s25, 1
      %p132 = por %p130, %p131
      %p133 = scmp.ne.s32.totalorder %s124, %s125
      %p134 = scmp.eq.s32.totalorder %s25, 0
      %p135 = por %p133, %p134
      %p136 = scmp.ne.s32.totalorder %s124, %s125
      %p137 = scmp.eq.s32.totalorder %s26, 1
      %p138 = por %p136, %p137
      %p140 = scmp.ne.s32.totalorder %s125, %s139
      %p141 = scmp.eq.s32.totalorder %s26, 0
      %p142 = por %p140, %p141
      %s144 = sadd.s32 %s143, 1
      %p147 = scmp.eq.s32.totalorder %s20, 1
      %p148 = scmp.ne.s32.totalorder %s143, %s145
      %p149 = scmp.eq.s32.totalorder %s20, 0
      %p150 = por %p148, %p149
      %p151 = scmp.ne.s32.totalorder %s143, %s145
      %p152 = scmp.eq.s32.totalorder %s25, 1
      %p153 = por %p151, %p152
      %p154 = scmp.ne.s32.totalorder %s145, %s146
      %p155 = scmp.eq.s32.totalorder %s25, 0
      %p156 = por %p154, %p155
      %p157 = scmp.ne.s32.totalorder %s145, %s146
      %p158 = scmp.eq.s32.totalorder %s26, 1
      %p159 = por %p157, %p158
      %p161 = scmp.ne.s32.totalorder %s146, %s160
      %p162 = scmp.eq.s32.totalorder %s26, 0
      %p163 = por %p161, %p162
      %s164 = ssub.s32 %s20, %s27
      %p165 = scmp.eq.s32.totalorder %s164, 0
      %s167 = sadd.s32 %s166, 1
      %s168 = scalar_select %p165, %s166, %s167
      %p171 = pneg %p165
      %p172 = scmp.eq.s32.totalorder %s20, 1
      %p173 = por %p171, %p172
      %p174 = scmp.ne.s32.totalorder %s166, %s169
      %p175 = scmp.eq.s32.totalorder %s20, 0
      %p176 = por %p174, %p175
      %p177 = scmp.ne.s32.totalorder %s166, %s169
      %p178 = scmp.eq.s32.totalorder %s25, 1
      %p179 = por %p177, %p178
      %p180 = scmp.ne.s32.totalorder %s169, %s170
      %p181 = scmp.eq.s32.totalorder %s25, 0
      %p182 = por %p180, %p181
      %p183 = scmp.ne.s32.totalorder %s169, %s170
      %p184 = scmp.eq.s32.totalorder %s26, 1
      %p185 = por %p183, %p184
      %p187 = scmp.ne.s32.totalorder %s170, %s186
      %p188 = scmp.eq.s32.totalorder %s26, 0
      %p189 = por %p187, %p188
      %s190 = ssub.s32 %s20, %s27
      %p191 = scmp.eq.s32.totalorder %s190, 0
      %s193 = sadd.s32 %s192, 1
      %s194 = scalar_select %p191, %s192, %s193
      %p197 = pneg %p191
      %p198 = scmp.eq.s32.totalorder %s20, 1
      %p199 = por %p197, %p198
      %p200 = scmp.ne.s32.totalorder %s192, %s195
      %p201 = scmp.eq.s32.totalorder %s20, 0
      %p202 = por %p200, %p201
      %p203 = scmp.ne.s32.totalorder %s192, %s195
      %p204 = scmp.eq.s32.totalorder %s25, 1
      %p205 = por %p203, %p204
      %p206 = scmp.ne.s32.totalorder %s195, %s196
      %p207 = scmp.eq.s32.totalorder %s25, 0
      %p208 = por %p206, %p207
      %p209 = scmp.ne.s32.totalorder %s195, %s196
      %p210 = scmp.eq.s32.totalorder %s26, 1
      %p211 = por %p209, %p210
      %p213 = scmp.ne.s32.totalorder %s196, %s212
      %p214 = scmp.eq.s32.totalorder %s26, 0
      %p215 = por %p213, %p214
      %p216 = scmp.le.s32.totalorder 1, %s20
      %p217 = scmp.lt.s32.totalorder %s20, 3
      %p218 = pnand %p216, %p217
      %p219 = pneg %p218
      // Predicated region
      $region9: #{tpu_custom_call.1} parent=5 // pred_check
        _
      $region10: #{tpu_custom_call.1} parent=5 // pred_check_branch
        %221 = sbr.rel (%p218) target = $region12
      $region11: #{tpu_custom_call.1} parent=5 // pred_region
        %s222 = ssub.s32 %s20, 1
        // Predicated region
        $region13: #{tpu_custom_call.1} parent=11 // pred_check
          %p223 = pneg %p93
        $region14: #{tpu_custom_call.1} parent=11 // pred_check_branch
          %225 = sbr.rel (%p223) target = $region16
        $region15: #{tpu_custom_call.1} parent=11 // pred_region
          _
        $region16: #{tpu_custom_call.1} parent=11 // pred_fallthru
          _
        // Predicated region
        $region17: #{tpu_custom_call.1} parent=11 // pred_check
          %p226 = pneg %p114
        $region18: #{tpu_custom_call.1} parent=11 // pred_check_branch
          %228 = sbr.rel (%p226) target = $region20
        $region19: #{tpu_custom_call.1} parent=11 // pred_region
          _
        $region20: #{tpu_custom_call.1} parent=11 // pred_fallthru
          _
        // Predicated region
        $region21: #{tpu_custom_call.1} parent=11 // pred_check
          %p229 = pneg %p135
        $region22: #{tpu_custom_call.1} parent=11 // pred_check_branch
          %231 = sbr.rel (%p229) target = $region24
        $region23: #{tpu_custom_call.1} parent=11 // pred_region
          _
        $region24: #{tpu_custom_call.1} parent=11 // pred_fallthru
          _
        // Predicated region
        $region25: #{tpu_custom_call.1} parent=11 // pred_check
          %p232 = pneg %p156
        $region26: #{tpu_custom_call.1} parent=11 // pred_check_branch
          %234 = sbr.rel (%p232) target = $region28
        $region27: #{tpu_custom_call.1} parent=11 // pred_region
          _
        $region28: #{tpu_custom_call.1} parent=11 // pred_fallthru
          _
      $region12: #{tpu_custom_call.1} parent=5 // pred_fallthru
        _
      %p235 = scmp.lt.s32.totalorder %s20, 2
      // Predicated region
      $region29: #{tpu_custom_call.1} parent=5 // pred_check
        %p236 = pneg %p235
      $region30: #{tpu_custom_call.1} parent=5 // pred_check_branch
        %238 = sbr.rel (%p236) target = $region32
      $region31: #{tpu_custom_call.1} parent=5 // pred_region
        // Predicated region
        $region33: #{tpu_custom_call.1} parent=31 // pred_check
          %p239 = pneg %p40
        $region34: #{tpu_custom_call.1} parent=31 // pred_check_branch
          %241 = sbr.rel (%p239) target = $region36
        $region35: #{tpu_custom_call.1} parent=31 // pred_region
          %s242 = smul.u32 16, %s20
          %p243 = scmp.lt.s32.totalorder %s242, 31
          %s244 = scalar_select %p243, %s242, 31
          %s245 = smul.addr %s244, 2
          %s246 = smul.addr %s245, 8
          %s247 = scalar_lea.vmem %s0, %s246
          %s248 = smul.u32 16, %s20
        $region36: #{tpu_custom_call.1} parent=31 // pred_fallthru
          _
        // Predicated region
        $region37: #{tpu_custom_call.1} parent=31 // pred_check
          %p249 = pneg %p66
        $region38: #{tpu_custom_call.1} parent=31 // pred_check_branch
          %251 = sbr.rel (%p249) target = $region40
        $region39: #{tpu_custom_call.1} parent=31 // pred_region
          %s252 = smul.u32 16, %s20
          %p253 = scmp.lt.s32.totalorder %s252, 31
          %s254 = scalar_select %p253, %s252, 31
          %s255 = smul.addr %s254, 8
          %s256 = scalar_lea.vmem %s1, %s255
          %s257 = smul.u32 16, %s20
        $region40: #{tpu_custom_call.1} parent=31 // pred_fallthru
          _
      $region32: #{tpu_custom_call.1} parent=5 // pred_fallthru
        _
      %p258 = scmp.le.s32.totalorder 1, %s20
      %p259 = scmp.lt.s32.totalorder %s20, 3
      %p260 = pnand %p258, %p259
      %p261 = pneg %p260
      // Predicated region
      $region41: #{tpu_custom_call.1} parent=5 // pred_check
        _
      $region42: #{tpu_custom_call.1} parent=5 // pred_check_branch
        %263 = sbr.rel (%p260) target = $region44
      $region43: #{tpu_custom_call.1} parent=5 // pred_region
        %s264 = ssub.s32 %s20, 1
        %s265 = smul.u32 16, %s25
        %p266 = scmp.lt.s32.totalorder %s265, 31
        %s267 = scalar_select %p266, %s265, 31
        %s268 = smul.addr %s267, 2
        %s269 = smul.addr %s268, 8
        %s270 = scalar_lea.vmem %s0, %s269
        %p271 = pneg %p46
        %p272 = pneg %p43
        %s273 = smul.u32 16, %s25
        %p274 = scmp.lt.s32.totalorder %s273, 31
        %s275 = scalar_select %p274, %s273, 31
        %s276 = smul.addr %s275, 8
        %s277 = scalar_lea.vmem %s1, %s276
        %p278 = pneg %p72
        %p279 = pneg %p69
        %p280 = pneg %p93
        %p281 = pneg %p90
        %p282 = pneg %p114
        %p283 = pneg %p111
        %p284 = pneg %p135
        %p285 = pneg %p132
        %p286 = pneg %p156
        %p287 = pneg %p153
        %p288 = pneg %p182
        %p289 = pneg %p179
        %s290 = sand.u32 %s169, 1
        %s291 = scalar_lea.sflag [#allocation4], %s290
        %s292 = sand.u32 %s169, 1
        %s293 = smul.addr %s292, 16
        %s294 = scalar_lea.vmem [#allocation3], %s293
        %p295 = pneg %p208
        %p296 = pneg %p205
        %s297 = sand.u32 %s195, 1
        %s298 = scalar_lea.sflag [#allocation6], %s297
        %s299 = sand.u32 %s195, 1
        %s300 = smul.addr %s299, 16
        %s301 = scalar_lea.vmem [#allocation5], %s300
        %s302 = smul.u32 16, %s25
        %p303 = scmp.lt.s32.totalorder %s302, 31
        %s304 = scalar_select %p303, %s302, 31
        %s305 = smul.addr %s304, 2
        %s306 = smul.addr %s305, 8
        %s307 = scalar_lea.vmem %s0, %s306
        %s308 = smul.u32 16, %s25
        %s309 = smul.u32 16, %s25
        %p310 = scmp.lt.s32.totalorder %s309, 31
        %s311 = scalar_select %p310, %s309, 31
        %s312 = smul.addr %s311, 8
        %s313 = scalar_lea.vmem %s1, %s312
        %s314 = smul.u32 16, %s25
        %s315 = smul.u32 2, %s25
        %s316 = smul.u32 2, %s25
        %v317 = vld [vmem:[%s307] sm:$0xff]
        %v318 = vld [vmem:[%s307 + $0x8] sm:$0xff]
        %v319 = vld [vmem:[%s307 + $0x10] sm:$0xff]
        %v320 = vld [vmem:[%s307 + $0x18] sm:$0xff]
        %v321 = vld [vmem:[%s307 + $0x20] sm:$0xff]
        %v322 = vld [vmem:[%s307 + $0x28] sm:$0xff]
        %v323 = vld [vmem:[%s307 + $0x30] sm:$0xff]
        %v324 = vld [vmem:[%s307 + $0x38] sm:$0xff]
        %v325 = vld [vmem:[%s307 + $0x40] sm:$0xff]
        %v326 = vld [vmem:[%s307 + $0x48] sm:$0xff]
        %v327 = vld [vmem:[%s307 + $0x50] sm:$0xff]
        %v328 = vld [vmem:[%s307 + $0x58] sm:$0xff]
        %v329 = vld [vmem:[%s307 + $0x60] sm:$0xff]
        %v330 = vld [vmem:[%s307 + $0x68] sm:$0xff]
        %v331 = vld [vmem:[%s307 + $0x70] sm:$0xff]
        %v332 = vld [vmem:[%s307 + $0x78] sm:$0xff]
        %v333 = vld [vmem:[%s307 + $0x80] sm:$0xff]
        %v334 = vld [vmem:[%s307 + $0x88] sm:$0xff]
        %v335 = vld [vmem:[%s307 + $0x90] sm:$0xff]
        %v336 = vld [vmem:[%s307 + $0x98] sm:$0xff]
        %v337 = vld [vmem:[%s307 + $0xa0] sm:$0xff]
        %v338 = vld [vmem:[%s307 + $0xa8] sm:$0xff]
        %v339 = vld [vmem:[%s307 + $0xb0] sm:$0xff]
        %v340 = vld [vmem:[%s307 + $0xb8] sm:$0xff]
        %v341 = vld [vmem:[%s307 + $0xc0] sm:$0xff]
        %v342 = vld [vmem:[%s307 + $0xc8] sm:$0xff]
        %v343 = vld [vmem:[%s307 + $0xd0] sm:$0xff]
        %v344 = vld [vmem:[%s307 + $0xd8] sm:$0xff]
        %v345 = vld [vmem:[%s307 + $0xe0] sm:$0xff]
        %v346 = vld [vmem:[%s307 + $0xe8] sm:$0xff]
        %v347 = vld [vmem:[%s307 + $0xf0] sm:$0xff]
        %v348 = vld [vmem:[%s307 + $0xf8] sm:$0xff]
        %v349 = vld [vmem:[%s2] sm:$0xff]
        %v350 = vld [vmem:[%s2 + $0x8] sm:$0xff]
        %v351 = vld [vmem:[%s3] sm:$0x1]
        %v353 = vlaneseq
        %v354 = vshrl.u32 %v353, 7
        %v355 = vsub.s32 0, %v354
        %v356 = vrot.slane %v351, %v355
        %vm358 = vcmask 130048
        %v360 = vsel %vm358, %v317, 0
        %v363 = vsel %vm358, %v318, 0
        %v366 = vsel %vm358, %v319, 0
        %v369 = vsel %vm358, %v320, 0
        %v372 = vsel %vm358, %v321, 0
        %v375 = vsel %vm358, %v322, 0
        %v378 = vsel %vm358, %v323, 0
        %v381 = vsel %vm358, %v324, 0
        %v384 = vsel %vm358, %v325, 0
        %v387 = vsel %vm358, %v326, 0
        %v390 = vsel %vm358, %v327, 0
        %v393 = vsel %vm358, %v328, 0
        %v396 = vsel %vm358, %v329, 0
        %v399 = vsel %vm358, %v330, 0
        %v402 = vsel %vm358, %v331, 0
        %v405 = vsel %vm358, %v332, 0
        %v408 = vsel %vm358, %v333, 0
        %v411 = vsel %vm358, %v334, 0
        %v414 = vsel %vm358, %v335, 0
        %v417 = vsel %vm358, %v336, 0
        %v420 = vsel %vm358, %v337, 0
        %v423 = vsel %vm358, %v338, 0
        %v426 = vsel %vm358, %v339, 0
        %v429 = vsel %vm358, %v340, 0
        %v432 = vsel %vm358, %v341, 0
        %v435 = vsel %vm358, %v342, 0
        %v438 = vsel %vm358, %v343, 0
        %v441 = vsel %vm358, %v344, 0
        %v444 = vsel %vm358, %v345, 0
        %v447 = vsel %vm358, %v346, 0
        %v450 = vsel %vm358, %v347, 0
        %v453 = vsel %vm358, %v348, 0
        %455 = vmatprep.subr.mxu0 0.0
        %456 = vmatpush1.msra.mxu0 %v349
        %457 = vmatprep.subr.mxu0 0.0
        %458 = vmatpush1.msra.mxu0 %v350
        %459 = vmatprep.subr.mxu0 0.0
        %460 = vmatpush1.msra.mxu0 0.0
        %461 = vmatprep.subr.mxu0 0.0
        %462 = vmatpush1.msra.mxu0 0.0
        %463 = vmatprep.subr.mxu0 0.0
        %464 = vmatpush1.msra.mxu0 0.0
        %465 = vmatprep.subr.mxu0 0.0
        %466 = vmatpush1.msra.mxu0 0.0
        %467 = vmatprep.subr.mxu0 0.0
        %468 = vmatpush1.msra.mxu0 0.0
        %469 = vmatprep.subr.mxu0 0.0
        %470 = vmatpush1.msra.mxu0 0.0
        %471 = vmatprep.subr.mxu0 0.0
        %472 = vmatpush1.msra.mxu0 0.0
        %473 = vmatprep.subr.mxu0 0.0
        %474 = vmatpush1.msra.mxu0 0.0
        %475 = vmatprep.subr.mxu0 0.0
        %476 = vmatpush1.msra.mxu0 0.0
        %477 = vmatprep.subr.mxu0 0.0
        %478 = vmatpush1.msra.mxu0 0.0
        %479 = vmatprep.subr.mxu0 0.0
        %480 = vmatpush1.msra.mxu0 0.0
        %481 = vmatprep.subr.mxu0 0.0
        %482 = vmatpush1.msra.mxu0 0.0
        %483 = vmatprep.subr.mxu0 0.0
        %484 = vmatpush1.msra.mxu0 0.0
        %485 = vmatprep.subr.mxu0 0.0
        %486 = vmatpush1.msra.mxu0 0.0
        %487 = vmatprep.subr.mxu0 0.0
        %488 = vmatpush1.msra.mxu0 0.0
        %489 = vmatprep.subr.mxu0 0.0
        %490 = vmatpush1.msra.mxu0 0.0
        %491 = vmatprep.subr.mxu0 0.0
        %492 = vmatpush1.msra.mxu0 0.0
        %493 = vmatprep.subr.mxu0 0.0
        %494 = vmatpush1.msra.mxu0 0.0
        %495 = vmatprep.subr.mxu0 0.0
        %496 = vmatpush1.msra.mxu0 0.0
        %497 = vmatprep.subr.mxu0 0.0
        %498 = vmatpush1.msra.mxu0 0.0
        %499 = vmatprep.subr.mxu0 0.0
        %500 = vmatpush1.msra.mxu0 0.0
        %501 = vmatprep.subr.mxu0 0.0
        %502 = vmatpush1.msra.mxu0 0.0
        %503 = vmatprep.subr.mxu0 0.0
        %504 = vmatpush1.msra.mxu0 0.0
        %505 = vmatprep.subr.mxu0 0.0
        %506 = vmatpush1.msra.mxu0 0.0
        %507 = vmatprep.subr.mxu0 0.0
        %508 = vmatpush1.msra.mxu0 0.0
        %509 = vmatprep.subr.mxu0 0.0
        %510 = vmatpush1.msra.mxu0 0.0
        %511 = vmatprep.subr.mxu0 0.0
        %512 = vmatpush1.msra.mxu0 0.0
        %513 = vmatprep.subr.mxu0 0.0
        %514 = vmatpush1.msra.mxu0 0.0
        %515 = vmatprep.subr.mxu0 0.0
        %516 = vmatpush1.msra.mxu0 0.0
        %517 = vmatprep.subr.mxu0 0.0
        %518 = vmatpush1.msra.mxu0 0.0
        %519 = vmatprep.mubr.f32.mxu0 0.0
        %520 = vmatmul.mubr.f32.gmra.mrb[0].mxu0 %v360
        %v521 = vpop.f32.mrb[0].mxu0
        %v522 = vadd.f32 %v356, %v521
        %v523 = vpop.f32.mrb[0].mxu0
        %524 = vmatprep.mubr.f32.mxu0 0.0
        %525 = vmatmul.mubr.f32.gmra.mrb[0].mxu0 %v363
        %v526 = vpop.f32.mrb[0].mxu0
        %v527 = vadd.f32 %v356, %v526
        %v528 = vpop.f32.mrb[0].mxu0
        %529 = vmatprep.mubr.f32.mxu0 0.0
        %530 = vmatmul.mubr.f32.gmra.mrb[0].mxu0 %v366
        %v531 = vpop.f32.mrb[0].mxu0
        %v532 = vadd.f32 %v356, %v531
        %v533 = vpop.f32.mrb[0].mxu0
        %534 = vmatprep.mubr.f32.mxu0 0.0
        %535 = vmatmul.mubr.f32.gmra.mrb[0].mxu0 %v369
        %v536 = vpop.f32.mrb[0].mxu0
        %v537 = vadd.f32 %v356, %v536
        %v538 = vpop.f32.mrb[0].mxu0
        %539 = vmatprep.mubr.f32.mxu0 0.0
        %540 = vmatmul.mubr.f32.gmra.mrb[0].mxu0 %v372
        %v541 = vpop.f32.mrb[0].mxu0
        %v542 = vadd.f32 %v356, %v541
        %v543 = vpop.f32.mrb[0].mxu0
        %544 = vmatprep.mubr.f32.mxu0 0.0
        %545 = vmatmul.mubr.f32.gmra.mrb[0].mxu0 %v375
        %v546 = vpop.f32.mrb[0].mxu0
        %v547 = vadd.f32 %v356, %v546
        %v548 = vpop.f32.mrb[0].mxu0
        %549 = vmatprep.mubr.f32.mxu0 0.0
        %550 = vmatmul.mubr.f32.gmra.mrb[0].mxu0 %v378
        %v551 = vpop.f32.mrb[0].mxu0
        %v552 = vadd.f32 %v356, %v551
        %v553 = vpop.f32.mrb[0].mxu0
        %554 = vmatprep.mubr.f32.mxu0 0.0
        %555 = vmatmul.mubr.f32.gmra.mrb[0].mxu0 %v381
        %v556 = vpop.f32.mrb[0].mxu0
        %v557 = vadd.f32 %v356, %v556
        %v558 = vpop.f32.mrb[0].mxu0
        %559 = vmatprep.mubr.f32.mxu0 0.0
        %560 = vmatmul.mubr.f32.gmra.mrb[0].mxu0 %v384
        %v561 = vpop.f32.mrb[0].mxu0
        %v562 = vadd.f32 %v356, %v561
        %v563 = vpop.f32.mrb[0].mxu0
        %564 = vmatprep.mubr.f32.mxu0 0.0
        %565 = vmatmul.mubr.f32.gmra.mrb[0].mxu0 %v387
        %v566 = vpop.f32.mrb[0].mxu0
        %v567 = vadd.f32 %v356, %v566
        %v568 = vpop.f32.mrb[0].mxu0
        %569 = vmatprep.mubr.f32.mxu0 0.0
        %570 = vmatmul.mubr.f32.gmra.mrb[0].mxu0 %v390
        %v571 = vpop.f32.mrb[0].mxu0
        %v572 = vadd.f32 %v356, %v571
        %v573 = vpop.f32.mrb[0].mxu0
        %574 = vmatprep.mubr.f32.mxu0 0.0
        %575 = vmatmul.mubr.f32.gmra.mrb[0].mxu0 %v393
        %v576 = vpop.f32.mrb[0].mxu0
        %v577 = vadd.f32 %v356, %v576
        %v578 = vpop.f32.mrb[0].mxu0
        %579 = vmatprep.mubr.f32.mxu0 0.0
        %580 = vmatmul.mubr.f32.gmra.mrb[0].mxu0 %v396
        %v581 = vpop.f32.mrb[0].mxu0
        %v582 = vadd.f32 %v356, %v581
        %v583 = vpop.f32.mrb[0].mxu0
        %584 = vmatprep.mubr.f32.mxu0 0.0
        %585 = vmatmul.mubr.f32.gmra.mrb[0].mxu0 %v399
        %v586 = vpop.f32.mrb[0].mxu0
        %v587 = vadd.f32 %v356, %v586
        %v588 = vpop.f32.mrb[0].mxu0
        %589 = vmatprep.mubr.f32.mxu0 0.0
        %590 = vmatmul.mubr.f32.gmra.mrb[0].mxu0 %v402
        %v591 = vpop.f32.mrb[0].mxu0
        %v592 = vadd.f32 %v356, %v591
        %v593 = vpop.f32.mrb[0].mxu0
        %594 = vmatprep.mubr.f32.mxu0 0.0
        %595 = vmatmul.mubr.f32.gmra.mrb[0].mxu0 %v405
        %v596 = vpop.f32.mrb[0].mxu0
        %v597 = vadd.f32 %v356, %v596
        %v598 = vpop.f32.mrb[0].mxu0
        %599 = vmatprep.mubr.f32.mxu0 0.0
        %600 = vmatmul.mubr.f32.gmra.mrb[0].mxu0 %v408
        %v601 = vpop.f32.mrb[0].mxu0
        %v602 = vadd.f32 %v356, %v601
        %v603 = vpop.f32.mrb[0].mxu0
        %604 = vmatprep.mubr.f32.mxu0 0.0
        %605 = vmatmul.mubr.f32.gmra.mrb[0].mxu0 %v411
        %v606 = vpop.f32.mrb[0].mxu0
        %v607 = vadd.f32 %v356, %v606
        %v608 = vpop.f32.mrb[0].mxu0
        %609 = vmatprep.mubr.f32.mxu0 0.0
        %610 = vmatmul.mubr.f32.gmra.mrb[0].mxu0 %v414
        %v611 = vpop.f32.mrb[0].mxu0
        %v612 = vadd.f32 %v356, %v611
        %v613 = vpop.f32.mrb[0].mxu0
        %614 = vmatprep.mubr.f32.mxu0 0.0
        %615 = vmatmul.mubr.f32.gmra.mrb[0].mxu0 %v417
        %v616 = vpop.f32.mrb[0].mxu0
        %v617 = vadd.f32 %v356, %v616
        %v618 = vpop.f32.mrb[0].mxu0
        %619 = vmatprep.mubr.f32.mxu0 0.0
        %620 = vmatmul.mubr.f32.gmra.mrb[0].mxu0 %v420
        %v621 = vpop.f32.mrb[0].mxu0
        %v622 = vadd.f32 %v356, %v621
        %v623 = vpop.f32.mrb[0].mxu0
        %624 = vmatprep.mubr.f32.mxu0 0.0
        %625 = vmatmul.mubr.f32.gmra.mrb[0].mxu0 %v423
        %v626 = vpop.f32.mrb[0].mxu0
        %v627 = vadd.f32 %v356, %v626
        %v628 = vpop.f32.mrb[0].mxu0
        %629 = vmatprep.mubr.f32.mxu0 0.0
        %630 = vmatmul.mubr.f32.gmra.mrb[0].mxu0 %v426
        %v631 = vpop.f32.mrb[0].mxu0
        %v632 = vadd.f32 %v356, %v631
        %v633 = vpop.f32.mrb[0].mxu0
        %634 = vmatprep.mubr.f32.mxu0 0.0
        %635 = vmatmul.mubr.f32.gmra.mrb[0].mxu0 %v429
        %v636 = vpop.f32.mrb[0].mxu0
        %v637 = vadd.f32 %v356, %v636
        %v638 = vpop.f32.mrb[0].mxu0
        %639 = vmatprep.mubr.f32.mxu0 0.0
        %640 = vmatmul.mubr.f32.gmra.mrb[0].mxu0 %v432
        %v641 = vpop.f32.mrb[0].mxu0
        %v642 = vadd.f32 %v356, %v641
        %v643 = vpop.f32.mrb[0].mxu0
        %644 = vmatprep.mubr.f32.mxu0 0.0
        %645 = vmatmul.mubr.f32.gmra.mrb[0].mxu0 %v435
        %v646 = vpop.f32.mrb[0].mxu0
        %v647 = vadd.f32 %v356, %v646
        %v648 = vpop.f32.mrb[0].mxu0
        %649 = vmatprep.mubr.f32.mxu0 0.0
        %650 = vmatmul.mubr.f32.gmra.mrb[0].mxu0 %v438
        %v651 = vpop.f32.mrb[0].mxu0
        %v652 = vadd.f32 %v356, %v651
        %v653 = vpop.f32.mrb[0].mxu0
        %654 = vmatprep.mubr.f32.mxu0 0.0
        %655 = vmatmul.mubr.f32.gmra.mrb[0].mxu0 %v441
        %v656 = vpop.f32.mrb[0].mxu0
        %v657 = vadd.f32 %v356, %v656
        %v658 = vpop.f32.mrb[0].mxu0
        %659 = vmatprep.mubr.f32.mxu0 0.0
        %660 = vmatmul.mubr.f32.gmra.mrb[0].mxu0 %v444
        %v661 = vpop.f32.mrb[0].mxu0
        %v662 = vadd.f32 %v356, %v661
        %v663 = vpop.f32.mrb[0].mxu0
        %664 = vmatprep.mubr.f32.mxu0 0.0
        %665 = vmatmul.mubr.f32.gmra.mrb[0].mxu0 %v447
        %v666 = vpop.f32.mrb[0].mxu0
        %v667 = vadd.f32 %v356, %v666
        %v668 = vpop.f32.mrb[0].mxu0
        %669 = vmatprep.mubr.f32.mxu0 0.0
        %670 = vmatmul.mubr.f32.gmra.mrb[0].mxu0 %v450
        %v671 = vpop.f32.mrb[0].mxu0
        %v672 = vadd.f32 %v356, %v671
        %v673 = vpop.f32.mrb[0].mxu0
        %674 = vmatprep.mubr.f32.mxu0 0.0
        %675 = vmatmul.mubr.f32.gmra.mrb[0].mxu0 %v453
        %v676 = vpop.f32.mrb[0].mxu0
        %v677 = vadd.f32 %v356, %v676
        %v678 = vpop.f32.mrb[0].mxu0
        %679 = vdwg.mxu0
        %681 = vrot.lane.b32.xlu0 %v527, 96
        %v682 = vpop.permute.xlu0 %681
        %v684 = vsel %vm358, %v522, 0
        %v686 = vsel %vm358, %v682, 0
        %688 = vmatprep.subr.mxu0 0.0
        %689 = vmatpush1.xpose.msra.mxu0 %v686
        %690 = vmatprep.subr.mxu0 0.0
        %691 = vmatpush1.xpose.msra.mxu0 0.0
        %692 = vmatprep.subr.mxu0 0.0
        %693 = vmatpush1.xpose.msra.mxu0 0.0
        %694 = vmatprep.subr.mxu0 0.0
        %695 = vmatpush1.xpose.msra.mxu0 0.0
        %696 = vmatprep.subr.mxu0 0.0
        %697 = vmatpush1.xpose.msra.mxu0 0.0
        %698 = vmatprep.subr.mxu0 0.0
        %699 = vmatpush1.xpose.msra.mxu0 0.0
        %700 = vmatprep.subr.mxu0 0.0
        %701 = vmatpush1.xpose.msra.mxu0 0.0
        %702 = vmatprep.subr.mxu0 0.0
        %703 = vmatpush1.xpose.msra.mxu0 0.0
        %704 = vmatprep.subr.mxu0 0.0
        %705 = vmatpush1.xpose.msra.mxu0 0.0
        %706 = vmatprep.subr.mxu0 0.0
        %707 = vmatpush1.xpose.msra.mxu0 0.0
        %708 = vmatprep.subr.mxu0 0.0
        %709 = vmatpush1.xpose.msra.mxu0 0.0
        %710 = vmatprep.subr.mxu0 0.0
        %711 = vmatpush1.xpose.msra.mxu0 0.0
        %712 = vmatprep.subr.mxu0 0.0
        %713 = vmatpush1.xpose.msra.mxu0 0.0
        %714 = vmatprep.subr.mxu0 0.0
        %715 = vmatpush1.xpose.msra.mxu0 0.0
        %716 = vmatprep.subr.mxu0 0.0
        %717 = vmatpush1.xpose.msra.mxu0 0.0
        %718 = vmatprep.subr.mxu0 0.0
        %719 = vmatpush1.xpose.msra.mxu0 0.0
        %720 = vmatprep.subr.mxu0 0.0
        %721 = vmatpush1.xpose.msra.mxu0 0.0
        %722 = vmatprep.subr.mxu0 0.0
        %723 = vmatpush1.xpose.msra.mxu0 0.0
        %724 = vmatprep.subr.mxu0 0.0
        %725 = vmatpush1.xpose.msra.mxu0 0.0
        %726 = vmatprep.subr.mxu0 0.0
        %727 = vmatpush1.xpose.msra.mxu0 0.0
        %728 = vmatprep.subr.mxu0 0.0
        %729 = vmatpush1.xpose.msra.mxu0 0.0
        %730 = vmatprep.subr.mxu0 0.0
        %731 = vmatpush1.xpose.msra.mxu0 0.0
        %732 = vmatprep.subr.mxu0 0.0
        %733 = vmatpush1.xpose.msra.mxu0 0.0
        %734 = vmatprep.subr.mxu0 0.0
        %735 = vmatpush1.xpose.msra.mxu0 0.0
        %736 = vmatprep.subr.mxu0 0.0
        %737 = vmatpush1.xpose.msra.mxu0 0.0
        %738 = vmatprep.subr.mxu0 0.0
        %739 = vmatpush1.xpose.msra.mxu0 0.0
        %740 = vmatprep.subr.mxu0 0.0
        %741 = vmatpush1.xpose.msra.mxu0 0.0
        %742 = vmatprep.subr.mxu0 0.0
        %743 = vmatpush1.xpose.msra.mxu0 0.0
        %744 = vmatprep.subr.mxu0 0.0
        %745 = vmatpush1.xpose.msra.mxu0 0.0
        %746 = vmatprep.subr.mxu0 0.0
        %747 = vmatpush1.xpose.msra.mxu0 0.0
        %748 = vmatprep.subr.mxu0 0.0
        %749 = vmatpush1.xpose.msra.mxu0 0.0
        %750 = vmatprep.subr.mxu0 0.0
        %751 = vmatpush1.xpose.msra.mxu0 0.0
        %752 = vmatprep.mubr.f32.mxu0 0.0
        %753 = vmatmul.mubr.f32.gmra.mrb[0].mxu0 %v684
        %v754 = vpop.f32.mrb[0].mxu0
        %v755 = vadd.f32 0.0, %v754
        %v756 = vpop.f32.mrb[0].mxu0
        %757 = vdwg.mxu0
        %759 = vrot.lane.b32.xlu0 %v537, 96
        %v760 = vpop.permute.xlu0 %759
        %v762 = vsel %vm358, %v532, 0
        %v764 = vsel %vm358, %v760, 0
        %766 = vmatprep.subr.mxu0 0.0
        %767 = vmatpush1.xpose.msra.mxu0 %v764
        %768 = vmatprep.subr.mxu0 0.0
        %769 = vmatpush1.xpose.msra.mxu0 0.0
        %770 = vmatprep.subr.mxu0 0.0
        %771 = vmatpush1.xpose.msra.mxu0 0.0
        %772 = vmatprep.subr.mxu0 0.0
        %773 = vmatpush1.xpose.msra.mxu0 0.0
        %774 = vmatprep.subr.mxu0 0.0
        %775 = vmatpush1.xpose.msra.mxu0 0.0
        %776 = vmatprep.subr.mxu0 0.0
        %777 = vmatpush1.xpose.msra.mxu0 0.0
        %778 = vmatprep.subr.mxu0 0.0
        %779 = vmatpush1.xpose.msra.mxu0 0.0
        %780 = vmatprep.subr.mxu0 0.0
        %781 = vmatpush1.xpose.msra.mxu0 0.0
        %782 = vmatprep.subr.mxu0 0.0
        %783 = vmatpush1.xpose.msra.mxu0 0.0
        %784 = vmatprep.subr.mxu0 0.0
        %785 = vmatpush1.xpose.msra.mxu0 0.0
        %786 = vmatprep.subr.mxu0 0.0
        %787 = vmatpush1.xpose.msra.mxu0 0.0
        %788 = vmatprep.subr.mxu0 0.0
        %789 = vmatpush1.xpose.msra.mxu0 0.0
        %790 = vmatprep.subr.mxu0 0.0
        %791 = vmatpush1.xpose.msra.mxu0 0.0
        %792 = vmatprep.subr.mxu0 0.0
        %793 = vmatpush1.xpose.msra.mxu0 0.0
        %794 = vmatprep.subr.mxu0 0.0
        %795 = vmatpush1.xpose.msra.mxu0 0.0
        %796 = vmatprep.subr.mxu0 0.0
        %797 = vmatpush1.xpose.msra.mxu0 0.0
        %798 = vmatprep.subr.mxu0 0.0
        %799 = vmatpush1.xpose.msra.mxu0 0.0
        %800 = vmatprep.subr.mxu0 0.0
        %801 = vmatpush1.xpose.msra.mxu0 0.0
        %802 = vmatprep.subr.mxu0 0.0
        %803 = vmatpush1.xpose.msra.mxu0 0.0
        %804 = vmatprep.subr.mxu0 0.0
        %805 = vmatpush1.xpose.msra.mxu0 0.0
        %806 = vmatprep.subr.mxu0 0.0
        %807 = vmatpush1.xpose.msra.mxu0 0.0
        %808 = vmatprep.subr.mxu0 0.0
        %809 = vmatpush1.xpose.msra.mxu0 0.0
        %810 = vmatprep.subr.mxu0 0.0
        %811 = vmatpush1.xpose.msra.mxu0 0.0
        %812 = vmatprep.subr.mxu0 0.0
        %813 = vmatpush1.xpose.msra.mxu0 0.0
        %814 = vmatprep.subr.mxu0 0.0
        %815 = vmatpush1.xpose.msra.mxu0 0.0
        %816 = vmatprep.subr.mxu0 0.0
        %817 = vmatpush1.xpose.msra.mxu0 0.0
        %818 = vmatprep.subr.mxu0 0.0
        %819 = vmatpush1.xpose.msra.mxu0 0.0
        %820 = vmatprep.subr.mxu0 0.0
        %821 = vmatpush1.xpose.msra.mxu0 0.0
        %822 = vmatprep.subr.mxu0 0.0
        %823 = vmatpush1.xpose.msra.mxu0 0.0
        %824 = vmatprep.subr.mxu0 0.0
        %825 = vmatpush1.xpose.msra.mxu0 0.0
        %826 = vmatprep.subr.mxu0 0.0
        %827 = vmatpush1.xpose.msra.mxu0 0.0
        %828 = vmatprep.subr.mxu0 0.0
        %829 = vmatpush1.xpose.msra.mxu0 0.0
        %830 = vmatprep.mubr.f32.mxu0 0.0
        %831 = vmatmul.mubr.f32.gmra.mrb[0].mxu0 %v762
        %v832 = vpop.f32.mrb[0].mxu0
        %v833 = vadd.f32 0.0, %v832
        %v834 = vpop.f32.mrb[0].mxu0
        %835 = vdwg.mxu0
        %837 = vrot.lane.b32.xlu0 %v547, 96
        %v838 = vpop.permute.xlu0 %837
        %v840 = vsel %vm358, %v542, 0
        %v842 = vsel %vm358, %v838, 0
        %844 = vmatprep.subr.mxu0 0.0
        %845 = vmatpush1.xpose.msra.mxu0 %v842
        %846 = vmatprep.subr.mxu0 0.0
        %847 = vmatpush1.xpose.msra.mxu0 0.0
        %848 = vmatprep.subr.mxu0 0.0
        %849 = vmatpush1.xpose.msra.mxu0 0.0
        %850 = vmatprep.subr.mxu0 0.0
        %851 = vmatpush1.xpose.msra.mxu0 0.0
        %852 = vmatprep.subr.mxu0 0.0
        %853 = vmatpush1.xpose.msra.mxu0 0.0
        %854 = vmatprep.subr.mxu0 0.0
        %855 = vmatpush1.xpose.msra.mxu0 0.0
        %856 = vmatprep.subr.mxu0 0.0
        %857 = vmatpush1.xpose.msra.mxu0 0.0
        %858 = vmatprep.subr.mxu0 0.0
        %859 = vmatpush1.xpose.msra.mxu0 0.0
        %860 = vmatprep.subr.mxu0 0.0
        %861 = vmatpush1.xpose.msra.mxu0 0.0
        %862 = vmatprep.subr.mxu0 0.0
        %863 = vmatpush1.xpose.msra.mxu0 0.0
        %864 = vmatprep.subr.mxu0 0.0
        %865 = vmatpush1.xpose.msra.mxu0 0.0
        %866 = vmatprep.subr.mxu0 0.0
        %867 = vmatpush1.xpose.msra.mxu0 0.0
        %868 = vmatprep.subr.mxu0 0.0
        %869 = vmatpush1.xpose.msra.mxu0 0.0
        %870 = vmatprep.subr.mxu0 0.0
        %871 = vmatpush1.xpose.msra.mxu0 0.0
        %872 = vmatprep.subr.mxu0 0.0
        %873 = vmatpush1.xpose.msra.mxu0 0.0
        %874 = vmatprep.subr.mxu0 0.0
        %875 = vmatpush1.xpose.msra.mxu0 0.0
        %876 = vmatprep.subr.mxu0 0.0
        %877 = vmatpush1.xpose.msra.mxu0 0.0
        %878 = vmatprep.subr.mxu0 0.0
        %879 = vmatpush1.xpose.msra.mxu0 0.0
        %880 = vmatprep.subr.mxu0 0.0
        %881 = vmatpush1.xpose.msra.mxu0 0.0
        %882 = vmatprep.subr.mxu0 0.0
        %883 = vmatpush1.xpose.msra.mxu0 0.0
        %884 = vmatprep.subr.mxu0 0.0
        %885 = vmatpush1.xpose.msra.mxu0 0.0
        %886 = vmatprep.subr.mxu0 0.0
        %887 = vmatpush1.xpose.msra.mxu0 0.0
        %888 = vmatprep.subr.mxu0 0.0
        %889 = vmatpush1.xpose.msra.mxu0 0.0
        %890 = vmatprep.subr.mxu0 0.0
        %891 = vmatpush1.xpose.msra.mxu0 0.0
        %892 = vmatprep.subr.mxu0 0.0
        %893 = vmatpush1.xpose.msra.mxu0 0.0
        %894 = vmatprep.subr.mxu0 0.0
        %895 = vmatpush1.xpose.msra.mxu0 0.0
        %896 = vmatprep.subr.mxu0 0.0
        %897 = vmatpush1.xpose.msra.mxu0 0.0
        %898 = vmatprep.subr.mxu0 0.0
        %899 = vmatpush1.xpose.msra.mxu0 0.0
        %900 = vmatprep.subr.mxu0 0.0
        %901 = vmatpush1.xpose.msra.mxu0 0.0
        %902 = vmatprep.subr.mxu0 0.0
        %903 = vmatpush1.xpose.msra.mxu0 0.0
        %904 = vmatprep.subr.mxu0 0.0
        %905 = vmatpush1.xpose.msra.mxu0 0.0
        %906 = vmatprep.subr.mxu0 0.0
        %907 = vmatpush1.xpose.msra.mxu0 0.0
        %908 = vmatprep.mubr.f32.mxu0 0.0
        %909 = vmatmul.mubr.f32.gmra.mrb[0].mxu0 %v840
        %v910 = vpop.f32.mrb[0].mxu0
        %v911 = vadd.f32 0.0, %v910
        %v912 = vpop.f32.mrb[0].mxu0
        %913 = vdwg.mxu0
        %915 = vrot.lane.b32.xlu0 %v557, 96
        %v916 = vpop.permute.xlu0 %915
        %v918 = vsel %vm358, %v552, 0
        %v920 = vsel %vm358, %v916, 0
        %922 = vmatprep.subr.mxu0 0.0
        %923 = vmatpush1.xpose.msra.mxu0 %v920
        %924 = vmatprep.subr.mxu0 0.0
        %925 = vmatpush1.xpose.msra.mxu0 0.0
        %926 = vmatprep.subr.mxu0 0.0
        %927 = vmatpush1.xpose.msra.mxu0 0.0
        %928 = vmatprep.subr.mxu0 0.0
        %929 = vmatpush1.xpose.msra.mxu0 0.0
        %930 = vmatprep.subr.mxu0 0.0
        %931 = vmatpush1.xpose.msra.mxu0 0.0
        %932 = vmatprep.subr.mxu0 0.0
        %933 = vmatpush1.xpose.msra.mxu0 0.0
        %934 = vmatprep.subr.mxu0 0.0
        %935 = vmatpush1.xpose.msra.mxu0 0.0
        %936 = vmatprep.subr.mxu0 0.0
        %937 = vmatpush1.xpose.msra.mxu0 0.0
        %938 = vmatprep.subr.mxu0 0.0
        %939 = vmatpush1.xpose.msra.mxu0 0.0
        %940 = vmatprep.subr.mxu0 0.0
        %941 = vmatpush1.xpose.msra.mxu0 0.0
        %942 = vmatprep.subr.mxu0 0.0
        %943 = vmatpush1.xpose.msra.mxu0 0.0
        %944 = vmatprep.subr.mxu0 0.0
        %945 = vmatpush1.xpose.msra.mxu0 0.0
        %946 = vmatprep.subr.mxu0 0.0
        %947 = vmatpush1.xpose.msra.mxu0 0.0
        %948 = vmatprep.subr.mxu0 0.0
        %949 = vmatpush1.xpose.msra.mxu0 0.0
        %950 = vmatprep.subr.mxu0 0.0
        %951 = vmatpush1.xpose.msra.mxu0 0.0
        %952 = vmatprep.subr.mxu0 0.0
        %953 = vmatpush1.xpose.msra.mxu0 0.0
        %954 = vmatprep.subr.mxu0 0.0
        %955 = vmatpush1.xpose.msra.mxu0 0.0
        %956 = vmatprep.subr.mxu0 0.0
        %957 = vmatpush1.xpose.msra.mxu0 0.0
        %958 = vmatprep.subr.mxu0 0.0
        %959 = vmatpush1.xpose.msra.mxu0 0.0
        %960 = vmatprep.subr.mxu0 0.0
        %961 = vmatpush1.xpose.msra.mxu0 0.0
        %962 = vmatprep.subr.mxu0 0.0
        %963 = vmatpush1.xpose.msra.mxu0 0.0
        %964 = vmatprep.subr.mxu0 0.0
        %965 = vmatpush1.xpose.msra.mxu0 0.0
        %966 = vmatprep.subr.mxu0 0.0
        %967 = vmatpush1.xpose.msra.mxu0 0.0
        %968 = vmatprep.subr.mxu0 0.0
        %969 = vmatpush1.xpose.msra.mxu0 0.0
        %970 = vmatprep.subr.mxu0 0.0
        %971 = vmatpush1.xpose.msra.mxu0 0.0
        %972 = vmatprep.subr.mxu0 0.0
        %973 = vmatpush1.xpose.msra.mxu0 0.0
        %974 = vmatprep.subr.mxu0 0.0
        %975 = vmatpush1.xpose.msra.mxu0 0.0
        %976 = vmatprep.subr.mxu0 0.0
        %977 = vmatpush1.xpose.msra.mxu0 0.0
        %978 = vmatprep.subr.mxu0 0.0
        %979 = vmatpush1.xpose.msra.mxu0 0.0
        %980 = vmatprep.subr.mxu0 0.0
        %981 = vmatpush1.xpose.msra.mxu0 0.0
        %982 = vmatprep.subr.mxu0 0.0
        %983 = vmatpush1.xpose.msra.mxu0 0.0
        %984 = vmatprep.subr.mxu0 0.0
        %985 = vmatpush1.xpose.msra.mxu0 0.0
        %986 = vmatprep.mubr.f32.mxu0 0.0
        %987 = vmatmul.mubr.f32.gmra.mrb[0].mxu0 %v918
        %v988 = vpop.f32.mrb[0].mxu0
        %v989 = vadd.f32 0.0, %v988
        %v990 = vpop.f32.mrb[0].mxu0
        %991 = vdwg.mxu0
        %993 = vrot.lane.b32.xlu0 %v567, 96
        %v994 = vpop.permute.xlu0 %993
        %v996 = vsel %vm358, %v562, 0
        %v998 = vsel %vm358, %v994, 0
        %1000 = vmatprep.subr.mxu0 0.0
        %1001 = vmatpush1.xpose.msra.mxu0 %v998
        %1002 = vmatprep.subr.mxu0 0.0
        %1003 = vmatpush1.xpose.msra.mxu0 0.0
        %1004 = vmatprep.subr.mxu0 0.0
        %1005 = vmatpush1.xpose.msra.mxu0 0.0
        %1006 = vmatprep.subr.mxu0 0.0
        %1007 = vmatpush1.xpose.msra.mxu0 0.0
        %1008 = vmatprep.subr.mxu0 0.0
        %1009 = vmatpush1.xpose.msra.mxu0 0.0
        %1010 = vmatprep.subr.mxu0 0.0
        %1011 = vmatpush1.xpose.msra.mxu0 0.0
        %1012 = vmatprep.subr.mxu0 0.0
        %1013 = vmatpush1.xpose.msra.mxu0 0.0
        %1014 = vmatprep.subr.mxu0 0.0
        %1015 = vmatpush1.xpose.msra.mxu0 0.0
        %1016 = vmatprep.subr.mxu0 0.0
        %1017 = vmatpush1.xpose.msra.mxu0 0.0
        %1018 = vmatprep.subr.mxu0 0.0
        %1019 = vmatpush1.xpose.msra.mxu0 0.0
        %1020 = vmatprep.subr.mxu0 0.0
        %1021 = vmatpush1.xpose.msra.mxu0 0.0
        %1022 = vmatprep.subr.mxu0 0.0
        %1023 = vmatpush1.xpose.msra.mxu0 0.0
        %1024 = vmatprep.subr.mxu0 0.0
        %1025 = vmatpush1.xpose.msra.mxu0 0.0
        %1026 = vmatprep.subr.mxu0 0.0
        %1027 = vmatpush1.xpose.msra.mxu0 0.0
        %1028 = vmatprep.subr.mxu0 0.0
        %1029 = vmatpush1.xpose.msra.mxu0 0.0
        %1030 = vmatprep.subr.mxu0 0.0
        %1031 = vmatpush1.xpose.msra.mxu0 0.0
        %1032 = vmatprep.subr.mxu0 0.0
        %1033 = vmatpush1.xpose.msra.mxu0 0.0
        %1034 = vmatprep.subr.mxu0 0.0
        %1035 = vmatpush1.xpose.msra.mxu0 0.0
        %1036 = vmatprep.subr.mxu0 0.0
        %1037 = vmatpush1.xpose.msra.mxu0 0.0
        %1038 = vmatprep.subr.mxu0 0.0
        %1039 = vmatpush1.xpose.msra.mxu0 0.0
        %1040 = vmatprep.subr.mxu0 0.0
        %1041 = vmatpush1.xpose.msra.mxu0 0.0
        %1042 = vmatprep.subr.mxu0 0.0
        %1043 = vmatpush1.xpose.msra.mxu0 0.0
        %1044 = vmatprep.subr.mxu0 0.0
        %1045 = vmatpush1.xpose.msra.mxu0 0.0
        %1046 = vmatprep.subr.mxu0 0.0
        %1047 = vmatpush1.xpose.msra.mxu0 0.0
        %1048 = vmatprep.subr.mxu0 0.0
        %1049 = vmatpush1.xpose.msra.mxu0 0.0
        %1050 = vmatprep.subr.mxu0 0.0
        %1051 = vmatpush1.xpose.msra.mxu0 0.0
        %1052 = vmatprep.subr.mxu0 0.0
        %1053 = vmatpush1.xpose.msra.mxu0 0.0
        %1054 = vmatprep.subr.mxu0 0.0
        %1055 = vmatpush1.xpose.msra.mxu0 0.0
        %1056 = vmatprep.subr.mxu0 0.0
        %1057 = vmatpush1.xpose.msra.mxu0 0.0
        %1058 = vmatprep.subr.mxu0 0.0
        %1059 = vmatpush1.xpose.msra.mxu0 0.0
        %1060 = vmatprep.subr.mxu0 0.0
        %1061 = vmatpush1.xpose.msra.mxu0 0.0
        %1062 = vmatprep.subr.mxu0 0.0
        %1063 = vmatpush1.xpose.msra.mxu0 0.0
        %1064 = vmatprep.mubr.f32.mxu0 0.0
        %1065 = vmatmul.mubr.f32.gmra.mrb[0].mxu0 %v996
        %v1066 = vpop.f32.mrb[0].mxu0
        %v1067 = vadd.f32 0.0, %v1066
        %v1068 = vpop.f32.mrb[0].mxu0
        %1069 = vdwg.mxu0
        %1071 = vrot.lane.b32.xlu0 %v577, 96
        %v1072 = vpop.permute.xlu0 %1071
        %v1074 = vsel %vm358, %v572, 0
        %v1076 = vsel %vm358, %v1072, 0
        %1078 = vmatprep.subr.mxu0 0.0
        %1079 = vmatpush1.xpose.msra.mxu0 %v1076
        %1080 = vmatprep.subr.mxu0 0.0
        %1081 = vmatpush1.xpose.msra.mxu0 0.0
        %1082 = vmatprep.subr.mxu0 0.0
        %1083 = vmatpush1.xpose.msra.mxu0 0.0
        %1084 = vmatprep.subr.mxu0 0.0
        %1085 = vmatpush1.xpose.msra.mxu0 0.0
        %1086 = vmatprep.subr.mxu0 0.0
        %1087 = vmatpush1.xpose.msra.mxu0 0.0
        %1088 = vmatprep.subr.mxu0 0.0
        %1089 = vmatpush1.xpose.msra.mxu0 0.0
        %1090 = vmatprep.subr.mxu0 0.0
        %1091 = vmatpush1.xpose.msra.mxu0 0.0
        %1092 = vmatprep.subr.mxu0 0.0
        %1093 = vmatpush1.xpose.msra.mxu0 0.0
        %1094 = vmatprep.subr.mxu0 0.0
        %1095 = vmatpush1.xpose.msra.mxu0 0.0
        %1096 = vmatprep.subr.mxu0 0.0
        %1097 = vmatpush1.xpose.msra.mxu0 0.0
        %1098 = vmatprep.subr.mxu0 0.0
        %1099 = vmatpush1.xpose.msra.mxu0 0.0
        %1100 = vmatprep.subr.mxu0 0.0
        %1101 = vmatpush1.xpose.msra.mxu0 0.0
        %1102 = vmatprep.subr.mxu0 0.0
        %1103 = vmatpush1.xpose.msra.mxu0 0.0
        %1104 = vmatprep.subr.mxu0 0.0
        %1105 = vmatpush1.xpose.msra.mxu0 0.0
        %1106 = vmatprep.subr.mxu0 0.0
        %1107 = vmatpush1.xpose.msra.mxu0 0.0
        %1108 = vmatprep.subr.mxu0 0.0
        %1109 = vmatpush1.xpose.msra.mxu0 0.0
        %1110 = vmatprep.subr.mxu0 0.0
        %1111 = vmatpush1.xpose.msra.mxu0 0.0
        %1112 = vmatprep.subr.mxu0 0.0
        %1113 = vmatpush1.xpose.msra.mxu0 0.0
        %1114 = vmatprep.subr.mxu0 0.0
        %1115 = vmatpush1.xpose.msra.mxu0 0.0
        %1116 = vmatprep.subr.mxu0 0.0
        %1117 = vmatpush1.xpose.msra.mxu0 0.0
        %1118 = vmatprep.subr.mxu0 0.0
        %1119 = vmatpush1.xpose.msra.mxu0 0.0
        %1120 = vmatprep.subr.mxu0 0.0
        %1121 = vmatpush1.xpose.msra.mxu0 0.0
        %1122 = vmatprep.subr.mxu0 0.0
        %1123 = vmatpush1.xpose.msra.mxu0 0.0
        %1124 = vmatprep.subr.mxu0 0.0
        %1125 = vmatpush1.xpose.msra.mxu0 0.0
        %1126 = vmatprep.subr.mxu0 0.0
        %1127 = vmatpush1.xpose.msra.mxu0 0.0
        %1128 = vmatprep.subr.mxu0 0.0
        %1129 = vmatpush1.xpose.msra.mxu0 0.0
        %1130 = vmatprep.subr.mxu0 0.0
        %1131 = vmatpush1.xpose.msra.mxu0 0.0
        %1132 = vmatprep.subr.mxu0 0.0
        %1133 = vmatpush1.xpose.msra.mxu0 0.0
        %1134 = vmatprep.subr.mxu0 0.0
        %1135 = vmatpush1.xpose.msra.mxu0 0.0
        %1136 = vmatprep.subr.mxu0 0.0
        %1137 = vmatpush1.xpose.msra.mxu0 0.0
        %1138 = vmatprep.subr.mxu0 0.0
        %1139 = vmatpush1.xpose.msra.mxu0 0.0
        %1140 = vmatprep.subr.mxu0 0.0
        %1141 = vmatpush1.xpose.msra.mxu0 0.0
        %1142 = vmatprep.mubr.f32.mxu0 0.0
        %1143 = vmatmul.mubr.f32.gmra.mrb[0].mxu0 %v1074
        %v1144 = vpop.f32.mrb[0].mxu0
        %v1145 = vadd.f32 0.0, %v1144
        %v1146 = vpop.f32.mrb[0].mxu0
        %1147 = vdwg.mxu0
        %1149 = vrot.lane.b32.xlu0 %v587, 96
        %v1150 = vpop.permute.xlu0 %1149
        %v1152 = vsel %vm358, %v582, 0
        %v1154 = vsel %vm358, %v1150, 0
        %1156 = vmatprep.subr.mxu0 0.0
        %1157 = vmatpush1.xpose.msra.mxu0 %v1154
        %1158 = vmatprep.subr.mxu0 0.0
        %1159 = vmatpush1.xpose.msra.mxu0 0.0
        %1160 = vmatprep.subr.mxu0 0.0
        %1161 = vmatpush1.xpose.msra.mxu0 0.0
        %1162 = vmatprep.subr.mxu0 0.0
        %1163 = vmatpush1.xpose.msra.mxu0 0.0
        %1164 = vmatprep.subr.mxu0 0.0
        %1165 = vmatpush1.xpose.msra.mxu0 0.0
        %1166 = vmatprep.subr.mxu0 0.0
        %1167 = vmatpush1.xpose.msra.mxu0 0.0
        %1168 = vmatprep.subr.mxu0 0.0
        %1169 = vmatpush1.xpose.msra.mxu0 0.0
        %1170 = vmatprep.subr.mxu0 0.0
        %1171 = vmatpush1.xpose.msra.mxu0 0.0
        %1172 = vmatprep.subr.mxu0 0.0
        %1173 = vmatpush1.xpose.msra.mxu0 0.0
        %1174 = vmatprep.subr.mxu0 0.0
        %1175 = vmatpush1.xpose.msra.mxu0 0.0
        %1176 = vmatprep.subr.mxu0 0.0
        %1177 = vmatpush1.xpose.msra.mxu0 0.0
        %1178 = vmatprep.subr.mxu0 0.0
        %1179 = vmatpush1.xpose.msra.mxu0 0.0
        %1180 = vmatprep.subr.mxu0 0.0
        %1181 = vmatpush1.xpose.msra.mxu0 0.0
        %1182 = vmatprep.subr.mxu0 0.0
        %1183 = vmatpush1.xpose.msra.mxu0 0.0
        %1184 = vmatprep.subr.mxu0 0.0
        %1185 = vmatpush1.xpose.msra.mxu0 0.0
        %1186 = vmatprep.subr.mxu0 0.0
        %1187 = vmatpush1.xpose.msra.mxu0 0.0
        %1188 = vmatprep.subr.mxu0 0.0
        %1189 = vmatpush1.xpose.msra.mxu0 0.0
        %1190 = vmatprep.subr.mxu0 0.0
        %1191 = vmatpush1.xpose.msra.mxu0 0.0
        %1192 = vmatprep.subr.mxu0 0.0
        %1193 = vmatpush1.xpose.msra.mxu0 0.0
        %1194 = vmatprep.subr.mxu0 0.0
        %1195 = vmatpush1.xpose.msra.mxu0 0.0
        %1196 = vmatprep.subr.mxu0 0.0
        %1197 = vmatpush1.xpose.msra.mxu0 0.0
        %1198 = vmatprep.subr.mxu0 0.0
        %1199 = vmatpush1.xpose.msra.mxu0 0.0
        %1200 = vmatprep.subr.mxu0 0.0
        %1201 = vmatpush1.xpose.msra.mxu0 0.0
        %1202 = vmatprep.subr.mxu0 0.0
        %1203 = vmatpush1.xpose.msra.mxu0 0.0
        %1204 = vmatprep.subr.mxu0 0.0
        %1205 = vmatpush1.xpose.msra.mxu0 0.0
        %1206 = vmatprep.subr.mxu0 0.0
        %1207 = vmatpush1.xpose.msra.mxu0 0.0
        %1208 = vmatprep.subr.mxu0 0.0
        %1209 = vmatpush1.xpose.msra.mxu0 0.0
        %1210 = vmatprep.subr.mxu0 0.0
        %1211 = vmatpush1.xpose.msra.mxu0 0.0
        %1212 = vmatprep.subr.mxu0 0.0
        %1213 = vmatpush1.xpose.msra.mxu0 0.0
        %1214 = vmatprep.subr.mxu0 0.0
        %1215 = vmatpush1.xpose.msra.mxu0 0.0
        %1216 = vmatprep.subr.mxu0 0.0
        %1217 = vmatpush1.xpose.msra.mxu0 0.0
        %1218 = vmatprep.subr.mxu0 0.0
        %1219 = vmatpush1.xpose.msra.mxu0 0.0
        %1220 = vmatprep.mubr.f32.mxu0 0.0
        %1221 = vmatmul.mubr.f32.gmra.mrb[0].mxu0 %v1152
        %v1222 = vpop.f32.mrb[0].mxu0
        %v1223 = vadd.f32 0.0, %v1222
        %v1224 = vpop.f32.mrb[0].mxu0
        %1225 = vdwg.mxu0
        %1227 = vrot.lane.b32.xlu0 %v597, 96
        %v1228 = vpop.permute.xlu0 %1227
        %v1230 = vsel %vm358, %v592, 0
        %v1232 = vsel %vm358, %v1228, 0
        %1234 = vmatprep.subr.mxu0 0.0
        %1235 = vmatpush1.xpose.msra.mxu0 %v1232
        %1236 = vmatprep.subr.mxu0 0.0
        %1237 = vmatpush1.xpose.msra.mxu0 0.0
        %1238 = vmatprep.subr.mxu0 0.0
        %1239 = vmatpush1.xpose.msra.mxu0 0.0
        %1240 = vmatprep.subr.mxu0 0.0
        %1241 = vmatpush1.xpose.msra.mxu0 0.0
        %1242 = vmatprep.subr.mxu0 0.0
        %1243 = vmatpush1.xpose.msra.mxu0 0.0
        %1244 = vmatprep.subr.mxu0 0.0
        %1245 = vmatpush1.xpose.msra.mxu0 0.0
        %1246 = vmatprep.subr.mxu0 0.0
        %1247 = vmatpush1.xpose.msra.mxu0 0.0
        %1248 = vmatprep.subr.mxu0 0.0
        %1249 = vmatpush1.xpose.msra.mxu0 0.0
        %1250 = vmatprep.subr.mxu0 0.0
        %1251 = vmatpush1.xpose.msra.mxu0 0.0
        %1252 = vmatprep.subr.mxu0 0.0
        %1253 = vmatpush1.xpose.msra.mxu0 0.0
        %1254 = vmatprep.subr.mxu0 0.0
        %1255 = vmatpush1.xpose.msra.mxu0 0.0
        %1256 = vmatprep.subr.mxu0 0.0
        %1257 = vmatpush1.xpose.msra.mxu0 0.0
        %1258 = vmatprep.subr.mxu0 0.0
        %1259 = vmatpush1.xpose.msra.mxu0 0.0
        %1260 = vmatprep.subr.mxu0 0.0
        %1261 = vmatpush1.xpose.msra.mxu0 0.0
        %1262 = vmatprep.subr.mxu0 0.0
        %1263 = vmatpush1.xpose.msra.mxu0 0.0
        %1264 = vmatprep.subr.mxu0 0.0
        %1265 = vmatpush1.xpose.msra.mxu0 0.0
        %1266 = vmatprep.subr.mxu0 0.0
        %1267 = vmatpush1.xpose.msra.mxu0 0.0
        %1268 = vmatprep.subr.mxu0 0.0
        %1269 = vmatpush1.xpose.msra.mxu0 0.0
        %1270 = vmatprep.subr.mxu0 0.0
        %1271 = vmatpush1.xpose.msra.mxu0 0.0
        %1272 = vmatprep.subr.mxu0 0.0
        %1273 = vmatpush1.xpose.msra.mxu0 0.0
        %1274 = vmatprep.subr.mxu0 0.0
        %1275 = vmatpush1.xpose.msra.mxu0 0.0
        %1276 = vmatprep.subr.mxu0 0.0
        %1277 = vmatpush1.xpose.msra.mxu0 0.0
        %1278 = vmatprep.subr.mxu0 0.0
        %1279 = vmatpush1.xpose.msra.mxu0 0.0
        %1280 = vmatprep.subr.mxu0 0.0
        %1281 = vmatpush1.xpose.msra.mxu0 0.0
        %1282 = vmatprep.subr.mxu0 0.0
        %1283 = vmatpush1.xpose.msra.mxu0 0.0
        %1284 = vmatprep.subr.mxu0 0.0
        %1285 = vmatpush1.xpose.msra.mxu0 0.0
        %1286 = vmatprep.subr.mxu0 0.0
        %1287 = vmatpush1.xpose.msra.mxu0 0.0
        %1288 = vmatprep.subr.mxu0 0.0
        %1289 = vmatpush1.xpose.msra.mxu0 0.0
        %1290 = vmatprep.subr.mxu0 0.0
        %1291 = vmatpush1.xpose.msra.mxu0 0.0
        %1292 = vmatprep.subr.mxu0 0.0
        %1293 = vmatpush1.xpose.msra.mxu0 0.0
        %1294 = vmatprep.subr.mxu0 0.0
        %1295 = vmatpush1.xpose.msra.mxu0 0.0
        %1296 = vmatprep.subr.mxu0 0.0
        %1297 = vmatpush1.xpose.msra.mxu0 0.0
        %1298 = vmatprep.mubr.f32.mxu0 0.0
        %1299 = vmatmul.mubr.f32.gmra.mrb[0].mxu0 %v1230
        %v1300 = vpop.f32.mrb[0].mxu0
        %v1301 = vadd.f32 0.0, %v1300
        %v1302 = vpop.f32.mrb[0].mxu0
        %1303 = vdwg.mxu0
        %1305 = vrot.lane.b32.xlu0 %v607, 96
        %v1306 = vpop.permute.xlu0 %1305
        %v1308 = vsel %vm358, %v602, 0
        %v1310 = vsel %vm358, %v1306, 0
        %1312 = vmatprep.subr.mxu0 0.0
        %1313 = vmatpush1.xpose.msra.mxu0 %v1310
        %1314 = vmatprep.subr.mxu0 0.0
        %1315 = vmatpush1.xpose.msra.mxu0 0.0
        %1316 = vmatprep.subr.mxu0 0.0
        %1317 = vmatpush1.xpose.msra.mxu0 0.0
        %1318 = vmatprep.subr.mxu0 0.0
        %1319 = vmatpush1.xpose.msra.mxu0 0.0
        %1320 = vmatprep.subr.mxu0 0.0
        %1321 = vmatpush1.xpose.msra.mxu0 0.0
        %1322 = vmatprep.subr.mxu0 0.0
        %1323 = vmatpush1.xpose.msra.mxu0 0.0
        %1324 = vmatprep.subr.mxu0 0.0
        %1325 = vmatpush1.xpose.msra.mxu0 0.0
        %1326 = vmatprep.subr.mxu0 0.0
        %1327 = vmatpush1.xpose.msra.mxu0 0.0
        %1328 = vmatprep.subr.mxu0 0.0
        %1329 = vmatpush1.xpose.msra.mxu0 0.0
        %1330 = vmatprep.subr.mxu0 0.0
        %1331 = vmatpush1.xpose.msra.mxu0 0.0
        %1332 = vmatprep.subr.mxu0 0.0
        %1333 = vmatpush1.xpose.msra.mxu0 0.0
        %1334 = vmatprep.subr.mxu0 0.0
        %1335 = vmatpush1.xpose.msra.mxu0 0.0
        %1336 = vmatprep.subr.mxu0 0.0
        %1337 = vmatpush1.xpose.msra.mxu0 0.0
        %1338 = vmatprep.subr.mxu0 0.0
        %1339 = vmatpush1.xpose.msra.mxu0 0.0
        %1340 = vmatprep.subr.mxu0 0.0
        %1341 = vmatpush1.xpose.msra.mxu0 0.0
        %1342 = vmatprep.subr.mxu0 0.0
        %1343 = vmatpush1.xpose.msra.mxu0 0.0
        %1344 = vmatprep.subr.mxu0 0.0
        %1345 = vmatpush1.xpose.msra.mxu0 0.0
        %1346 = vmatprep.subr.mxu0 0.0
        %1347 = vmatpush1.xpose.msra.mxu0 0.0
        %1348 = vmatprep.subr.mxu0 0.0
        %1349 = vmatpush1.xpose.msra.mxu0 0.0
        %1350 = vmatprep.subr.mxu0 0.0
        %1351 = vmatpush1.xpose.msra.mxu0 0.0
        %1352 = vmatprep.subr.mxu0 0.0
        %1353 = vmatpush1.xpose.msra.mxu0 0.0
        %1354 = vmatprep.subr.mxu0 0.0
        %1355 = vmatpush1.xpose.msra.mxu0 0.0
        %1356 = vmatprep.subr.mxu0 0.0
        %1357 = vmatpush1.xpose.msra.mxu0 0.0
        %1358 = vmatprep.subr.mxu0 0.0
        %1359 = vmatpush1.xpose.msra.mxu0 0.0
        %1360 = vmatprep.subr.mxu0 0.0
        %1361 = vmatpush1.xpose.msra.mxu0 0.0
        %1362 = vmatprep.subr.mxu0 0.0
        %1363 = vmatpush1.xpose.msra.mxu0 0.0
        %1364 = vmatprep.subr.mxu0 0.0
        %1365 = vmatpush1.xpose.msra.mxu0 0.0
        %1366 = vmatprep.subr.mxu0 0.0
        %1367 = vmatpush1.xpose.msra.mxu0 0.0
        %1368 = vmatprep.subr.mxu0 0.0
        %1369 = vmatpush1.xpose.msra.mxu0 0.0
        %1370 = vmatprep.subr.mxu0 0.0
        %1371 = vmatpush1.xpose.msra.mxu0 0.0
        %1372 = vmatprep.subr.mxu0 0.0
        %1373 = vmatpush1.xpose.msra.mxu0 0.0
        %1374 = vmatprep.subr.mxu0 0.0
        %1375 = vmatpush1.xpose.msra.mxu0 0.0
        %1376 = vmatprep.mubr.f32.mxu0 0.0
        %1377 = vmatmul.mubr.f32.gmra.mrb[0].mxu0 %v1308
        %v1378 = vpop.f32.mrb[0].mxu0
        %v1379 = vadd.f32 0.0, %v1378
        %v1380 = vpop.f32.mrb[0].mxu0
        %1381 = vdwg.mxu0
        %1383 = vrot.lane.b32.xlu0 %v617, 96
        %v1384 = vpop.permute.xlu0 %1383
        %v1386 = vsel %vm358, %v612, 0
        %v1388 = vsel %vm358, %v1384, 0
        %1390 = vmatprep.subr.mxu0 0.0
        %1391 = vmatpush1.xpose.msra.mxu0 %v1388
        %1392 = vmatprep.subr.mxu0 0.0
        %1393 = vmatpush1.xpose.msra.mxu0 0.0
        %1394 = vmatprep.subr.mxu0 0.0
        %1395 = vmatpush1.xpose.msra.mxu0 0.0
        %1396 = vmatprep.subr.mxu0 0.0
        %1397 = vmatpush1.xpose.msra.mxu0 0.0
        %1398 = vmatprep.subr.mxu0 0.0
        %1399 = vmatpush1.xpose.msra.mxu0 0.0
        %1400 = vmatprep.subr.mxu0 0.0
        %1401 = vmatpush1.xpose.msra.mxu0 0.0
        %1402 = vmatprep.subr.mxu0 0.0
        %1403 = vmatpush1.xpose.msra.mxu0 0.0
        %1404 = vmatprep.subr.mxu0 0.0
        %1405 = vmatpush1.xpose.msra.mxu0 0.0
        %1406 = vmatprep.subr.mxu0 0.0
        %1407 = vmatpush1.xpose.msra.mxu0 0.0
        %1408 = vmatprep.subr.mxu0 0.0
        %1409 = vmatpush1.xpose.msra.mxu0 0.0
        %1410 = vmatprep.subr.mxu0 0.0
        %1411 = vmatpush1.xpose.msra.mxu0 0.0
        %1412 = vmatprep.subr.mxu0 0.0
        %1413 = vmatpush1.xpose.msra.mxu0 0.0
        %1414 = vmatprep.subr.mxu0 0.0
        %1415 = vmatpush1.xpose.msra.mxu0 0.0
        %1416 = vmatprep.subr.mxu0 0.0
        %1417 = vmatpush1.xpose.msra.mxu0 0.0
        %1418 = vmatprep.subr.mxu0 0.0
        %1419 = vmatpush1.xpose.msra.mxu0 0.0
        %1420 = vmatprep.subr.mxu0 0.0
        %1421 = vmatpush1.xpose.msra.mxu0 0.0
        %1422 = vmatprep.subr.mxu0 0.0
        %1423 = vmatpush1.xpose.msra.mxu0 0.0
        %1424 = vmatprep.subr.mxu0 0.0
        %1425 = vmatpush1.xpose.msra.mxu0 0.0
        %1426 = vmatprep.subr.mxu0 0.0
        %1427 = vmatpush1.xpose.msra.mxu0 0.0
        %1428 = vmatprep.subr.mxu0 0.0
        %1429 = vmatpush1.xpose.msra.mxu0 0.0
        %1430 = vmatprep.subr.mxu0 0.0
        %1431 = vmatpush1.xpose.msra.mxu0 0.0
        %1432 = vmatprep.subr.mxu0 0.0
        %1433 = vmatpush1.xpose.msra.mxu0 0.0
        %1434 = vmatprep.subr.mxu0 0.0
        %1435 = vmatpush1.xpose.msra.mxu0 0.0
        %1436 = vmatprep.subr.mxu0 0.0
        %1437 = vmatpush1.xpose.msra.mxu0 0.0
        %1438 = vmatprep.subr.mxu0 0.0
        %1439 = vmatpush1.xpose.msra.mxu0 0.0
        %1440 = vmatprep.subr.mxu0 0.0
        %1441 = vmatpush1.xpose.msra.mxu0 0.0
        %1442 = vmatprep.subr.mxu0 0.0
        %1443 = vmatpush1.xpose.msra.mxu0 0.0
        %1444 = vmatprep.subr.mxu0 0.0
        %1445 = vmatpush1.xpose.msra.mxu0 0.0
        %1446 = vmatprep.subr.mxu0 0.0
        %1447 = vmatpush1.xpose.msra.mxu0 0.0
        %1448 = vmatprep.subr.mxu0 0.0
        %1449 = vmatpush1.xpose.msra.mxu0 0.0
        %1450 = vmatprep.subr.mxu0 0.0
        %1451 = vmatpush1.xpose.msra.mxu0 0.0
        %1452 = vmatprep.subr.mxu0 0.0
        %1453 = vmatpush1.xpose.msra.mxu0 0.0
        %1454 = vmatprep.mubr.f32.mxu0 0.0
        %1455 = vmatmul.mubr.f32.gmra.mrb[0].mxu0 %v1386
        %v1456 = vpop.f32.mrb[0].mxu0
        %v1457 = vadd.f32 0.0, %v1456
        %v1458 = vpop.f32.mrb[0].mxu0
        %1459 = vdwg.mxu0
        %1461 = vrot.lane.b32.xlu0 %v627, 96
        %v1462 = vpop.permute.xlu0 %1461
        %v1464 = vsel %vm358, %v622, 0
        %v1466 = vsel %vm358, %v1462, 0
        %1468 = vmatprep.subr.mxu0 0.0
        %1469 = vmatpush1.xpose.msra.mxu0 %v1466
        %1470 = vmatprep.subr.mxu0 0.0
        %1471 = vmatpush1.xpose.msra.mxu0 0.0
        %1472 = vmatprep.subr.mxu0 0.0
        %1473 = vmatpush1.xpose.msra.mxu0 0.0
        %1474 = vmatprep.subr.mxu0 0.0
        %1475 = vmatpush1.xpose.msra.mxu0 0.0
        %1476 = vmatprep.subr.mxu0 0.0
        %1477 = vmatpush1.xpose.msra.mxu0 0.0
        %1478 = vmatprep.subr.mxu0 0.0
        %1479 = vmatpush1.xpose.msra.mxu0 0.0
        %1480 = vmatprep.subr.mxu0 0.0
        %1481 = vmatpush1.xpose.msra.mxu0 0.0
        %1482 = vmatprep.subr.mxu0 0.0
        %1483 = vmatpush1.xpose.msra.mxu0 0.0
        %1484 = vmatprep.subr.mxu0 0.0
        %1485 = vmatpush1.xpose.msra.mxu0 0.0
        %1486 = vmatprep.subr.mxu0 0.0
        %1487 = vmatpush1.xpose.msra.mxu0 0.0
        %1488 = vmatprep.subr.mxu0 0.0
        %1489 = vmatpush1.xpose.msra.mxu0 0.0
        %1490 = vmatprep.subr.mxu0 0.0
        %1491 = vmatpush1.xpose.msra.mxu0 0.0
        %1492 = vmatprep.subr.mxu0 0.0
        %1493 = vmatpush1.xpose.msra.mxu0 0.0
        %1494 = vmatprep.subr.mxu0 0.0
        %1495 = vmatpush1.xpose.msra.mxu0 0.0
        %1496 = vmatprep.subr.mxu0 0.0
        %1497 = vmatpush1.xpose.msra.mxu0 0.0
        %1498 = vmatprep.subr.mxu0 0.0
        %1499 = vmatpush1.xpose.msra.mxu0 0.0
        %1500 = vmatprep.subr.mxu0 0.0
        %1501 = vmatpush1.xpose.msra.mxu0 0.0
        %1502 = vmatprep.subr.mxu0 0.0
        %1503 = vmatpush1.xpose.msra.mxu0 0.0
        %1504 = vmatprep.subr.mxu0 0.0
        %1505 = vmatpush1.xpose.msra.mxu0 0.0
        %1506 = vmatprep.subr.mxu0 0.0
        %1507 = vmatpush1.xpose.msra.mxu0 0.0
        %1508 = vmatprep.subr.mxu0 0.0
        %1509 = vmatpush1.xpose.msra.mxu0 0.0
        %1510 = vmatprep.subr.mxu0 0.0
        %1511 = vmatpush1.xpose.msra.mxu0 0.0
        %1512 = vmatprep.subr.mxu0 0.0
        %1513 = vmatpush1.xpose.msra.mxu0 0.0
        %1514 = vmatprep.subr.mxu0 0.0
        %1515 = vmatpush1.xpose.msra.mxu0 0.0
        %1516 = vmatprep.subr.mxu0 0.0
        %1517 = vmatpush1.xpose.msra.mxu0 0.0
        %1518 = vmatprep.subr.mxu0 0.0
        %1519 = vmatpush1.xpose.msra.mxu0 0.0
        %1520 = vmatprep.subr.mxu0 0.0
        %1521 = vmatpush1.xpose.msra.mxu0 0.0
        %1522 = vmatprep.subr.mxu0 0.0
        %1523 = vmatpush1.xpose.msra.mxu0 0.0
        %1524 = vmatprep.subr.mxu0 0.0
        %1525 = vmatpush1.xpose.msra.mxu0 0.0
        %1526 = vmatprep.subr.mxu0 0.0
        %1527 = vmatpush1.xpose.msra.mxu0 0.0
        %1528 = vmatprep.subr.mxu0 0.0
        %1529 = vmatpush1.xpose.msra.mxu0 0.0
        %1530 = vmatprep.subr.mxu0 0.0
        %1531 = vmatpush1.xpose.msra.mxu0 0.0
        %1532 = vmatprep.mubr.f32.mxu0 0.0
        %1533 = vmatmul.mubr.f32.gmra.mrb[0].mxu0 %v1464
        %v1534 = vpop.f32.mrb[0].mxu0
        %v1535 = vadd.f32 0.0, %v1534
        %v1536 = vpop.f32.mrb[0].mxu0
        %1537 = vdwg.mxu0
        %1539 = vrot.lane.b32.xlu0 %v637, 96
        %v1540 = vpop.permute.xlu0 %1539
        %v1542 = vsel %vm358, %v632, 0
        %v1544 = vsel %vm358, %v1540, 0
        %1546 = vmatprep.subr.mxu0 0.0
        %1547 = vmatpush1.xpose.msra.mxu0 %v1544
        %1548 = vmatprep.subr.mxu0 0.0
        %1549 = vmatpush1.xpose.msra.mxu0 0.0
        %1550 = vmatprep.subr.mxu0 0.0
        %1551 = vmatpush1.xpose.msra.mxu0 0.0
        %1552 = vmatprep.subr.mxu0 0.0
        %1553 = vmatpush1.xpose.msra.mxu0 0.0
        %1554 = vmatprep.subr.mxu0 0.0
        %1555 = vmatpush1.xpose.msra.mxu0 0.0
        %1556 = vmatprep.subr.mxu0 0.0
        %1557 = vmatpush1.xpose.msra.mxu0 0.0
        %1558 = vmatprep.subr.mxu0 0.0
        %1559 = vmatpush1.xpose.msra.mxu0 0.0
        %1560 = vmatprep.subr.mxu0 0.0
        %1561 = vmatpush1.xpose.msra.mxu0 0.0
        %1562 = vmatprep.subr.mxu0 0.0
        %1563 = vmatpush1.xpose.msra.mxu0 0.0
        %1564 = vmatprep.subr.mxu0 0.0
        %1565 = vmatpush1.xpose.msra.mxu0 0.0
        %1566 = vmatprep.subr.mxu0 0.0
        %1567 = vmatpush1.xpose.msra.mxu0 0.0
        %1568 = vmatprep.subr.mxu0 0.0
        %1569 = vmatpush1.xpose.msra.mxu0 0.0
        %1570 = vmatprep.subr.mxu0 0.0
        %1571 = vmatpush1.xpose.msra.mxu0 0.0
        %1572 = vmatprep.subr.mxu0 0.0
        %1573 = vmatpush1.xpose.msra.mxu0 0.0
        %1574 = vmatprep.subr.mxu0 0.0
        %1575 = vmatpush1.xpose.msra.mxu0 0.0
        %1576 = vmatprep.subr.mxu0 0.0
        %1577 = vmatpush1.xpose.msra.mxu0 0.0
        %1578 = vmatprep.subr.mxu0 0.0
        %1579 = vmatpush1.xpose.msra.mxu0 0.0
        %1580 = vmatprep.subr.mxu0 0.0
        %1581 = vmatpush1.xpose.msra.mxu0 0.0
        %1582 = vmatprep.subr.mxu0 0.0
        %1583 = vmatpush1.xpose.msra.mxu0 0.0
        %1584 = vmatprep.subr.mxu0 0.0
        %1585 = vmatpush1.xpose.msra.mxu0 0.0
        %1586 = vmatprep.subr.mxu0 0.0
        %1587 = vmatpush1.xpose.msra.mxu0 0.0
        %1588 = vmatprep.subr.mxu0 0.0
        %1589 = vmatpush1.xpose.msra.mxu0 0.0
        %1590 = vmatprep.subr.mxu0 0.0
        %1591 = vmatpush1.xpose.msra.mxu0 0.0
        %1592 = vmatprep.subr.mxu0 0.0
        %1593 = vmatpush1.xpose.msra.mxu0 0.0
        %1594 = vmatprep.subr.mxu0 0.0
        %1595 = vmatpush1.xpose.msra.mxu0 0.0
        %1596 = vmatprep.subr.mxu0 0.0
        %1597 = vmatpush1.xpose.msra.mxu0 0.0
        %1598 = vmatprep.subr.mxu0 0.0
        %1599 = vmatpush1.xpose.msra.mxu0 0.0
        %1600 = vmatprep.subr.mxu0 0.0
        %1601 = vmatpush1.xpose.msra.mxu0 0.0
        %1602 = vmatprep.subr.mxu0 0.0
        %1603 = vmatpush1.xpose.msra.mxu0 0.0
        %1604 = vmatprep.subr.mxu0 0.0
        %1605 = vmatpush1.xpose.msra.mxu0 0.0
        %1606 = vmatprep.subr.mxu0 0.0
        %1607 = vmatpush1.xpose.msra.mxu0 0.0
        %1608 = vmatprep.subr.mxu0 0.0
        %1609 = vmatpush1.xpose.msra.mxu0 0.0
        %1610 = vmatprep.mubr.f32.mxu0 0.0
        %1611 = vmatmul.mubr.f32.gmra.mrb[0].mxu0 %v1542
        %v1612 = vpop.f32.mrb[0].mxu0
        %v1613 = vadd.f32 0.0, %v1612
        %v1614 = vpop.f32.mrb[0].mxu0
        %1615 = vdwg.mxu0
        %1617 = vrot.lane.b32.xlu0 %v647, 96
        %v1618 = vpop.permute.xlu0 %1617
        %v1620 = vsel %vm358, %v642, 0
        %v1622 = vsel %vm358, %v1618, 0
        %1624 = vmatprep.subr.mxu0 0.0
        %1625 = vmatpush1.xpose.msra.mxu0 %v1622
        %1626 = vmatprep.subr.mxu0 0.0
        %1627 = vmatpush1.xpose.msra.mxu0 0.0
        %1628 = vmatprep.subr.mxu0 0.0
        %1629 = vmatpush1.xpose.msra.mxu0 0.0
        %1630 = vmatprep.subr.mxu0 0.0
        %1631 = vmatpush1.xpose.msra.mxu0 0.0
        %1632 = vmatprep.subr.mxu0 0.0
        %1633 = vmatpush1.xpose.msra.mxu0 0.0
        %1634 = vmatprep.subr.mxu0 0.0
        %1635 = vmatpush1.xpose.msra.mxu0 0.0
        %1636 = vmatprep.subr.mxu0 0.0
        %1637 = vmatpush1.xpose.msra.mxu0 0.0
        %1638 = vmatprep.subr.mxu0 0.0
        %1639 = vmatpush1.xpose.msra.mxu0 0.0
        %1640 = vmatprep.subr.mxu0 0.0
        %1641 = vmatpush1.xpose.msra.mxu0 0.0
        %1642 = vmatprep.subr.mxu0 0.0
        %1643 = vmatpush1.xpose.msra.mxu0 0.0
        %1644 = vmatprep.subr.mxu0 0.0
        %1645 = vmatpush1.xpose.msra.mxu0 0.0
        %1646 = vmatprep.subr.mxu0 0.0
        %1647 = vmatpush1.xpose.msra.mxu0 0.0
        %1648 = vmatprep.subr.mxu0 0.0
        %1649 = vmatpush1.xpose.msra.mxu0 0.0
        %1650 = vmatprep.subr.mxu0 0.0
        %1651 = vmatpush1.xpose.msra.mxu0 0.0
        %1652 = vmatprep.subr.mxu0 0.0
        %1653 = vmatpush1.xpose.msra.mxu0 0.0
        %1654 = vmatprep.subr.mxu0 0.0
        %1655 = vmatpush1.xpose.msra.mxu0 0.0
        %1656 = vmatprep.subr.mxu0 0.0
        %1657 = vmatpush1.xpose.msra.mxu0 0.0
        %1658 = vmatprep.subr.mxu0 0.0
        %1659 = vmatpush1.xpose.msra.mxu0 0.0
        %1660 = vmatprep.subr.mxu0 0.0
        %1661 = vmatpush1.xpose.msra.mxu0 0.0
        %1662 = vmatprep.subr.mxu0 0.0
        %1663 = vmatpush1.xpose.msra.mxu0 0.0
        %1664 = vmatprep.subr.mxu0 0.0
        %1665 = vmatpush1.xpose.msra.mxu0 0.0
        %1666 = vmatprep.subr.mxu0 0.0
        %1667 = vmatpush1.xpose.msra.mxu0 0.0
        %1668 = vmatprep.subr.mxu0 0.0
        %1669 = vmatpush1.xpose.msra.mxu0 0.0
        %1670 = vmatprep.subr.mxu0 0.0
        %1671 = vmatpush1.xpose.msra.mxu0 0.0
        %1672 = vmatprep.subr.mxu0 0.0
        %1673 = vmatpush1.xpose.msra.mxu0 0.0
        %1674 = vmatprep.subr.mxu0 0.0
        %1675 = vmatpush1.xpose.msra.mxu0 0.0
        %1676 = vmatprep.subr.mxu0 0.0
        %1677 = vmatpush1.xpose.msra.mxu0 0.0
        %1678 = vmatprep.subr.mxu0 0.0
        %1679 = vmatpush1.xpose.msra.mxu0 0.0
        %1680 = vmatprep.subr.mxu0 0.0
        %1681 = vmatpush1.xpose.msra.mxu0 0.0
        %1682 = vmatprep.subr.mxu0 0.0
        %1683 = vmatpush1.xpose.msra.mxu0 0.0
        %1684 = vmatprep.subr.mxu0 0.0
        %1685 = vmatpush1.xpose.msra.mxu0 0.0
        %1686 = vmatprep.subr.mxu0 0.0
        %1687 = vmatpush1.xpose.msra.mxu0 0.0
        %1688 = vmatprep.mubr.f32.mxu0 0.0
        %1689 = vmatmul.mubr.f32.gmra.mrb[0].mxu0 %v1620
        %v1690 = vpop.f32.mrb[0].mxu0
        %v1691 = vadd.f32 0.0, %v1690
        %v1692 = vpop.f32.mrb[0].mxu0
        %1693 = vdwg.mxu0
        %1695 = vrot.lane.b32.xlu0 %v657, 96
        %v1696 = vpop.permute.xlu0 %1695
        %v1698 = vsel %vm358, %v652, 0
        %v1700 = vsel %vm358, %v1696, 0
        %1702 = vmatprep.subr.mxu0 0.0
        %1703 = vmatpush1.xpose.msra.mxu0 %v1700
        %1704 = vmatprep.subr.mxu0 0.0
        %1705 = vmatpush1.xpose.msra.mxu0 0.0
        %1706 = vmatprep.subr.mxu0 0.0
        %1707 = vmatpush1.xpose.msra.mxu0 0.0
        %1708 = vmatprep.subr.mxu0 0.0
        %1709 = vmatpush1.xpose.msra.mxu0 0.0
        %1710 = vmatprep.subr.mxu0 0.0
        %1711 = vmatpush1.xpose.msra.mxu0 0.0
        %1712 = vmatprep.subr.mxu0 0.0
        %1713 = vmatpush1.xpose.msra.mxu0 0.0
        %1714 = vmatprep.subr.mxu0 0.0
        %1715 = vmatpush1.xpose.msra.mxu0 0.0
        %1716 = vmatprep.subr.mxu0 0.0
        %1717 = vmatpush1.xpose.msra.mxu0 0.0
        %1718 = vmatprep.subr.mxu0 0.0
        %1719 = vmatpush1.xpose.msra.mxu0 0.0
        %1720 = vmatprep.subr.mxu0 0.0
        %1721 = vmatpush1.xpose.msra.mxu0 0.0
        %1722 = vmatprep.subr.mxu0 0.0
        %1723 = vmatpush1.xpose.msra.mxu0 0.0
        %1724 = vmatprep.subr.mxu0 0.0
        %1725 = vmatpush1.xpose.msra.mxu0 0.0
        %1726 = vmatprep.subr.mxu0 0.0
        %1727 = vmatpush1.xpose.msra.mxu0 0.0
        %1728 = vmatprep.subr.mxu0 0.0
        %1729 = vmatpush1.xpose.msra.mxu0 0.0
        %1730 = vmatprep.subr.mxu0 0.0
        %1731 = vmatpush1.xpose.msra.mxu0 0.0
        %1732 = vmatprep.subr.mxu0 0.0
        %1733 = vmatpush1.xpose.msra.mxu0 0.0
        %1734 = vmatprep.subr.mxu0 0.0
        %1735 = vmatpush1.xpose.msra.mxu0 0.0
        %1736 = vmatprep.subr.mxu0 0.0
        %1737 = vmatpush1.xpose.msra.mxu0 0.0
        %1738 = vmatprep.subr.mxu0 0.0
        %1739 = vmatpush1.xpose.msra.mxu0 0.0
        %1740 = vmatprep.subr.mxu0 0.0
        %1741 = vmatpush1.xpose.msra.mxu0 0.0
        %1742 = vmatprep.subr.mxu0 0.0
        %1743 = vmatpush1.xpose.msra.mxu0 0.0
        %1744 = vmatprep.subr.mxu0 0.0
        %1745 = vmatpush1.xpose.msra.mxu0 0.0
        %1746 = vmatprep.subr.mxu0 0.0
        %1747 = vmatpush1.xpose.msra.mxu0 0.0
        %1748 = vmatprep.subr.mxu0 0.0
        %1749 = vmatpush1.xpose.msra.mxu0 0.0
        %1750 = vmatprep.subr.mxu0 0.0
        %1751 = vmatpush1.xpose.msra.mxu0 0.0
        %1752 = vmatprep.subr.mxu0 0.0
        %1753 = vmatpush1.xpose.msra.mxu0 0.0
        %1754 = vmatprep.subr.mxu0 0.0
        %1755 = vmatpush1.xpose.msra.mxu0 0.0
        %1756 = vmatprep.subr.mxu0 0.0
        %1757 = vmatpush1.xpose.msra.mxu0 0.0
        %1758 = vmatprep.subr.mxu0 0.0
        %1759 = vmatpush1.xpose.msra.mxu0 0.0
        %1760 = vmatprep.subr.mxu0 0.0
        %1761 = vmatpush1.xpose.msra.mxu0 0.0
        %1762 = vmatprep.subr.mxu0 0.0
        %1763 = vmatpush1.xpose.msra.mxu0 0.0
        %1764 = vmatprep.subr.mxu0 0.0
        %1765 = vmatpush1.xpose.msra.mxu0 0.0
        %1766 = vmatprep.mubr.f32.mxu0 0.0
        %1767 = vmatmul.mubr.f32.gmra.mrb[0].mxu0 %v1698
        %v1768 = vpop.f32.mrb[0].mxu0
        %v1769 = vadd.f32 0.0, %v1768
        %v1770 = vpop.f32.mrb[0].mxu0
        %1771 = vdwg.mxu0
        %1773 = vrot.lane.b32.xlu0 %v667, 96
        %v1774 = vpop.permute.xlu0 %1773
        %v1776 = vsel %vm358, %v662, 0
        %v1778 = vsel %vm358, %v1774, 0
        %1780 = vmatprep.subr.mxu0 0.0
        %1781 = vmatpush1.xpose.msra.mxu0 %v1778
        %1782 = vmatprep.subr.mxu0 0.0
        %1783 = vmatpush1.xpose.msra.mxu0 0.0
        %1784 = vmatprep.subr.mxu0 0.0
        %1785 = vmatpush1.xpose.msra.mxu0 0.0
        %1786 = vmatprep.subr.mxu0 0.0
        %1787 = vmatpush1.xpose.msra.mxu0 0.0
        %1788 = vmatprep.subr.mxu0 0.0
        %1789 = vmatpush1.xpose.msra.mxu0 0.0
        %1790 = vmatprep.subr.mxu0 0.0
        %1791 = vmatpush1.xpose.msra.mxu0 0.0
        %1792 = vmatprep.subr.mxu0 0.0
        %1793 = vmatpush1.xpose.msra.mxu0 0.0
        %1794 = vmatprep.subr.mxu0 0.0
        %1795 = vmatpush1.xpose.msra.mxu0 0.0
        %1796 = vmatprep.subr.mxu0 0.0
        %1797 = vmatpush1.xpose.msra.mxu0 0.0
        %1798 = vmatprep.subr.mxu0 0.0
        %1799 = vmatpush1.xpose.msra.mxu0 0.0
        %1800 = vmatprep.subr.mxu0 0.0
        %1801 = vmatpush1.xpose.msra.mxu0 0.0
        %1802 = vmatprep.subr.mxu0 0.0
        %1803 = vmatpush1.xpose.msra.mxu0 0.0
        %1804 = vmatprep.subr.mxu0 0.0
        %1805 = vmatpush1.xpose.msra.mxu0 0.0
        %1806 = vmatprep.subr.mxu0 0.0
        %1807 = vmatpush1.xpose.msra.mxu0 0.0
        %1808 = vmatprep.subr.mxu0 0.0
        %1809 = vmatpush1.xpose.msra.mxu0 0.0
        %1810 = vmatprep.subr.mxu0 0.0
        %1811 = vmatpush1.xpose.msra.mxu0 0.0
        %1812 = vmatprep.subr.mxu0 0.0
        %1813 = vmatpush1.xpose.msra.mxu0 0.0
        %1814 = vmatprep.subr.mxu0 0.0
        %1815 = vmatpush1.xpose.msra.mxu0 0.0
        %1816 = vmatprep.subr.mxu0 0.0
        %1817 = vmatpush1.xpose.msra.mxu0 0.0
        %1818 = vmatprep.subr.mxu0 0.0
        %1819 = vmatpush1.xpose.msra.mxu0 0.0
        %1820 = vmatprep.subr.mxu0 0.0
        %1821 = vmatpush1.xpose.msra.mxu0 0.0
        %1822 = vmatprep.subr.mxu0 0.0
        %1823 = vmatpush1.xpose.msra.mxu0 0.0
        %1824 = vmatprep.subr.mxu0 0.0
        %1825 = vmatpush1.xpose.msra.mxu0 0.0
        %1826 = vmatprep.subr.mxu0 0.0
        %1827 = vmatpush1.xpose.msra.mxu0 0.0
        %1828 = vmatprep.subr.mxu0 0.0
        %1829 = vmatpush1.xpose.msra.mxu0 0.0
        %1830 = vmatprep.subr.mxu0 0.0
        %1831 = vmatpush1.xpose.msra.mxu0 0.0
        %1832 = vmatprep.subr.mxu0 0.0
        %1833 = vmatpush1.xpose.msra.mxu0 0.0
        %1834 = vmatprep.subr.mxu0 0.0
        %1835 = vmatpush1.xpose.msra.mxu0 0.0
        %1836 = vmatprep.subr.mxu0 0.0
        %1837 = vmatpush1.xpose.msra.mxu0 0.0
        %1838 = vmatprep.subr.mxu0 0.0
        %1839 = vmatpush1.xpose.msra.mxu0 0.0
        %1840 = vmatprep.subr.mxu0 0.0
        %1841 = vmatpush1.xpose.msra.mxu0 0.0
        %1842 = vmatprep.subr.mxu0 0.0
        %1843 = vmatpush1.xpose.msra.mxu0 0.0
        %1844 = vmatprep.mubr.f32.mxu0 0.0
        %1845 = vmatmul.mubr.f32.gmra.mrb[0].mxu0 %v1776
        %v1846 = vpop.f32.mrb[0].mxu0
        %v1847 = vadd.f32 0.0, %v1846
        %v1848 = vpop.f32.mrb[0].mxu0
        %1849 = vdwg.mxu0
        %1851 = vrot.lane.b32.xlu0 %v677, 96
        %v1852 = vpop.permute.xlu0 %1851
        %v1854 = vsel %vm358, %v672, 0
        %v1856 = vsel %vm358, %v1852, 0
        %1858 = vmatprep.subr.mxu0 0.0
        %1859 = vmatpush1.xpose.msra.mxu0 %v1856
        %1860 = vmatprep.subr.mxu0 0.0
        %1861 = vmatpush1.xpose.msra.mxu0 0.0
        %1862 = vmatprep.subr.mxu0 0.0
        %1863 = vmatpush1.xpose.msra.mxu0 0.0
        %1864 = vmatprep.subr.mxu0 0.0
        %1865 = vmatpush1.xpose.msra.mxu0 0.0
        %1866 = vmatprep.subr.mxu0 0.0
        %1867 = vmatpush1.xpose.msra.mxu0 0.0
        %1868 = vmatprep.subr.mxu0 0.0
        %1869 = vmatpush1.xpose.msra.mxu0 0.0
        %1870 = vmatprep.subr.mxu0 0.0
        %1871 = vmatpush1.xpose.msra.mxu0 0.0
        %1872 = vmatprep.subr.mxu0 0.0
        %1873 = vmatpush1.xpose.msra.mxu0 0.0
        %1874 = vmatprep.subr.mxu0 0.0
        %1875 = vmatpush1.xpose.msra.mxu0 0.0
        %1876 = vmatprep.subr.mxu0 0.0
        %1877 = vmatpush1.xpose.msra.mxu0 0.0
        %1878 = vmatprep.subr.mxu0 0.0
        %1879 = vmatpush1.xpose.msra.mxu0 0.0
        %1880 = vmatprep.subr.mxu0 0.0
        %1881 = vmatpush1.xpose.msra.mxu0 0.0
        %1882 = vmatprep.subr.mxu0 0.0
        %1883 = vmatpush1.xpose.msra.mxu0 0.0
        %1884 = vmatprep.subr.mxu0 0.0
        %1885 = vmatpush1.xpose.msra.mxu0 0.0
        %1886 = vmatprep.subr.mxu0 0.0
        %1887 = vmatpush1.xpose.msra.mxu0 0.0
        %1888 = vmatprep.subr.mxu0 0.0
        %1889 = vmatpush1.xpose.msra.mxu0 0.0
        %1890 = vmatprep.subr.mxu0 0.0
        %1891 = vmatpush1.xpose.msra.mxu0 0.0
        %1892 = vmatprep.subr.mxu0 0.0
        %1893 = vmatpush1.xpose.msra.mxu0 0.0
        %1894 = vmatprep.subr.mxu0 0.0
        %1895 = vmatpush1.xpose.msra.mxu0 0.0
        %1896 = vmatprep.subr.mxu0 0.0
        %1897 = vmatpush1.xpose.msra.mxu0 0.0
        %1898 = vmatprep.subr.mxu0 0.0
        %1899 = vmatpush1.xpose.msra.mxu0 0.0
        %1900 = vmatprep.subr.mxu0 0.0
        %1901 = vmatpush1.xpose.msra.mxu0 0.0
        %1902 = vmatprep.subr.mxu0 0.0
        %1903 = vmatpush1.xpose.msra.mxu0 0.0
        %1904 = vmatprep.subr.mxu0 0.0
        %1905 = vmatpush1.xpose.msra.mxu0 0.0
        %1906 = vmatprep.subr.mxu0 0.0
        %1907 = vmatpush1.xpose.msra.mxu0 0.0
        %1908 = vmatprep.subr.mxu0 0.0
        %1909 = vmatpush1.xpose.msra.mxu0 0.0
        %1910 = vmatprep.subr.mxu0 0.0
        %1911 = vmatpush1.xpose.msra.mxu0 0.0
        %1912 = vmatprep.subr.mxu0 0.0
        %1913 = vmatpush1.xpose.msra.mxu0 0.0
        %1914 = vmatprep.subr.mxu0 0.0
        %1915 = vmatpush1.xpose.msra.mxu0 0.0
        %1916 = vmatprep.subr.mxu0 0.0
        %1917 = vmatpush1.xpose.msra.mxu0 0.0
        %1918 = vmatprep.subr.mxu0 0.0
        %1919 = vmatpush1.xpose.msra.mxu0 0.0
        %1920 = vmatprep.subr.mxu0 0.0
        %1921 = vmatpush1.xpose.msra.mxu0 0.0
        %1922 = vmatprep.mubr.f32.mxu0 0.0
        %1923 = vmatmul.mubr.f32.gmra.mrb[0].mxu0 %v1854
        %v1924 = vpop.f32.mrb[0].mxu0
        %v1925 = vadd.f32 0.0, %v1924
        %v1926 = vpop.f32.mrb[0].mxu0
        %1927 = vdwg.mxu0
        %1928 = vrot.lane.b32.xlu0 %v522, 112
        %v1929 = vpop.permute.xlu0 %1928
        %1930 = vrot.lane.b32.xlu0 %v527, 80
        %v1931 = vpop.permute.xlu0 %1930
        %v1932 = vsel %vm358, %v1929, 0
        %v1934 = vsel %vm358, %v1931, 0
        %1936 = vmatprep.subr.mxu0 0.0
        %1937 = vmatpush1.xpose.msra.mxu0 %v1934
        %1938 = vmatprep.subr.mxu0 0.0
        %1939 = vmatpush1.xpose.msra.mxu0 0.0
        %1940 = vmatprep.subr.mxu0 0.0
        %1941 = vmatpush1.xpose.msra.mxu0 0.0
        %1942 = vmatprep.subr.mxu0 0.0
        %1943 = vmatpush1.xpose.msra.mxu0 0.0
        %1944 = vmatprep.subr.mxu0 0.0
        %1945 = vmatpush1.xpose.msra.mxu0 0.0
        %1946 = vmatprep.subr.mxu0 0.0
        %1947 = vmatpush1.xpose.msra.mxu0 0.0
        %1948 = vmatprep.subr.mxu0 0.0
        %1949 = vmatpush1.xpose.msra.mxu0 0.0
        %1950 = vmatprep.subr.mxu0 0.0
        %1951 = vmatpush1.xpose.msra.mxu0 0.0
        %1952 = vmatprep.subr.mxu0 0.0
        %1953 = vmatpush1.xpose.msra.mxu0 0.0
        %1954 = vmatprep.subr.mxu0 0.0
        %1955 = vmatpush1.xpose.msra.mxu0 0.0
        %1956 = vmatprep.subr.mxu0 0.0
        %1957 = vmatpush1.xpose.msra.mxu0 0.0
        %1958 = vmatprep.subr.mxu0 0.0
        %1959 = vmatpush1.xpose.msra.mxu0 0.0
        %1960 = vmatprep.subr.mxu0 0.0
        %1961 = vmatpush1.xpose.msra.mxu0 0.0
        %1962 = vmatprep.subr.mxu0 0.0
        %1963 = vmatpush1.xpose.msra.mxu0 0.0
        %1964 = vmatprep.subr.mxu0 0.0
        %1965 = vmatpush1.xpose.msra.mxu0 0.0
        %1966 = vmatprep.subr.mxu0 0.0
        %1967 = vmatpush1.xpose.msra.mxu0 0.0
        %1968 = vmatprep.subr.mxu0 0.0
        %1969 = vmatpush1.xpose.msra.mxu0 0.0
        %1970 = vmatprep.subr.mxu0 0.0
        %1971 = vmatpush1.xpose.msra.mxu0 0.0
        %1972 = vmatprep.subr.mxu0 0.0
        %1973 = vmatpush1.xpose.msra.mxu0 0.0
        %1974 = vmatprep.subr.mxu0 0.0
        %1975 = vmatpush1.xpose.msra.mxu0 0.0
        %1976 = vmatprep.subr.mxu0 0.0
        %1977 = vmatpush1.xpose.msra.mxu0 0.0
        %1978 = vmatprep.subr.mxu0 0.0
        %1979 = vmatpush1.xpose.msra.mxu0 0.0
        %1980 = vmatprep.subr.mxu0 0.0
        %1981 = vmatpush1.xpose.msra.mxu0 0.0
        %1982 = vmatprep.subr.mxu0 0.0
        %1983 = vmatpush1.xpose.msra.mxu0 0.0
        %1984 = vmatprep.subr.mxu0 0.0
        %1985 = vmatpush1.xpose.msra.mxu0 0.0
        %1986 = vmatprep.subr.mxu0 0.0
        %1987 = vmatpush1.xpose.msra.mxu0 0.0
        %1988 = vmatprep.subr.mxu0 0.0
        %1989 = vmatpush1.xpose.msra.mxu0 0.0
        %1990 = vmatprep.subr.mxu0 0.0
        %1991 = vmatpush1.xpose.msra.mxu0 0.0
        %1992 = vmatprep.subr.mxu0 0.0
        %1993 = vmatpush1.xpose.msra.mxu0 0.0
        %1994 = vmatprep.subr.mxu0 0.0
        %1995 = vmatpush1.xpose.msra.mxu0 0.0
        %1996 = vmatprep.subr.mxu0 0.0
        %1997 = vmatpush1.xpose.msra.mxu0 0.0
        %1998 = vmatprep.subr.mxu0 0.0
        %1999 = vmatpush1.xpose.msra.mxu0 0.0
        %2000 = vmatprep.mubr.f32.mxu0 0.0
        %2001 = vmatmul.mubr.f32.gmra.mrb[0].mxu0 %v1932
        %v2002 = vpop.f32.mrb[0].mxu0
        %v2003 = vadd.f32 0.0, %v2002
        %v2004 = vpop.f32.mrb[0].mxu0
        %2005 = vdwg.mxu0
        %2006 = vrot.lane.b32.xlu0 %v532, 112
        %v2007 = vpop.permute.xlu0 %2006
        %2008 = vrot.lane.b32.xlu0 %v537, 80
        %v2009 = vpop.permute.xlu0 %2008
        %v2010 = vsel %vm358, %v2007, 0
        %v2012 = vsel %vm358, %v2009, 0
        %2014 = vmatprep.subr.mxu0 0.0
        %2015 = vmatpush1.xpose.msra.mxu0 %v2012
        %2016 = vmatprep.subr.mxu0 0.0
        %2017 = vmatpush1.xpose.msra.mxu0 0.0
        %2018 = vmatprep.subr.mxu0 0.0
        %2019 = vmatpush1.xpose.msra.mxu0 0.0
        %2020 = vmatprep.subr.mxu0 0.0
        %2021 = vmatpush1.xpose.msra.mxu0 0.0
        %2022 = vmatprep.subr.mxu0 0.0
        %2023 = vmatpush1.xpose.msra.mxu0 0.0
        %2024 = vmatprep.subr.mxu0 0.0
        %2025 = vmatpush1.xpose.msra.mxu0 0.0
        %2026 = vmatprep.subr.mxu0 0.0
        %2027 = vmatpush1.xpose.msra.mxu0 0.0
        %2028 = vmatprep.subr.mxu0 0.0
        %2029 = vmatpush1.xpose.msra.mxu0 0.0
        %2030 = vmatprep.subr.mxu0 0.0
        %2031 = vmatpush1.xpose.msra.mxu0 0.0
        %2032 = vmatprep.subr.mxu0 0.0
        %2033 = vmatpush1.xpose.msra.mxu0 0.0
        %2034 = vmatprep.subr.mxu0 0.0
        %2035 = vmatpush1.xpose.msra.mxu0 0.0
        %2036 = vmatprep.subr.mxu0 0.0
        %2037 = vmatpush1.xpose.msra.mxu0 0.0
        %2038 = vmatprep.subr.mxu0 0.0
        %2039 = vmatpush1.xpose.msra.mxu0 0.0
        %2040 = vmatprep.subr.mxu0 0.0
        %2041 = vmatpush1.xpose.msra.mxu0 0.0
        %2042 = vmatprep.subr.mxu0 0.0
        %2043 = vmatpush1.xpose.msra.mxu0 0.0
        %2044 = vmatprep.subr.mxu0 0.0
        %2045 = vmatpush1.xpose.msra.mxu0 0.0
        %2046 = vmatprep.subr.mxu0 0.0
        %2047 = vmatpush1.xpose.msra.mxu0 0.0
        %2048 = vmatprep.subr.mxu0 0.0
        %2049 = vmatpush1.xpose.msra.mxu0 0.0
        %2050 = vmatprep.subr.mxu0 0.0
        %2051 = vmatpush1.xpose.msra.mxu0 0.0
        %2052 = vmatprep.subr.mxu0 0.0
        %2053 = vmatpush1.xpose.msra.mxu0 0.0
        %2054 = vmatprep.subr.mxu0 0.0
        %2055 = vmatpush1.xpose.msra.mxu0 0.0
        %2056 = vmatprep.subr.mxu0 0.0
        %2057 = vmatpush1.xpose.msra.mxu0 0.0
        %2058 = vmatprep.subr.mxu0 0.0
        %2059 = vmatpush1.xpose.msra.mxu0 0.0
        %2060 = vmatprep.subr.mxu0 0.0
        %2061 = vmatpush1.xpose.msra.mxu0 0.0
        %2062 = vmatprep.subr.mxu0 0.0
        %2063 = vmatpush1.xpose.msra.mxu0 0.0
        %2064 = vmatprep.subr.mxu0 0.0
        %2065 = vmatpush1.xpose.msra.mxu0 0.0
        %2066 = vmatprep.subr.mxu0 0.0
        %2067 = vmatpush1.xpose.msra.mxu0 0.0
        %2068 = vmatprep.subr.mxu0 0.0
        %2069 = vmatpush1.xpose.msra.mxu0 0.0
        %2070 = vmatprep.subr.mxu0 0.0
        %2071 = vmatpush1.xpose.msra.mxu0 0.0
        %2072 = vmatprep.subr.mxu0 0.0
        %2073 = vmatpush1.xpose.msra.mxu0 0.0
        %2074 = vmatprep.subr.mxu0 0.0
        %2075 = vmatpush1.xpose.msra.mxu0 0.0
        %2076 = vmatprep.subr.mxu0 0.0
        %2077 = vmatpush1.xpose.msra.mxu0 0.0
        %2078 = vmatprep.mubr.f32.mxu0 0.0
        %2079 = vmatmul.mubr.f32.gmra.mrb[0].mxu0 %v2010
        %v2080 = vpop.f32.mrb[0].mxu0
        %v2081 = vadd.f32 0.0, %v2080
        %v2082 = vpop.f32.mrb[0].mxu0
        %2083 = vdwg.mxu0
        %2084 = vrot.lane.b32.xlu0 %v542, 112
        %v2085 = vpop.permute.xlu0 %2084
        %2086 = vrot.lane.b32.xlu0 %v547, 80
        %v2087 = vpop.permute.xlu0 %2086
        %v2088 = vsel %vm358, %v2085, 0
        %v2090 = vsel %vm358, %v2087, 0
        %2092 = vmatprep.subr.mxu0 0.0
        %2093 = vmatpush1.xpose.msra.mxu0 %v2090
        %2094 = vmatprep.subr.mxu0 0.0
        %2095 = vmatpush1.xpose.msra.mxu0 0.0
        %2096 = vmatprep.subr.mxu0 0.0
        %2097 = vmatpush1.xpose.msra.mxu0 0.0
        %2098 = vmatprep.subr.mxu0 0.0
        %2099 = vmatpush1.xpose.msra.mxu0 0.0
        %2100 = vmatprep.subr.mxu0 0.0
        %2101 = vmatpush1.xpose.msra.mxu0 0.0
        %2102 = vmatprep.subr.mxu0 0.0
        %2103 = vmatpush1.xpose.msra.mxu0 0.0
        %2104 = vmatprep.subr.mxu0 0.0
        %2105 = vmatpush1.xpose.msra.mxu0 0.0
        %2106 = vmatprep.subr.mxu0 0.0
        %2107 = vmatpush1.xpose.msra.mxu0 0.0
        %2108 = vmatprep.subr.mxu0 0.0
        %2109 = vmatpush1.xpose.msra.mxu0 0.0
        %2110 = vmatprep.subr.mxu0 0.0
        %2111 = vmatpush1.xpose.msra.mxu0 0.0
        %2112 = vmatprep.subr.mxu0 0.0
        %2113 = vmatpush1.xpose.msra.mxu0 0.0
        %2114 = vmatprep.subr.mxu0 0.0
        %2115 = vmatpush1.xpose.msra.mxu0 0.0
        %2116 = vmatprep.subr.mxu0 0.0
        %2117 = vmatpush1.xpose.msra.mxu0 0.0
        %2118 = vmatprep.subr.mxu0 0.0
        %2119 = vmatpush1.xpose.msra.mxu0 0.0
        %2120 = vmatprep.subr.mxu0 0.0
        %2121 = vmatpush1.xpose.msra.mxu0 0.0
        %2122 = vmatprep.subr.mxu0 0.0
        %2123 = vmatpush1.xpose.msra.mxu0 0.0
        %2124 = vmatprep.subr.mxu0 0.0
        %2125 = vmatpush1.xpose.msra.mxu0 0.0
        %2126 = vmatprep.subr.mxu0 0.0
        %2127 = vmatpush1.xpose.msra.mxu0 0.0
        %2128 = vmatprep.subr.mxu0 0.0
        %2129 = vmatpush1.xpose.msra.mxu0 0.0
        %2130 = vmatprep.subr.mxu0 0.0
        %2131 = vmatpush1.xpose.msra.mxu0 0.0
        %2132 = vmatprep.subr.mxu0 0.0
        %2133 = vmatpush1.xpose.msra.mxu0 0.0
        %2134 = vmatprep.subr.mxu0 0.0
        %2135 = vmatpush1.xpose.msra.mxu0 0.0
        %2136 = vmatprep.subr.mxu0 0.0
        %2137 = vmatpush1.xpose.msra.mxu0 0.0
        %2138 = vmatprep.subr.mxu0 0.0
        %2139 = vmatpush1.xpose.msra.mxu0 0.0
        %2140 = vmatprep.subr.mxu0 0.0
        %2141 = vmatpush1.xpose.msra.mxu0 0.0
        %2142 = vmatprep.subr.mxu0 0.0
        %2143 = vmatpush1.xpose.msra.mxu0 0.0
        %2144 = vmatprep.subr.mxu0 0.0
        %2145 = vmatpush1.xpose.msra.mxu0 0.0
        %2146 = vmatprep.subr.mxu0 0.0
        %2147 = vmatpush1.xpose.msra.mxu0 0.0
        %2148 = vmatprep.subr.mxu0 0.0
        %2149 = vmatpush1.xpose.msra.mxu0 0.0
        %2150 = vmatprep.subr.mxu0 0.0
        %2151 = vmatpush1.xpose.msra.mxu0 0.0
        %2152 = vmatprep.subr.mxu0 0.0
        %2153 = vmatpush1.xpose.msra.mxu0 0.0
        %2154 = vmatprep.subr.mxu0 0.0
        %2155 = vmatpush1.xpose.msra.mxu0 0.0
        %2156 = vmatprep.mubr.f32.mxu0 0.0
        %2157 = vmatmul.mubr.f32.gmra.mrb[0].mxu0 %v2088
        %v2158 = vpop.f32.mrb[0].mxu0
        %v2159 = vadd.f32 0.0, %v2158
        %v2160 = vpop.f32.mrb[0].mxu0
        %2161 = vdwg.mxu0
        %2162 = vrot.lane.b32.xlu0 %v552, 112
        %v2163 = vpop.permute.xlu0 %2162
        %2164 = vrot.lane.b32.xlu0 %v557, 80
        %v2165 = vpop.permute.xlu0 %2164
        %v2166 = vsel %vm358, %v2163, 0
        %v2168 = vsel %vm358, %v2165, 0
        %2170 = vmatprep.subr.mxu0 0.0
        %2171 = vmatpush1.xpose.msra.mxu0 %v2168
        %2172 = vmatprep.subr.mxu0 0.0
        %2173 = vmatpush1.xpose.msra.mxu0 0.0
        %2174 = vmatprep.subr.mxu0 0.0
        %2175 = vmatpush1.xpose.msra.mxu0 0.0
        %2176 = vmatprep.subr.mxu0 0.0
        %2177 = vmatpush1.xpose.msra.mxu0 0.0
        %2178 = vmatprep.subr.mxu0 0.0
        %2179 = vmatpush1.xpose.msra.mxu0 0.0
        %2180 = vmatprep.subr.mxu0 0.0
        %2181 = vmatpush1.xpose.msra.mxu0 0.0
        %2182 = vmatprep.subr.mxu0 0.0
        %2183 = vmatpush1.xpose.msra.mxu0 0.0
        %2184 = vmatprep.subr.mxu0 0.0
        %2185 = vmatpush1.xpose.msra.mxu0 0.0
        %2186 = vmatprep.subr.mxu0 0.0
        %2187 = vmatpush1.xpose.msra.mxu0 0.0
        %2188 = vmatprep.subr.mxu0 0.0
        %2189 = vmatpush1.xpose.msra.mxu0 0.0
        %2190 = vmatprep.subr.mxu0 0.0
        %2191 = vmatpush1.xpose.msra.mxu0 0.0
        %2192 = vmatprep.subr.mxu0 0.0
        %2193 = vmatpush1.xpose.msra.mxu0 0.0
        %2194 = vmatprep.subr.mxu0 0.0
        %2195 = vmatpush1.xpose.msra.mxu0 0.0
        %2196 = vmatprep.subr.mxu0 0.0
        %2197 = vmatpush1.xpose.msra.mxu0 0.0
        %2198 = vmatprep.subr.mxu0 0.0
        %2199 = vmatpush1.xpose.msra.mxu0 0.0
        %2200 = vmatprep.subr.mxu0 0.0
        %2201 = vmatpush1.xpose.msra.mxu0 0.0
        %2202 = vmatprep.subr.mxu0 0.0
        %2203 = vmatpush1.xpose.msra.mxu0 0.0
        %2204 = vmatprep.subr.mxu0 0.0
        %2205 = vmatpush1.xpose.msra.mxu0 0.0
        %2206 = vmatprep.subr.mxu0 0.0
        %2207 = vmatpush1.xpose.msra.mxu0 0.0
        %2208 = vmatprep.subr.mxu0 0.0
        %2209 = vmatpush1.xpose.msra.mxu0 0.0
        %2210 = vmatprep.subr.mxu0 0.0
        %2211 = vmatpush1.xpose.msra.mxu0 0.0
        %2212 = vmatprep.subr.mxu0 0.0
        %2213 = vmatpush1.xpose.msra.mxu0 0.0
        %2214 = vmatprep.subr.mxu0 0.0
        %2215 = vmatpush1.xpose.msra.mxu0 0.0
        %2216 = vmatprep.subr.mxu0 0.0
        %2217 = vmatpush1.xpose.msra.mxu0 0.0
        %2218 = vmatprep.subr.mxu0 0.0
        %2219 = vmatpush1.xpose.msra.mxu0 0.0
        %2220 = vmatprep.subr.mxu0 0.0
        %2221 = vmatpush1.xpose.msra.mxu0 0.0
        %2222 = vmatprep.subr.mxu0 0.0
        %2223 = vmatpush1.xpose.msra.mxu0 0.0
        %2224 = vmatprep.subr.mxu0 0.0
        %2225 = vmatpush1.xpose.msra.mxu0 0.0
        %2226 = vmatprep.subr.mxu0 0.0
        %2227 = vmatpush1.xpose.msra.mxu0 0.0
        %2228 = vmatprep.subr.mxu0 0.0
        %2229 = vmatpush1.xpose.msra.mxu0 0.0
        %2230 = vmatprep.subr.mxu0 0.0
        %2231 = vmatpush1.xpose.msra.mxu0 0.0
        %2232 = vmatprep.subr.mxu0 0.0
        %2233 = vmatpush1.xpose.msra.mxu0 0.0
        %2234 = vmatprep.mubr.f32.mxu0 0.0
        %2235 = vmatmul.mubr.f32.gmra.mrb[0].mxu0 %v2166
        %v2236 = vpop.f32.mrb[0].mxu0
        %v2237 = vadd.f32 0.0, %v2236
        %v2238 = vpop.f32.mrb[0].mxu0
        %2239 = vdwg.mxu0
        %2240 = vrot.lane.b32.xlu0 %v562, 112
        %v2241 = vpop.permute.xlu0 %2240
        %2242 = vrot.lane.b32.xlu0 %v567, 80
        %v2243 = vpop.permute.xlu0 %2242
        %v2244 = vsel %vm358, %v2241, 0
        %v2246 = vsel %vm358, %v2243, 0
        %2248 = vmatprep.subr.mxu0 0.0
        %2249 = vmatpush1.xpose.msra.mxu0 %v2246
        %2250 = vmatprep.subr.mxu0 0.0
        %2251 = vmatpush1.xpose.msra.mxu0 0.0
        %2252 = vmatprep.subr.mxu0 0.0
        %2253 = vmatpush1.xpose.msra.mxu0 0.0
        %2254 = vmatprep.subr.mxu0 0.0
        %2255 = vmatpush1.xpose.msra.mxu0 0.0
        %2256 = vmatprep.subr.mxu0 0.0
        %2257 = vmatpush1.xpose.msra.mxu0 0.0
        %2258 = vmatprep.subr.mxu0 0.0
        %2259 = vmatpush1.xpose.msra.mxu0 0.0
        %2260 = vmatprep.subr.mxu0 0.0
        %2261 = vmatpush1.xpose.msra.mxu0 0.0
        %2262 = vmatprep.subr.mxu0 0.0
        %2263 = vmatpush1.xpose.msra.mxu0 0.0
        %2264 = vmatprep.subr.mxu0 0.0
        %2265 = vmatpush1.xpose.msra.mxu0 0.0
        %2266 = vmatprep.subr.mxu0 0.0
        %2267 = vmatpush1.xpose.msra.mxu0 0.0
        %2268 = vmatprep.subr.mxu0 0.0
        %2269 = vmatpush1.xpose.msra.mxu0 0.0
        %2270 = vmatprep.subr.mxu0 0.0
        %2271 = vmatpush1.xpose.msra.mxu0 0.0
        %2272 = vmatprep.subr.mxu0 0.0
        %2273 = vmatpush1.xpose.msra.mxu0 0.0
        %2274 = vmatprep.subr.mxu0 0.0
        %2275 = vmatpush1.xpose.msra.mxu0 0.0
        %2276 = vmatprep.subr.mxu0 0.0
        %2277 = vmatpush1.xpose.msra.mxu0 0.0
        %2278 = vmatprep.subr.mxu0 0.0
        %2279 = vmatpush1.xpose.msra.mxu0 0.0
        %2280 = vmatprep.subr.mxu0 0.0
        %2281 = vmatpush1.xpose.msra.mxu0 0.0
        %2282 = vmatprep.subr.mxu0 0.0
        %2283 = vmatpush1.xpose.msra.mxu0 0.0
        %2284 = vmatprep.subr.mxu0 0.0
        %2285 = vmatpush1.xpose.msra.mxu0 0.0
        %2286 = vmatprep.subr.mxu0 0.0
        %2287 = vmatpush1.xpose.msra.mxu0 0.0
        %2288 = vmatprep.subr.mxu0 0.0
        %2289 = vmatpush1.xpose.msra.mxu0 0.0
        %2290 = vmatprep.subr.mxu0 0.0
        %2291 = vmatpush1.xpose.msra.mxu0 0.0
        %2292 = vmatprep.subr.mxu0 0.0
        %2293 = vmatpush1.xpose.msra.mxu0 0.0
        %2294 = vmatprep.subr.mxu0 0.0
        %2295 = vmatpush1.xpose.msra.mxu0 0.0
        %2296 = vmatprep.subr.mxu0 0.0
        %2297 = vmatpush1.xpose.msra.mxu0 0.0
        %2298 = vmatprep.subr.mxu0 0.0
        %2299 = vmatpush1.xpose.msra.mxu0 0.0
        %2300 = vmatprep.subr.mxu0 0.0
        %2301 = vmatpush1.xpose.msra.mxu0 0.0
        %2302 = vmatprep.subr.mxu0 0.0
        %2303 = vmatpush1.xpose.msra.mxu0 0.0
        %2304 = vmatprep.subr.mxu0 0.0
        %2305 = vmatpush1.xpose.msra.mxu0 0.0
        %2306 = vmatprep.subr.mxu0 0.0
        %2307 = vmatpush1.xpose.msra.mxu0 0.0
        %2308 = vmatprep.subr.mxu0 0.0
        %2309 = vmatpush1.xpose.msra.mxu0 0.0
        %2310 = vmatprep.subr.mxu0 0.0
        %2311 = vmatpush1.xpose.msra.mxu0 0.0
        %2312 = vmatprep.mubr.f32.mxu0 0.0
        %2313 = vmatmul.mubr.f32.gmra.mrb[0].mxu0 %v2244
        %v2314 = vpop.f32.mrb[0].mxu0
        %v2315 = vadd.f32 0.0, %v2314
        %v2316 = vpop.f32.mrb[0].mxu0
        %2317 = vdwg.mxu0
        %2318 = vrot.lane.b32.xlu0 %v572, 112
        %v2319 = vpop.permute.xlu0 %2318
        %2320 = vrot.lane.b32.xlu0 %v577, 80
        %v2321 = vpop.permute.xlu0 %2320
        %v2322 = vsel %vm358, %v2319, 0
        %v2324 = vsel %vm358, %v2321, 0
        %2326 = vmatprep.subr.mxu0 0.0
        %2327 = vmatpush1.xpose.msra.mxu0 %v2324
        %2328 = vmatprep.subr.mxu0 0.0
        %2329 = vmatpush1.xpose.msra.mxu0 0.0
        %2330 = vmatprep.subr.mxu0 0.0
        %2331 = vmatpush1.xpose.msra.mxu0 0.0
        %2332 = vmatprep.subr.mxu0 0.0
        %2333 = vmatpush1.xpose.msra.mxu0 0.0
        %2334 = vmatprep.subr.mxu0 0.0
        %2335 = vmatpush1.xpose.msra.mxu0 0.0
        %2336 = vmatprep.subr.mxu0 0.0
        %2337 = vmatpush1.xpose.msra.mxu0 0.0
        %2338 = vmatprep.subr.mxu0 0.0
        %2339 = vmatpush1.xpose.msra.mxu0 0.0
        %2340 = vmatprep.subr.mxu0 0.0
        %2341 = vmatpush1.xpose.msra.mxu0 0.0
        %2342 = vmatprep.subr.mxu0 0.0
        %2343 = vmatpush1.xpose.msra.mxu0 0.0
        %2344 = vmatprep.subr.mxu0 0.0
        %2345 = vmatpush1.xpose.msra.mxu0 0.0
        %2346 = vmatprep.subr.mxu0 0.0
        %2347 = vmatpush1.xpose.msra.mxu0 0.0
        %2348 = vmatprep.subr.mxu0 0.0
        %2349 = vmatpush1.xpose.msra.mxu0 0.0
        %2350 = vmatprep.subr.mxu0 0.0
        %2351 = vmatpush1.xpose.msra.mxu0 0.0
        %2352 = vmatprep.subr.mxu0 0.0
        %2353 = vmatpush1.xpose.msra.mxu0 0.0
        %2354 = vmatprep.subr.mxu0 0.0
        %2355 = vmatpush1.xpose.msra.mxu0 0.0
        %2356 = vmatprep.subr.mxu0 0.0
        %2357 = vmatpush1.xpose.msra.mxu0 0.0
        %2358 = vmatprep.subr.mxu0 0.0
        %2359 = vmatpush1.xpose.msra.mxu0 0.0
        %2360 = vmatprep.subr.mxu0 0.0
        %2361 = vmatpush1.xpose.msra.mxu0 0.0
        %2362 = vmatprep.subr.mxu0 0.0
        %2363 = vmatpush1.xpose.msra.mxu0 0.0
        %2364 = vmatprep.subr.mxu0 0.0
        %2365 = vmatpush1.xpose.msra.mxu0 0.0
        %2366 = vmatprep.subr.mxu0 0.0
        %2367 = vmatpush1.xpose.msra.mxu0 0.0
        %2368 = vmatprep.subr.mxu0 0.0
        %2369 = vmatpush1.xpose.msra.mxu0 0.0
        %2370 = vmatprep.subr.mxu0 0.0
        %2371 = vmatpush1.xpose.msra.mxu0 0.0
        %2372 = vmatprep.subr.mxu0 0.0
        %2373 = vmatpush1.xpose.msra.mxu0 0.0
        %2374 = vmatprep.subr.mxu0 0.0
        %2375 = vmatpush1.xpose.msra.mxu0 0.0
        %2376 = vmatprep.subr.mxu0 0.0
        %2377 = vmatpush1.xpose.msra.mxu0 0.0
        %2378 = vmatprep.subr.mxu0 0.0
        %2379 = vmatpush1.xpose.msra.mxu0 0.0
        %2380 = vmatprep.subr.mxu0 0.0
        %2381 = vmatpush1.xpose.msra.mxu0 0.0
        %2382 = vmatprep.subr.mxu0 0.0
        %2383 = vmatpush1.xpose.msra.mxu0 0.0
        %2384 = vmatprep.subr.mxu0 0.0
        %2385 = vmatpush1.xpose.msra.mxu0 0.0
        %2386 = vmatprep.subr.mxu0 0.0
        %2387 = vmatpush1.xpose.msra.mxu0 0.0
        %2388 = vmatprep.subr.mxu0 0.0
        %2389 = vmatpush1.xpose.msra.mxu0 0.0
        %2390 = vmatprep.mubr.f32.mxu0 0.0
        %2391 = vmatmul.mubr.f32.gmra.mrb[0].mxu0 %v2322
        %v2392 = vpop.f32.mrb[0].mxu0
        %v2393 = vadd.f32 0.0, %v2392
        %v2394 = vpop.f32.mrb[0].mxu0
        %2395 = vdwg.mxu0
        %2396 = vrot.lane.b32.xlu0 %v582, 112
        %v2397 = vpop.permute.xlu0 %2396
        %2398 = vrot.lane.b32.xlu0 %v587, 80
        %v2399 = vpop.permute.xlu0 %2398
        %v2400 = vsel %vm358, %v2397, 0
        %v2402 = vsel %vm358, %v2399, 0
        %2404 = vmatprep.subr.mxu0 0.0
        %2405 = vmatpush1.xpose.msra.mxu0 %v2402
        %2406 = vmatprep.subr.mxu0 0.0
        %2407 = vmatpush1.xpose.msra.mxu0 0.0
        %2408 = vmatprep.subr.mxu0 0.0
        %2409 = vmatpush1.xpose.msra.mxu0 0.0
        %2410 = vmatprep.subr.mxu0 0.0
        %2411 = vmatpush1.xpose.msra.mxu0 0.0
        %2412 = vmatprep.subr.mxu0 0.0
        %2413 = vmatpush1.xpose.msra.mxu0 0.0
        %2414 = vmatprep.subr.mxu0 0.0
        %2415 = vmatpush1.xpose.msra.mxu0 0.0
        %2416 = vmatprep.subr.mxu0 0.0
        %2417 = vmatpush1.xpose.msra.mxu0 0.0
        %2418 = vmatprep.subr.mxu0 0.0
        %2419 = vmatpush1.xpose.msra.mxu0 0.0
        %2420 = vmatprep.subr.mxu0 0.0
        %2421 = vmatpush1.xpose.msra.mxu0 0.0
        %2422 = vmatprep.subr.mxu0 0.0
        %2423 = vmatpush1.xpose.msra.mxu0 0.0
        %2424 = vmatprep.subr.mxu0 0.0
        %2425 = vmatpush1.xpose.msra.mxu0 0.0
        %2426 = vmatprep.subr.mxu0 0.0
        %2427 = vmatpush1.xpose.msra.mxu0 0.0
        %2428 = vmatprep.subr.mxu0 0.0
        %2429 = vmatpush1.xpose.msra.mxu0 0.0
        %2430 = vmatprep.subr.mxu0 0.0
        %2431 = vmatpush1.xpose.msra.mxu0 0.0
        %2432 = vmatprep.subr.mxu0 0.0
        %2433 = vmatpush1.xpose.msra.mxu0 0.0
        %2434 = vmatprep.subr.mxu0 0.0
        %2435 = vmatpush1.xpose.msra.mxu0 0.0
        %2436 = vmatprep.subr.mxu0 0.0
        %2437 = vmatpush1.xpose.msra.mxu0 0.0
        %2438 = vmatprep.subr.mxu0 0.0
        %2439 = vmatpush1.xpose.msra.mxu0 0.0
        %2440 = vmatprep.subr.mxu0 0.0
        %2441 = vmatpush1.xpose.msra.mxu0 0.0
        %2442 = vmatprep.subr.mxu0 0.0
        %2443 = vmatpush1.xpose.msra.mxu0 0.0
        %2444 = vmatprep.subr.mxu0 0.0
        %2445 = vmatpush1.xpose.msra.mxu0 0.0
        %2446 = vmatprep.subr.mxu0 0.0
        %2447 = vmatpush1.xpose.msra.mxu0 0.0
        %2448 = vmatprep.subr.mxu0 0.0
        %2449 = vmatpush1.xpose.msra.mxu0 0.0
        %2450 = vmatprep.subr.mxu0 0.0
        %2451 = vmatpush1.xpose.msra.mxu0 0.0
        %2452 = vmatprep.subr.mxu0 0.0
        %2453 = vmatpush1.xpose.msra.mxu0 0.0
        %2454 = vmatprep.subr.mxu0 0.0
        %2455 = vmatpush1.xpose.msra.mxu0 0.0
        %2456 = vmatprep.subr.mxu0 0.0
        %2457 = vmatpush1.xpose.msra.mxu0 0.0
        %2458 = vmatprep.subr.mxu0 0.0
        %2459 = vmatpush1.xpose.msra.mxu0 0.0
        %2460 = vmatprep.subr.mxu0 0.0
        %2461 = vmatpush1.xpose.msra.mxu0 0.0
        %2462 = vmatprep.subr.mxu0 0.0
        %2463 = vmatpush1.xpose.msra.mxu0 0.0
        %2464 = vmatprep.subr.mxu0 0.0
        %2465 = vmatpush1.xpose.msra.mxu0 0.0
        %2466 = vmatprep.subr.mxu0 0.0
        %2467 = vmatpush1.xpose.msra.mxu0 0.0
        %2468 = vmatprep.mubr.f32.mxu0 0.0
        %2469 = vmatmul.mubr.f32.gmra.mrb[0].mxu0 %v2400
        %v2470 = vpop.f32.mrb[0].mxu0
        %v2471 = vadd.f32 0.0, %v2470
        %v2472 = vpop.f32.mrb[0].mxu0
        %2473 = vdwg.mxu0
        %2474 = vrot.lane.b32.xlu0 %v592, 112
        %v2475 = vpop.permute.xlu0 %2474
        %2476 = vrot.lane.b32.xlu0 %v597, 80
        %v2477 = vpop.permute.xlu0 %2476
        %v2478 = vsel %vm358, %v2475, 0
        %v2480 = vsel %vm358, %v2477, 0
        %2482 = vmatprep.subr.mxu0 0.0
        %2483 = vmatpush1.xpose.msra.mxu0 %v2480
        %2484 = vmatprep.subr.mxu0 0.0
        %2485 = vmatpush1.xpose.msra.mxu0 0.0
        %2486 = vmatprep.subr.mxu0 0.0
        %2487 = vmatpush1.xpose.msra.mxu0 0.0
        %2488 = vmatprep.subr.mxu0 0.0
        %2489 = vmatpush1.xpose.msra.mxu0 0.0
        %2490 = vmatprep.subr.mxu0 0.0
        %2491 = vmatpush1.xpose.msra.mxu0 0.0
        %2492 = vmatprep.subr.mxu0 0.0
        %2493 = vmatpush1.xpose.msra.mxu0 0.0
        %2494 = vmatprep.subr.mxu0 0.0
        %2495 = vmatpush1.xpose.msra.mxu0 0.0
        %2496 = vmatprep.subr.mxu0 0.0
        %2497 = vmatpush1.xpose.msra.mxu0 0.0
        %2498 = vmatprep.subr.mxu0 0.0
        %2499 = vmatpush1.xpose.msra.mxu0 0.0
        %2500 = vmatprep.subr.mxu0 0.0
        %2501 = vmatpush1.xpose.msra.mxu0 0.0
        %2502 = vmatprep.subr.mxu0 0.0
        %2503 = vmatpush1.xpose.msra.mxu0 0.0
        %2504 = vmatprep.subr.mxu0 0.0
        %2505 = vmatpush1.xpose.msra.mxu0 0.0
        %2506 = vmatprep.subr.mxu0 0.0
        %2507 = vmatpush1.xpose.msra.mxu0 0.0
        %2508 = vmatprep.subr.mxu0 0.0
        %2509 = vmatpush1.xpose.msra.mxu0 0.0
        %2510 = vmatprep.subr.mxu0 0.0
        %2511 = vmatpush1.xpose.msra.mxu0 0.0
        %2512 = vmatprep.subr.mxu0 0.0
        %2513 = vmatpush1.xpose.msra.mxu0 0.0
        %2514 = vmatprep.subr.mxu0 0.0
        %2515 = vmatpush1.xpose.msra.mxu0 0.0
        %2516 = vmatprep.subr.mxu0 0.0
        %2517 = vmatpush1.xpose.msra.mxu0 0.0
        %2518 = vmatprep.subr.mxu0 0.0
        %2519 = vmatpush1.xpose.msra.mxu0 0.0
        %2520 = vmatprep.subr.mxu0 0.0
        %2521 = vmatpush1.xpose.msra.mxu0 0.0
        %2522 = vmatprep.subr.mxu0 0.0
        %2523 = vmatpush1.xpose.msra.mxu0 0.0
        %2524 = vmatprep.subr.mxu0 0.0
        %2525 = vmatpush1.xpose.msra.mxu0 0.0
        %2526 = vmatprep.subr.mxu0 0.0
        %2527 = vmatpush1.xpose.msra.mxu0 0.0
        %2528 = vmatprep.subr.mxu0 0.0
        %2529 = vmatpush1.xpose.msra.mxu0 0.0
        %2530 = vmatprep.subr.mxu0 0.0
        %2531 = vmatpush1.xpose.msra.mxu0 0.0
        %2532 = vmatprep.subr.mxu0 0.0
        %2533 = vmatpush1.xpose.msra.mxu0 0.0
        %2534 = vmatprep.subr.mxu0 0.0
        %2535 = vmatpush1.xpose.msra.mxu0 0.0
        %2536 = vmatprep.subr.mxu0 0.0
        %2537 = vmatpush1.xpose.msra.mxu0 0.0
        %2538 = vmatprep.subr.mxu0 0.0
        %2539 = vmatpush1.xpose.msra.mxu0 0.0
        %2540 = vmatprep.subr.mxu0 0.0
        %2541 = vmatpush1.xpose.msra.mxu0 0.0
        %2542 = vmatprep.subr.mxu0 0.0
        %2543 = vmatpush1.xpose.msra.mxu0 0.0
        %2544 = vmatprep.subr.mxu0 0.0
        %2545 = vmatpush1.xpose.msra.mxu0 0.0
        %2546 = vmatprep.mubr.f32.mxu0 0.0
        %2547 = vmatmul.mubr.f32.gmra.mrb[0].mxu0 %v2478
        %v2548 = vpop.f32.mrb[0].mxu0
        %v2549 = vadd.f32 0.0, %v2548
        %v2550 = vpop.f32.mrb[0].mxu0
        %2551 = vdwg.mxu0
        %2552 = vrot.lane.b32.xlu0 %v602, 112
        %v2553 = vpop.permute.xlu0 %2552
        %2554 = vrot.lane.b32.xlu0 %v607, 80
        %v2555 = vpop.permute.xlu0 %2554
        %v2556 = vsel %vm358, %v2553, 0
        %v2558 = vsel %vm358, %v2555, 0
        %2560 = vmatprep.subr.mxu0 0.0
        %2561 = vmatpush1.xpose.msra.mxu0 %v2558
        %2562 = vmatprep.subr.mxu0 0.0
        %2563 = vmatpush1.xpose.msra.mxu0 0.0
        %2564 = vmatprep.subr.mxu0 0.0
        %2565 = vmatpush1.xpose.msra.mxu0 0.0
        %2566 = vmatprep.subr.mxu0 0.0
        %2567 = vmatpush1.xpose.msra.mxu0 0.0
        %2568 = vmatprep.subr.mxu0 0.0
        %2569 = vmatpush1.xpose.msra.mxu0 0.0
        %2570 = vmatprep.subr.mxu0 0.0
        %2571 = vmatpush1.xpose.msra.mxu0 0.0
        %2572 = vmatprep.subr.mxu0 0.0
        %2573 = vmatpush1.xpose.msra.mxu0 0.0
        %2574 = vmatprep.subr.mxu0 0.0
        %2575 = vmatpush1.xpose.msra.mxu0 0.0
        %2576 = vmatprep.subr.mxu0 0.0
        %2577 = vmatpush1.xpose.msra.mxu0 0.0
        %2578 = vmatprep.subr.mxu0 0.0
        %2579 = vmatpush1.xpose.msra.mxu0 0.0
        %2580 = vmatprep.subr.mxu0 0.0
        %2581 = vmatpush1.xpose.msra.mxu0 0.0
        %2582 = vmatprep.subr.mxu0 0.0
        %2583 = vmatpush1.xpose.msra.mxu0 0.0
        %2584 = vmatprep.subr.mxu0 0.0
        %2585 = vmatpush1.xpose.msra.mxu0 0.0
        %2586 = vmatprep.subr.mxu0 0.0
        %2587 = vmatpush1.xpose.msra.mxu0 0.0
        %2588 = vmatprep.subr.mxu0 0.0
        %2589 = vmatpush1.xpose.msra.mxu0 0.0
        %2590 = vmatprep.subr.mxu0 0.0
        %2591 = vmatpush1.xpose.msra.mxu0 0.0
        %2592 = vmatprep.subr.mxu0 0.0
        %2593 = vmatpush1.xpose.msra.mxu0 0.0
        %2594 = vmatprep.subr.mxu0 0.0
        %2595 = vmatpush1.xpose.msra.mxu0 0.0
        %2596 = vmatprep.subr.mxu0 0.0
        %2597 = vmatpush1.xpose.msra.mxu0 0.0
        %2598 = vmatprep.subr.mxu0 0.0
        %2599 = vmatpush1.xpose.msra.mxu0 0.0
        %2600 = vmatprep.subr.mxu0 0.0
        %2601 = vmatpush1.xpose.msra.mxu0 0.0
        %2602 = vmatprep.subr.mxu0 0.0
        %2603 = vmatpush1.xpose.msra.mxu0 0.0
        %2604 = vmatprep.subr.mxu0 0.0
        %2605 = vmatpush1.xpose.msra.mxu0 0.0
        %2606 = vmatprep.subr.mxu0 0.0
        %2607 = vmatpush1.xpose.msra.mxu0 0.0
        %2608 = vmatprep.subr.mxu0 0.0
        %2609 = vmatpush1.xpose.msra.mxu0 0.0
        %2610 = vmatprep.subr.mxu0 0.0
        %2611 = vmatpush1.xpose.msra.mxu0 0.0
        %2612 = vmatprep.subr.mxu0 0.0
        %2613 = vmatpush1.xpose.msra.mxu0 0.0
        %2614 = vmatprep.subr.mxu0 0.0
        %2615 = vmatpush1.xpose.msra.mxu0 0.0
        %2616 = vmatprep.subr.mxu0 0.0
        %2617 = vmatpush1.xpose.msra.mxu0 0.0
        %2618 = vmatprep.subr.mxu0 0.0
        %2619 = vmatpush1.xpose.msra.mxu0 0.0
        %2620 = vmatprep.subr.mxu0 0.0
        %2621 = vmatpush1.xpose.msra.mxu0 0.0
        %2622 = vmatprep.subr.mxu0 0.0
        %2623 = vmatpush1.xpose.msra.mxu0 0.0
        %2624 = vmatprep.mubr.f32.mxu0 0.0
        %2625 = vmatmul.mubr.f32.gmra.mrb[0].mxu0 %v2556
        %v2626 = vpop.f32.mrb[0].mxu0
        %v2627 = vadd.f32 0.0, %v2626
        %v2628 = vpop.f32.mrb[0].mxu0
        %2629 = vdwg.mxu0
        %2630 = vrot.lane.b32.xlu0 %v612, 112
        %v2631 = vpop.permute.xlu0 %2630
        %2632 = vrot.lane.b32.xlu0 %v617, 80
        %v2633 = vpop.permute.xlu0 %2632
        %v2634 = vsel %vm358, %v2631, 0
        %v2636 = vsel %vm358, %v2633, 0
        %2638 = vmatprep.subr.mxu0 0.0
        %2639 = vmatpush1.xpose.msra.mxu0 %v2636
        %2640 = vmatprep.subr.mxu0 0.0
        %2641 = vmatpush1.xpose.msra.mxu0 0.0
        %2642 = vmatprep.subr.mxu0 0.0
        %2643 = vmatpush1.xpose.msra.mxu0 0.0
        %2644 = vmatprep.subr.mxu0 0.0
        %2645 = vmatpush1.xpose.msra.mxu0 0.0
        %2646 = vmatprep.subr.mxu0 0.0
        %2647 = vmatpush1.xpose.msra.mxu0 0.0
        %2648 = vmatprep.subr.mxu0 0.0
        %2649 = vmatpush1.xpose.msra.mxu0 0.0
        %2650 = vmatprep.subr.mxu0 0.0
        %2651 = vmatpush1.xpose.msra.mxu0 0.0
        %2652 = vmatprep.subr.mxu0 0.0
        %2653 = vmatpush1.xpose.msra.mxu0 0.0
        %2654 = vmatprep.subr.mxu0 0.0
        %2655 = vmatpush1.xpose.msra.mxu0 0.0
        %2656 = vmatprep.subr.mxu0 0.0
        %2657 = vmatpush1.xpose.msra.mxu0 0.0
        %2658 = vmatprep.subr.mxu0 0.0
        %2659 = vmatpush1.xpose.msra.mxu0 0.0
        %2660 = vmatprep.subr.mxu0 0.0
        %2661 = vmatpush1.xpose.msra.mxu0 0.0
        %2662 = vmatprep.subr.mxu0 0.0
        %2663 = vmatpush1.xpose.msra.mxu0 0.0
        %2664 = vmatprep.subr.mxu0 0.0
        %2665 = vmatpush1.xpose.msra.mxu0 0.0
        %2666 = vmatprep.subr.mxu0 0.0
        %2667 = vmatpush1.xpose.msra.mxu0 0.0
        %2668 = vmatprep.subr.mxu0 0.0
        %2669 = vmatpush1.xpose.msra.mxu0 0.0
        %2670 = vmatprep.subr.mxu0 0.0
        %2671 = vmatpush1.xpose.msra.mxu0 0.0
        %2672 = vmatprep.subr.mxu0 0.0
        %2673 = vmatpush1.xpose.msra.mxu0 0.0
        %2674 = vmatprep.subr.mxu0 0.0
        %2675 = vmatpush1.xpose.msra.mxu0 0.0
        %2676 = vmatprep.subr.mxu0 0.0
        %2677 = vmatpush1.xpose.msra.mxu0 0.0
        %2678 = vmatprep.subr.mxu0 0.0
        %2679 = vmatpush1.xpose.msra.mxu0 0.0
        %2680 = vmatprep.subr.mxu0 0.0
        %2681 = vmatpush1.xpose.msra.mxu0 0.0
        %2682 = vmatprep.subr.mxu0 0.0
        %2683 = vmatpush1.xpose.msra.mxu0 0.0
        %2684 = vmatprep.subr.mxu0 0.0
        %2685 = vmatpush1.xpose.msra.mxu0 0.0
        %2686 = vmatprep.subr.mxu0 0.0
        %2687 = vmatpush1.xpose.msra.mxu0 0.0
        %2688 = vmatprep.subr.mxu0 0.0
        %2689 = vmatpush1.xpose.msra.mxu0 0.0
        %2690 = vmatprep.subr.mxu0 0.0
        %2691 = vmatpush1.xpose.msra.mxu0 0.0
        %2692 = vmatprep.subr.mxu0 0.0
        %2693 = vmatpush1.xpose.msra.mxu0 0.0
        %2694 = vmatprep.subr.mxu0 0.0
        %2695 = vmatpush1.xpose.msra.mxu0 0.0
        %2696 = vmatprep.subr.mxu0 0.0
        %2697 = vmatpush1.xpose.msra.mxu0 0.0
        %2698 = vmatprep.subr.mxu0 0.0
        %2699 = vmatpush1.xpose.msra.mxu0 0.0
        %2700 = vmatprep.subr.mxu0 0.0
        %2701 = vmatpush1.xpose.msra.mxu0 0.0
        %2702 = vmatprep.mubr.f32.mxu0 0.0
        %2703 = vmatmul.mubr.f32.gmra.mrb[0].mxu0 %v2634
        %v2704 = vpop.f32.mrb[0].mxu0
        %v2705 = vadd.f32 0.0, %v2704
        %v2706 = vpop.f32.mrb[0].mxu0
        %2707 = vdwg.mxu0
        %2708 = vrot.lane.b32.xlu0 %v622, 112
        %v2709 = vpop.permute.xlu0 %2708
        %2710 = vrot.lane.b32.xlu0 %v627, 80
        %v2711 = vpop.permute.xlu0 %2710
        %v2712 = vsel %vm358, %v2709, 0
        %v2714 = vsel %vm358, %v2711, 0
        %2716 = vmatprep.subr.mxu0 0.0
        %2717 = vmatpush1.xpose.msra.mxu0 %v2714
        %2718 = vmatprep.subr.mxu0 0.0
        %2719 = vmatpush1.xpose.msra.mxu0 0.0
        %2720 = vmatprep.subr.mxu0 0.0
        %2721 = vmatpush1.xpose.msra.mxu0 0.0
        %2722 = vmatprep.subr.mxu0 0.0
        %2723 = vmatpush1.xpose.msra.mxu0 0.0
        %2724 = vmatprep.subr.mxu0 0.0
        %2725 = vmatpush1.xpose.msra.mxu0 0.0
        %2726 = vmatprep.subr.mxu0 0.0
        %2727 = vmatpush1.xpose.msra.mxu0 0.0
        %2728 = vmatprep.subr.mxu0 0.0
        %2729 = vmatpush1.xpose.msra.mxu0 0.0
        %2730 = vmatprep.subr.mxu0 0.0
        %2731 = vmatpush1.xpose.msra.mxu0 0.0
        %2732 = vmatprep.subr.mxu0 0.0
        %2733 = vmatpush1.xpose.msra.mxu0 0.0
        %2734 = vmatprep.subr.mxu0 0.0
        %2735 = vmatpush1.xpose.msra.mxu0 0.0
        %2736 = vmatprep.subr.mxu0 0.0
        %2737 = vmatpush1.xpose.msra.mxu0 0.0
        %2738 = vmatprep.subr.mxu0 0.0
        %2739 = vmatpush1.xpose.msra.mxu0 0.0
        %2740 = vmatprep.subr.mxu0 0.0
        %2741 = vmatpush1.xpose.msra.mxu0 0.0
        %2742 = vmatprep.subr.mxu0 0.0
        %2743 = vmatpush1.xpose.msra.mxu0 0.0
        %2744 = vmatprep.subr.mxu0 0.0
        %2745 = vmatpush1.xpose.msra.mxu0 0.0
        %2746 = vmatprep.subr.mxu0 0.0
        %2747 = vmatpush1.xpose.msra.mxu0 0.0
        %2748 = vmatprep.subr.mxu0 0.0
        %2749 = vmatpush1.xpose.msra.mxu0 0.0
        %2750 = vmatprep.subr.mxu0 0.0
        %2751 = vmatpush1.xpose.msra.mxu0 0.0
        %2752 = vmatprep.subr.mxu0 0.0
        %2753 = vmatpush1.xpose.msra.mxu0 0.0
        %2754 = vmatprep.subr.mxu0 0.0
        %2755 = vmatpush1.xpose.msra.mxu0 0.0
        %2756 = vmatprep.subr.mxu0 0.0
        %2757 = vmatpush1.xpose.msra.mxu0 0.0
        %2758 = vmatprep.subr.mxu0 0.0
        %2759 = vmatpush1.xpose.msra.mxu0 0.0
        %2760 = vmatprep.subr.mxu0 0.0
        %2761 = vmatpush1.xpose.msra.mxu0 0.0
        %2762 = vmatprep.subr.mxu0 0.0
        %2763 = vmatpush1.xpose.msra.mxu0 0.0
        %2764 = vmatprep.subr.mxu0 0.0
        %2765 = vmatpush1.xpose.msra.mxu0 0.0
        %2766 = vmatprep.subr.mxu0 0.0
        %2767 = vmatpush1.xpose.msra.mxu0 0.0
        %2768 = vmatprep.subr.mxu0 0.0
        %2769 = vmatpush1.xpose.msra.mxu0 0.0
        %2770 = vmatprep.subr.mxu0 0.0
        %2771 = vmatpush1.xpose.msra.mxu0 0.0
        %2772 = vmatprep.subr.mxu0 0.0
        %2773 = vmatpush1.xpose.msra.mxu0 0.0
        %2774 = vmatprep.subr.mxu0 0.0
        %2775 = vmatpush1.xpose.msra.mxu0 0.0
        %2776 = vmatprep.subr.mxu0 0.0
        %2777 = vmatpush1.xpose.msra.mxu0 0.0
        %2778 = vmatprep.subr.mxu0 0.0
        %2779 = vmatpush1.xpose.msra.mxu0 0.0
        %2780 = vmatprep.mubr.f32.mxu0 0.0
        %2781 = vmatmul.mubr.f32.gmra.mrb[0].mxu0 %v2712
        %v2782 = vpop.f32.mrb[0].mxu0
        %v2783 = vadd.f32 0.0, %v2782
        %v2784 = vpop.f32.mrb[0].mxu0
        %2785 = vdwg.mxu0
        %2786 = vrot.lane.b32.xlu0 %v632, 112
        %v2787 = vpop.permute.xlu0 %2786
        %2788 = vrot.lane.b32.xlu0 %v637, 80
        %v2789 = vpop.permute.xlu0 %2788
        %v2790 = vsel %vm358, %v2787, 0
        %v2792 = vsel %vm358, %v2789, 0
        %2794 = vmatprep.subr.mxu0 0.0
        %2795 = vmatpush1.xpose.msra.mxu0 %v2792
        %2796 = vmatprep.subr.mxu0 0.0
        %2797 = vmatpush1.xpose.msra.mxu0 0.0
        %2798 = vmatprep.subr.mxu0 0.0
        %2799 = vmatpush1.xpose.msra.mxu0 0.0
        %2800 = vmatprep.subr.mxu0 0.0
        %2801 = vmatpush1.xpose.msra.mxu0 0.0
        %2802 = vmatprep.subr.mxu0 0.0
        %2803 = vmatpush1.xpose.msra.mxu0 0.0
        %2804 = vmatprep.subr.mxu0 0.0
        %2805 = vmatpush1.xpose.msra.mxu0 0.0
        %2806 = vmatprep.subr.mxu0 0.0
        %2807 = vmatpush1.xpose.msra.mxu0 0.0
        %2808 = vmatprep.subr.mxu0 0.0
        %2809 = vmatpush1.xpose.msra.mxu0 0.0
        %2810 = vmatprep.subr.mxu0 0.0
        %2811 = vmatpush1.xpose.msra.mxu0 0.0
        %2812 = vmatprep.subr.mxu0 0.0
        %2813 = vmatpush1.xpose.msra.mxu0 0.0
        %2814 = vmatprep.subr.mxu0 0.0
        %2815 = vmatpush1.xpose.msra.mxu0 0.0
        %2816 = vmatprep.subr.mxu0 0.0
        %2817 = vmatpush1.xpose.msra.mxu0 0.0
        %2818 = vmatprep.subr.mxu0 0.0
        %2819 = vmatpush1.xpose.msra.mxu0 0.0
        %2820 = vmatprep.subr.mxu0 0.0
        %2821 = vmatpush1.xpose.msra.mxu0 0.0
        %2822 = vmatprep.subr.mxu0 0.0
        %2823 = vmatpush1.xpose.msra.mxu0 0.0
        %2824 = vmatprep.subr.mxu0 0.0
        %2825 = vmatpush1.xpose.msra.mxu0 0.0
        %2826 = vmatprep.subr.mxu0 0.0
        %2827 = vmatpush1.xpose.msra.mxu0 0.0
        %2828 = vmatprep.subr.mxu0 0.0
        %2829 = vmatpush1.xpose.msra.mxu0 0.0
        %2830 = vmatprep.subr.mxu0 0.0
        %2831 = vmatpush1.xpose.msra.mxu0 0.0
        %2832 = vmatprep.subr.mxu0 0.0
        %2833 = vmatpush1.xpose.msra.mxu0 0.0
        %2834 = vmatprep.subr.mxu0 0.0
        %2835 = vmatpush1.xpose.msra.mxu0 0.0
        %2836 = vmatprep.subr.mxu0 0.0
        %2837 = vmatpush1.xpose.msra.mxu0 0.0
        %2838 = vmatprep.subr.mxu0 0.0
        %2839 = vmatpush1.xpose.msra.mxu0 0.0
        %2840 = vmatprep.subr.mxu0 0.0
        %2841 = vmatpush1.xpose.msra.mxu0 0.0
        %2842 = vmatprep.subr.mxu0 0.0
        %2843 = vmatpush1.xpose.msra.mxu0 0.0
        %2844 = vmatprep.subr.mxu0 0.0
        %2845 = vmatpush1.xpose.msra.mxu0 0.0
        %2846 = vmatprep.subr.mxu0 0.0
        %2847 = vmatpush1.xpose.msra.mxu0 0.0
        %2848 = vmatprep.subr.mxu0 0.0
        %2849 = vmatpush1.xpose.msra.mxu0 0.0
        %2850 = vmatprep.subr.mxu0 0.0
        %2851 = vmatpush1.xpose.msra.mxu0 0.0
        %2852 = vmatprep.subr.mxu0 0.0
        %2853 = vmatpush1.xpose.msra.mxu0 0.0
        %2854 = vmatprep.subr.mxu0 0.0
        %2855 = vmatpush1.xpose.msra.mxu0 0.0
        %2856 = vmatprep.subr.mxu0 0.0
        %2857 = vmatpush1.xpose.msra.mxu0 0.0
        %2858 = vmatprep.mubr.f32.mxu0 0.0
        %2859 = vmatmul.mubr.f32.gmra.mrb[0].mxu0 %v2790
        %v2860 = vpop.f32.mrb[0].mxu0
        %v2861 = vadd.f32 0.0, %v2860
        %v2862 = vpop.f32.mrb[0].mxu0
        %2863 = vdwg.mxu0
        %2864 = vrot.lane.b32.xlu0 %v642, 112
        %v2865 = vpop.permute.xlu0 %2864
        %2866 = vrot.lane.b32.xlu0 %v647, 80
        %v2867 = vpop.permute.xlu0 %2866
        %v2868 = vsel %vm358, %v2865, 0
        %v2870 = vsel %vm358, %v2867, 0
        %2872 = vmatprep.subr.mxu0 0.0
        %2873 = vmatpush1.xpose.msra.mxu0 %v2870
        %2874 = vmatprep.subr.mxu0 0.0
        %2875 = vmatpush1.xpose.msra.mxu0 0.0
        %2876 = vmatprep.subr.mxu0 0.0
        %2877 = vmatpush1.xpose.msra.mxu0 0.0
        %2878 = vmatprep.subr.mxu0 0.0
        %2879 = vmatpush1.xpose.msra.mxu0 0.0
        %2880 = vmatprep.subr.mxu0 0.0
        %2881 = vmatpush1.xpose.msra.mxu0 0.0
        %2882 = vmatprep.subr.mxu0 0.0
        %2883 = vmatpush1.xpose.msra.mxu0 0.0
        %2884 = vmatprep.subr.mxu0 0.0
        %2885 = vmatpush1.xpose.msra.mxu0 0.0
        %2886 = vmatprep.subr.mxu0 0.0
        %2887 = vmatpush1.xpose.msra.mxu0 0.0
        %2888 = vmatprep.subr.mxu0 0.0
        %2889 = vmatpush1.xpose.msra.mxu0 0.0
        %2890 = vmatprep.subr.mxu0 0.0
        %2891 = vmatpush1.xpose.msra.mxu0 0.0
        %2892 = vmatprep.subr.mxu0 0.0
        %2893 = vmatpush1.xpose.msra.mxu0 0.0
        %2894 = vmatprep.subr.mxu0 0.0
        %2895 = vmatpush1.xpose.msra.mxu0 0.0
        %2896 = vmatprep.subr.mxu0 0.0
        %2897 = vmatpush1.xpose.msra.mxu0 0.0
        %2898 = vmatprep.subr.mxu0 0.0
        %2899 = vmatpush1.xpose.msra.mxu0 0.0
        %2900 = vmatprep.subr.mxu0 0.0
        %2901 = vmatpush1.xpose.msra.mxu0 0.0
        %2902 = vmatprep.subr.mxu0 0.0
        %2903 = vmatpush1.xpose.msra.mxu0 0.0
        %2904 = vmatprep.subr.mxu0 0.0
        %2905 = vmatpush1.xpose.msra.mxu0 0.0
        %2906 = vmatprep.subr.mxu0 0.0
        %2907 = vmatpush1.xpose.msra.mxu0 0.0
        %2908 = vmatprep.subr.mxu0 0.0
        %2909 = vmatpush1.xpose.msra.mxu0 0.0
        %2910 = vmatprep.subr.mxu0 0.0
        %2911 = vmatpush1.xpose.msra.mxu0 0.0
        %2912 = vmatprep.subr.mxu0 0.0
        %2913 = vmatpush1.xpose.msra.mxu0 0.0
        %2914 = vmatprep.subr.mxu0 0.0
        %2915 = vmatpush1.xpose.msra.mxu0 0.0
        %2916 = vmatprep.subr.mxu0 0.0
        %2917 = vmatpush1.xpose.msra.mxu0 0.0
        %2918 = vmatprep.subr.mxu0 0.0
        %2919 = vmatpush1.xpose.msra.mxu0 0.0
        %2920 = vmatprep.subr.mxu0 0.0
        %2921 = vmatpush1.xpose.msra.mxu0 0.0
        %2922 = vmatprep.subr.mxu0 0.0
        %2923 = vmatpush1.xpose.msra.mxu0 0.0
        %2924 = vmatprep.subr.mxu0 0.0
        %2925 = vmatpush1.xpose.msra.mxu0 0.0
        %2926 = vmatprep.subr.mxu0 0.0
        %2927 = vmatpush1.xpose.msra.mxu0 0.0
        %2928 = vmatprep.subr.mxu0 0.0
        %2929 = vmatpush1.xpose.msra.mxu0 0.0
        %2930 = vmatprep.subr.mxu0 0.0
        %2931 = vmatpush1.xpose.msra.mxu0 0.0
        %2932 = vmatprep.subr.mxu0 0.0
        %2933 = vmatpush1.xpose.msra.mxu0 0.0
        %2934 = vmatprep.subr.mxu0 0.0
        %2935 = vmatpush1.xpose.msra.mxu0 0.0
        %2936 = vmatprep.mubr.f32.mxu0 0.0
        %2937 = vmatmul.mubr.f32.gmra.mrb[0].mxu0 %v2868
        %v2938 = vpop.f32.mrb[0].mxu0
        %v2939 = vadd.f32 0.0, %v2938
        %v2940 = vpop.f32.mrb[0].mxu0
        %2941 = vdwg.mxu0
        %2942 = vrot.lane.b32.xlu0 %v652, 112
        %v2943 = vpop.permute.xlu0 %2942
        %2944 = vrot.lane.b32.xlu0 %v657, 80
        %v2945 = vpop.permute.xlu0 %2944
        %v2946 = vsel %vm358, %v2943, 0
        %v2948 = vsel %vm358, %v2945, 0
        %2950 = vmatprep.subr.mxu0 0.0
        %2951 = vmatpush1.xpose.msra.mxu0 %v2948
        %2952 = vmatprep.subr.mxu0 0.0
        %2953 = vmatpush1.xpose.msra.mxu0 0.0
        %2954 = vmatprep.subr.mxu0 0.0
        %2955 = vmatpush1.xpose.msra.mxu0 0.0
        %2956 = vmatprep.subr.mxu0 0.0
        %2957 = vmatpush1.xpose.msra.mxu0 0.0
        %2958 = vmatprep.subr.mxu0 0.0
        %2959 = vmatpush1.xpose.msra.mxu0 0.0
        %2960 = vmatprep.subr.mxu0 0.0
        %2961 = vmatpush1.xpose.msra.mxu0 0.0
        %2962 = vmatprep.subr.mxu0 0.0
        %2963 = vmatpush1.xpose.msra.mxu0 0.0
        %2964 = vmatprep.subr.mxu0 0.0
        %2965 = vmatpush1.xpose.msra.mxu0 0.0
        %2966 = vmatprep.subr.mxu0 0.0
        %2967 = vmatpush1.xpose.msra.mxu0 0.0
        %2968 = vmatprep.subr.mxu0 0.0
        %2969 = vmatpush1.xpose.msra.mxu0 0.0
        %2970 = vmatprep.subr.mxu0 0.0
        %2971 = vmatpush1.xpose.msra.mxu0 0.0
        %2972 = vmatprep.subr.mxu0 0.0
        %2973 = vmatpush1.xpose.msra.mxu0 0.0
        %2974 = vmatprep.subr.mxu0 0.0
        %2975 = vmatpush1.xpose.msra.mxu0 0.0
        %2976 = vmatprep.subr.mxu0 0.0
        %2977 = vmatpush1.xpose.msra.mxu0 0.0
        %2978 = vmatprep.subr.mxu0 0.0
        %2979 = vmatpush1.xpose.msra.mxu0 0.0
        %2980 = vmatprep.subr.mxu0 0.0
        %2981 = vmatpush1.xpose.msra.mxu0 0.0
        %2982 = vmatprep.subr.mxu0 0.0
        %2983 = vmatpush1.xpose.msra.mxu0 0.0
        %2984 = vmatprep.subr.mxu0 0.0
        %2985 = vmatpush1.xpose.msra.mxu0 0.0
        %2986 = vmatprep.subr.mxu0 0.0
        %2987 = vmatpush1.xpose.msra.mxu0 0.0
        %2988 = vmatprep.subr.mxu0 0.0
        %2989 = vmatpush1.xpose.msra.mxu0 0.0
        %2990 = vmatprep.subr.mxu0 0.0
        %2991 = vmatpush1.xpose.msra.mxu0 0.0
        %2992 = vmatprep.subr.mxu0 0.0
        %2993 = vmatpush1.xpose.msra.mxu0 0.0
        %2994 = vmatprep.subr.mxu0 0.0
        %2995 = vmatpush1.xpose.msra.mxu0 0.0
        %2996 = vmatprep.subr.mxu0 0.0
        %2997 = vmatpush1.xpose.msra.mxu0 0.0
        %2998 = vmatprep.subr.mxu0 0.0
        %2999 = vmatpush1.xpose.msra.mxu0 0.0
        %3000 = vmatprep.subr.mxu0 0.0
        %3001 = vmatpush1.xpose.msra.mxu0 0.0
        %3002 = vmatprep.subr.mxu0 0.0
        %3003 = vmatpush1.xpose.msra.mxu0 0.0
        %3004 = vmatprep.subr.mxu0 0.0
        %3005 = vmatpush1.xpose.msra.mxu0 0.0
        %3006 = vmatprep.subr.mxu0 0.0
        %3007 = vmatpush1.xpose.msra.mxu0 0.0
        %3008 = vmatprep.subr.mxu0 0.0
        %3009 = vmatpush1.xpose.msra.mxu0 0.0
        %3010 = vmatprep.subr.mxu0 0.0
        %3011 = vmatpush1.xpose.msra.mxu0 0.0
        %3012 = vmatprep.subr.mxu0 0.0
        %3013 = vmatpush1.xpose.msra.mxu0 0.0
        %3014 = vmatprep.mubr.f32.mxu0 0.0
        %3015 = vmatmul.mubr.f32.gmra.mrb[0].mxu0 %v2946
        %v3016 = vpop.f32.mrb[0].mxu0
        %v3017 = vadd.f32 0.0, %v3016
        %v3018 = vpop.f32.mrb[0].mxu0
        %3019 = vdwg.mxu0
        %3020 = vrot.lane.b32.xlu0 %v662, 112
        %v3021 = vpop.permute.xlu0 %3020
        %3022 = vrot.lane.b32.xlu0 %v667, 80
        %v3023 = vpop.permute.xlu0 %3022
        %v3024 = vsel %vm358, %v3021, 0
        %v3026 = vsel %vm358, %v3023, 0
        %3028 = vmatprep.subr.mxu0 0.0
        %3029 = vmatpush1.xpose.msra.mxu0 %v3026
        %3030 = vmatprep.subr.mxu0 0.0
        %3031 = vmatpush1.xpose.msra.mxu0 0.0
        %3032 = vmatprep.subr.mxu0 0.0
        %3033 = vmatpush1.xpose.msra.mxu0 0.0
        %3034 = vmatprep.subr.mxu0 0.0
        %3035 = vmatpush1.xpose.msra.mxu0 0.0
        %3036 = vmatprep.subr.mxu0 0.0
        %3037 = vmatpush1.xpose.msra.mxu0 0.0
        %3038 = vmatprep.subr.mxu0 0.0
        %3039 = vmatpush1.xpose.msra.mxu0 0.0
        %3040 = vmatprep.subr.mxu0 0.0
        %3041 = vmatpush1.xpose.msra.mxu0 0.0
        %3042 = vmatprep.subr.mxu0 0.0
        %3043 = vmatpush1.xpose.msra.mxu0 0.0
        %3044 = vmatprep.subr.mxu0 0.0
        %3045 = vmatpush1.xpose.msra.mxu0 0.0
        %3046 = vmatprep.subr.mxu0 0.0
        %3047 = vmatpush1.xpose.msra.mxu0 0.0
        %3048 = vmatprep.subr.mxu0 0.0
        %3049 = vmatpush1.xpose.msra.mxu0 0.0
        %3050 = vmatprep.subr.mxu0 0.0
        %3051 = vmatpush1.xpose.msra.mxu0 0.0
        %3052 = vmatprep.subr.mxu0 0.0
        %3053 = vmatpush1.xpose.msra.mxu0 0.0
        %3054 = vmatprep.subr.mxu0 0.0
        %3055 = vmatpush1.xpose.msra.mxu0 0.0
        %3056 = vmatprep.subr.mxu0 0.0
        %3057 = vmatpush1.xpose.msra.mxu0 0.0
        %3058 = vmatprep.subr.mxu0 0.0
        %3059 = vmatpush1.xpose.msra.mxu0 0.0
        %3060 = vmatprep.subr.mxu0 0.0
        %3061 = vmatpush1.xpose.msra.mxu0 0.0
        %3062 = vmatprep.subr.mxu0 0.0
        %3063 = vmatpush1.xpose.msra.mxu0 0.0
        %3064 = vmatprep.subr.mxu0 0.0
        %3065 = vmatpush1.xpose.msra.mxu0 0.0
        %3066 = vmatprep.subr.mxu0 0.0
        %3067 = vmatpush1.xpose.msra.mxu0 0.0
        %3068 = vmatprep.subr.mxu0 0.0
        %3069 = vmatpush1.xpose.msra.mxu0 0.0
        %3070 = vmatprep.subr.mxu0 0.0
        %3071 = vmatpush1.xpose.msra.mxu0 0.0
        %3072 = vmatprep.subr.mxu0 0.0
        %3073 = vmatpush1.xpose.msra.mxu0 0.0
        %3074 = vmatprep.subr.mxu0 0.0
        %3075 = vmatpush1.xpose.msra.mxu0 0.0
        %3076 = vmatprep.subr.mxu0 0.0
        %3077 = vmatpush1.xpose.msra.mxu0 0.0
        %3078 = vmatprep.subr.mxu0 0.0
        %3079 = vmatpush1.xpose.msra.mxu0 0.0
        %3080 = vmatprep.subr.mxu0 0.0
        %3081 = vmatpush1.xpose.msra.mxu0 0.0
        %3082 = vmatprep.subr.mxu0 0.0
        %3083 = vmatpush1.xpose.msra.mxu0 0.0
        %3084 = vmatprep.subr.mxu0 0.0
        %3085 = vmatpush1.xpose.msra.mxu0 0.0
        %3086 = vmatprep.subr.mxu0 0.0
        %3087 = vmatpush1.xpose.msra.mxu0 0.0
        %3088 = vmatprep.subr.mxu0 0.0
        %3089 = vmatpush1.xpose.msra.mxu0 0.0
        %3090 = vmatprep.subr.mxu0 0.0
        %3091 = vmatpush1.xpose.msra.mxu0 0.0
        %3092 = vmatprep.mubr.f32.mxu0 0.0
        %3093 = vmatmul.mubr.f32.gmra.mrb[0].mxu0 %v3024
        %v3094 = vpop.f32.mrb[0].mxu0
        %v3095 = vadd.f32 0.0, %v3094
        %v3096 = vpop.f32.mrb[0].mxu0
        %3097 = vdwg.mxu0
        %3098 = vrot.lane.b32.xlu0 %v672, 112
        %v3099 = vpop.permute.xlu0 %3098
        %3100 = vrot.lane.b32.xlu0 %v677, 80
        %v3101 = vpop.permute.xlu0 %3100
        %v3102 = vsel %vm358, %v3099, 0
        %v3104 = vsel %vm358, %v3101, 0
        %3106 = vmatprep.subr.mxu0 0.0
        %3107 = vmatpush1.xpose.msra.mxu0 %v3104
        %3108 = vmatprep.subr.mxu0 0.0
        %3109 = vmatpush1.xpose.msra.mxu0 0.0
        %3110 = vmatprep.subr.mxu0 0.0
        %3111 = vmatpush1.xpose.msra.mxu0 0.0
        %3112 = vmatprep.subr.mxu0 0.0
        %3113 = vmatpush1.xpose.msra.mxu0 0.0
        %3114 = vmatprep.subr.mxu0 0.0
        %3115 = vmatpush1.xpose.msra.mxu0 0.0
        %3116 = vmatprep.subr.mxu0 0.0
        %3117 = vmatpush1.xpose.msra.mxu0 0.0
        %3118 = vmatprep.subr.mxu0 0.0
        %3119 = vmatpush1.xpose.msra.mxu0 0.0
        %3120 = vmatprep.subr.mxu0 0.0
        %3121 = vmatpush1.xpose.msra.mxu0 0.0
        %3122 = vmatprep.subr.mxu0 0.0
        %3123 = vmatpush1.xpose.msra.mxu0 0.0
        %3124 = vmatprep.subr.mxu0 0.0
        %3125 = vmatpush1.xpose.msra.mxu0 0.0
        %3126 = vmatprep.subr.mxu0 0.0
        %3127 = vmatpush1.xpose.msra.mxu0 0.0
        %3128 = vmatprep.subr.mxu0 0.0
        %3129 = vmatpush1.xpose.msra.mxu0 0.0
        %3130 = vmatprep.subr.mxu0 0.0
        %3131 = vmatpush1.xpose.msra.mxu0 0.0
        %3132 = vmatprep.subr.mxu0 0.0
        %3133 = vmatpush1.xpose.msra.mxu0 0.0
        %3134 = vmatprep.subr.mxu0 0.0
        %3135 = vmatpush1.xpose.msra.mxu0 0.0
        %3136 = vmatprep.subr.mxu0 0.0
        %3137 = vmatpush1.xpose.msra.mxu0 0.0
        %3138 = vmatprep.subr.mxu0 0.0
        %3139 = vmatpush1.xpose.msra.mxu0 0.0
        %3140 = vmatprep.subr.mxu0 0.0
        %3141 = vmatpush1.xpose.msra.mxu0 0.0
        %3142 = vmatprep.subr.mxu0 0.0
        %3143 = vmatpush1.xpose.msra.mxu0 0.0
        %3144 = vmatprep.subr.mxu0 0.0
        %3145 = vmatpush1.xpose.msra.mxu0 0.0
        %3146 = vmatprep.subr.mxu0 0.0
        %3147 = vmatpush1.xpose.msra.mxu0 0.0
        %3148 = vmatprep.subr.mxu0 0.0
        %3149 = vmatpush1.xpose.msra.mxu0 0.0
        %3150 = vmatprep.subr.mxu0 0.0
        %3151 = vmatpush1.xpose.msra.mxu0 0.0
        %3152 = vmatprep.subr.mxu0 0.0
        %3153 = vmatpush1.xpose.msra.mxu0 0.0
        %3154 = vmatprep.subr.mxu0 0.0
        %3155 = vmatpush1.xpose.msra.mxu0 0.0
        %3156 = vmatprep.subr.mxu0 0.0
        %3157 = vmatpush1.xpose.msra.mxu0 0.0
        %3158 = vmatprep.subr.mxu0 0.0
        %3159 = vmatpush1.xpose.msra.mxu0 0.0
        %3160 = vmatprep.subr.mxu0 0.0
        %3161 = vmatpush1.xpose.msra.mxu0 0.0
        %3162 = vmatprep.subr.mxu0 0.0
        %3163 = vmatpush1.xpose.msra.mxu0 0.0
        %3164 = vmatprep.subr.mxu0 0.0
        %3165 = vmatpush1.xpose.msra.mxu0 0.0
        %3166 = vmatprep.subr.mxu0 0.0
        %3167 = vmatpush1.xpose.msra.mxu0 0.0
        %3168 = vmatprep.subr.mxu0 0.0
        %3169 = vmatpush1.xpose.msra.mxu0 0.0
        %3170 = vmatprep.mubr.f32.mxu0 0.0
        %3171 = vmatmul.mubr.f32.gmra.mrb[0].mxu0 %v3102
        %v3172 = vpop.f32.mrb[0].mxu0
        %v3173 = vadd.f32 0.0, %v3172
        %v3174 = vpop.f32.mrb[0].mxu0
        %3175 = vdwg.mxu0
        %vm3176 = vcmask 64512
        %v3177 = vsel %vm3176, %v755, -inf
        %3178 = vmax.xlane.f32.xlu0 %v3177
        %v3179 = vpop.xlane.xlu0 %3178
        %v3180 = vsel %vm3176, %v833, -inf
        %3181 = vmax.xlane.f32.xlu0 %v3180
        %v3182 = vpop.xlane.xlu0 %3181
        %v3183 = vsel %vm3176, %v911, -inf
        %3184 = vmax.xlane.f32.xlu0 %v3183
        %v3185 = vpop.xlane.xlu0 %3184
        %v3186 = vsel %vm3176, %v989, -inf
        %3187 = vmax.xlane.f32.xlu0 %v3186
        %v3188 = vpop.xlane.xlu0 %3187
        %v3189 = vsel %vm3176, %v1067, -inf
        %3190 = vmax.xlane.f32.xlu0 %v3189
        %v3191 = vpop.xlane.xlu0 %3190
        %v3192 = vsel %vm3176, %v1145, -inf
        %3193 = vmax.xlane.f32.xlu0 %v3192
        %v3194 = vpop.xlane.xlu0 %3193
        %v3195 = vsel %vm3176, %v1223, -inf
        %3196 = vmax.xlane.f32.xlu0 %v3195
        %v3197 = vpop.xlane.xlu0 %3196
        %v3198 = vsel %vm3176, %v1301, -inf
        %3199 = vmax.xlane.f32.xlu0 %v3198
        %v3200 = vpop.xlane.xlu0 %3199
        %v3201 = vsel %vm3176, %v1379, -inf
        %3202 = vmax.xlane.f32.xlu0 %v3201
        %v3203 = vpop.xlane.xlu0 %3202
        %v3204 = vsel %vm3176, %v1457, -inf
        %3205 = vmax.xlane.f32.xlu0 %v3204
        %v3206 = vpop.xlane.xlu0 %3205
        %v3207 = vsel %vm3176, %v1535, -inf
        %3208 = vmax.xlane.f32.xlu0 %v3207
        %v3209 = vpop.xlane.xlu0 %3208
        %v3210 = vsel %vm3176, %v1613, -inf
        %3211 = vmax.xlane.f32.xlu0 %v3210
        %v3212 = vpop.xlane.xlu0 %3211
        %v3213 = vsel %vm3176, %v1691, -inf
        %3214 = vmax.xlane.f32.xlu0 %v3213
        %v3215 = vpop.xlane.xlu0 %3214
        %v3216 = vsel %vm3176, %v1769, -inf
        %3217 = vmax.xlane.f32.xlu0 %v3216
        %v3218 = vpop.xlane.xlu0 %3217
        %v3219 = vsel %vm3176, %v1847, -inf
        %3220 = vmax.xlane.f32.xlu0 %v3219
        %v3221 = vpop.xlane.xlu0 %3220
        %v3222 = vsel %vm3176, %v1925, -inf
        %3223 = vmax.xlane.f32.xlu0 %v3222
        %v3224 = vpop.xlane.xlu0 %3223
        %v3225 = vsel %vm3176, %v2003, -inf
        %3226 = vmax.xlane.f32.xlu0 %v3225
        %v3227 = vpop.xlane.xlu0 %3226
        %v3228 = vsel %vm3176, %v2081, -inf
        %3229 = vmax.xlane.f32.xlu0 %v3228
        %v3230 = vpop.xlane.xlu0 %3229
        %v3231 = vsel %vm3176, %v2159, -inf
        %3232 = vmax.xlane.f32.xlu0 %v3231
        %v3233 = vpop.xlane.xlu0 %3232
        %v3234 = vsel %vm3176, %v2237, -inf
        %3235 = vmax.xlane.f32.xlu0 %v3234
        %v3236 = vpop.xlane.xlu0 %3235
        %v3237 = vsel %vm3176, %v2315, -inf
        %3238 = vmax.xlane.f32.xlu0 %v3237
        %v3239 = vpop.xlane.xlu0 %3238
        %v3240 = vsel %vm3176, %v2393, -inf
        %3241 = vmax.xlane.f32.xlu0 %v3240
        %v3242 = vpop.xlane.xlu0 %3241
        %v3243 = vsel %vm3176, %v2471, -inf
        %3244 = vmax.xlane.f32.xlu0 %v3243
        %v3245 = vpop.xlane.xlu0 %3244
        %v3246 = vsel %vm3176, %v2549, -inf
        %3247 = vmax.xlane.f32.xlu0 %v3246
        %v3248 = vpop.xlane.xlu0 %3247
        %v3249 = vsel %vm3176, %v2627, -inf
        %3250 = vmax.xlane.f32.xlu0 %v3249
        %v3251 = vpop.xlane.xlu0 %3250
        %v3252 = vsel %vm3176, %v2705, -inf
        %3253 = vmax.xlane.f32.xlu0 %v3252
        %v3254 = vpop.xlane.xlu0 %3253
        %v3255 = vsel %vm3176, %v2783, -inf
        %3256 = vmax.xlane.f32.xlu0 %v3255
        %v3257 = vpop.xlane.xlu0 %3256
        %v3258 = vsel %vm3176, %v2861, -inf
        %3259 = vmax.xlane.f32.xlu0 %v3258
        %v3260 = vpop.xlane.xlu0 %3259
        %v3261 = vsel %vm3176, %v2939, -inf
        %3262 = vmax.xlane.f32.xlu0 %v3261
        %v3263 = vpop.xlane.xlu0 %3262
        %v3264 = vsel %vm3176, %v3017, -inf
        %3265 = vmax.xlane.f32.xlu0 %v3264
        %v3266 = vpop.xlane.xlu0 %3265
        %v3267 = vsel %vm3176, %v3095, -inf
        %3268 = vmax.xlane.f32.xlu0 %v3267
        %v3269 = vpop.xlane.xlu0 %3268
        %v3270 = vsel %vm3176, %v3173, -inf
        %3271 = vmax.xlane.f32.xlu0 %v3270
        %v3272 = vpop.xlane.xlu0 %3271
        %v3273 = vsub.f32 %v755, %v3179
        %v3274 = vsub.f32 %v833, %v3182
        %v3275 = vsub.f32 %v911, %v3185
        %v3276 = vsub.f32 %v989, %v3188
        %v3277 = vsub.f32 %v1067, %v3191
        %v3278 = vsub.f32 %v1145, %v3194
        %v3279 = vsub.f32 %v1223, %v3197
        %v3280 = vsub.f32 %v1301, %v3200
        %v3281 = vsub.f32 %v1379, %v3203
        %v3282 = vsub.f32 %v1457, %v3206
        %v3283 = vsub.f32 %v1535, %v3209
        %v3284 = vsub.f32 %v1613, %v3212
        %v3285 = vsub.f32 %v1691, %v3215
        %v3286 = vsub.f32 %v1769, %v3218
        %v3287 = vsub.f32 %v1847, %v3221
        %v3288 = vsub.f32 %v1925, %v3224
        %v3289 = vsub.f32 %v2003, %v3227
        %v3290 = vsub.f32 %v2081, %v3230
        %v3291 = vsub.f32 %v2159, %v3233
        %v3292 = vsub.f32 %v2237, %v3236
        %v3293 = vsub.f32 %v2315, %v3239
        %v3294 = vsub.f32 %v2393, %v3242
        %v3295 = vsub.f32 %v2471, %v3245
        %v3296 = vsub.f32 %v2549, %v3248
        %v3297 = vsub.f32 %v2627, %v3251
        %v3298 = vsub.f32 %v2705, %v3254
        %v3299 = vsub.f32 %v2783, %v3257
        %v3300 = vsub.f32 %v2861, %v3260
        %v3301 = vsub.f32 %v2939, %v3263
        %v3302 = vsub.f32 %v3017, %v3266
        %v3303 = vsub.f32 %v3095, %v3269
        %v3304 = vsub.f32 %v3173, %v3272
        %v3305 = vmul.f32 %v3273, 1.442695
        %v3306 = vpow.pop %v3305
        %v3307 = vmul.f32 %v3274, 1.442695
        %v3308 = vpow.pop %v3307
        %v3309 = vmul.f32 %v3275, 1.442695
        %v3310 = vpow.pop %v3309
        %v3311 = vmul.f32 %v3276, 1.442695
        %v3312 = vpow.pop %v3311
        %v3313 = vmul.f32 %v3277, 1.442695
        %v3314 = vpow.pop %v3313
        %v3315 = vmul.f32 %v3278, 1.442695
        %v3316 = vpow.pop %v3315
        %v3317 = vmul.f32 %v3279, 1.442695
        %v3318 = vpow.pop %v3317
        %v3319 = vmul.f32 %v3280, 1.442695
        %v3320 = vpow.pop %v3319
        %v3321 = vmul.f32 %v3281, 1.442695
        %v3322 = vpow.pop %v3321
        %v3323 = vmul.f32 %v3282, 1.442695
        %v3324 = vpow.pop %v3323
        %v3325 = vmul.f32 %v3283, 1.442695
        %v3326 = vpow.pop %v3325
        %v3327 = vmul.f32 %v3284, 1.442695
        %v3328 = vpow.pop %v3327
        %v3329 = vmul.f32 %v3285, 1.442695
        %v3330 = vpow.pop %v3329
        %v3331 = vmul.f32 %v3286, 1.442695
        %v3332 = vpow.pop %v3331
        %v3333 = vmul.f32 %v3287, 1.442695
        %v3334 = vpow.pop %v3333
        %v3335 = vmul.f32 %v3288, 1.442695
        %v3336 = vpow.pop %v3335
        %v3337 = vmul.f32 %v3289, 1.442695
        %v3338 = vpow.pop %v3337
        %v3339 = vmul.f32 %v3290, 1.442695
        %v3340 = vpow.pop %v3339
        %v3341 = vmul.f32 %v3291, 1.442695
        %v3342 = vpow.pop %v3341
        %v3343 = vmul.f32 %v3292, 1.442695
        %v3344 = vpow.pop %v3343
        %v3345 = vmul.f32 %v3293, 1.442695
        %v3346 = vpow.pop %v3345
        %v3347 = vmul.f32 %v3294, 1.442695
        %v3348 = vpow.pop %v3347
        %v3349 = vmul.f32 %v3295, 1.442695
        %v3350 = vpow.pop %v3349
        %v3351 = vmul.f32 %v3296, 1.442695
        %v3352 = vpow.pop %v3351
        %v3353 = vmul.f32 %v3297, 1.442695
        %v3354 = vpow.pop %v3353
        %v3355 = vmul.f32 %v3298, 1.442695
        %v3356 = vpow.pop %v3355
        %v3357 = vmul.f32 %v3299, 1.442695
        %v3358 = vpow.pop %v3357
        %v3359 = vmul.f32 %v3300, 1.442695
        %v3360 = vpow.pop %v3359
        %v3361 = vmul.f32 %v3301, 1.442695
        %v3362 = vpow.pop %v3361
        %v3363 = vmul.f32 %v3302, 1.442695
        %v3364 = vpow.pop %v3363
        %v3365 = vmul.f32 %v3303, 1.442695
        %v3366 = vpow.pop %v3365
        %v3367 = vmul.f32 %v3304, 1.442695
        %v3368 = vpow.pop %v3367
        %v3369 = vsel %vm3176, %v3306, 0.0
        %3370 = vadd.xlane.f32.xlu0 %v3369
        %v3371 = vpop.xlane.xlu0 %3370
        %v3372 = vsel %vm3176, %v3308, 0.0
        %3373 = vadd.xlane.f32.xlu0 %v3372
        %v3374 = vpop.xlane.xlu0 %3373
        %v3375 = vsel %vm3176, %v3310, 0.0
        %3376 = vadd.xlane.f32.xlu0 %v3375
        %v3377 = vpop.xlane.xlu0 %3376
        %v3378 = vsel %vm3176, %v3312, 0.0
        %3379 = vadd.xlane.f32.xlu0 %v3378
        %v3380 = vpop.xlane.xlu0 %3379
        %v3381 = vsel %vm3176, %v3314, 0.0
        %3382 = vadd.xlane.f32.xlu0 %v3381
        %v3383 = vpop.xlane.xlu0 %3382
        %v3384 = vsel %vm3176, %v3316, 0.0
        %3385 = vadd.xlane.f32.xlu0 %v3384
        %v3386 = vpop.xlane.xlu0 %3385
        %v3387 = vsel %vm3176, %v3318, 0.0
        %3388 = vadd.xlane.f32.xlu0 %v3387
        %v3389 = vpop.xlane.xlu0 %3388
        %v3390 = vsel %vm3176, %v3320, 0.0
        %3391 = vadd.xlane.f32.xlu0 %v3390
        %v3392 = vpop.xlane.xlu0 %3391
        %v3393 = vsel %vm3176, %v3322, 0.0
        %3394 = vadd.xlane.f32.xlu0 %v3393
        %v3395 = vpop.xlane.xlu0 %3394
        %v3396 = vsel %vm3176, %v3324, 0.0
        %3397 = vadd.xlane.f32.xlu0 %v3396
        %v3398 = vpop.xlane.xlu0 %3397
        %v3399 = vsel %vm3176, %v3326, 0.0
        %3400 = vadd.xlane.f32.xlu0 %v3399
        %v3401 = vpop.xlane.xlu0 %3400
        %v3402 = vsel %vm3176, %v3328, 0.0
        %3403 = vadd.xlane.f32.xlu0 %v3402
        %v3404 = vpop.xlane.xlu0 %3403
        %v3405 = vsel %vm3176, %v3330, 0.0
        %3406 = vadd.xlane.f32.xlu0 %v3405
        %v3407 = vpop.xlane.xlu0 %3406
        %v3408 = vsel %vm3176, %v3332, 0.0
        %3409 = vadd.xlane.f32.xlu0 %v3408
        %v3410 = vpop.xlane.xlu0 %3409
        %v3411 = vsel %vm3176, %v3334, 0.0
        %3412 = vadd.xlane.f32.xlu0 %v3411
        %v3413 = vpop.xlane.xlu0 %3412
        %v3414 = vsel %vm3176, %v3336, 0.0
        %3415 = vadd.xlane.f32.xlu0 %v3414
        %v3416 = vpop.xlane.xlu0 %3415
        %v3417 = vsel %vm3176, %v3338, 0.0
        %3418 = vadd.xlane.f32.xlu0 %v3417
        %v3419 = vpop.xlane.xlu0 %3418
        %v3420 = vsel %vm3176, %v3340, 0.0
        %3421 = vadd.xlane.f32.xlu0 %v3420
        %v3422 = vpop.xlane.xlu0 %3421
        %v3423 = vsel %vm3176, %v3342, 0.0
        %3424 = vadd.xlane.f32.xlu0 %v3423
        %v3425 = vpop.xlane.xlu0 %3424
        %v3426 = vsel %vm3176, %v3344, 0.0
        %3427 = vadd.xlane.f32.xlu0 %v3426
        %v3428 = vpop.xlane.xlu0 %3427
        %v3429 = vsel %vm3176, %v3346, 0.0
        %3430 = vadd.xlane.f32.xlu0 %v3429
        %v3431 = vpop.xlane.xlu0 %3430
        %v3432 = vsel %vm3176, %v3348, 0.0
        %3433 = vadd.xlane.f32.xlu0 %v3432
        %v3434 = vpop.xlane.xlu0 %3433
        %v3435 = vsel %vm3176, %v3350, 0.0
        %3436 = vadd.xlane.f32.xlu0 %v3435
        %v3437 = vpop.xlane.xlu0 %3436
        %v3438 = vsel %vm3176, %v3352, 0.0
        %3439 = vadd.xlane.f32.xlu0 %v3438
        %v3440 = vpop.xlane.xlu0 %3439
        %v3441 = vsel %vm3176, %v3354, 0.0
        %3442 = vadd.xlane.f32.xlu0 %v3441
        %v3443 = vpop.xlane.xlu0 %3442
        %v3444 = vsel %vm3176, %v3356, 0.0
        %3445 = vadd.xlane.f32.xlu0 %v3444
        %v3446 = vpop.xlane.xlu0 %3445
        %v3447 = vsel %vm3176, %v3358, 0.0
        %3448 = vadd.xlane.f32.xlu0 %v3447
        %v3449 = vpop.xlane.xlu0 %3448
        %v3450 = vsel %vm3176, %v3360, 0.0
        %3451 = vadd.xlane.f32.xlu0 %v3450
        %v3452 = vpop.xlane.xlu0 %3451
        %v3453 = vsel %vm3176, %v3362, 0.0
        %3454 = vadd.xlane.f32.xlu0 %v3453
        %v3455 = vpop.xlane.xlu0 %3454
        %v3456 = vsel %vm3176, %v3364, 0.0
        %3457 = vadd.xlane.f32.xlu0 %v3456
        %v3458 = vpop.xlane.xlu0 %3457
        %v3459 = vsel %vm3176, %v3366, 0.0
        %3460 = vadd.xlane.f32.xlu0 %v3459
        %v3461 = vpop.xlane.xlu0 %3460
        %v3462 = vsel %vm3176, %v3368, 0.0
        %3463 = vadd.xlane.f32.xlu0 %v3462
        %v3464 = vpop.xlane.xlu0 %3463
        %v3465 = vrcp.pop %v3371
        %v3466 = vmul.f32 %v3306, %v3465
        %v3467 = vrcp.pop %v3374
        %v3468 = vmul.f32 %v3308, %v3467
        %v3469 = vrcp.pop %v3377
        %v3470 = vmul.f32 %v3310, %v3469
        %v3471 = vrcp.pop %v3380
        %v3472 = vmul.f32 %v3312, %v3471
        %v3473 = vrcp.pop %v3383
        %v3474 = vmul.f32 %v3314, %v3473
        %v3475 = vrcp.pop %v3386
        %v3476 = vmul.f32 %v3316, %v3475
        %v3477 = vrcp.pop %v3389
        %v3478 = vmul.f32 %v3318, %v3477
        %v3479 = vrcp.pop %v3392
        %v3480 = vmul.f32 %v3320, %v3479
        %v3481 = vrcp.pop %v3395
        %v3482 = vmul.f32 %v3322, %v3481
        %v3483 = vrcp.pop %v3398
        %v3484 = vmul.f32 %v3324, %v3483
        %v3485 = vrcp.pop %v3401
        %v3486 = vmul.f32 %v3326, %v3485
        %v3487 = vrcp.pop %v3404
        %v3488 = vmul.f32 %v3328, %v3487
        %v3489 = vrcp.pop %v3407
        %v3490 = vmul.f32 %v3330, %v3489
        %v3491 = vrcp.pop %v3410
        %v3492 = vmul.f32 %v3332, %v3491
        %v3493 = vrcp.pop %v3413
        %v3494 = vmul.f32 %v3334, %v3493
        %v3495 = vrcp.pop %v3416
        %v3496 = vmul.f32 %v3336, %v3495
        %v3497 = vrcp.pop %v3419
        %v3498 = vmul.f32 %v3338, %v3497
        %v3499 = vrcp.pop %v3422
        %v3500 = vmul.f32 %v3340, %v3499
        %v3501 = vrcp.pop %v3425
        %v3502 = vmul.f32 %v3342, %v3501
        %v3503 = vrcp.pop %v3428
        %v3504 = vmul.f32 %v3344, %v3503
        %v3505 = vrcp.pop %v3431
        %v3506 = vmul.f32 %v3346, %v3505
        %v3507 = vrcp.pop %v3434
        %v3508 = vmul.f32 %v3348, %v3507
        %v3509 = vrcp.pop %v3437
        %v3510 = vmul.f32 %v3350, %v3509
        %v3511 = vrcp.pop %v3440
        %v3512 = vmul.f32 %v3352, %v3511
        %v3513 = vrcp.pop %v3443
        %v3514 = vmul.f32 %v3354, %v3513
        %v3515 = vrcp.pop %v3446
        %v3516 = vmul.f32 %v3356, %v3515
        %v3517 = vrcp.pop %v3449
        %v3518 = vmul.f32 %v3358, %v3517
        %v3519 = vrcp.pop %v3452
        %v3520 = vmul.f32 %v3360, %v3519
        %v3521 = vrcp.pop %v3455
        %v3522 = vmul.f32 %v3362, %v3521
        %v3523 = vrcp.pop %v3458
        %v3524 = vmul.f32 %v3364, %v3523
        %v3525 = vrcp.pop %v3461
        %v3526 = vmul.f32 %v3366, %v3525
        %v3527 = vrcp.pop %v3464
        %v3528 = vmul.f32 %v3368, %v3527
        %v3529 = vld [vmem:[%s313] sm:$0xff]
        %v3530 = vld [vmem:[%s313 + $0x8] sm:$0xff]
        %v3531 = vld [vmem:[%s313 + $0x10] sm:$0xff]
        %v3532 = vld [vmem:[%s313 + $0x18] sm:$0xff]
        %v3533 = vld [vmem:[%s313 + $0x20] sm:$0xff]
        %v3534 = vld [vmem:[%s313 + $0x28] sm:$0xff]
        %v3535 = vld [vmem:[%s313 + $0x30] sm:$0xff]
        %v3536 = vld [vmem:[%s313 + $0x38] sm:$0xff]
        %v3537 = vld [vmem:[%s313 + $0x40] sm:$0xff]
        %v3538 = vld [vmem:[%s313 + $0x48] sm:$0xff]
        %v3539 = vld [vmem:[%s313 + $0x50] sm:$0xff]
        %v3540 = vld [vmem:[%s313 + $0x58] sm:$0xff]
        %v3541 = vld [vmem:[%s313 + $0x60] sm:$0xff]
        %v3542 = vld [vmem:[%s313 + $0x68] sm:$0xff]
        %v3543 = vld [vmem:[%s313 + $0x70] sm:$0xff]
        %v3544 = vld [vmem:[%s313 + $0x78] sm:$0xff]
        %v3545 = vld [vmem:[%s5] sm:$0x1]
        %v3547 = vlaneseq
        %v3548 = vshrl.u32 %v3547, 7
        %v3549 = vsub.s32 0, %v3548
        %v3550 = vrot.slane %v3545, %v3549
        %3552 = vst.msk [vmem:[#allocation2] sm:$0xff] %vm358, %v3550
        %3553 = vst.msk [vmem:[#allocation2 + $0x8] sm:$0xff] %vm358, %v3550
        %3554 = vst.msk [vmem:[#allocation2 + $0x10] sm:$0xff] %vm358, %v3550
        %3555 = vst.msk [vmem:[#allocation2 + $0x18] sm:$0xff] %vm358, %v3550
        %3556 = vst.msk [vmem:[#allocation2 + $0x20] sm:$0xff] %vm358, %v3550
        %3557 = vst.msk [vmem:[#allocation2 + $0x28] sm:$0xff] %vm358, %v3550
        %3558 = vst.msk [vmem:[#allocation2 + $0x30] sm:$0xff] %vm358, %v3550
        %3559 = vst.msk [vmem:[#allocation2 + $0x38] sm:$0xff] %vm358, %v3550
        %3560 = vst.msk [vmem:[#allocation2 + $0x40] sm:$0xff] %vm358, %v3550
        %3561 = vst.msk [vmem:[#allocation2 + $0x48] sm:$0xff] %vm358, %v3550
        %3562 = vst.msk [vmem:[#allocation2 + $0x50] sm:$0xff] %vm358, %v3550
        %3563 = vst.msk [vmem:[#allocation2 + $0x58] sm:$0xff] %vm358, %v3550
        %3564 = vst.msk [vmem:[#allocation2 + $0x60] sm:$0xff] %vm358, %v3550
        %3565 = vst.msk [vmem:[#allocation2 + $0x68] sm:$0xff] %vm358, %v3550
        %3566 = vst.msk [vmem:[#allocation2 + $0x70] sm:$0xff] %vm358, %v3550
        %3567 = vst.msk [vmem:[#allocation2 + $0x78] sm:$0xff] %vm358, %v3550
        %v3569 = vsel %vm3176, %v3466, 0
        %3571 = vmatprep.subr.mxu0 0.0
        %3572 = vmatpush1.msra.mxu0 %v3529
        %3573 = vmatprep.subr.mxu0 0.0
        %3574 = vmatpush1.msra.mxu0 0.0
        %3575 = vmatprep.subr.mxu0 0.0
        %3576 = vmatpush1.msra.mxu0 0.0
        %3577 = vmatprep.subr.mxu0 0.0
        %3578 = vmatpush1.msra.mxu0 0.0
        %3579 = vmatprep.subr.mxu0 0.0
        %3580 = vmatpush1.msra.mxu0 0.0
        %3581 = vmatprep.subr.mxu0 0.0
        %3582 = vmatpush1.msra.mxu0 0.0
        %3583 = vmatprep.subr.mxu0 0.0
        %3584 = vmatpush1.msra.mxu0 0.0
        %3585 = vmatprep.subr.mxu0 0.0
        %3586 = vmatpush1.msra.mxu0 0.0
        %3587 = vmatprep.subr.mxu0 0.0
        %3588 = vmatpush1.msra.mxu0 0.0
        %3589 = vmatprep.subr.mxu0 0.0
        %3590 = vmatpush1.msra.mxu0 0.0
        %3591 = vmatprep.subr.mxu0 0.0
        %3592 = vmatpush1.msra.mxu0 0.0
        %3593 = vmatprep.subr.mxu0 0.0
        %3594 = vmatpush1.msra.mxu0 0.0
        %3595 = vmatprep.subr.mxu0 0.0
        %3596 = vmatpush1.msra.mxu0 0.0
        %3597 = vmatprep.subr.mxu0 0.0
        %3598 = vmatpush1.msra.mxu0 0.0
        %3599 = vmatprep.subr.mxu0 0.0
        %3600 = vmatpush1.msra.mxu0 0.0
        %3601 = vmatprep.subr.mxu0 0.0
        %3602 = vmatpush1.msra.mxu0 0.0
        %3603 = vmatprep.subr.mxu0 0.0
        %3604 = vmatpush1.msra.mxu0 0.0
        %3605 = vmatprep.subr.mxu0 0.0
        %3606 = vmatpush1.msra.mxu0 0.0
        %3607 = vmatprep.subr.mxu0 0.0
        %3608 = vmatpush1.msra.mxu0 0.0
        %3609 = vmatprep.subr.mxu0 0.0
        %3610 = vmatpush1.msra.mxu0 0.0
        %3611 = vmatprep.subr.mxu0 0.0
        %3612 = vmatpush1.msra.mxu0 0.0
        %3613 = vmatprep.subr.mxu0 0.0
        %3614 = vmatpush1.msra.mxu0 0.0
        %3615 = vmatprep.subr.mxu0 0.0
        %3616 = vmatpush1.msra.mxu0 0.0
        %3617 = vmatprep.subr.mxu0 0.0
        %3618 = vmatpush1.msra.mxu0 0.0
        %3619 = vmatprep.subr.mxu0 0.0
        %3620 = vmatpush1.msra.mxu0 0.0
        %3621 = vmatprep.subr.mxu0 0.0
        %3622 = vmatpush1.msra.mxu0 0.0
        %3623 = vmatprep.subr.mxu0 0.0
        %3624 = vmatpush1.msra.mxu0 0.0
        %3625 = vmatprep.subr.mxu0 0.0
        %3626 = vmatpush1.msra.mxu0 0.0
        %3627 = vmatprep.subr.mxu0 0.0
        %3628 = vmatpush1.msra.mxu0 0.0
        %3629 = vmatprep.subr.mxu0 0.0
        %3630 = vmatpush1.msra.mxu0 0.0
        %3631 = vmatprep.subr.mxu0 0.0
        %3632 = vmatpush1.msra.mxu0 0.0
        %3633 = vmatprep.subr.mxu0 0.0
        %3634 = vmatpush1.msra.mxu0 0.0
        %3635 = vmatprep.mubr.f32.mxu0 0.0
        %3636 = vmatmul.mubr.f32.gmra.mrb[0].mxu0 %v3569
        %v3637 = vpop.f32.mrb[0].mxu0
        %v3638 = vadd.f32 0.0, %v3637
        %v3639 = vpop.f32.mrb[0].mxu0
        %3640 = vdwg.mxu0
        %v3642 = vsel %vm3176, %v3468, 0
        %3644 = vmatprep.subr.mxu0 0.0
        %3645 = vmatpush1.msra.mxu0 %v3530
        %3646 = vmatprep.subr.mxu0 0.0
        %3647 = vmatpush1.msra.mxu0 0.0
        %3648 = vmatprep.subr.mxu0 0.0
        %3649 = vmatpush1.msra.mxu0 0.0
        %3650 = vmatprep.subr.mxu0 0.0
        %3651 = vmatpush1.msra.mxu0 0.0
        %3652 = vmatprep.subr.mxu0 0.0
        %3653 = vmatpush1.msra.mxu0 0.0
        %3654 = vmatprep.subr.mxu0 0.0
        %3655 = vmatpush1.msra.mxu0 0.0
        %3656 = vmatprep.subr.mxu0 0.0
        %3657 = vmatpush1.msra.mxu0 0.0
        %3658 = vmatprep.subr.mxu0 0.0
        %3659 = vmatpush1.msra.mxu0 0.0
        %3660 = vmatprep.subr.mxu0 0.0
        %3661 = vmatpush1.msra.mxu0 0.0
        %3662 = vmatprep.subr.mxu0 0.0
        %3663 = vmatpush1.msra.mxu0 0.0
        %3664 = vmatprep.subr.mxu0 0.0
        %3665 = vmatpush1.msra.mxu0 0.0
        %3666 = vmatprep.subr.mxu0 0.0
        %3667 = vmatpush1.msra.mxu0 0.0
        %3668 = vmatprep.subr.mxu0 0.0
        %3669 = vmatpush1.msra.mxu0 0.0
        %3670 = vmatprep.subr.mxu0 0.0
        %3671 = vmatpush1.msra.mxu0 0.0
        %3672 = vmatprep.subr.mxu0 0.0
        %3673 = vmatpush1.msra.mxu0 0.0
        %3674 = vmatprep.subr.mxu0 0.0
        %3675 = vmatpush1.msra.mxu0 0.0
        %3676 = vmatprep.subr.mxu0 0.0
        %3677 = vmatpush1.msra.mxu0 0.0
        %3678 = vmatprep.subr.mxu0 0.0
        %3679 = vmatpush1.msra.mxu0 0.0
        %3680 = vmatprep.subr.mxu0 0.0
        %3681 = vmatpush1.msra.mxu0 0.0
        %3682 = vmatprep.subr.mxu0 0.0
        %3683 = vmatpush1.msra.mxu0 0.0
        %3684 = vmatprep.subr.mxu0 0.0
        %3685 = vmatpush1.msra.mxu0 0.0
        %3686 = vmatprep.subr.mxu0 0.0
        %3687 = vmatpush1.msra.mxu0 0.0
        %3688 = vmatprep.subr.mxu0 0.0
        %3689 = vmatpush1.msra.mxu0 0.0
        %3690 = vmatprep.subr.mxu0 0.0
        %3691 = vmatpush1.msra.mxu0 0.0
        %3692 = vmatprep.subr.mxu0 0.0
        %3693 = vmatpush1.msra.mxu0 0.0
        %3694 = vmatprep.subr.mxu0 0.0
        %3695 = vmatpush1.msra.mxu0 0.0
        %3696 = vmatprep.subr.mxu0 0.0
        %3697 = vmatpush1.msra.mxu0 0.0
        %3698 = vmatprep.subr.mxu0 0.0
        %3699 = vmatpush1.msra.mxu0 0.0
        %3700 = vmatprep.subr.mxu0 0.0
        %3701 = vmatpush1.msra.mxu0 0.0
        %3702 = vmatprep.subr.mxu0 0.0
        %3703 = vmatpush1.msra.mxu0 0.0
        %3704 = vmatprep.subr.mxu0 0.0
        %3705 = vmatpush1.msra.mxu0 0.0
        %3706 = vmatprep.subr.mxu0 0.0
        %3707 = vmatpush1.msra.mxu0 0.0
        %3708 = vmatprep.mubr.f32.mxu0 0.0
        %3709 = vmatmul.mubr.f32.gmra.mrb[0].mxu0 %v3642
        %v3710 = vpop.f32.mrb[0].mxu0
        %v3711 = vadd.f32 0.0, %v3710
        %v3712 = vpop.f32.mrb[0].mxu0
        %3713 = vdwg.mxu0
        %v3715 = vsel %vm3176, %v3470, 0
        %3717 = vmatprep.subr.mxu0 0.0
        %3718 = vmatpush1.msra.mxu0 %v3531
        %3719 = vmatprep.subr.mxu0 0.0
        %3720 = vmatpush1.msra.mxu0 0.0
        %3721 = vmatprep.subr.mxu0 0.0
        %3722 = vmatpush1.msra.mxu0 0.0
        %3723 = vmatprep.subr.mxu0 0.0
        %3724 = vmatpush1.msra.mxu0 0.0
        %3725 = vmatprep.subr.mxu0 0.0
        %3726 = vmatpush1.msra.mxu0 0.0
        %3727 = vmatprep.subr.mxu0 0.0
        %3728 = vmatpush1.msra.mxu0 0.0
        %3729 = vmatprep.subr.mxu0 0.0
        %3730 = vmatpush1.msra.mxu0 0.0
        %3731 = vmatprep.subr.mxu0 0.0
        %3732 = vmatpush1.msra.mxu0 0.0
        %3733 = vmatprep.subr.mxu0 0.0
        %3734 = vmatpush1.msra.mxu0 0.0
        %3735 = vmatprep.subr.mxu0 0.0
        %3736 = vmatpush1.msra.mxu0 0.0
        %3737 = vmatprep.subr.mxu0 0.0
        %3738 = vmatpush1.msra.mxu0 0.0
        %3739 = vmatprep.subr.mxu0 0.0
        %3740 = vmatpush1.msra.mxu0 0.0
        %3741 = vmatprep.subr.mxu0 0.0
        %3742 = vmatpush1.msra.mxu0 0.0
        %3743 = vmatprep.subr.mxu0 0.0
        %3744 = vmatpush1.msra.mxu0 0.0
        %3745 = vmatprep.subr.mxu0 0.0
        %3746 = vmatpush1.msra.mxu0 0.0
        %3747 = vmatprep.subr.mxu0 0.0
        %3748 = vmatpush1.msra.mxu0 0.0
        %3749 = vmatprep.subr.mxu0 0.0
        %3750 = vmatpush1.msra.mxu0 0.0
        %3751 = vmatprep.subr.mxu0 0.0
        %3752 = vmatpush1.msra.mxu0 0.0
        %3753 = vmatprep.subr.mxu0 0.0
        %3754 = vmatpush1.msra.mxu0 0.0
        %3755 = vmatprep.subr.mxu0 0.0
        %3756 = vmatpush1.msra.mxu0 0.0
        %3757 = vmatprep.subr.mxu0 0.0
        %3758 = vmatpush1.msra.mxu0 0.0
        %3759 = vmatprep.subr.mxu0 0.0
        %3760 = vmatpush1.msra.mxu0 0.0
        %3761 = vmatprep.subr.mxu0 0.0
        %3762 = vmatpush1.msra.mxu0 0.0
        %3763 = vmatprep.subr.mxu0 0.0
        %3764 = vmatpush1.msra.mxu0 0.0
        %3765 = vmatprep.subr.mxu0 0.0
        %3766 = vmatpush1.msra.mxu0 0.0
        %3767 = vmatprep.subr.mxu0 0.0
        %3768 = vmatpush1.msra.mxu0 0.0
        %3769 = vmatprep.subr.mxu0 0.0
        %3770 = vmatpush1.msra.mxu0 0.0
        %3771 = vmatprep.subr.mxu0 0.0
        %3772 = vmatpush1.msra.mxu0 0.0
        %3773 = vmatprep.subr.mxu0 0.0
        %3774 = vmatpush1.msra.mxu0 0.0
        %3775 = vmatprep.subr.mxu0 0.0
        %3776 = vmatpush1.msra.mxu0 0.0
        %3777 = vmatprep.subr.mxu0 0.0
        %3778 = vmatpush1.msra.mxu0 0.0
        %3779 = vmatprep.subr.mxu0 0.0
        %3780 = vmatpush1.msra.mxu0 0.0
        %3781 = vmatprep.mubr.f32.mxu0 0.0
        %3782 = vmatmul.mubr.f32.gmra.mrb[0].mxu0 %v3715
        %v3783 = vpop.f32.mrb[0].mxu0
        %v3784 = vadd.f32 0.0, %v3783
        %v3785 = vpop.f32.mrb[0].mxu0
        %3786 = vdwg.mxu0
        %v3788 = vsel %vm3176, %v3472, 0
        %3790 = vmatprep.subr.mxu0 0.0
        %3791 = vmatpush1.msra.mxu0 %v3532
        %3792 = vmatprep.subr.mxu0 0.0
        %3793 = vmatpush1.msra.mxu0 0.0
        %3794 = vmatprep.subr.mxu0 0.0
        %3795 = vmatpush1.msra.mxu0 0.0
        %3796 = vmatprep.subr.mxu0 0.0
        %3797 = vmatpush1.msra.mxu0 0.0
        %3798 = vmatprep.subr.mxu0 0.0
        %3799 = vmatpush1.msra.mxu0 0.0
        %3800 = vmatprep.subr.mxu0 0.0
        %3801 = vmatpush1.msra.mxu0 0.0
        %3802 = vmatprep.subr.mxu0 0.0
        %3803 = vmatpush1.msra.mxu0 0.0
        %3804 = vmatprep.subr.mxu0 0.0
        %3805 = vmatpush1.msra.mxu0 0.0
        %3806 = vmatprep.subr.mxu0 0.0
        %3807 = vmatpush1.msra.mxu0 0.0
        %3808 = vmatprep.subr.mxu0 0.0
        %3809 = vmatpush1.msra.mxu0 0.0
        %3810 = vmatprep.subr.mxu0 0.0
        %3811 = vmatpush1.msra.mxu0 0.0
        %3812 = vmatprep.subr.mxu0 0.0
        %3813 = vmatpush1.msra.mxu0 0.0
        %3814 = vmatprep.subr.mxu0 0.0
        %3815 = vmatpush1.msra.mxu0 0.0
        %3816 = vmatprep.subr.mxu0 0.0
        %3817 = vmatpush1.msra.mxu0 0.0
        %3818 = vmatprep.subr.mxu0 0.0
        %3819 = vmatpush1.msra.mxu0 0.0
        %3820 = vmatprep.subr.mxu0 0.0
        %3821 = vmatpush1.msra.mxu0 0.0
        %3822 = vmatprep.subr.mxu0 0.0
        %3823 = vmatpush1.msra.mxu0 0.0
        %3824 = vmatprep.subr.mxu0 0.0
        %3825 = vmatpush1.msra.mxu0 0.0
        %3826 = vmatprep.subr.mxu0 0.0
        %3827 = vmatpush1.msra.mxu0 0.0
        %3828 = vmatprep.subr.mxu0 0.0
        %3829 = vmatpush1.msra.mxu0 0.0
        %3830 = vmatprep.subr.mxu0 0.0
        %3831 = vmatpush1.msra.mxu0 0.0
        %3832 = vmatprep.subr.mxu0 0.0
        %3833 = vmatpush1.msra.mxu0 0.0
        %3834 = vmatprep.subr.mxu0 0.0
        %3835 = vmatpush1.msra.mxu0 0.0
        %3836 = vmatprep.subr.mxu0 0.0
        %3837 = vmatpush1.msra.mxu0 0.0
        %3838 = vmatprep.subr.mxu0 0.0
        %3839 = vmatpush1.msra.mxu0 0.0
        %3840 = vmatprep.subr.mxu0 0.0
        %3841 = vmatpush1.msra.mxu0 0.0
        %3842 = vmatprep.subr.mxu0 0.0
        %3843 = vmatpush1.msra.mxu0 0.0
        %3844 = vmatprep.subr.mxu0 0.0
        %3845 = vmatpush1.msra.mxu0 0.0
        %3846 = vmatprep.subr.mxu0 0.0
        %3847 = vmatpush1.msra.mxu0 0.0
        %3848 = vmatprep.subr.mxu0 0.0
        %3849 = vmatpush1.msra.mxu0 0.0
        %3850 = vmatprep.subr.mxu0 0.0
        %3851 = vmatpush1.msra.mxu0 0.0
        %3852 = vmatprep.subr.mxu0 0.0
        %3853 = vmatpush1.msra.mxu0 0.0
        %3854 = vmatprep.mubr.f32.mxu0 0.0
        %3855 = vmatmul.mubr.f32.gmra.mrb[0].mxu0 %v3788
        %v3856 = vpop.f32.mrb[0].mxu0
        %v3857 = vadd.f32 0.0, %v3856
        %v3858 = vpop.f32.mrb[0].mxu0
        %3859 = vdwg.mxu0
        %v3861 = vsel %vm3176, %v3474, 0
        %3863 = vmatprep.subr.mxu0 0.0
        %3864 = vmatpush1.msra.mxu0 %v3533
        %3865 = vmatprep.subr.mxu0 0.0
        %3866 = vmatpush1.msra.mxu0 0.0
        %3867 = vmatprep.subr.mxu0 0.0
        %3868 = vmatpush1.msra.mxu0 0.0
        %3869 = vmatprep.subr.mxu0 0.0
        %3870 = vmatpush1.msra.mxu0 0.0
        %3871 = vmatprep.subr.mxu0 0.0
        %3872 = vmatpush1.msra.mxu0 0.0
        %3873 = vmatprep.subr.mxu0 0.0
        %3874 = vmatpush1.msra.mxu0 0.0
        %3875 = vmatprep.subr.mxu0 0.0
        %3876 = vmatpush1.msra.mxu0 0.0
        %3877 = vmatprep.subr.mxu0 0.0
        %3878 = vmatpush1.msra.mxu0 0.0
        %3879 = vmatprep.subr.mxu0 0.0
        %3880 = vmatpush1.msra.mxu0 0.0
        %3881 = vmatprep.subr.mxu0 0.0
        %3882 = vmatpush1.msra.mxu0 0.0
        %3883 = vmatprep.subr.mxu0 0.0
        %3884 = vmatpush1.msra.mxu0 0.0
        %3885 = vmatprep.subr.mxu0 0.0
        %3886 = vmatpush1.msra.mxu0 0.0
        %3887 = vmatprep.subr.mxu0 0.0
        %3888 = vmatpush1.msra.mxu0 0.0
        %3889 = vmatprep.subr.mxu0 0.0
        %3890 = vmatpush1.msra.mxu0 0.0
        %3891 = vmatprep.subr.mxu0 0.0
        %3892 = vmatpush1.msra.mxu0 0.0
        %3893 = vmatprep.subr.mxu0 0.0
        %3894 = vmatpush1.msra.mxu0 0.0
        %3895 = vmatprep.subr.mxu0 0.0
        %3896 = vmatpush1.msra.mxu0 0.0
        %3897 = vmatprep.subr.mxu0 0.0
        %3898 = vmatpush1.msra.mxu0 0.0
        %3899 = vmatprep.subr.mxu0 0.0
        %3900 = vmatpush1.msra.mxu0 0.0
        %3901 = vmatprep.subr.mxu0 0.0
        %3902 = vmatpush1.msra.mxu0 0.0
        %3903 = vmatprep.subr.mxu0 0.0
        %3904 = vmatpush1.msra.mxu0 0.0
        %3905 = vmatprep.subr.mxu0 0.0
        %3906 = vmatpush1.msra.mxu0 0.0
        %3907 = vmatprep.subr.mxu0 0.0
        %3908 = vmatpush1.msra.mxu0 0.0
        %3909 = vmatprep.subr.mxu0 0.0
        %3910 = vmatpush1.msra.mxu0 0.0
        %3911 = vmatprep.subr.mxu0 0.0
        %3912 = vmatpush1.msra.mxu0 0.0
        %3913 = vmatprep.subr.mxu0 0.0
        %3914 = vmatpush1.msra.mxu0 0.0
        %3915 = vmatprep.subr.mxu0 0.0
        %3916 = vmatpush1.msra.mxu0 0.0
        %3917 = vmatprep.subr.mxu0 0.0
        %3918 = vmatpush1.msra.mxu0 0.0
        %3919 = vmatprep.subr.mxu0 0.0
        %3920 = vmatpush1.msra.mxu0 0.0
        %3921 = vmatprep.subr.mxu0 0.0
        %3922 = vmatpush1.msra.mxu0 0.0
        %3923 = vmatprep.subr.mxu0 0.0
        %3924 = vmatpush1.msra.mxu0 0.0
        %3925 = vmatprep.subr.mxu0 0.0
        %3926 = vmatpush1.msra.mxu0 0.0
        %3927 = vmatprep.mubr.f32.mxu0 0.0
        %3928 = vmatmul.mubr.f32.gmra.mrb[0].mxu0 %v3861
        %v3929 = vpop.f32.mrb[0].mxu0
        %v3930 = vadd.f32 0.0, %v3929
        %v3931 = vpop.f32.mrb[0].mxu0
        %3932 = vdwg.mxu0
        %v3934 = vsel %vm3176, %v3476, 0
        %3936 = vmatprep.subr.mxu0 0.0
        %3937 = vmatpush1.msra.mxu0 %v3534
        %3938 = vmatprep.subr.mxu0 0.0
        %3939 = vmatpush1.msra.mxu0 0.0
        %3940 = vmatprep.subr.mxu0 0.0
        %3941 = vmatpush1.msra.mxu0 0.0
        %3942 = vmatprep.subr.mxu0 0.0
        %3943 = vmatpush1.msra.mxu0 0.0
        %3944 = vmatprep.subr.mxu0 0.0
        %3945 = vmatpush1.msra.mxu0 0.0
        %3946 = vmatprep.subr.mxu0 0.0
        %3947 = vmatpush1.msra.mxu0 0.0
        %3948 = vmatprep.subr.mxu0 0.0
        %3949 = vmatpush1.msra.mxu0 0.0
        %3950 = vmatprep.subr.mxu0 0.0
        %3951 = vmatpush1.msra.mxu0 0.0
        %3952 = vmatprep.subr.mxu0 0.0
        %3953 = vmatpush1.msra.mxu0 0.0
        %3954 = vmatprep.subr.mxu0 0.0
        %3955 = vmatpush1.msra.mxu0 0.0
        %3956 = vmatprep.subr.mxu0 0.0
        %3957 = vmatpush1.msra.mxu0 0.0
        %3958 = vmatprep.subr.mxu0 0.0
        %3959 = vmatpush1.msra.mxu0 0.0
        %3960 = vmatprep.subr.mxu0 0.0
        %3961 = vmatpush1.msra.mxu0 0.0
        %3962 = vmatprep.subr.mxu0 0.0
        %3963 = vmatpush1.msra.mxu0 0.0
        %3964 = vmatprep.subr.mxu0 0.0
        %3965 = vmatpush1.msra.mxu0 0.0
        %3966 = vmatprep.subr.mxu0 0.0
        %3967 = vmatpush1.msra.mxu0 0.0
        %3968 = vmatprep.subr.mxu0 0.0
        %3969 = vmatpush1.msra.mxu0 0.0
        %3970 = vmatprep.subr.mxu0 0.0
        %3971 = vmatpush1.msra.mxu0 0.0
        %3972 = vmatprep.subr.mxu0 0.0
        %3973 = vmatpush1.msra.mxu0 0.0
        %3974 = vmatprep.subr.mxu0 0.0
        %3975 = vmatpush1.msra.mxu0 0.0
        %3976 = vmatprep.subr.mxu0 0.0
        %3977 = vmatpush1.msra.mxu0 0.0
        %3978 = vmatprep.subr.mxu0 0.0
        %3979 = vmatpush1.msra.mxu0 0.0
        %3980 = vmatprep.subr.mxu0 0.0
        %3981 = vmatpush1.msra.mxu0 0.0
        %3982 = vmatprep.subr.mxu0 0.0
        %3983 = vmatpush1.msra.mxu0 0.0
        %3984 = vmatprep.subr.mxu0 0.0
        %3985 = vmatpush1.msra.mxu0 0.0
        %3986 = vmatprep.subr.mxu0 0.0
        %3987 = vmatpush1.msra.mxu0 0.0
        %3988 = vmatprep.subr.mxu0 0.0
        %3989 = vmatpush1.msra.mxu0 0.0
        %3990 = vmatprep.subr.mxu0 0.0
        %3991 = vmatpush1.msra.mxu0 0.0
        %3992 = vmatprep.subr.mxu0 0.0
        %3993 = vmatpush1.msra.mxu0 0.0
        %3994 = vmatprep.subr.mxu0 0.0
        %3995 = vmatpush1.msra.mxu0 0.0
        %3996 = vmatprep.subr.mxu0 0.0
        %3997 = vmatpush1.msra.mxu0 0.0
        %3998 = vmatprep.subr.mxu0 0.0
        %3999 = vmatpush1.msra.mxu0 0.0
        %4000 = vmatprep.mubr.f32.mxu0 0.0
        %4001 = vmatmul.mubr.f32.gmra.mrb[0].mxu0 %v3934
        %v4002 = vpop.f32.mrb[0].mxu0
        %v4003 = vadd.f32 0.0, %v4002
        %v4004 = vpop.f32.mrb[0].mxu0
        %4005 = vdwg.mxu0
        %v4007 = vsel %vm3176, %v3478, 0
        %4009 = vmatprep.subr.mxu0 0.0
        %4010 = vmatpush1.msra.mxu0 %v3535
        %4011 = vmatprep.subr.mxu0 0.0
        %4012 = vmatpush1.msra.mxu0 0.0
        %4013 = vmatprep.subr.mxu0 0.0
        %4014 = vmatpush1.msra.mxu0 0.0
        %4015 = vmatprep.subr.mxu0 0.0
        %4016 = vmatpush1.msra.mxu0 0.0
        %4017 = vmatprep.subr.mxu0 0.0
        %4018 = vmatpush1.msra.mxu0 0.0
        %4019 = vmatprep.subr.mxu0 0.0
        %4020 = vmatpush1.msra.mxu0 0.0
        %4021 = vmatprep.subr.mxu0 0.0
        %4022 = vmatpush1.msra.mxu0 0.0
        %4023 = vmatprep.subr.mxu0 0.0
        %4024 = vmatpush1.msra.mxu0 0.0
        %4025 = vmatprep.subr.mxu0 0.0
        %4026 = vmatpush1.msra.mxu0 0.0
        %4027 = vmatprep.subr.mxu0 0.0
        %4028 = vmatpush1.msra.mxu0 0.0
        %4029 = vmatprep.subr.mxu0 0.0
        %4030 = vmatpush1.msra.mxu0 0.0
        %4031 = vmatprep.subr.mxu0 0.0
        %4032 = vmatpush1.msra.mxu0 0.0
        %4033 = vmatprep.subr.mxu0 0.0
        %4034 = vmatpush1.msra.mxu0 0.0
        %4035 = vmatprep.subr.mxu0 0.0
        %4036 = vmatpush1.msra.mxu0 0.0
        %4037 = vmatprep.subr.mxu0 0.0
        %4038 = vmatpush1.msra.mxu0 0.0
        %4039 = vmatprep.subr.mxu0 0.0
        %4040 = vmatpush1.msra.mxu0 0.0
        %4041 = vmatprep.subr.mxu0 0.0
        %4042 = vmatpush1.msra.mxu0 0.0
        %4043 = vmatprep.subr.mxu0 0.0
        %4044 = vmatpush1.msra.mxu0 0.0
        %4045 = vmatprep.subr.mxu0 0.0
        %4046 = vmatpush1.msra.mxu0 0.0
        %4047 = vmatprep.subr.mxu0 0.0
        %4048 = vmatpush1.msra.mxu0 0.0
        %4049 = vmatprep.subr.mxu0 0.0
        %4050 = vmatpush1.msra.mxu0 0.0
        %4051 = vmatprep.subr.mxu0 0.0
        %4052 = vmatpush1.msra.mxu0 0.0
        %4053 = vmatprep.subr.mxu0 0.0
        %4054 = vmatpush1.msra.mxu0 0.0
        %4055 = vmatprep.subr.mxu0 0.0
        %4056 = vmatpush1.msra.mxu0 0.0
        %4057 = vmatprep.subr.mxu0 0.0
        %4058 = vmatpush1.msra.mxu0 0.0
        %4059 = vmatprep.subr.mxu0 0.0
        %4060 = vmatpush1.msra.mxu0 0.0
        %4061 = vmatprep.subr.mxu0 0.0
        %4062 = vmatpush1.msra.mxu0 0.0
        %4063 = vmatprep.subr.mxu0 0.0
        %4064 = vmatpush1.msra.mxu0 0.0
        %4065 = vmatprep.subr.mxu0 0.0
        %4066 = vmatpush1.msra.mxu0 0.0
        %4067 = vmatprep.subr.mxu0 0.0
        %4068 = vmatpush1.msra.mxu0 0.0
        %4069 = vmatprep.subr.mxu0 0.0
        %4070 = vmatpush1.msra.mxu0 0.0
        %4071 = vmatprep.subr.mxu0 0.0
        %4072 = vmatpush1.msra.mxu0 0.0
        %4073 = vmatprep.mubr.f32.mxu0 0.0
        %4074 = vmatmul.mubr.f32.gmra.mrb[0].mxu0 %v4007
        %v4075 = vpop.f32.mrb[0].mxu0
        %v4076 = vadd.f32 0.0, %v4075
        %v4077 = vpop.f32.mrb[0].mxu0
        %4078 = vdwg.mxu0
        %v4080 = vsel %vm3176, %v3480, 0
        %4082 = vmatprep.subr.mxu0 0.0
        %4083 = vmatpush1.msra.mxu0 %v3536
        %4084 = vmatprep.subr.mxu0 0.0
        %4085 = vmatpush1.msra.mxu0 0.0
        %4086 = vmatprep.subr.mxu0 0.0
        %4087 = vmatpush1.msra.mxu0 0.0
        %4088 = vmatprep.subr.mxu0 0.0
        %4089 = vmatpush1.msra.mxu0 0.0
        %4090 = vmatprep.subr.mxu0 0.0
        %4091 = vmatpush1.msra.mxu0 0.0
        %4092 = vmatprep.subr.mxu0 0.0
        %4093 = vmatpush1.msra.mxu0 0.0
        %4094 = vmatprep.subr.mxu0 0.0
        %4095 = vmatpush1.msra.mxu0 0.0
        %4096 = vmatprep.subr.mxu0 0.0
        %4097 = vmatpush1.msra.mxu0 0.0
        %4098 = vmatprep.subr.mxu0 0.0
        %4099 = vmatpush1.msra.mxu0 0.0
        %4100 = vmatprep.subr.mxu0 0.0
        %4101 = vmatpush1.msra.mxu0 0.0
        %4102 = vmatprep.subr.mxu0 0.0
        %4103 = vmatpush1.msra.mxu0 0.0
        %4104 = vmatprep.subr.mxu0 0.0
        %4105 = vmatpush1.msra.mxu0 0.0
        %4106 = vmatprep.subr.mxu0 0.0
        %4107 = vmatpush1.msra.mxu0 0.0
        %4108 = vmatprep.subr.mxu0 0.0
        %4109 = vmatpush1.msra.mxu0 0.0
        %4110 = vmatprep.subr.mxu0 0.0
        %4111 = vmatpush1.msra.mxu0 0.0
        %4112 = vmatprep.subr.mxu0 0.0
        %4113 = vmatpush1.msra.mxu0 0.0
        %4114 = vmatprep.subr.mxu0 0.0
        %4115 = vmatpush1.msra.mxu0 0.0
        %4116 = vmatprep.subr.mxu0 0.0
        %4117 = vmatpush1.msra.mxu0 0.0
        %4118 = vmatprep.subr.mxu0 0.0
        %4119 = vmatpush1.msra.mxu0 0.0
        %4120 = vmatprep.subr.mxu0 0.0
        %4121 = vmatpush1.msra.mxu0 0.0
        %4122 = vmatprep.subr.mxu0 0.0
        %4123 = vmatpush1.msra.mxu0 0.0
        %4124 = vmatprep.subr.mxu0 0.0
        %4125 = vmatpush1.msra.mxu0 0.0
        %4126 = vmatprep.subr.mxu0 0.0
        %4127 = vmatpush1.msra.mxu0 0.0
        %4128 = vmatprep.subr.mxu0 0.0
        %4129 = vmatpush1.msra.mxu0 0.0
        %4130 = vmatprep.subr.mxu0 0.0
        %4131 = vmatpush1.msra.mxu0 0.0
        %4132 = vmatprep.subr.mxu0 0.0
        %4133 = vmatpush1.msra.mxu0 0.0
        %4134 = vmatprep.subr.mxu0 0.0
        %4135 = vmatpush1.msra.mxu0 0.0
        %4136 = vmatprep.subr.mxu0 0.0
        %4137 = vmatpush1.msra.mxu0 0.0
        %4138 = vmatprep.subr.mxu0 0.0
        %4139 = vmatpush1.msra.mxu0 0.0
        %4140 = vmatprep.subr.mxu0 0.0
        %4141 = vmatpush1.msra.mxu0 0.0
        %4142 = vmatprep.subr.mxu0 0.0
        %4143 = vmatpush1.msra.mxu0 0.0
        %4144 = vmatprep.subr.mxu0 0.0
        %4145 = vmatpush1.msra.mxu0 0.0
        %4146 = vmatprep.mubr.f32.mxu0 0.0
        %4147 = vmatmul.mubr.f32.gmra.mrb[0].mxu0 %v4080
        %v4148 = vpop.f32.mrb[0].mxu0
        %v4149 = vadd.f32 0.0, %v4148
        %v4150 = vpop.f32.mrb[0].mxu0
        %4151 = vdwg.mxu0
        %v4153 = vsel %vm3176, %v3482, 0
        %4155 = vmatprep.subr.mxu0 0.0
        %4156 = vmatpush1.msra.mxu0 %v3537
        %4157 = vmatprep.subr.mxu0 0.0
        %4158 = vmatpush1.msra.mxu0 0.0
        %4159 = vmatprep.subr.mxu0 0.0
        %4160 = vmatpush1.msra.mxu0 0.0
        %4161 = vmatprep.subr.mxu0 0.0
        %4162 = vmatpush1.msra.mxu0 0.0
        %4163 = vmatprep.subr.mxu0 0.0
        %4164 = vmatpush1.msra.mxu0 0.0
        %4165 = vmatprep.subr.mxu0 0.0
        %4166 = vmatpush1.msra.mxu0 0.0
        %4167 = vmatprep.subr.mxu0 0.0
        %4168 = vmatpush1.msra.mxu0 0.0
        %4169 = vmatprep.subr.mxu0 0.0
        %4170 = vmatpush1.msra.mxu0 0.0
        %4171 = vmatprep.subr.mxu0 0.0
        %4172 = vmatpush1.msra.mxu0 0.0
        %4173 = vmatprep.subr.mxu0 0.0
        %4174 = vmatpush1.msra.mxu0 0.0
        %4175 = vmatprep.subr.mxu0 0.0
        %4176 = vmatpush1.msra.mxu0 0.0
        %4177 = vmatprep.subr.mxu0 0.0
        %4178 = vmatpush1.msra.mxu0 0.0
        %4179 = vmatprep.subr.mxu0 0.0
        %4180 = vmatpush1.msra.mxu0 0.0
        %4181 = vmatprep.subr.mxu0 0.0
        %4182 = vmatpush1.msra.mxu0 0.0
        %4183 = vmatprep.subr.mxu0 0.0
        %4184 = vmatpush1.msra.mxu0 0.0
        %4185 = vmatprep.subr.mxu0 0.0
        %4186 = vmatpush1.msra.mxu0 0.0
        %4187 = vmatprep.subr.mxu0 0.0
        %4188 = vmatpush1.msra.mxu0 0.0
        %4189 = vmatprep.subr.mxu0 0.0
        %4190 = vmatpush1.msra.mxu0 0.0
        %4191 = vmatprep.subr.mxu0 0.0
        %4192 = vmatpush1.msra.mxu0 0.0
        %4193 = vmatprep.subr.mxu0 0.0
        %4194 = vmatpush1.msra.mxu0 0.0
        %4195 = vmatprep.subr.mxu0 0.0
        %4196 = vmatpush1.msra.mxu0 0.0
        %4197 = vmatprep.subr.mxu0 0.0
        %4198 = vmatpush1.msra.mxu0 0.0
        %4199 = vmatprep.subr.mxu0 0.0
        %4200 = vmatpush1.msra.mxu0 0.0
        %4201 = vmatprep.subr.mxu0 0.0
        %4202 = vmatpush1.msra.mxu0 0.0
        %4203 = vmatprep.subr.mxu0 0.0
        %4204 = vmatpush1.msra.mxu0 0.0
        %4205 = vmatprep.subr.mxu0 0.0
        %4206 = vmatpush1.msra.mxu0 0.0
        %4207 = vmatprep.subr.mxu0 0.0
        %4208 = vmatpush1.msra.mxu0 0.0
        %4209 = vmatprep.subr.mxu0 0.0
        %4210 = vmatpush1.msra.mxu0 0.0
        %4211 = vmatprep.subr.mxu0 0.0
        %4212 = vmatpush1.msra.mxu0 0.0
        %4213 = vmatprep.subr.mxu0 0.0
        %4214 = vmatpush1.msra.mxu0 0.0
        %4215 = vmatprep.subr.mxu0 0.0
        %4216 = vmatpush1.msra.mxu0 0.0
        %4217 = vmatprep.subr.mxu0 0.0
        %4218 = vmatpush1.msra.mxu0 0.0
        %4219 = vmatprep.mubr.f32.mxu0 0.0
        %4220 = vmatmul.mubr.f32.gmra.mrb[0].mxu0 %v4153
        %v4221 = vpop.f32.mrb[0].mxu0
        %v4222 = vadd.f32 0.0, %v4221
        %v4223 = vpop.f32.mrb[0].mxu0
        %4224 = vdwg.mxu0
        %v4226 = vsel %vm3176, %v3484, 0
        %4228 = vmatprep.subr.mxu0 0.0
        %4229 = vmatpush1.msra.mxu0 %v3538
        %4230 = vmatprep.subr.mxu0 0.0
        %4231 = vmatpush1.msra.mxu0 0.0
        %4232 = vmatprep.subr.mxu0 0.0
        %4233 = vmatpush1.msra.mxu0 0.0
        %4234 = vmatprep.subr.mxu0 0.0
        %4235 = vmatpush1.msra.mxu0 0.0
        %4236 = vmatprep.subr.mxu0 0.0
        %4237 = vmatpush1.msra.mxu0 0.0
        %4238 = vmatprep.subr.mxu0 0.0
        %4239 = vmatpush1.msra.mxu0 0.0
        %4240 = vmatprep.subr.mxu0 0.0
        %4241 = vmatpush1.msra.mxu0 0.0
        %4242 = vmatprep.subr.mxu0 0.0
        %4243 = vmatpush1.msra.mxu0 0.0
        %4244 = vmatprep.subr.mxu0 0.0
        %4245 = vmatpush1.msra.mxu0 0.0
        %4246 = vmatprep.subr.mxu0 0.0
        %4247 = vmatpush1.msra.mxu0 0.0
        %4248 = vmatprep.subr.mxu0 0.0
        %4249 = vmatpush1.msra.mxu0 0.0
        %4250 = vmatprep.subr.mxu0 0.0
        %4251 = vmatpush1.msra.mxu0 0.0
        %4252 = vmatprep.subr.mxu0 0.0
        %4253 = vmatpush1.msra.mxu0 0.0
        %4254 = vmatprep.subr.mxu0 0.0
        %4255 = vmatpush1.msra.mxu0 0.0
        %4256 = vmatprep.subr.mxu0 0.0
        %4257 = vmatpush1.msra.mxu0 0.0
        %4258 = vmatprep.subr.mxu0 0.0
        %4259 = vmatpush1.msra.mxu0 0.0
        %4260 = vmatprep.subr.mxu0 0.0
        %4261 = vmatpush1.msra.mxu0 0.0
        %4262 = vmatprep.subr.mxu0 0.0
        %4263 = vmatpush1.msra.mxu0 0.0
        %4264 = vmatprep.subr.mxu0 0.0
        %4265 = vmatpush1.msra.mxu0 0.0
        %4266 = vmatprep.subr.mxu0 0.0
        %4267 = vmatpush1.msra.mxu0 0.0
        %4268 = vmatprep.subr.mxu0 0.0
        %4269 = vmatpush1.msra.mxu0 0.0
        %4270 = vmatprep.subr.mxu0 0.0
        %4271 = vmatpush1.msra.mxu0 0.0
        %4272 = vmatprep.subr.mxu0 0.0
        %4273 = vmatpush1.msra.mxu0 0.0
        %4274 = vmatprep.subr.mxu0 0.0
        %4275 = vmatpush1.msra.mxu0 0.0
        %4276 = vmatprep.subr.mxu0 0.0
        %4277 = vmatpush1.msra.mxu0 0.0
        %4278 = vmatprep.subr.mxu0 0.0
        %4279 = vmatpush1.msra.mxu0 0.0
        %4280 = vmatprep.subr.mxu0 0.0
        %4281 = vmatpush1.msra.mxu0 0.0
        %4282 = vmatprep.subr.mxu0 0.0
        %4283 = vmatpush1.msra.mxu0 0.0
        %4284 = vmatprep.subr.mxu0 0.0
        %4285 = vmatpush1.msra.mxu0 0.0
        %4286 = vmatprep.subr.mxu0 0.0
        %4287 = vmatpush1.msra.mxu0 0.0
        %4288 = vmatprep.subr.mxu0 0.0
        %4289 = vmatpush1.msra.mxu0 0.0
        %4290 = vmatprep.subr.mxu0 0.0
        %4291 = vmatpush1.msra.mxu0 0.0
        %4292 = vmatprep.mubr.f32.mxu0 0.0
        %4293 = vmatmul.mubr.f32.gmra.mrb[0].mxu0 %v4226
        %v4294 = vpop.f32.mrb[0].mxu0
        %v4295 = vadd.f32 0.0, %v4294
        %v4296 = vpop.f32.mrb[0].mxu0
        %4297 = vdwg.mxu0
        %v4299 = vsel %vm3176, %v3486, 0
        %4301 = vmatprep.subr.mxu0 0.0
        %4302 = vmatpush1.msra.mxu0 %v3539
        %4303 = vmatprep.subr.mxu0 0.0
        %4304 = vmatpush1.msra.mxu0 0.0
        %4305 = vmatprep.subr.mxu0 0.0
        %4306 = vmatpush1.msra.mxu0 0.0
        %4307 = vmatprep.subr.mxu0 0.0
        %4308 = vmatpush1.msra.mxu0 0.0
        %4309 = vmatprep.subr.mxu0 0.0
        %4310 = vmatpush1.msra.mxu0 0.0
        %4311 = vmatprep.subr.mxu0 0.0
        %4312 = vmatpush1.msra.mxu0 0.0
        %4313 = vmatprep.subr.mxu0 0.0
        %4314 = vmatpush1.msra.mxu0 0.0
        %4315 = vmatprep.subr.mxu0 0.0
        %4316 = vmatpush1.msra.mxu0 0.0
        %4317 = vmatprep.subr.mxu0 0.0
        %4318 = vmatpush1.msra.mxu0 0.0
        %4319 = vmatprep.subr.mxu0 0.0
        %4320 = vmatpush1.msra.mxu0 0.0
        %4321 = vmatprep.subr.mxu0 0.0
        %4322 = vmatpush1.msra.mxu0 0.0
        %4323 = vmatprep.subr.mxu0 0.0
        %4324 = vmatpush1.msra.mxu0 0.0
        %4325 = vmatprep.subr.mxu0 0.0
        %4326 = vmatpush1.msra.mxu0 0.0
        %4327 = vmatprep.subr.mxu0 0.0
        %4328 = vmatpush1.msra.mxu0 0.0
        %4329 = vmatprep.subr.mxu0 0.0
        %4330 = vmatpush1.msra.mxu0 0.0
        %4331 = vmatprep.subr.mxu0 0.0
        %4332 = vmatpush1.msra.mxu0 0.0
        %4333 = vmatprep.subr.mxu0 0.0
        %4334 = vmatpush1.msra.mxu0 0.0
        %4335 = vmatprep.subr.mxu0 0.0
        %4336 = vmatpush1.msra.mxu0 0.0
        %4337 = vmatprep.subr.mxu0 0.0
        %4338 = vmatpush1.msra.mxu0 0.0
        %4339 = vmatprep.subr.mxu0 0.0
        %4340 = vmatpush1.msra.mxu0 0.0
        %4341 = vmatprep.subr.mxu0 0.0
        %4342 = vmatpush1.msra.mxu0 0.0
        %4343 = vmatprep.subr.mxu0 0.0
        %4344 = vmatpush1.msra.mxu0 0.0
        %4345 = vmatprep.subr.mxu0 0.0
        %4346 = vmatpush1.msra.mxu0 0.0
        %4347 = vmatprep.subr.mxu0 0.0
        %4348 = vmatpush1.msra.mxu0 0.0
        %4349 = vmatprep.subr.mxu0 0.0
        %4350 = vmatpush1.msra.mxu0 0.0
        %4351 = vmatprep.subr.mxu0 0.0
        %4352 = vmatpush1.msra.mxu0 0.0
        %4353 = vmatprep.subr.mxu0 0.0
        %4354 = vmatpush1.msra.mxu0 0.0
        %4355 = vmatprep.subr.mxu0 0.0
        %4356 = vmatpush1.msra.mxu0 0.0
        %4357 = vmatprep.subr.mxu0 0.0
        %4358 = vmatpush1.msra.mxu0 0.0
        %4359 = vmatprep.subr.mxu0 0.0
        %4360 = vmatpush1.msra.mxu0 0.0
        %4361 = vmatprep.subr.mxu0 0.0
        %4362 = vmatpush1.msra.mxu0 0.0
        %4363 = vmatprep.subr.mxu0 0.0
        %4364 = vmatpush1.msra.mxu0 0.0
        %4365 = vmatprep.mubr.f32.mxu0 0.0
        %4366 = vmatmul.mubr.f32.gmra.mrb[0].mxu0 %v4299
        %v4367 = vpop.f32.mrb[0].mxu0
        %v4368 = vadd.f32 0.0, %v4367
        %v4369 = vpop.f32.mrb[0].mxu0
        %4370 = vdwg.mxu0
        %v4372 = vsel %vm3176, %v3488, 0
        %4374 = vmatprep.subr.mxu0 0.0
        %4375 = vmatpush1.msra.mxu0 %v3540
        %4376 = vmatprep.subr.mxu0 0.0
        %4377 = vmatpush1.msra.mxu0 0.0
        %4378 = vmatprep.subr.mxu0 0.0
        %4379 = vmatpush1.msra.mxu0 0.0
        %4380 = vmatprep.subr.mxu0 0.0
        %4381 = vmatpush1.msra.mxu0 0.0
        %4382 = vmatprep.subr.mxu0 0.0
        %4383 = vmatpush1.msra.mxu0 0.0
        %4384 = vmatprep.subr.mxu0 0.0
        %4385 = vmatpush1.msra.mxu0 0.0
        %4386 = vmatprep.subr.mxu0 0.0
        %4387 = vmatpush1.msra.mxu0 0.0
        %4388 = vmatprep.subr.mxu0 0.0
        %4389 = vmatpush1.msra.mxu0 0.0
        %4390 = vmatprep.subr.mxu0 0.0
        %4391 = vmatpush1.msra.mxu0 0.0
        %4392 = vmatprep.subr.mxu0 0.0
        %4393 = vmatpush1.msra.mxu0 0.0
        %4394 = vmatprep.subr.mxu0 0.0
        %4395 = vmatpush1.msra.mxu0 0.0
        %4396 = vmatprep.subr.mxu0 0.0
        %4397 = vmatpush1.msra.mxu0 0.0
        %4398 = vmatprep.subr.mxu0 0.0
        %4399 = vmatpush1.msra.mxu0 0.0
        %4400 = vmatprep.subr.mxu0 0.0
        %4401 = vmatpush1.msra.mxu0 0.0
        %4402 = vmatprep.subr.mxu0 0.0
        %4403 = vmatpush1.msra.mxu0 0.0
        %4404 = vmatprep.subr.mxu0 0.0
        %4405 = vmatpush1.msra.mxu0 0.0
        %4406 = vmatprep.subr.mxu0 0.0
        %4407 = vmatpush1.msra.mxu0 0.0
        %4408 = vmatprep.subr.mxu0 0.0
        %4409 = vmatpush1.msra.mxu0 0.0
        %4410 = vmatprep.subr.mxu0 0.0
        %4411 = vmatpush1.msra.mxu0 0.0
        %4412 = vmatprep.subr.mxu0 0.0
        %4413 = vmatpush1.msra.mxu0 0.0
        %4414 = vmatprep.subr.mxu0 0.0
        %4415 = vmatpush1.msra.mxu0 0.0
        %4416 = vmatprep.subr.mxu0 0.0
        %4417 = vmatpush1.msra.mxu0 0.0
        %4418 = vmatprep.subr.mxu0 0.0
        %4419 = vmatpush1.msra.mxu0 0.0
        %4420 = vmatprep.subr.mxu0 0.0
        %4421 = vmatpush1.msra.mxu0 0.0
        %4422 = vmatprep.subr.mxu0 0.0
        %4423 = vmatpush1.msra.mxu0 0.0
        %4424 = vmatprep.subr.mxu0 0.0
        %4425 = vmatpush1.msra.mxu0 0.0
        %4426 = vmatprep.subr.mxu0 0.0
        %4427 = vmatpush1.msra.mxu0 0.0
        %4428 = vmatprep.subr.mxu0 0.0
        %4429 = vmatpush1.msra.mxu0 0.0
        %4430 = vmatprep.subr.mxu0 0.0
        %4431 = vmatpush1.msra.mxu0 0.0
        %4432 = vmatprep.subr.mxu0 0.0
        %4433 = vmatpush1.msra.mxu0 0.0
        %4434 = vmatprep.subr.mxu0 0.0
        %4435 = vmatpush1.msra.mxu0 0.0
        %4436 = vmatprep.subr.mxu0 0.0
        %4437 = vmatpush1.msra.mxu0 0.0
        %4438 = vmatprep.mubr.f32.mxu0 0.0
        %4439 = vmatmul.mubr.f32.gmra.mrb[0].mxu0 %v4372
        %v4440 = vpop.f32.mrb[0].mxu0
        %v4441 = vadd.f32 0.0, %v4440
        %v4442 = vpop.f32.mrb[0].mxu0
        %4443 = vdwg.mxu0
        %v4445 = vsel %vm3176, %v3490, 0
        %4447 = vmatprep.subr.mxu0 0.0
        %4448 = vmatpush1.msra.mxu0 %v3541
        %4449 = vmatprep.subr.mxu0 0.0
        %4450 = vmatpush1.msra.mxu0 0.0
        %4451 = vmatprep.subr.mxu0 0.0
        %4452 = vmatpush1.msra.mxu0 0.0
        %4453 = vmatprep.subr.mxu0 0.0
        %4454 = vmatpush1.msra.mxu0 0.0
        %4455 = vmatprep.subr.mxu0 0.0
        %4456 = vmatpush1.msra.mxu0 0.0
        %4457 = vmatprep.subr.mxu0 0.0
        %4458 = vmatpush1.msra.mxu0 0.0
        %4459 = vmatprep.subr.mxu0 0.0
        %4460 = vmatpush1.msra.mxu0 0.0
        %4461 = vmatprep.subr.mxu0 0.0
        %4462 = vmatpush1.msra.mxu0 0.0
        %4463 = vmatprep.subr.mxu0 0.0
        %4464 = vmatpush1.msra.mxu0 0.0
        %4465 = vmatprep.subr.mxu0 0.0
        %4466 = vmatpush1.msra.mxu0 0.0
        %4467 = vmatprep.subr.mxu0 0.0
        %4468 = vmatpush1.msra.mxu0 0.0
        %4469 = vmatprep.subr.mxu0 0.0
        %4470 = vmatpush1.msra.mxu0 0.0
        %4471 = vmatprep.subr.mxu0 0.0
        %4472 = vmatpush1.msra.mxu0 0.0
        %4473 = vmatprep.subr.mxu0 0.0
        %4474 = vmatpush1.msra.mxu0 0.0
        %4475 = vmatprep.subr.mxu0 0.0
        %4476 = vmatpush1.msra.mxu0 0.0
        %4477 = vmatprep.subr.mxu0 0.0
        %4478 = vmatpush1.msra.mxu0 0.0
        %4479 = vmatprep.subr.mxu0 0.0
        %4480 = vmatpush1.msra.mxu0 0.0
        %4481 = vmatprep.subr.mxu0 0.0
        %4482 = vmatpush1.msra.mxu0 0.0
        %4483 = vmatprep.subr.mxu0 0.0
        %4484 = vmatpush1.msra.mxu0 0.0
        %4485 = vmatprep.subr.mxu0 0.0
        %4486 = vmatpush1.msra.mxu0 0.0
        %4487 = vmatprep.subr.mxu0 0.0
        %4488 = vmatpush1.msra.mxu0 0.0
        %4489 = vmatprep.subr.mxu0 0.0
        %4490 = vmatpush1.msra.mxu0 0.0
        %4491 = vmatprep.subr.mxu0 0.0
        %4492 = vmatpush1.msra.mxu0 0.0
        %4493 = vmatprep.subr.mxu0 0.0
        %4494 = vmatpush1.msra.mxu0 0.0
        %4495 = vmatprep.subr.mxu0 0.0
        %4496 = vmatpush1.msra.mxu0 0.0
        %4497 = vmatprep.subr.mxu0 0.0
        %4498 = vmatpush1.msra.mxu0 0.0
        %4499 = vmatprep.subr.mxu0 0.0
        %4500 = vmatpush1.msra.mxu0 0.0
        %4501 = vmatprep.subr.mxu0 0.0
        %4502 = vmatpush1.msra.mxu0 0.0
        %4503 = vmatprep.subr.mxu0 0.0
        %4504 = vmatpush1.msra.mxu0 0.0
        %4505 = vmatprep.subr.mxu0 0.0
        %4506 = vmatpush1.msra.mxu0 0.0
        %4507 = vmatprep.subr.mxu0 0.0
        %4508 = vmatpush1.msra.mxu0 0.0
        %4509 = vmatprep.subr.mxu0 0.0
        %4510 = vmatpush1.msra.mxu0 0.0
        %4511 = vmatprep.mubr.f32.mxu0 0.0
        %4512 = vmatmul.mubr.f32.gmra.mrb[0].mxu0 %v4445
        %v4513 = vpop.f32.mrb[0].mxu0
        %v4514 = vadd.f32 0.0, %v4513
        %v4515 = vpop.f32.mrb[0].mxu0
        %4516 = vdwg.mxu0
        %v4518 = vsel %vm3176, %v3492, 0
        %4520 = vmatprep.subr.mxu0 0.0
        %4521 = vmatpush1.msra.mxu0 %v3542
        %4522 = vmatprep.subr.mxu0 0.0
        %4523 = vmatpush1.msra.mxu0 0.0
        %4524 = vmatprep.subr.mxu0 0.0
        %4525 = vmatpush1.msra.mxu0 0.0
        %4526 = vmatprep.subr.mxu0 0.0
        %4527 = vmatpush1.msra.mxu0 0.0
        %4528 = vmatprep.subr.mxu0 0.0
        %4529 = vmatpush1.msra.mxu0 0.0
        %4530 = vmatprep.subr.mxu0 0.0
        %4531 = vmatpush1.msra.mxu0 0.0
        %4532 = vmatprep.subr.mxu0 0.0
        %4533 = vmatpush1.msra.mxu0 0.0
        %4534 = vmatprep.subr.mxu0 0.0
        %4535 = vmatpush1.msra.mxu0 0.0
        %4536 = vmatprep.subr.mxu0 0.0
        %4537 = vmatpush1.msra.mxu0 0.0
        %4538 = vmatprep.subr.mxu0 0.0
        %4539 = vmatpush1.msra.mxu0 0.0
        %4540 = vmatprep.subr.mxu0 0.0
        %4541 = vmatpush1.msra.mxu0 0.0
        %4542 = vmatprep.subr.mxu0 0.0
        %4543 = vmatpush1.msra.mxu0 0.0
        %4544 = vmatprep.subr.mxu0 0.0
        %4545 = vmatpush1.msra.mxu0 0.0
        %4546 = vmatprep.subr.mxu0 0.0
        %4547 = vmatpush1.msra.mxu0 0.0
        %4548 = vmatprep.subr.mxu0 0.0
        %4549 = vmatpush1.msra.mxu0 0.0
        %4550 = vmatprep.subr.mxu0 0.0
        %4551 = vmatpush1.msra.mxu0 0.0
        %4552 = vmatprep.subr.mxu0 0.0
        %4553 = vmatpush1.msra.mxu0 0.0
        %4554 = vmatprep.subr.mxu0 0.0
        %4555 = vmatpush1.msra.mxu0 0.0
        %4556 = vmatprep.subr.mxu0 0.0
        %4557 = vmatpush1.msra.mxu0 0.0
        %4558 = vmatprep.subr.mxu0 0.0
        %4559 = vmatpush1.msra.mxu0 0.0
        %4560 = vmatprep.subr.mxu0 0.0
        %4561 = vmatpush1.msra.mxu0 0.0
        %4562 = vmatprep.subr.mxu0 0.0
        %4563 = vmatpush1.msra.mxu0 0.0
        %4564 = vmatprep.subr.mxu0 0.0
        %4565 = vmatpush1.msra.mxu0 0.0
        %4566 = vmatprep.subr.mxu0 0.0
        %4567 = vmatpush1.msra.mxu0 0.0
        %4568 = vmatprep.subr.mxu0 0.0
        %4569 = vmatpush1.msra.mxu0 0.0
        %4570 = vmatprep.subr.mxu0 0.0
        %4571 = vmatpush1.msra.mxu0 0.0
        %4572 = vmatprep.subr.mxu0 0.0
        %4573 = vmatpush1.msra.mxu0 0.0
        %4574 = vmatprep.subr.mxu0 0.0
        %4575 = vmatpush1.msra.mxu0 0.0
        %4576 = vmatprep.subr.mxu0 0.0
        %4577 = vmatpush1.msra.mxu0 0.0
        %4578 = vmatprep.subr.mxu0 0.0
        %4579 = vmatpush1.msra.mxu0 0.0
        %4580 = vmatprep.subr.mxu0 0.0
        %4581 = vmatpush1.msra.mxu0 0.0
        %4582 = vmatprep.subr.mxu0 0.0
        %4583 = vmatpush1.msra.mxu0 0.0
        %4584 = vmatprep.mubr.f32.mxu0 0.0
        %4585 = vmatmul.mubr.f32.gmra.mrb[0].mxu0 %v4518
        %v4586 = vpop.f32.mrb[0].mxu0
        %v4587 = vadd.f32 0.0, %v4586
        %v4588 = vpop.f32.mrb[0].mxu0
        %4589 = vdwg.mxu0
        %v4591 = vsel %vm3176, %v3494, 0
        %4593 = vmatprep.subr.mxu0 0.0
        %4594 = vmatpush1.msra.mxu0 %v3543
        %4595 = vmatprep.subr.mxu0 0.0
        %4596 = vmatpush1.msra.mxu0 0.0
        %4597 = vmatprep.subr.mxu0 0.0
        %4598 = vmatpush1.msra.mxu0 0.0
        %4599 = vmatprep.subr.mxu0 0.0
        %4600 = vmatpush1.msra.mxu0 0.0
        %4601 = vmatprep.subr.mxu0 0.0
        %4602 = vmatpush1.msra.mxu0 0.0
        %4603 = vmatprep.subr.mxu0 0.0
        %4604 = vmatpush1.msra.mxu0 0.0
        %4605 = vmatprep.subr.mxu0 0.0
        %4606 = vmatpush1.msra.mxu0 0.0
        %4607 = vmatprep.subr.mxu0 0.0
        %4608 = vmatpush1.msra.mxu0 0.0
        %4609 = vmatprep.subr.mxu0 0.0
        %4610 = vmatpush1.msra.mxu0 0.0
        %4611 = vmatprep.subr.mxu0 0.0
        %4612 = vmatpush1.msra.mxu0 0.0
        %4613 = vmatprep.subr.mxu0 0.0
        %4614 = vmatpush1.msra.mxu0 0.0
        %4615 = vmatprep.subr.mxu0 0.0
        %4616 = vmatpush1.msra.mxu0 0.0
        %4617 = vmatprep.subr.mxu0 0.0
        %4618 = vmatpush1.msra.mxu0 0.0
        %4619 = vmatprep.subr.mxu0 0.0
        %4620 = vmatpush1.msra.mxu0 0.0
        %4621 = vmatprep.subr.mxu0 0.0
        %4622 = vmatpush1.msra.mxu0 0.0
        %4623 = vmatprep.subr.mxu0 0.0
        %4624 = vmatpush1.msra.mxu0 0.0
        %4625 = vmatprep.subr.mxu0 0.0
        %4626 = vmatpush1.msra.mxu0 0.0
        %4627 = vmatprep.subr.mxu0 0.0
        %4628 = vmatpush1.msra.mxu0 0.0
        %4629 = vmatprep.subr.mxu0 0.0
        %4630 = vmatpush1.msra.mxu0 0.0
        %4631 = vmatprep.subr.mxu0 0.0
        %4632 = vmatpush1.msra.mxu0 0.0
        %4633 = vmatprep.subr.mxu0 0.0
        %4634 = vmatpush1.msra.mxu0 0.0
        %4635 = vmatprep.subr.mxu0 0.0
        %4636 = vmatpush1.msra.mxu0 0.0
        %4637 = vmatprep.subr.mxu0 0.0
        %4638 = vmatpush1.msra.mxu0 0.0
        %4639 = vmatprep.subr.mxu0 0.0
        %4640 = vmatpush1.msra.mxu0 0.0
        %4641 = vmatprep.subr.mxu0 0.0
        %4642 = vmatpush1.msra.mxu0 0.0
        %4643 = vmatprep.subr.mxu0 0.0
        %4644 = vmatpush1.msra.mxu0 0.0
        %4645 = vmatprep.subr.mxu0 0.0
        %4646 = vmatpush1.msra.mxu0 0.0
        %4647 = vmatprep.subr.mxu0 0.0
        %4648 = vmatpush1.msra.mxu0 0.0
        %4649 = vmatprep.subr.mxu0 0.0
        %4650 = vmatpush1.msra.mxu0 0.0
        %4651 = vmatprep.subr.mxu0 0.0
        %4652 = vmatpush1.msra.mxu0 0.0
        %4653 = vmatprep.subr.mxu0 0.0
        %4654 = vmatpush1.msra.mxu0 0.0
        %4655 = vmatprep.subr.mxu0 0.0
        %4656 = vmatpush1.msra.mxu0 0.0
        %4657 = vmatprep.mubr.f32.mxu0 0.0
        %4658 = vmatmul.mubr.f32.gmra.mrb[0].mxu0 %v4591
        %v4659 = vpop.f32.mrb[0].mxu0
        %v4660 = vadd.f32 0.0, %v4659
        %v4661 = vpop.f32.mrb[0].mxu0
        %4662 = vdwg.mxu0
        %v4664 = vsel %vm3176, %v3496, 0
        %4666 = vmatprep.subr.mxu0 0.0
        %4667 = vmatpush1.msra.mxu0 %v3544
        %4668 = vmatprep.subr.mxu0 0.0
        %4669 = vmatpush1.msra.mxu0 0.0
        %4670 = vmatprep.subr.mxu0 0.0
        %4671 = vmatpush1.msra.mxu0 0.0
        %4672 = vmatprep.subr.mxu0 0.0
        %4673 = vmatpush1.msra.mxu0 0.0
        %4674 = vmatprep.subr.mxu0 0.0
        %4675 = vmatpush1.msra.mxu0 0.0
        %4676 = vmatprep.subr.mxu0 0.0
        %4677 = vmatpush1.msra.mxu0 0.0
        %4678 = vmatprep.subr.mxu0 0.0
        %4679 = vmatpush1.msra.mxu0 0.0
        %4680 = vmatprep.subr.mxu0 0.0
        %4681 = vmatpush1.msra.mxu0 0.0
        %4682 = vmatprep.subr.mxu0 0.0
        %4683 = vmatpush1.msra.mxu0 0.0
        %4684 = vmatprep.subr.mxu0 0.0
        %4685 = vmatpush1.msra.mxu0 0.0
        %4686 = vmatprep.subr.mxu0 0.0
        %4687 = vmatpush1.msra.mxu0 0.0
        %4688 = vmatprep.subr.mxu0 0.0
        %4689 = vmatpush1.msra.mxu0 0.0
        %4690 = vmatprep.subr.mxu0 0.0
        %4691 = vmatpush1.msra.mxu0 0.0
        %4692 = vmatprep.subr.mxu0 0.0
        %4693 = vmatpush1.msra.mxu0 0.0
        %4694 = vmatprep.subr.mxu0 0.0
        %4695 = vmatpush1.msra.mxu0 0.0
        %4696 = vmatprep.subr.mxu0 0.0
        %4697 = vmatpush1.msra.mxu0 0.0
        %4698 = vmatprep.subr.mxu0 0.0
        %4699 = vmatpush1.msra.mxu0 0.0
        %4700 = vmatprep.subr.mxu0 0.0
        %4701 = vmatpush1.msra.mxu0 0.0
        %4702 = vmatprep.subr.mxu0 0.0
        %4703 = vmatpush1.msra.mxu0 0.0
        %4704 = vmatprep.subr.mxu0 0.0
        %4705 = vmatpush1.msra.mxu0 0.0
        %4706 = vmatprep.subr.mxu0 0.0
        %4707 = vmatpush1.msra.mxu0 0.0
        %4708 = vmatprep.subr.mxu0 0.0
        %4709 = vmatpush1.msra.mxu0 0.0
        %4710 = vmatprep.subr.mxu0 0.0
        %4711 = vmatpush1.msra.mxu0 0.0
        %4712 = vmatprep.subr.mxu0 0.0
        %4713 = vmatpush1.msra.mxu0 0.0
        %4714 = vmatprep.subr.mxu0 0.0
        %4715 = vmatpush1.msra.mxu0 0.0
        %4716 = vmatprep.subr.mxu0 0.0
        %4717 = vmatpush1.msra.mxu0 0.0
        %4718 = vmatprep.subr.mxu0 0.0
        %4719 = vmatpush1.msra.mxu0 0.0
        %4720 = vmatprep.subr.mxu0 0.0
        %4721 = vmatpush1.msra.mxu0 0.0
        %4722 = vmatprep.subr.mxu0 0.0
        %4723 = vmatpush1.msra.mxu0 0.0
        %4724 = vmatprep.subr.mxu0 0.0
        %4725 = vmatpush1.msra.mxu0 0.0
        %4726 = vmatprep.subr.mxu0 0.0
        %4727 = vmatpush1.msra.mxu0 0.0
        %4728 = vmatprep.subr.mxu0 0.0
        %4729 = vmatpush1.msra.mxu0 0.0
        %4730 = vmatprep.mubr.f32.mxu0 0.0
        %4731 = vmatmul.mubr.f32.gmra.mrb[0].mxu0 %v4664
        %v4732 = vpop.f32.mrb[0].mxu0
        %v4733 = vadd.f32 0.0, %v4732
        %v4734 = vpop.f32.mrb[0].mxu0
        %4735 = vdwg.mxu0
        %v4736 = vld [vmem:[#allocation2] sm:$0xff]
        %v4737 = vld [vmem:[#allocation2 + $0x8] sm:$0xff]
        %v4738 = vld [vmem:[#allocation2 + $0x10] sm:$0xff]
        %v4739 = vld [vmem:[#allocation2 + $0x18] sm:$0xff]
        %v4740 = vld [vmem:[#allocation2 + $0x20] sm:$0xff]
        %v4741 = vld [vmem:[#allocation2 + $0x28] sm:$0xff]
        %v4742 = vld [vmem:[#allocation2 + $0x30] sm:$0xff]
        %v4743 = vld [vmem:[#allocation2 + $0x38] sm:$0xff]
        %v4744 = vld [vmem:[#allocation2 + $0x40] sm:$0xff]
        %v4745 = vld [vmem:[#allocation2 + $0x48] sm:$0xff]
        %v4746 = vld [vmem:[#allocation2 + $0x50] sm:$0xff]
        %v4747 = vld [vmem:[#allocation2 + $0x58] sm:$0xff]
        %v4748 = vld [vmem:[#allocation2 + $0x60] sm:$0xff]
        %v4749 = vld [vmem:[#allocation2 + $0x68] sm:$0xff]
        %v4750 = vld [vmem:[#allocation2 + $0x70] sm:$0xff]
        %v4751 = vld [vmem:[#allocation2 + $0x78] sm:$0xff]
        %v4752 = vld [vmem:[%s4] sm:$0xff]
        %v4753 = vld [vmem:[%s4 + $0x8] sm:$0xff]
        %v4755 = vsel %vm358, %v3638, 0
        %v4758 = vsel %vm358, %v3711, 0
        %v4761 = vsel %vm358, %v3784, 0
        %v4764 = vsel %vm358, %v3857, 0
        %v4767 = vsel %vm358, %v3930, 0
        %v4770 = vsel %vm358, %v4003, 0
        %v4773 = vsel %vm358, %v4076, 0
        %v4776 = vsel %vm358, %v4149, 0
        %v4779 = vsel %vm358, %v4222, 0
        %v4782 = vsel %vm358, %v4295, 0
        %v4785 = vsel %vm358, %v4368, 0
        %v4788 = vsel %vm358, %v4441, 0
        %v4791 = vsel %vm358, %v4514, 0
        %v4794 = vsel %vm358, %v4587, 0
        %v4797 = vsel %vm358, %v4660, 0
        %v4800 = vsel %vm358, %v4733, 0
        %4802 = vmatprep.subr.mxu0 0.0
        %4803 = vmatpush1.msra.mxu0 %v4752
        %4804 = vmatprep.subr.mxu0 0.0
        %4805 = vmatpush1.msra.mxu0 %v4753
        %4806 = vmatprep.subr.mxu0 0.0
        %4807 = vmatpush1.msra.mxu0 0.0
        %4808 = vmatprep.subr.mxu0 0.0
        %4809 = vmatpush1.msra.mxu0 0.0
        %4810 = vmatprep.subr.mxu0 0.0
        %4811 = vmatpush1.msra.mxu0 0.0
        %4812 = vmatprep.subr.mxu0 0.0
        %4813 = vmatpush1.msra.mxu0 0.0
        %4814 = vmatprep.subr.mxu0 0.0
        %4815 = vmatpush1.msra.mxu0 0.0
        %4816 = vmatprep.subr.mxu0 0.0
        %4817 = vmatpush1.msra.mxu0 0.0
        %4818 = vmatprep.subr.mxu0 0.0
        %4819 = vmatpush1.msra.mxu0 0.0
        %4820 = vmatprep.subr.mxu0 0.0
        %4821 = vmatpush1.msra.mxu0 0.0
        %4822 = vmatprep.subr.mxu0 0.0
        %4823 = vmatpush1.msra.mxu0 0.0
        %4824 = vmatprep.subr.mxu0 0.0
        %4825 = vmatpush1.msra.mxu0 0.0
        %4826 = vmatprep.subr.mxu0 0.0
        %4827 = vmatpush1.msra.mxu0 0.0
        %4828 = vmatprep.subr.mxu0 0.0
        %4829 = vmatpush1.msra.mxu0 0.0
        %4830 = vmatprep.subr.mxu0 0.0
        %4831 = vmatpush1.msra.mxu0 0.0
        %4832 = vmatprep.subr.mxu0 0.0
        %4833 = vmatpush1.msra.mxu0 0.0
        %4834 = vmatprep.subr.mxu0 0.0
        %4835 = vmatpush1.msra.mxu0 0.0
        %4836 = vmatprep.subr.mxu0 0.0
        %4837 = vmatpush1.msra.mxu0 0.0
        %4838 = vmatprep.subr.mxu0 0.0
        %4839 = vmatpush1.msra.mxu0 0.0
        %4840 = vmatprep.subr.mxu0 0.0
        %4841 = vmatpush1.msra.mxu0 0.0
        %4842 = vmatprep.subr.mxu0 0.0
        %4843 = vmatpush1.msra.mxu0 0.0
        %4844 = vmatprep.subr.mxu0 0.0
        %4845 = vmatpush1.msra.mxu0 0.0
        %4846 = vmatprep.subr.mxu0 0.0
        %4847 = vmatpush1.msra.mxu0 0.0
        %4848 = vmatprep.subr.mxu0 0.0
        %4849 = vmatpush1.msra.mxu0 0.0
        %4850 = vmatprep.subr.mxu0 0.0
        %4851 = vmatpush1.msra.mxu0 0.0
        %4852 = vmatprep.subr.mxu0 0.0
        %4853 = vmatpush1.msra.mxu0 0.0
        %4854 = vmatprep.subr.mxu0 0.0
        %4855 = vmatpush1.msra.mxu0 0.0
        %4856 = vmatprep.subr.mxu0 0.0
        %4857 = vmatpush1.msra.mxu0 0.0
        %4858 = vmatprep.subr.mxu0 0.0
        %4859 = vmatpush1.msra.mxu0 0.0
        %4860 = vmatprep.subr.mxu0 0.0
        %4861 = vmatpush1.msra.mxu0 0.0
        %4862 = vmatprep.subr.mxu0 0.0
        %4863 = vmatpush1.msra.mxu0 0.0
        %4864 = vmatprep.subr.mxu0 0.0
        %4865 = vmatpush1.msra.mxu0 0.0
        %4866 = vmatprep.mubr.f32.mxu0 0.0
        %4867 = vmatmul.mubr.f32.gmra.mrb[0].mxu0 %v4755
        %v4868 = vpop.f32.mrb[0].mxu0
        %v4869 = vadd.f32 0.0, %v4868
        %v4870 = vpop.f32.mrb[0].mxu0
        %4871 = vmatprep.mubr.f32.mxu0 0.0
        %4872 = vmatmul.mubr.f32.gmra.mrb[0].mxu0 %v4758
        %v4873 = vpop.f32.mrb[0].mxu0
        %v4874 = vadd.f32 0.0, %v4873
        %v4875 = vpop.f32.mrb[0].mxu0
        %4876 = vmatprep.mubr.f32.mxu0 0.0
        %4877 = vmatmul.mubr.f32.gmra.mrb[0].mxu0 %v4761
        %v4878 = vpop.f32.mrb[0].mxu0
        %v4879 = vadd.f32 0.0, %v4878
        %v4880 = vpop.f32.mrb[0].mxu0
        %4881 = vmatprep.mubr.f32.mxu0 0.0
        %4882 = vmatmul.mubr.f32.gmra.mrb[0].mxu0 %v4764
        %v4883 = vpop.f32.mrb[0].mxu0
        %v4884 = vadd.f32 0.0, %v4883
        %v4885 = vpop.f32.mrb[0].mxu0
        %4886 = vmatprep.mubr.f32.mxu0 0.0
        %4887 = vmatmul.mubr.f32.gmra.mrb[0].mxu0 %v4767
        %v4888 = vpop.f32.mrb[0].mxu0
        %v4889 = vadd.f32 0.0, %v4888
        %v4890 = vpop.f32.mrb[0].mxu0
        %4891 = vmatprep.mubr.f32.mxu0 0.0
        %4892 = vmatmul.mubr.f32.gmra.mrb[0].mxu0 %v4770
        %v4893 = vpop.f32.mrb[0].mxu0
        %v4894 = vadd.f32 0.0, %v4893
        %v4895 = vpop.f32.mrb[0].mxu0
        %4896 = vmatprep.mubr.f32.mxu0 0.0
        %4897 = vmatmul.mubr.f32.gmra.mrb[0].mxu0 %v4773
        %v4898 = vpop.f32.mrb[0].mxu0
        %v4899 = vadd.f32 0.0, %v4898
        %v4900 = vpop.f32.mrb[0].mxu0
        %4901 = vmatprep.mubr.f32.mxu0 0.0
        %4902 = vmatmul.mubr.f32.gmra.mrb[0].mxu0 %v4776
        %v4903 = vpop.f32.mrb[0].mxu0
        %v4904 = vadd.f32 0.0, %v4903
        %v4905 = vpop.f32.mrb[0].mxu0
        %4906 = vmatprep.mubr.f32.mxu0 0.0
        %4907 = vmatmul.mubr.f32.gmra.mrb[0].mxu0 %v4779
        %v4908 = vpop.f32.mrb[0].mxu0
        %v4909 = vadd.f32 0.0, %v4908
        %v4910 = vpop.f32.mrb[0].mxu0
        %4911 = vmatprep.mubr.f32.mxu0 0.0
        %4912 = vmatmul.mubr.f32.gmra.mrb[0].mxu0 %v4782
        %v4913 = vpop.f32.mrb[0].mxu0
        %v4914 = vadd.f32 0.0, %v4913
        %v4915 = vpop.f32.mrb[0].mxu0
        %4916 = vmatprep.mubr.f32.mxu0 0.0
        %4917 = vmatmul.mubr.f32.gmra.mrb[0].mxu0 %v4785
        %v4918 = vpop.f32.mrb[0].mxu0
        %v4919 = vadd.f32 0.0, %v4918
        %v4920 = vpop.f32.mrb[0].mxu0
        %4921 = vmatprep.mubr.f32.mxu0 0.0
        %4922 = vmatmul.mubr.f32.gmra.mrb[0].mxu0 %v4788
        %v4923 = vpop.f32.mrb[0].mxu0
        %v4924 = vadd.f32 0.0, %v4923
        %v4925 = vpop.f32.mrb[0].mxu0
        %4926 = vmatprep.mubr.f32.mxu0 0.0
        %4927 = vmatmul.mubr.f32.gmra.mrb[0].mxu0 %v4791
        %v4928 = vpop.f32.mrb[0].mxu0
        %v4929 = vadd.f32 0.0, %v4928
        %v4930 = vpop.f32.mrb[0].mxu0
        %4931 = vmatprep.mubr.f32.mxu0 0.0
        %4932 = vmatmul.mubr.f32.gmra.mrb[0].mxu0 %v4794
        %v4933 = vpop.f32.mrb[0].mxu0
        %v4934 = vadd.f32 0.0, %v4933
        %v4935 = vpop.f32.mrb[0].mxu0
        %4936 = vmatprep.mubr.f32.mxu0 0.0
        %4937 = vmatmul.mubr.f32.gmra.mrb[0].mxu0 %v4797
        %v4938 = vpop.f32.mrb[0].mxu0
        %v4939 = vadd.f32 0.0, %v4938
        %v4940 = vpop.f32.mrb[0].mxu0
        %4941 = vmatprep.mubr.f32.mxu0 0.0
        %4942 = vmatmul.mubr.f32.gmra.mrb[0].mxu0 %v4800
        %v4943 = vpop.f32.mrb[0].mxu0
        %v4944 = vadd.f32 0.0, %v4943
        %v4945 = vpop.f32.mrb[0].mxu0
        %4946 = vdwg.mxu0
        %v4947 = vadd.f32 %v4736, %v4869
        %v4948 = vadd.f32 %v4737, %v4874
        %v4949 = vadd.f32 %v4738, %v4879
        %v4950 = vadd.f32 %v4739, %v4884
        %v4951 = vadd.f32 %v4740, %v4889
        %v4952 = vadd.f32 %v4741, %v4894
        %v4953 = vadd.f32 %v4742, %v4899
        %v4954 = vadd.f32 %v4743, %v4904
        %v4955 = vadd.f32 %v4744, %v4909
        %v4956 = vadd.f32 %v4745, %v4914
        %v4957 = vadd.f32 %v4746, %v4919
        %v4958 = vadd.f32 %v4747, %v4924
        %v4959 = vadd.f32 %v4748, %v4929
        %v4960 = vadd.f32 %v4749, %v4934
        %v4961 = vadd.f32 %v4750, %v4939
        %v4962 = vadd.f32 %v4751, %v4944
        %4963 = vst.msk [vmem:[#allocation2] sm:$0xff] %vm358, %v4947
        %4964 = vst.msk [vmem:[#allocation2 + $0x8] sm:$0xff] %vm358, %v4948
        %4965 = vst.msk [vmem:[#allocation2 + $0x10] sm:$0xff] %vm358, %v4949
        %4966 = vst.msk [vmem:[#allocation2 + $0x18] sm:$0xff] %vm358, %v4950
        %4967 = vst.msk [vmem:[#allocation2 + $0x20] sm:$0xff] %vm358, %v4951
        %4968 = vst.msk [vmem:[#allocation2 + $0x28] sm:$0xff] %vm358, %v4952
        %4969 = vst.msk [vmem:[#allocation2 + $0x30] sm:$0xff] %vm358, %v4953
        %4970 = vst.msk [vmem:[#allocation2 + $0x38] sm:$0xff] %vm358, %v4954
        %4971 = vst.msk [vmem:[#allocation2 + $0x40] sm:$0xff] %vm358, %v4955
        %4972 = vst.msk [vmem:[#allocation2 + $0x48] sm:$0xff] %vm358, %v4956
        %4973 = vst.msk [vmem:[#allocation2 + $0x50] sm:$0xff] %vm358, %v4957
        %4974 = vst.msk [vmem:[#allocation2 + $0x58] sm:$0xff] %vm358, %v4958
        %4975 = vst.msk [vmem:[#allocation2 + $0x60] sm:$0xff] %vm358, %v4959
        %4976 = vst.msk [vmem:[#allocation2 + $0x68] sm:$0xff] %vm358, %v4960
        %4977 = vst.msk [vmem:[#allocation2 + $0x70] sm:$0xff] %vm358, %v4961
        %4978 = vst.msk [vmem:[#allocation2 + $0x78] sm:$0xff] %vm358, %v4962
        %v4980 = vsel %vm3176, %v3498, 0
        %4982 = vmatprep.subr.mxu0 0.0
        %4983 = vmatpush1.msra.mxu0 %v3529
        %4984 = vmatprep.subr.mxu0 0.0
        %4985 = vmatpush1.msra.mxu0 0.0
        %4986 = vmatprep.subr.mxu0 0.0
        %4987 = vmatpush1.msra.mxu0 0.0
        %4988 = vmatprep.subr.mxu0 0.0
        %4989 = vmatpush1.msra.mxu0 0.0
        %4990 = vmatprep.subr.mxu0 0.0
        %4991 = vmatpush1.msra.mxu0 0.0
        %4992 = vmatprep.subr.mxu0 0.0
        %4993 = vmatpush1.msra.mxu0 0.0
        %4994 = vmatprep.subr.mxu0 0.0
        %4995 = vmatpush1.msra.mxu0 0.0
        %4996 = vmatprep.subr.mxu0 0.0
        %4997 = vmatpush1.msra.mxu0 0.0
        %4998 = vmatprep.subr.mxu0 0.0
        %4999 = vmatpush1.msra.mxu0 0.0
        %5000 = vmatprep.subr.mxu0 0.0
        %5001 = vmatpush1.msra.mxu0 0.0
        %5002 = vmatprep.subr.mxu0 0.0
        %5003 = vmatpush1.msra.mxu0 0.0
        %5004 = vmatprep.subr.mxu0 0.0
        %5005 = vmatpush1.msra.mxu0 0.0
        %5006 = vmatprep.subr.mxu0 0.0
        %5007 = vmatpush1.msra.mxu0 0.0
        %5008 = vmatprep.subr.mxu0 0.0
        %5009 = vmatpush1.msra.mxu0 0.0
        %5010 = vmatprep.subr.mxu0 0.0
        %5011 = vmatpush1.msra.mxu0 0.0
        %5012 = vmatprep.subr.mxu0 0.0
        %5013 = vmatpush1.msra.mxu0 0.0
        %5014 = vmatprep.subr.mxu0 0.0
        %5015 = vmatpush1.msra.mxu0 0.0
        %5016 = vmatprep.subr.mxu0 0.0
        %5017 = vmatpush1.msra.mxu0 0.0
        %5018 = vmatprep.subr.mxu0 0.0
        %5019 = vmatpush1.msra.mxu0 0.0
        %5020 = vmatprep.subr.mxu0 0.0
        %5021 = vmatpush1.msra.mxu0 0.0
        %5022 = vmatprep.subr.mxu0 0.0
        %5023 = vmatpush1.msra.mxu0 0.0
        %5024 = vmatprep.subr.mxu0 0.0
        %5025 = vmatpush1.msra.mxu0 0.0
        %5026 = vmatprep.subr.mxu0 0.0
        %5027 = vmatpush1.msra.mxu0 0.0
        %5028 = vmatprep.subr.mxu0 0.0
        %5029 = vmatpush1.msra.mxu0 0.0
        %5030 = vmatprep.subr.mxu0 0.0
        %5031 = vmatpush1.msra.mxu0 0.0
        %5032 = vmatprep.subr.mxu0 0.0
        %5033 = vmatpush1.msra.mxu0 0.0
        %5034 = vmatprep.subr.mxu0 0.0
        %5035 = vmatpush1.msra.mxu0 0.0
        %5036 = vmatprep.subr.mxu0 0.0
        %5037 = vmatpush1.msra.mxu0 0.0
        %5038 = vmatprep.subr.mxu0 0.0
        %5039 = vmatpush1.msra.mxu0 0.0
        %5040 = vmatprep.subr.mxu0 0.0
        %5041 = vmatpush1.msra.mxu0 0.0
        %5042 = vmatprep.subr.mxu0 0.0
        %5043 = vmatpush1.msra.mxu0 0.0
        %5044 = vmatprep.subr.mxu0 0.0
        %5045 = vmatpush1.msra.mxu0 0.0
        %5046 = vmatprep.mubr.f32.mxu0 0.0
        %5047 = vmatmul.mubr.f32.gmra.mrb[0].mxu0 %v4980
        %v5048 = vpop.f32.mrb[0].mxu0
        %v5049 = vadd.f32 0.0, %v5048
        %v5050 = vpop.f32.mrb[0].mxu0
        %5051 = vdwg.mxu0
        %v5053 = vsel %vm3176, %v3500, 0
        %5055 = vmatprep.subr.mxu0 0.0
        %5056 = vmatpush1.msra.mxu0 %v3530
        %5057 = vmatprep.subr.mxu0 0.0
        %5058 = vmatpush1.msra.mxu0 0.0
        %5059 = vmatprep.subr.mxu0 0.0
        %5060 = vmatpush1.msra.mxu0 0.0
        %5061 = vmatprep.subr.mxu0 0.0
        %5062 = vmatpush1.msra.mxu0 0.0
        %5063 = vmatprep.subr.mxu0 0.0
        %5064 = vmatpush1.msra.mxu0 0.0
        %5065 = vmatprep.subr.mxu0 0.0
        %5066 = vmatpush1.msra.mxu0 0.0
        %5067 = vmatprep.subr.mxu0 0.0
        %5068 = vmatpush1.msra.mxu0 0.0
        %5069 = vmatprep.subr.mxu0 0.0
        %5070 = vmatpush1.msra.mxu0 0.0
        %5071 = vmatprep.subr.mxu0 0.0
        %5072 = vmatpush1.msra.mxu0 0.0
        %5073 = vmatprep.subr.mxu0 0.0
        %5074 = vmatpush1.msra.mxu0 0.0
        %5075 = vmatprep.subr.mxu0 0.0
        %5076 = vmatpush1.msra.mxu0 0.0
        %5077 = vmatprep.subr.mxu0 0.0
        %5078 = vmatpush1.msra.mxu0 0.0
        %5079 = vmatprep.subr.mxu0 0.0
        %5080 = vmatpush1.msra.mxu0 0.0
        %5081 = vmatprep.subr.mxu0 0.0
        %5082 = vmatpush1.msra.mxu0 0.0
        %5083 = vmatprep.subr.mxu0 0.0
        %5084 = vmatpush1.msra.mxu0 0.0
        %5085 = vmatprep.subr.mxu0 0.0
        %5086 = vmatpush1.msra.mxu0 0.0
        %5087 = vmatprep.subr.mxu0 0.0
        %5088 = vmatpush1.msra.mxu0 0.0
        %5089 = vmatprep.subr.mxu0 0.0
        %5090 = vmatpush1.msra.mxu0 0.0
        %5091 = vmatprep.subr.mxu0 0.0
        %5092 = vmatpush1.msra.mxu0 0.0
        %5093 = vmatprep.subr.mxu0 0.0
        %5094 = vmatpush1.msra.mxu0 0.0
        %5095 = vmatprep.subr.mxu0 0.0
        %5096 = vmatpush1.msra.mxu0 0.0
        %5097 = vmatprep.subr.mxu0 0.0
        %5098 = vmatpush1.msra.mxu0 0.0
        %5099 = vmatprep.subr.mxu0 0.0
        %5100 = vmatpush1.msra.mxu0 0.0
        %5101 = vmatprep.subr.mxu0 0.0
        %5102 = vmatpush1.msra.mxu0 0.0
        %5103 = vmatprep.subr.mxu0 0.0
        %5104 = vmatpush1.msra.mxu0 0.0
        %5105 = vmatprep.subr.mxu0 0.0
        %5106 = vmatpush1.msra.mxu0 0.0
        %5107 = vmatprep.subr.mxu0 0.0
        %5108 = vmatpush1.msra.mxu0 0.0
        %5109 = vmatprep.subr.mxu0 0.0
        %5110 = vmatpush1.msra.mxu0 0.0
        %5111 = vmatprep.subr.mxu0 0.0
        %5112 = vmatpush1.msra.mxu0 0.0
        %5113 = vmatprep.subr.mxu0 0.0
        %5114 = vmatpush1.msra.mxu0 0.0
        %5115 = vmatprep.subr.mxu0 0.0
        %5116 = vmatpush1.msra.mxu0 0.0
        %5117 = vmatprep.subr.mxu0 0.0
        %5118 = vmatpush1.msra.mxu0 0.0
        %5119 = vmatprep.mubr.f32.mxu0 0.0
        %5120 = vmatmul.mubr.f32.gmra.mrb[0].mxu0 %v5053
        %v5121 = vpop.f32.mrb[0].mxu0
        %v5122 = vadd.f32 0.0, %v5121
        %v5123 = vpop.f32.mrb[0].mxu0
        %5124 = vdwg.mxu0
        %v5126 = vsel %vm3176, %v3502, 0
        %5128 = vmatprep.subr.mxu0 0.0
        %5129 = vmatpush1.msra.mxu0 %v3531
        %5130 = vmatprep.subr.mxu0 0.0
        %5131 = vmatpush1.msra.mxu0 0.0
        %5132 = vmatprep.subr.mxu0 0.0
        %5133 = vmatpush1.msra.mxu0 0.0
        %5134 = vmatprep.subr.mxu0 0.0
        %5135 = vmatpush1.msra.mxu0 0.0
        %5136 = vmatprep.subr.mxu0 0.0
        %5137 = vmatpush1.msra.mxu0 0.0
        %5138 = vmatprep.subr.mxu0 0.0
        %5139 = vmatpush1.msra.mxu0 0.0
        %5140 = vmatprep.subr.mxu0 0.0
        %5141 = vmatpush1.msra.mxu0 0.0
        %5142 = vmatprep.subr.mxu0 0.0
        %5143 = vmatpush1.msra.mxu0 0.0
        %5144 = vmatprep.subr.mxu0 0.0
        %5145 = vmatpush1.msra.mxu0 0.0
        %5146 = vmatprep.subr.mxu0 0.0
        %5147 = vmatpush1.msra.mxu0 0.0
        %5148 = vmatprep.subr.mxu0 0.0
        %5149 = vmatpush1.msra.mxu0 0.0
        %5150 = vmatprep.subr.mxu0 0.0
        %5151 = vmatpush1.msra.mxu0 0.0
        %5152 = vmatprep.subr.mxu0 0.0
        %5153 = vmatpush1.msra.mxu0 0.0
        %5154 = vmatprep.subr.mxu0 0.0
        %5155 = vmatpush1.msra.mxu0 0.0
        %5156 = vmatprep.subr.mxu0 0.0
        %5157 = vmatpush1.msra.mxu0 0.0
        %5158 = vmatprep.subr.mxu0 0.0
        %5159 = vmatpush1.msra.mxu0 0.0
        %5160 = vmatprep.subr.mxu0 0.0
        %5161 = vmatpush1.msra.mxu0 0.0
        %5162 = vmatprep.subr.mxu0 0.0
        %5163 = vmatpush1.msra.mxu0 0.0
        %5164 = vmatprep.subr.mxu0 0.0
        %5165 = vmatpush1.msra.mxu0 0.0
        %5166 = vmatprep.subr.mxu0 0.0
        %5167 = vmatpush1.msra.mxu0 0.0
        %5168 = vmatprep.subr.mxu0 0.0
        %5169 = vmatpush1.msra.mxu0 0.0
        %5170 = vmatprep.subr.mxu0 0.0
        %5171 = vmatpush1.msra.mxu0 0.0
        %5172 = vmatprep.subr.mxu0 0.0
        %5173 = vmatpush1.msra.mxu0 0.0
        %5174 = vmatprep.subr.mxu0 0.0
        %5175 = vmatpush1.msra.mxu0 0.0
        %5176 = vmatprep.subr.mxu0 0.0
        %5177 = vmatpush1.msra.mxu0 0.0
        %5178 = vmatprep.subr.mxu0 0.0
        %5179 = vmatpush1.msra.mxu0 0.0
        %5180 = vmatprep.subr.mxu0 0.0
        %5181 = vmatpush1.msra.mxu0 0.0
        %5182 = vmatprep.subr.mxu0 0.0
        %5183 = vmatpush1.msra.mxu0 0.0
        %5184 = vmatprep.subr.mxu0 0.0
        %5185 = vmatpush1.msra.mxu0 0.0
        %5186 = vmatprep.subr.mxu0 0.0
        %5187 = vmatpush1.msra.mxu0 0.0
        %5188 = vmatprep.subr.mxu0 0.0
        %5189 = vmatpush1.msra.mxu0 0.0
        %5190 = vmatprep.subr.mxu0 0.0
        %5191 = vmatpush1.msra.mxu0 0.0
        %5192 = vmatprep.mubr.f32.mxu0 0.0
        %5193 = vmatmul.mubr.f32.gmra.mrb[0].mxu0 %v5126
        %v5194 = vpop.f32.mrb[0].mxu0
        %v5195 = vadd.f32 0.0, %v5194
        %v5196 = vpop.f32.mrb[0].mxu0
        %5197 = vdwg.mxu0
        %v5199 = vsel %vm3176, %v3504, 0
        %5201 = vmatprep.subr.mxu0 0.0
        %5202 = vmatpush1.msra.mxu0 %v3532
        %5203 = vmatprep.subr.mxu0 0.0
        %5204 = vmatpush1.msra.mxu0 0.0
        %5205 = vmatprep.subr.mxu0 0.0
        %5206 = vmatpush1.msra.mxu0 0.0
        %5207 = vmatprep.subr.mxu0 0.0
        %5208 = vmatpush1.msra.mxu0 0.0
        %5209 = vmatprep.subr.mxu0 0.0
        %5210 = vmatpush1.msra.mxu0 0.0
        %5211 = vmatprep.subr.mxu0 0.0
        %5212 = vmatpush1.msra.mxu0 0.0
        %5213 = vmatprep.subr.mxu0 0.0
        %5214 = vmatpush1.msra.mxu0 0.0
        %5215 = vmatprep.subr.mxu0 0.0
        %5216 = vmatpush1.msra.mxu0 0.0
        %5217 = vmatprep.subr.mxu0 0.0
        %5218 = vmatpush1.msra.mxu0 0.0
        %5219 = vmatprep.subr.mxu0 0.0
        %5220 = vmatpush1.msra.mxu0 0.0
        %5221 = vmatprep.subr.mxu0 0.0
        %5222 = vmatpush1.msra.mxu0 0.0
        %5223 = vmatprep.subr.mxu0 0.0
        %5224 = vmatpush1.msra.mxu0 0.0
        %5225 = vmatprep.subr.mxu0 0.0
        %5226 = vmatpush1.msra.mxu0 0.0
        %5227 = vmatprep.subr.mxu0 0.0
        %5228 = vmatpush1.msra.mxu0 0.0
        %5229 = vmatprep.subr.mxu0 0.0
        %5230 = vmatpush1.msra.mxu0 0.0
        %5231 = vmatprep.subr.mxu0 0.0
        %5232 = vmatpush1.msra.mxu0 0.0
        %5233 = vmatprep.subr.mxu0 0.0
        %5234 = vmatpush1.msra.mxu0 0.0
        %5235 = vmatprep.subr.mxu0 0.0
        %5236 = vmatpush1.msra.mxu0 0.0
        %5237 = vmatprep.subr.mxu0 0.0
        %5238 = vmatpush1.msra.mxu0 0.0
        %5239 = vmatprep.subr.mxu0 0.0
        %5240 = vmatpush1.msra.mxu0 0.0
        %5241 = vmatprep.subr.mxu0 0.0
        %5242 = vmatpush1.msra.mxu0 0.0
        %5243 = vmatprep.subr.mxu0 0.0
        %5244 = vmatpush1.msra.mxu0 0.0
        %5245 = vmatprep.subr.mxu0 0.0
        %5246 = vmatpush1.msra.mxu0 0.0
        %5247 = vmatprep.subr.mxu0 0.0
        %5248 = vmatpush1.msra.mxu0 0.0
        %5249 = vmatprep.subr.mxu0 0.0
        %5250 = vmatpush1.msra.mxu0 0.0
        %5251 = vmatprep.subr.mxu0 0.0
        %5252 = vmatpush1.msra.mxu0 0.0
        %5253 = vmatprep.subr.mxu0 0.0
        %5254 = vmatpush1.msra.mxu0 0.0
        %5255 = vmatprep.subr.mxu0 0.0
        %5256 = vmatpush1.msra.mxu0 0.0
        %5257 = vmatprep.subr.mxu0 0.0
        %5258 = vmatpush1.msra.mxu0 0.0
        %5259 = vmatprep.subr.mxu0 0.0
        %5260 = vmatpush1.msra.mxu0 0.0
        %5261 = vmatprep.subr.mxu0 0.0
        %5262 = vmatpush1.msra.mxu0 0.0
        %5263 = vmatprep.subr.mxu0 0.0
        %5264 = vmatpush1.msra.mxu0 0.0
        %5265 = vmatprep.mubr.f32.mxu0 0.0
        %5266 = vmatmul.mubr.f32.gmra.mrb[0].mxu0 %v5199
        %v5267 = vpop.f32.mrb[0].mxu0
        %v5268 = vadd.f32 0.0, %v5267
        %v5269 = vpop.f32.mrb[0].mxu0
        %5270 = vdwg.mxu0
        %v5272 = vsel %vm3176, %v3506, 0
        %5274 = vmatprep.subr.mxu0 0.0
        %5275 = vmatpush1.msra.mxu0 %v3533
        %5276 = vmatprep.subr.mxu0 0.0
        %5277 = vmatpush1.msra.mxu0 0.0
        %5278 = vmatprep.subr.mxu0 0.0
        %5279 = vmatpush1.msra.mxu0 0.0
        %5280 = vmatprep.subr.mxu0 0.0
        %5281 = vmatpush1.msra.mxu0 0.0
        %5282 = vmatprep.subr.mxu0 0.0
        %5283 = vmatpush1.msra.mxu0 0.0
        %5284 = vmatprep.subr.mxu0 0.0
        %5285 = vmatpush1.msra.mxu0 0.0
        %5286 = vmatprep.subr.mxu0 0.0
        %5287 = vmatpush1.msra.mxu0 0.0
        %5288 = vmatprep.subr.mxu0 0.0
        %5289 = vmatpush1.msra.mxu0 0.0
        %5290 = vmatprep.subr.mxu0 0.0
        %5291 = vmatpush1.msra.mxu0 0.0
        %5292 = vmatprep.subr.mxu0 0.0
        %5293 = vmatpush1.msra.mxu0 0.0
        %5294 = vmatprep.subr.mxu0 0.0
        %5295 = vmatpush1.msra.mxu0 0.0
        %5296 = vmatprep.subr.mxu0 0.0
        %5297 = vmatpush1.msra.mxu0 0.0
        %5298 = vmatprep.subr.mxu0 0.0
        %5299 = vmatpush1.msra.mxu0 0.0
        %5300 = vmatprep.subr.mxu0 0.0
        %5301 = vmatpush1.msra.mxu0 0.0
        %5302 = vmatprep.subr.mxu0 0.0
        %5303 = vmatpush1.msra.mxu0 0.0
        %5304 = vmatprep.subr.mxu0 0.0
        %5305 = vmatpush1.msra.mxu0 0.0
        %5306 = vmatprep.subr.mxu0 0.0
        %5307 = vmatpush1.msra.mxu0 0.0
        %5308 = vmatprep.subr.mxu0 0.0
        %5309 = vmatpush1.msra.mxu0 0.0
        %5310 = vmatprep.subr.mxu0 0.0
        %5311 = vmatpush1.msra.mxu0 0.0
        %5312 = vmatprep.subr.mxu0 0.0
        %5313 = vmatpush1.msra.mxu0 0.0
        %5314 = vmatprep.subr.mxu0 0.0
        %5315 = vmatpush1.msra.mxu0 0.0
        %5316 = vmatprep.subr.mxu0 0.0
        %5317 = vmatpush1.msra.mxu0 0.0
        %5318 = vmatprep.subr.mxu0 0.0
        %5319 = vmatpush1.msra.mxu0 0.0
        %5320 = vmatprep.subr.mxu0 0.0
        %5321 = vmatpush1.msra.mxu0 0.0
        %5322 = vmatprep.subr.mxu0 0.0
        %5323 = vmatpush1.msra.mxu0 0.0
        %5324 = vmatprep.subr.mxu0 0.0
        %5325 = vmatpush1.msra.mxu0 0.0
        %5326 = vmatprep.subr.mxu0 0.0
        %5327 = vmatpush1.msra.mxu0 0.0
        %5328 = vmatprep.subr.mxu0 0.0
        %5329 = vmatpush1.msra.mxu0 0.0
        %5330 = vmatprep.subr.mxu0 0.0
        %5331 = vmatpush1.msra.mxu0 0.0
        %5332 = vmatprep.subr.mxu0 0.0
        %5333 = vmatpush1.msra.mxu0 0.0
        %5334 = vmatprep.subr.mxu0 0.0
        %5335 = vmatpush1.msra.mxu0 0.0
        %5336 = vmatprep.subr.mxu0 0.0
        %5337 = vmatpush1.msra.mxu0 0.0
        %5338 = vmatprep.mubr.f32.mxu0 0.0
        %5339 = vmatmul.mubr.f32.gmra.mrb[0].mxu0 %v5272
        %v5340 = vpop.f32.mrb[0].mxu0
        %v5341 = vadd.f32 0.0, %v5340
        %v5342 = vpop.f32.mrb[0].mxu0
        %5343 = vdwg.mxu0
        %v5345 = vsel %vm3176, %v3508, 0
        %5347 = vmatprep.subr.mxu0 0.0
        %5348 = vmatpush1.msra.mxu0 %v3534
        %5349 = vmatprep.subr.mxu0 0.0
        %5350 = vmatpush1.msra.mxu0 0.0
        %5351 = vmatprep.subr.mxu0 0.0
        %5352 = vmatpush1.msra.mxu0 0.0
        %5353 = vmatprep.subr.mxu0 0.0
        %5354 = vmatpush1.msra.mxu0 0.0
        %5355 = vmatprep.subr.mxu0 0.0
        %5356 = vmatpush1.msra.mxu0 0.0
        %5357 = vmatprep.subr.mxu0 0.0
        %5358 = vmatpush1.msra.mxu0 0.0
        %5359 = vmatprep.subr.mxu0 0.0
        %5360 = vmatpush1.msra.mxu0 0.0
        %5361 = vmatprep.subr.mxu0 0.0
        %5362 = vmatpush1.msra.mxu0 0.0
        %5363 = vmatprep.subr.mxu0 0.0
        %5364 = vmatpush1.msra.mxu0 0.0
        %5365 = vmatprep.subr.mxu0 0.0
        %5366 = vmatpush1.msra.mxu0 0.0
        %5367 = vmatprep.subr.mxu0 0.0
        %5368 = vmatpush1.msra.mxu0 0.0
        %5369 = vmatprep.subr.mxu0 0.0
        %5370 = vmatpush1.msra.mxu0 0.0
        %5371 = vmatprep.subr.mxu0 0.0
        %5372 = vmatpush1.msra.mxu0 0.0
        %5373 = vmatprep.subr.mxu0 0.0
        %5374 = vmatpush1.msra.mxu0 0.0
        %5375 = vmatprep.subr.mxu0 0.0
        %5376 = vmatpush1.msra.mxu0 0.0
        %5377 = vmatprep.subr.mxu0 0.0
        %5378 = vmatpush1.msra.mxu0 0.0
        %5379 = vmatprep.subr.mxu0 0.0
        %5380 = vmatpush1.msra.mxu0 0.0
        %5381 = vmatprep.subr.mxu0 0.0
        %5382 = vmatpush1.msra.mxu0 0.0
        %5383 = vmatprep.subr.mxu0 0.0
        %5384 = vmatpush1.msra.mxu0 0.0
        %5385 = vmatprep.subr.mxu0 0.0
        %5386 = vmatpush1.msra.mxu0 0.0
        %5387 = vmatprep.subr.mxu0 0.0
        %5388 = vmatpush1.msra.mxu0 0.0
        %5389 = vmatprep.subr.mxu0 0.0
        %5390 = vmatpush1.msra.mxu0 0.0
        %5391 = vmatprep.subr.mxu0 0.0
        %5392 = vmatpush1.msra.mxu0 0.0
        %5393 = vmatprep.subr.mxu0 0.0
        %5394 = vmatpush1.msra.mxu0 0.0
        %5395 = vmatprep.subr.mxu0 0.0
        %5396 = vmatpush1.msra.mxu0 0.0
        %5397 = vmatprep.subr.mxu0 0.0
        %5398 = vmatpush1.msra.mxu0 0.0
        %5399 = vmatprep.subr.mxu0 0.0
        %5400 = vmatpush1.msra.mxu0 0.0
        %5401 = vmatprep.subr.mxu0 0.0
        %5402 = vmatpush1.msra.mxu0 0.0
        %5403 = vmatprep.subr.mxu0 0.0
        %5404 = vmatpush1.msra.mxu0 0.0
        %5405 = vmatprep.subr.mxu0 0.0
        %5406 = vmatpush1.msra.mxu0 0.0
        %5407 = vmatprep.subr.mxu0 0.0
        %5408 = vmatpush1.msra.mxu0 0.0
        %5409 = vmatprep.subr.mxu0 0.0
        %5410 = vmatpush1.msra.mxu0 0.0
        %5411 = vmatprep.mubr.f32.mxu0 0.0
        %5412 = vmatmul.mubr.f32.gmra.mrb[0].mxu0 %v5345
        %v5413 = vpop.f32.mrb[0].mxu0
        %v5414 = vadd.f32 0.0, %v5413
        %v5415 = vpop.f32.mrb[0].mxu0
        %5416 = vdwg.mxu0
        %v5418 = vsel %vm3176, %v3510, 0
        %5420 = vmatprep.subr.mxu0 0.0
        %5421 = vmatpush1.msra.mxu0 %v3535
        %5422 = vmatprep.subr.mxu0 0.0
        %5423 = vmatpush1.msra.mxu0 0.0
        %5424 = vmatprep.subr.mxu0 0.0
        %5425 = vmatpush1.msra.mxu0 0.0
        %5426 = vmatprep.subr.mxu0 0.0
        %5427 = vmatpush1.msra.mxu0 0.0
        %5428 = vmatprep.subr.mxu0 0.0
        %5429 = vmatpush1.msra.mxu0 0.0
        %5430 = vmatprep.subr.mxu0 0.0
        %5431 = vmatpush1.msra.mxu0 0.0
        %5432 = vmatprep.subr.mxu0 0.0
        %5433 = vmatpush1.msra.mxu0 0.0
        %5434 = vmatprep.subr.mxu0 0.0
        %5435 = vmatpush1.msra.mxu0 0.0
        %5436 = vmatprep.subr.mxu0 0.0
        %5437 = vmatpush1.msra.mxu0 0.0
        %5438 = vmatprep.subr.mxu0 0.0
        %5439 = vmatpush1.msra.mxu0 0.0
        %5440 = vmatprep.subr.mxu0 0.0
        %5441 = vmatpush1.msra.mxu0 0.0
        %5442 = vmatprep.subr.mxu0 0.0
        %5443 = vmatpush1.msra.mxu0 0.0
        %5444 = vmatprep.subr.mxu0 0.0
        %5445 = vmatpush1.msra.mxu0 0.0
        %5446 = vmatprep.subr.mxu0 0.0
        %5447 = vmatpush1.msra.mxu0 0.0
        %5448 = vmatprep.subr.mxu0 0.0
        %5449 = vmatpush1.msra.mxu0 0.0
        %5450 = vmatprep.subr.mxu0 0.0
        %5451 = vmatpush1.msra.mxu0 0.0
        %5452 = vmatprep.subr.mxu0 0.0
        %5453 = vmatpush1.msra.mxu0 0.0
        %5454 = vmatprep.subr.mxu0 0.0
        %5455 = vmatpush1.msra.mxu0 0.0
        %5456 = vmatprep.subr.mxu0 0.0
        %5457 = vmatpush1.msra.mxu0 0.0
        %5458 = vmatprep.subr.mxu0 0.0
        %5459 = vmatpush1.msra.mxu0 0.0
        %5460 = vmatprep.subr.mxu0 0.0
        %5461 = vmatpush1.msra.mxu0 0.0
        %5462 = vmatprep.subr.mxu0 0.0
        %5463 = vmatpush1.msra.mxu0 0.0
        %5464 = vmatprep.subr.mxu0 0.0
        %5465 = vmatpush1.msra.mxu0 0.0
        %5466 = vmatprep.subr.mxu0 0.0
        %5467 = vmatpush1.msra.mxu0 0.0
        %5468 = vmatprep.subr.mxu0 0.0
        %5469 = vmatpush1.msra.mxu0 0.0
        %5470 = vmatprep.subr.mxu0 0.0
        %5471 = vmatpush1.msra.mxu0 0.0
        %5472 = vmatprep.subr.mxu0 0.0
        %5473 = vmatpush1.msra.mxu0 0.0
        %5474 = vmatprep.subr.mxu0 0.0
        %5475 = vmatpush1.msra.mxu0 0.0
        %5476 = vmatprep.subr.mxu0 0.0
        %5477 = vmatpush1.msra.mxu0 0.0
        %5478 = vmatprep.subr.mxu0 0.0
        %5479 = vmatpush1.msra.mxu0 0.0
        %5480 = vmatprep.subr.mxu0 0.0
        %5481 = vmatpush1.msra.mxu0 0.0
        %5482 = vmatprep.subr.mxu0 0.0
        %5483 = vmatpush1.msra.mxu0 0.0
        %5484 = vmatprep.mubr.f32.mxu0 0.0
        %5485 = vmatmul.mubr.f32.gmra.mrb[0].mxu0 %v5418
        %v5486 = vpop.f32.mrb[0].mxu0
        %v5487 = vadd.f32 0.0, %v5486
        %v5488 = vpop.f32.mrb[0].mxu0
        %5489 = vdwg.mxu0
        %v5491 = vsel %vm3176, %v3512, 0
        %5493 = vmatprep.subr.mxu0 0.0
        %5494 = vmatpush1.msra.mxu0 %v3536
        %5495 = vmatprep.subr.mxu0 0.0
        %5496 = vmatpush1.msra.mxu0 0.0
        %5497 = vmatprep.subr.mxu0 0.0
        %5498 = vmatpush1.msra.mxu0 0.0
        %5499 = vmatprep.subr.mxu0 0.0
        %5500 = vmatpush1.msra.mxu0 0.0
        %5501 = vmatprep.subr.mxu0 0.0
        %5502 = vmatpush1.msra.mxu0 0.0
        %5503 = vmatprep.subr.mxu0 0.0
        %5504 = vmatpush1.msra.mxu0 0.0
        %5505 = vmatprep.subr.mxu0 0.0
        %5506 = vmatpush1.msra.mxu0 0.0
        %5507 = vmatprep.subr.mxu0 0.0
        %5508 = vmatpush1.msra.mxu0 0.0
        %5509 = vmatprep.subr.mxu0 0.0
        %5510 = vmatpush1.msra.mxu0 0.0
        %5511 = vmatprep.subr.mxu0 0.0
        %5512 = vmatpush1.msra.mxu0 0.0
        %5513 = vmatprep.subr.mxu0 0.0
        %5514 = vmatpush1.msra.mxu0 0.0
        %5515 = vmatprep.subr.mxu0 0.0
        %5516 = vmatpush1.msra.mxu0 0.0
        %5517 = vmatprep.subr.mxu0 0.0
        %5518 = vmatpush1.msra.mxu0 0.0
        %5519 = vmatprep.subr.mxu0 0.0
        %5520 = vmatpush1.msra.mxu0 0.0
        %5521 = vmatprep.subr.mxu0 0.0
        %5522 = vmatpush1.msra.mxu0 0.0
        %5523 = vmatprep.subr.mxu0 0.0
        %5524 = vmatpush1.msra.mxu0 0.0
        %5525 = vmatprep.subr.mxu0 0.0
        %5526 = vmatpush1.msra.mxu0 0.0
        %5527 = vmatprep.subr.mxu0 0.0
        %5528 = vmatpush1.msra.mxu0 0.0
        %5529 = vmatprep.subr.mxu0 0.0
        %5530 = vmatpush1.msra.mxu0 0.0
        %5531 = vmatprep.subr.mxu0 0.0
        %5532 = vmatpush1.msra.mxu0 0.0
        %5533 = vmatprep.subr.mxu0 0.0
        %5534 = vmatpush1.msra.mxu0 0.0
        %5535 = vmatprep.subr.mxu0 0.0
        %5536 = vmatpush1.msra.mxu0 0.0
        %5537 = vmatprep.subr.mxu0 0.0
        %5538 = vmatpush1.msra.mxu0 0.0
        %5539 = vmatprep.subr.mxu0 0.0
        %5540 = vmatpush1.msra.mxu0 0.0
        %5541 = vmatprep.subr.mxu0 0.0
        %5542 = vmatpush1.msra.mxu0 0.0
        %5543 = vmatprep.subr.mxu0 0.0
        %5544 = vmatpush1.msra.mxu0 0.0
        %5545 = vmatprep.subr.mxu0 0.0
        %5546 = vmatpush1.msra.mxu0 0.0
        %5547 = vmatprep.subr.mxu0 0.0
        %5548 = vmatpush1.msra.mxu0 0.0
        %5549 = vmatprep.subr.mxu0 0.0
        %5550 = vmatpush1.msra.mxu0 0.0
        %5551 = vmatprep.subr.mxu0 0.0
        %5552 = vmatpush1.msra.mxu0 0.0
        %5553 = vmatprep.subr.mxu0 0.0
        %5554 = vmatpush1.msra.mxu0 0.0
        %5555 = vmatprep.subr.mxu0 0.0
        %5556 = vmatpush1.msra.mxu0 0.0
        %5557 = vmatprep.mubr.f32.mxu0 0.0
        %5558 = vmatmul.mubr.f32.gmra.mrb[0].mxu0 %v5491
        %v5559 = vpop.f32.mrb[0].mxu0
        %v5560 = vadd.f32 0.0, %v5559
        %v5561 = vpop.f32.mrb[0].mxu0
        %5562 = vdwg.mxu0
        %v5564 = vsel %vm3176, %v3514, 0
        %5566 = vmatprep.subr.mxu0 0.0
        %5567 = vmatpush1.msra.mxu0 %v3537
        %5568 = vmatprep.subr.mxu0 0.0
        %5569 = vmatpush1.msra.mxu0 0.0
        %5570 = vmatprep.subr.mxu0 0.0
        %5571 = vmatpush1.msra.mxu0 0.0
        %5572 = vmatprep.subr.mxu0 0.0
        %5573 = vmatpush1.msra.mxu0 0.0
        %5574 = vmatprep.subr.mxu0 0.0
        %5575 = vmatpush1.msra.mxu0 0.0
        %5576 = vmatprep.subr.mxu0 0.0
        %5577 = vmatpush1.msra.mxu0 0.0
        %5578 = vmatprep.subr.mxu0 0.0
        %5579 = vmatpush1.msra.mxu0 0.0
        %5580 = vmatprep.subr.mxu0 0.0
        %5581 = vmatpush1.msra.mxu0 0.0
        %5582 = vmatprep.subr.mxu0 0.0
        %5583 = vmatpush1.msra.mxu0 0.0
        %5584 = vmatprep.subr.mxu0 0.0
        %5585 = vmatpush1.msra.mxu0 0.0
        %5586 = vmatprep.subr.mxu0 0.0
        %5587 = vmatpush1.msra.mxu0 0.0
        %5588 = vmatprep.subr.mxu0 0.0
        %5589 = vmatpush1.msra.mxu0 0.0
        %5590 = vmatprep.subr.mxu0 0.0
        %5591 = vmatpush1.msra.mxu0 0.0
        %5592 = vmatprep.subr.mxu0 0.0
        %5593 = vmatpush1.msra.mxu0 0.0
        %5594 = vmatprep.subr.mxu0 0.0
        %5595 = vmatpush1.msra.mxu0 0.0
        %5596 = vmatprep.subr.mxu0 0.0
        %5597 = vmatpush1.msra.mxu0 0.0
        %5598 = vmatprep.subr.mxu0 0.0
        %5599 = vmatpush1.msra.mxu0 0.0
        %5600 = vmatprep.subr.mxu0 0.0
        %5601 = vmatpush1.msra.mxu0 0.0
        %5602 = vmatprep.subr.mxu0 0.0
        %5603 = vmatpush1.msra.mxu0 0.0
        %5604 = vmatprep.subr.mxu0 0.0
        %5605 = vmatpush1.msra.mxu0 0.0
        %5606 = vmatprep.subr.mxu0 0.0
        %5607 = vmatpush1.msra.mxu0 0.0
        %5608 = vmatprep.subr.mxu0 0.0
        %5609 = vmatpush1.msra.mxu0 0.0
        %5610 = vmatprep.subr.mxu0 0.0
        %5611 = vmatpush1.msra.mxu0 0.0
        %5612 = vmatprep.subr.mxu0 0.0
        %5613 = vmatpush1.msra.mxu0 0.0
        %5614 = vmatprep.subr.mxu0 0.0
        %5615 = vmatpush1.msra.mxu0 0.0
        %5616 = vmatprep.subr.mxu0 0.0
        %5617 = vmatpush1.msra.mxu0 0.0
        %5618 = vmatprep.subr.mxu0 0.0
        %5619 = vmatpush1.msra.mxu0 0.0
        %5620 = vmatprep.subr.mxu0 0.0
        %5621 = vmatpush1.msra.mxu0 0.0
        %5622 = vmatprep.subr.mxu0 0.0
        %5623 = vmatpush1.msra.mxu0 0.0
        %5624 = vmatprep.subr.mxu0 0.0
        %5625 = vmatpush1.msra.mxu0 0.0
        %5626 = vmatprep.subr.mxu0 0.0
        %5627 = vmatpush1.msra.mxu0 0.0
        %5628 = vmatprep.subr.mxu0 0.0
        %5629 = vmatpush1.msra.mxu0 0.0
        %5630 = vmatprep.mubr.f32.mxu0 0.0
        %5631 = vmatmul.mubr.f32.gmra.mrb[0].mxu0 %v5564
        %v5632 = vpop.f32.mrb[0].mxu0
        %v5633 = vadd.f32 0.0, %v5632
        %v5634 = vpop.f32.mrb[0].mxu0
        %5635 = vdwg.mxu0
        %v5637 = vsel %vm3176, %v3516, 0
        %5639 = vmatprep.subr.mxu0 0.0
        %5640 = vmatpush1.msra.mxu0 %v3538
        %5641 = vmatprep.subr.mxu0 0.0
        %5642 = vmatpush1.msra.mxu0 0.0
        %5643 = vmatprep.subr.mxu0 0.0
        %5644 = vmatpush1.msra.mxu0 0.0
        %5645 = vmatprep.subr.mxu0 0.0
        %5646 = vmatpush1.msra.mxu0 0.0
        %5647 = vmatprep.subr.mxu0 0.0
        %5648 = vmatpush1.msra.mxu0 0.0
        %5649 = vmatprep.subr.mxu0 0.0
        %5650 = vmatpush1.msra.mxu0 0.0
        %5651 = vmatprep.subr.mxu0 0.0
        %5652 = vmatpush1.msra.mxu0 0.0
        %5653 = vmatprep.subr.mxu0 0.0
        %5654 = vmatpush1.msra.mxu0 0.0
        %5655 = vmatprep.subr.mxu0 0.0
        %5656 = vmatpush1.msra.mxu0 0.0
        %5657 = vmatprep.subr.mxu0 0.0
        %5658 = vmatpush1.msra.mxu0 0.0
        %5659 = vmatprep.subr.mxu0 0.0
        %5660 = vmatpush1.msra.mxu0 0.0
        %5661 = vmatprep.subr.mxu0 0.0
        %5662 = vmatpush1.msra.mxu0 0.0
        %5663 = vmatprep.subr.mxu0 0.0
        %5664 = vmatpush1.msra.mxu0 0.0
        %5665 = vmatprep.subr.mxu0 0.0
        %5666 = vmatpush1.msra.mxu0 0.0
        %5667 = vmatprep.subr.mxu0 0.0
        %5668 = vmatpush1.msra.mxu0 0.0
        %5669 = vmatprep.subr.mxu0 0.0
        %5670 = vmatpush1.msra.mxu0 0.0
        %5671 = vmatprep.subr.mxu0 0.0
        %5672 = vmatpush1.msra.mxu0 0.0
        %5673 = vmatprep.subr.mxu0 0.0
        %5674 = vmatpush1.msra.mxu0 0.0
        %5675 = vmatprep.subr.mxu0 0.0
        %5676 = vmatpush1.msra.mxu0 0.0
        %5677 = vmatprep.subr.mxu0 0.0
        %5678 = vmatpush1.msra.mxu0 0.0
        %5679 = vmatprep.subr.mxu0 0.0
        %5680 = vmatpush1.msra.mxu0 0.0
        %5681 = vmatprep.subr.mxu0 0.0
        %5682 = vmatpush1.msra.mxu0 0.0
        %5683 = vmatprep.subr.mxu0 0.0
        %5684 = vmatpush1.msra.mxu0 0.0
        %5685 = vmatprep.subr.mxu0 0.0
        %5686 = vmatpush1.msra.mxu0 0.0
        %5687 = vmatprep.subr.mxu0 0.0
        %5688 = vmatpush1.msra.mxu0 0.0
        %5689 = vmatprep.subr.mxu0 0.0
        %5690 = vmatpush1.msra.mxu0 0.0
        %5691 = vmatprep.subr.mxu0 0.0
        %5692 = vmatpush1.msra.mxu0 0.0
        %5693 = vmatprep.subr.mxu0 0.0
        %5694 = vmatpush1.msra.mxu0 0.0
        %5695 = vmatprep.subr.mxu0 0.0
        %5696 = vmatpush1.msra.mxu0 0.0
        %5697 = vmatprep.subr.mxu0 0.0
        %5698 = vmatpush1.msra.mxu0 0.0
        %5699 = vmatprep.subr.mxu0 0.0
        %5700 = vmatpush1.msra.mxu0 0.0
        %5701 = vmatprep.subr.mxu0 0.0
        %5702 = vmatpush1.msra.mxu0 0.0
        %5703 = vmatprep.mubr.f32.mxu0 0.0
        %5704 = vmatmul.mubr.f32.gmra.mrb[0].mxu0 %v5637
        %v5705 = vpop.f32.mrb[0].mxu0
        %v5706 = vadd.f32 0.0, %v5705
        %v5707 = vpop.f32.mrb[0].mxu0
        %5708 = vdwg.mxu0
        %v5710 = vsel %vm3176, %v3518, 0
        %5712 = vmatprep.subr.mxu0 0.0
        %5713 = vmatpush1.msra.mxu0 %v3539
        %5714 = vmatprep.subr.mxu0 0.0
        %5715 = vmatpush1.msra.mxu0 0.0
        %5716 = vmatprep.subr.mxu0 0.0
        %5717 = vmatpush1.msra.mxu0 0.0
        %5718 = vmatprep.subr.mxu0 0.0
        %5719 = vmatpush1.msra.mxu0 0.0
        %5720 = vmatprep.subr.mxu0 0.0
        %5721 = vmatpush1.msra.mxu0 0.0
        %5722 = vmatprep.subr.mxu0 0.0
        %5723 = vmatpush1.msra.mxu0 0.0
        %5724 = vmatprep.subr.mxu0 0.0
        %5725 = vmatpush1.msra.mxu0 0.0
        %5726 = vmatprep.subr.mxu0 0.0
        %5727 = vmatpush1.msra.mxu0 0.0
        %5728 = vmatprep.subr.mxu0 0.0
        %5729 = vmatpush1.msra.mxu0 0.0
        %5730 = vmatprep.subr.mxu0 0.0
        %5731 = vmatpush1.msra.mxu0 0.0
        %5732 = vmatprep.subr.mxu0 0.0
        %5733 = vmatpush1.msra.mxu0 0.0
        %5734 = vmatprep.subr.mxu0 0.0
        %5735 = vmatpush1.msra.mxu0 0.0
        %5736 = vmatprep.subr.mxu0 0.0
        %5737 = vmatpush1.msra.mxu0 0.0
        %5738 = vmatprep.subr.mxu0 0.0
        %5739 = vmatpush1.msra.mxu0 0.0
        %5740 = vmatprep.subr.mxu0 0.0
        %5741 = vmatpush1.msra.mxu0 0.0
        %5742 = vmatprep.subr.mxu0 0.0
        %5743 = vmatpush1.msra.mxu0 0.0
        %5744 = vmatprep.subr.mxu0 0.0
        %5745 = vmatpush1.msra.mxu0 0.0
        %5746 = vmatprep.subr.mxu0 0.0
        %5747 = vmatpush1.msra.mxu0 0.0
        %5748 = vmatprep.subr.mxu0 0.0
        %5749 = vmatpush1.msra.mxu0 0.0
        %5750 = vmatprep.subr.mxu0 0.0
        %5751 = vmatpush1.msra.mxu0 0.0
        %5752 = vmatprep.subr.mxu0 0.0
        %5753 = vmatpush1.msra.mxu0 0.0
        %5754 = vmatprep.subr.mxu0 0.0
        %5755 = vmatpush1.msra.mxu0 0.0
        %5756 = vmatprep.subr.mxu0 0.0
        %5757 = vmatpush1.msra.mxu0 0.0
        %5758 = vmatprep.subr.mxu0 0.0
        %5759 = vmatpush1.msra.mxu0 0.0
        %5760 = vmatprep.subr.mxu0 0.0
        %5761 = vmatpush1.msra.mxu0 0.0
        %5762 = vmatprep.subr.mxu0 0.0
        %5763 = vmatpush1.msra.mxu0 0.0
        %5764 = vmatprep.subr.mxu0 0.0
        %5765 = vmatpush1.msra.mxu0 0.0
        %5766 = vmatprep.subr.mxu0 0.0
        %5767 = vmatpush1.msra.mxu0 0.0
        %5768 = vmatprep.subr.mxu0 0.0
        %5769 = vmatpush1.msra.mxu0 0.0
        %5770 = vmatprep.subr.mxu0 0.0
        %5771 = vmatpush1.msra.mxu0 0.0
        %5772 = vmatprep.subr.mxu0 0.0
        %5773 = vmatpush1.msra.mxu0 0.0
        %5774 = vmatprep.subr.mxu0 0.0
        %5775 = vmatpush1.msra.mxu0 0.0
        %5776 = vmatprep.mubr.f32.mxu0 0.0
        %5777 = vmatmul.mubr.f32.gmra.mrb[0].mxu0 %v5710
        %v5778 = vpop.f32.mrb[0].mxu0
        %v5779 = vadd.f32 0.0, %v5778
        %v5780 = vpop.f32.mrb[0].mxu0
        %5781 = vdwg.mxu0
        %v5783 = vsel %vm3176, %v3520, 0
        %5785 = vmatprep.subr.mxu0 0.0
        %5786 = vmatpush1.msra.mxu0 %v3540
        %5787 = vmatprep.subr.mxu0 0.0
        %5788 = vmatpush1.msra.mxu0 0.0
        %5789 = vmatprep.subr.mxu0 0.0
        %5790 = vmatpush1.msra.mxu0 0.0
        %5791 = vmatprep.subr.mxu0 0.0
        %5792 = vmatpush1.msra.mxu0 0.0
        %5793 = vmatprep.subr.mxu0 0.0
        %5794 = vmatpush1.msra.mxu0 0.0
        %5795 = vmatprep.subr.mxu0 0.0
        %5796 = vmatpush1.msra.mxu0 0.0
        %5797 = vmatprep.subr.mxu0 0.0
        %5798 = vmatpush1.msra.mxu0 0.0
        %5799 = vmatprep.subr.mxu0 0.0
        %5800 = vmatpush1.msra.mxu0 0.0
        %5801 = vmatprep.subr.mxu0 0.0
        %5802 = vmatpush1.msra.mxu0 0.0
        %5803 = vmatprep.subr.mxu0 0.0
        %5804 = vmatpush1.msra.mxu0 0.0
        %5805 = vmatprep.subr.mxu0 0.0
        %5806 = vmatpush1.msra.mxu0 0.0
        %5807 = vmatprep.subr.mxu0 0.0
        %5808 = vmatpush1.msra.mxu0 0.0
        %5809 = vmatprep.subr.mxu0 0.0
        %5810 = vmatpush1.msra.mxu0 0.0
        %5811 = vmatprep.subr.mxu0 0.0
        %5812 = vmatpush1.msra.mxu0 0.0
        %5813 = vmatprep.subr.mxu0 0.0
        %5814 = vmatpush1.msra.mxu0 0.0
        %5815 = vmatprep.subr.mxu0 0.0
        %5816 = vmatpush1.msra.mxu0 0.0
        %5817 = vmatprep.subr.mxu0 0.0
        %5818 = vmatpush1.msra.mxu0 0.0
        %5819 = vmatprep.subr.mxu0 0.0
        %5820 = vmatpush1.msra.mxu0 0.0
        %5821 = vmatprep.subr.mxu0 0.0
        %5822 = vmatpush1.msra.mxu0 0.0
        %5823 = vmatprep.subr.mxu0 0.0
        %5824 = vmatpush1.msra.mxu0 0.0
        %5825 = vmatprep.subr.mxu0 0.0
        %5826 = vmatpush1.msra.mxu0 0.0
        %5827 = vmatprep.subr.mxu0 0.0
        %5828 = vmatpush1.msra.mxu0 0.0
        %5829 = vmatprep.subr.mxu0 0.0
        %5830 = vmatpush1.msra.mxu0 0.0
        %5831 = vmatprep.subr.mxu0 0.0
        %5832 = vmatpush1.msra.mxu0 0.0
        %5833 = vmatprep.subr.mxu0 0.0
        %5834 = vmatpush1.msra.mxu0 0.0
        %5835 = vmatprep.subr.mxu0 0.0
        %5836 = vmatpush1.msra.mxu0 0.0
        %5837 = vmatprep.subr.mxu0 0.0
        %5838 = vmatpush1.msra.mxu0 0.0
        %5839 = vmatprep.subr.mxu0 0.0
        %5840 = vmatpush1.msra.mxu0 0.0
        %5841 = vmatprep.subr.mxu0 0.0
        %5842 = vmatpush1.msra.mxu0 0.0
        %5843 = vmatprep.subr.mxu0 0.0
        %5844 = vmatpush1.msra.mxu0 0.0
        %5845 = vmatprep.subr.mxu0 0.0
        %5846 = vmatpush1.msra.mxu0 0.0
        %5847 = vmatprep.subr.mxu0 0.0
        %5848 = vmatpush1.msra.mxu0 0.0
        %5849 = vmatprep.mubr.f32.mxu0 0.0
        %5850 = vmatmul.mubr.f32.gmra.mrb[0].mxu0 %v5783
        %v5851 = vpop.f32.mrb[0].mxu0
        %v5852 = vadd.f32 0.0, %v5851
        %v5853 = vpop.f32.mrb[0].mxu0
        %5854 = vdwg.mxu0
        %v5856 = vsel %vm3176, %v3522, 0
        %5858 = vmatprep.subr.mxu0 0.0
        %5859 = vmatpush1.msra.mxu0 %v3541
        %5860 = vmatprep.subr.mxu0 0.0
        %5861 = vmatpush1.msra.mxu0 0.0
        %5862 = vmatprep.subr.mxu0 0.0
        %5863 = vmatpush1.msra.mxu0 0.0
        %5864 = vmatprep.subr.mxu0 0.0
        %5865 = vmatpush1.msra.mxu0 0.0
        %5866 = vmatprep.subr.mxu0 0.0
        %5867 = vmatpush1.msra.mxu0 0.0
        %5868 = vmatprep.subr.mxu0 0.0
        %5869 = vmatpush1.msra.mxu0 0.0
        %5870 = vmatprep.subr.mxu0 0.0
        %5871 = vmatpush1.msra.mxu0 0.0
        %5872 = vmatprep.subr.mxu0 0.0
        %5873 = vmatpush1.msra.mxu0 0.0
        %5874 = vmatprep.subr.mxu0 0.0
        %5875 = vmatpush1.msra.mxu0 0.0
        %5876 = vmatprep.subr.mxu0 0.0
        %5877 = vmatpush1.msra.mxu0 0.0
        %5878 = vmatprep.subr.mxu0 0.0
        %5879 = vmatpush1.msra.mxu0 0.0
        %5880 = vmatprep.subr.mxu0 0.0
        %5881 = vmatpush1.msra.mxu0 0.0
        %5882 = vmatprep.subr.mxu0 0.0
        %5883 = vmatpush1.msra.mxu0 0.0
        %5884 = vmatprep.subr.mxu0 0.0
        %5885 = vmatpush1.msra.mxu0 0.0
        %5886 = vmatprep.subr.mxu0 0.0
        %5887 = vmatpush1.msra.mxu0 0.0
        %5888 = vmatprep.subr.mxu0 0.0
        %5889 = vmatpush1.msra.mxu0 0.0
        %5890 = vmatprep.subr.mxu0 0.0
        %5891 = vmatpush1.msra.mxu0 0.0
        %5892 = vmatprep.subr.mxu0 0.0
        %5893 = vmatpush1.msra.mxu0 0.0
        %5894 = vmatprep.subr.mxu0 0.0
        %5895 = vmatpush1.msra.mxu0 0.0
        %5896 = vmatprep.subr.mxu0 0.0
        %5897 = vmatpush1.msra.mxu0 0.0
        %5898 = vmatprep.subr.mxu0 0.0
        %5899 = vmatpush1.msra.mxu0 0.0
        %5900 = vmatprep.subr.mxu0 0.0
        %5901 = vmatpush1.msra.mxu0 0.0
        %5902 = vmatprep.subr.mxu0 0.0
        %5903 = vmatpush1.msra.mxu0 0.0
        %5904 = vmatprep.subr.mxu0 0.0
        %5905 = vmatpush1.msra.mxu0 0.0
        %5906 = vmatprep.subr.mxu0 0.0
        %5907 = vmatpush1.msra.mxu0 0.0
        %5908 = vmatprep.subr.mxu0 0.0
        %5909 = vmatpush1.msra.mxu0 0.0
        %5910 = vmatprep.subr.mxu0 0.0
        %5911 = vmatpush1.msra.mxu0 0.0
        %5912 = vmatprep.subr.mxu0 0.0
        %5913 = vmatpush1.msra.mxu0 0.0
        %5914 = vmatprep.subr.mxu0 0.0
        %5915 = vmatpush1.msra.mxu0 0.0
        %5916 = vmatprep.subr.mxu0 0.0
        %5917 = vmatpush1.msra.mxu0 0.0
        %5918 = vmatprep.subr.mxu0 0.0
        %5919 = vmatpush1.msra.mxu0 0.0
        %5920 = vmatprep.subr.mxu0 0.0
        %5921 = vmatpush1.msra.mxu0 0.0
        %5922 = vmatprep.mubr.f32.mxu0 0.0
        %5923 = vmatmul.mubr.f32.gmra.mrb[0].mxu0 %v5856
        %v5924 = vpop.f32.mrb[0].mxu0
        %v5925 = vadd.f32 0.0, %v5924
        %v5926 = vpop.f32.mrb[0].mxu0
        %5927 = vdwg.mxu0
        %v5929 = vsel %vm3176, %v3524, 0
        %5931 = vmatprep.subr.mxu0 0.0
        %5932 = vmatpush1.msra.mxu0 %v3542
        %5933 = vmatprep.subr.mxu0 0.0
        %5934 = vmatpush1.msra.mxu0 0.0
        %5935 = vmatprep.subr.mxu0 0.0
        %5936 = vmatpush1.msra.mxu0 0.0
        %5937 = vmatprep.subr.mxu0 0.0
        %5938 = vmatpush1.msra.mxu0 0.0
        %5939 = vmatprep.subr.mxu0 0.0
        %5940 = vmatpush1.msra.mxu0 0.0
        %5941 = vmatprep.subr.mxu0 0.0
        %5942 = vmatpush1.msra.mxu0 0.0
        %5943 = vmatprep.subr.mxu0 0.0
        %5944 = vmatpush1.msra.mxu0 0.0
        %5945 = vmatprep.subr.mxu0 0.0
        %5946 = vmatpush1.msra.mxu0 0.0
        %5947 = vmatprep.subr.mxu0 0.0
        %5948 = vmatpush1.msra.mxu0 0.0
        %5949 = vmatprep.subr.mxu0 0.0
        %5950 = vmatpush1.msra.mxu0 0.0
        %5951 = vmatprep.subr.mxu0 0.0
        %5952 = vmatpush1.msra.mxu0 0.0
        %5953 = vmatprep.subr.mxu0 0.0
        %5954 = vmatpush1.msra.mxu0 0.0
        %5955 = vmatprep.subr.mxu0 0.0
        %5956 = vmatpush1.msra.mxu0 0.0
        %5957 = vmatprep.subr.mxu0 0.0
        %5958 = vmatpush1.msra.mxu0 0.0
        %5959 = vmatprep.subr.mxu0 0.0
        %5960 = vmatpush1.msra.mxu0 0.0
        %5961 = vmatprep.subr.mxu0 0.0
        %5962 = vmatpush1.msra.mxu0 0.0
        %5963 = vmatprep.subr.mxu0 0.0
        %5964 = vmatpush1.msra.mxu0 0.0
        %5965 = vmatprep.subr.mxu0 0.0
        %5966 = vmatpush1.msra.mxu0 0.0
        %5967 = vmatprep.subr.mxu0 0.0
        %5968 = vmatpush1.msra.mxu0 0.0
        %5969 = vmatprep.subr.mxu0 0.0
        %5970 = vmatpush1.msra.mxu0 0.0
        %5971 = vmatprep.subr.mxu0 0.0
        %5972 = vmatpush1.msra.mxu0 0.0
        %5973 = vmatprep.subr.mxu0 0.0
        %5974 = vmatpush1.msra.mxu0 0.0
        %5975 = vmatprep.subr.mxu0 0.0
        %5976 = vmatpush1.msra.mxu0 0.0
        %5977 = vmatprep.subr.mxu0 0.0
        %5978 = vmatpush1.msra.mxu0 0.0
        %5979 = vmatprep.subr.mxu0 0.0
        %5980 = vmatpush1.msra.mxu0 0.0
        %5981 = vmatprep.subr.mxu0 0.0
        %5982 = vmatpush1.msra.mxu0 0.0
        %5983 = vmatprep.subr.mxu0 0.0
        %5984 = vmatpush1.msra.mxu0 0.0
        %5985 = vmatprep.subr.mxu0 0.0
        %5986 = vmatpush1.msra.mxu0 0.0
        %5987 = vmatprep.subr.mxu0 0.0
        %5988 = vmatpush1.msra.mxu0 0.0
        %5989 = vmatprep.subr.mxu0 0.0
        %5990 = vmatpush1.msra.mxu0 0.0
        %5991 = vmatprep.subr.mxu0 0.0
        %5992 = vmatpush1.msra.mxu0 0.0
        %5993 = vmatprep.subr.mxu0 0.0
        %5994 = vmatpush1.msra.mxu0 0.0
        %5995 = vmatprep.mubr.f32.mxu0 0.0
        %5996 = vmatmul.mubr.f32.gmra.mrb[0].mxu0 %v5929
        %v5997 = vpop.f32.mrb[0].mxu0
        %v5998 = vadd.f32 0.0, %v5997
        %v5999 = vpop.f32.mrb[0].mxu0
        %6000 = vdwg.mxu0
        %v6002 = vsel %vm3176, %v3526, 0
        %6004 = vmatprep.subr.mxu0 0.0
        %6005 = vmatpush1.msra.mxu0 %v3543
        %6006 = vmatprep.subr.mxu0 0.0
        %6007 = vmatpush1.msra.mxu0 0.0
        %6008 = vmatprep.subr.mxu0 0.0
        %6009 = vmatpush1.msra.mxu0 0.0
        %6010 = vmatprep.subr.mxu0 0.0
        %6011 = vmatpush1.msra.mxu0 0.0
        %6012 = vmatprep.subr.mxu0 0.0
        %6013 = vmatpush1.msra.mxu0 0.0
        %6014 = vmatprep.subr.mxu0 0.0
        %6015 = vmatpush1.msra.mxu0 0.0
        %6016 = vmatprep.subr.mxu0 0.0
        %6017 = vmatpush1.msra.mxu0 0.0
        %6018 = vmatprep.subr.mxu0 0.0
        %6019 = vmatpush1.msra.mxu0 0.0
        %6020 = vmatprep.subr.mxu0 0.0
        %6021 = vmatpush1.msra.mxu0 0.0
        %6022 = vmatprep.subr.mxu0 0.0
        %6023 = vmatpush1.msra.mxu0 0.0
        %6024 = vmatprep.subr.mxu0 0.0
        %6025 = vmatpush1.msra.mxu0 0.0
        %6026 = vmatprep.subr.mxu0 0.0
        %6027 = vmatpush1.msra.mxu0 0.0
        %6028 = vmatprep.subr.mxu0 0.0
        %6029 = vmatpush1.msra.mxu0 0.0
        %6030 = vmatprep.subr.mxu0 0.0
        %6031 = vmatpush1.msra.mxu0 0.0
        %6032 = vmatprep.subr.mxu0 0.0
        %6033 = vmatpush1.msra.mxu0 0.0
        %6034 = vmatprep.subr.mxu0 0.0
        %6035 = vmatpush1.msra.mxu0 0.0
        %6036 = vmatprep.subr.mxu0 0.0
        %6037 = vmatpush1.msra.mxu0 0.0
        %6038 = vmatprep.subr.mxu0 0.0
        %6039 = vmatpush1.msra.mxu0 0.0
        %6040 = vmatprep.subr.mxu0 0.0
        %6041 = vmatpush1.msra.mxu0 0.0
        %6042 = vmatprep.subr.mxu0 0.0
        %6043 = vmatpush1.msra.mxu0 0.0
        %6044 = vmatprep.subr.mxu0 0.0
        %6045 = vmatpush1.msra.mxu0 0.0
        %6046 = vmatprep.subr.mxu0 0.0
        %6047 = vmatpush1.msra.mxu0 0.0
        %6048 = vmatprep.subr.mxu0 0.0
        %6049 = vmatpush1.msra.mxu0 0.0
        %6050 = vmatprep.subr.mxu0 0.0
        %6051 = vmatpush1.msra.mxu0 0.0
        %6052 = vmatprep.subr.mxu0 0.0
        %6053 = vmatpush1.msra.mxu0 0.0
        %6054 = vmatprep.subr.mxu0 0.0
        %6055 = vmatpush1.msra.mxu0 0.0
        %6056 = vmatprep.subr.mxu0 0.0
        %6057 = vmatpush1.msra.mxu0 0.0
        %6058 = vmatprep.subr.mxu0 0.0
        %6059 = vmatpush1.msra.mxu0 0.0
        %6060 = vmatprep.subr.mxu0 0.0
        %6061 = vmatpush1.msra.mxu0 0.0
        %6062 = vmatprep.subr.mxu0 0.0
        %6063 = vmatpush1.msra.mxu0 0.0
        %6064 = vmatprep.subr.mxu0 0.0
        %6065 = vmatpush1.msra.mxu0 0.0
        %6066 = vmatprep.subr.mxu0 0.0
        %6067 = vmatpush1.msra.mxu0 0.0
        %6068 = vmatprep.mubr.f32.mxu0 0.0
        %6069 = vmatmul.mubr.f32.gmra.mrb[0].mxu0 %v6002
        %v6070 = vpop.f32.mrb[0].mxu0
        %v6071 = vadd.f32 0.0, %v6070
        %v6072 = vpop.f32.mrb[0].mxu0
        %6073 = vdwg.mxu0
        %v6075 = vsel %vm3176, %v3528, 0
        %6077 = vmatprep.subr.mxu0 0.0
        %6078 = vmatpush1.msra.mxu0 %v3544
        %6079 = vmatprep.subr.mxu0 0.0
        %6080 = vmatpush1.msra.mxu0 0.0
        %6081 = vmatprep.subr.mxu0 0.0
        %6082 = vmatpush1.msra.mxu0 0.0
        %6083 = vmatprep.subr.mxu0 0.0
        %6084 = vmatpush1.msra.mxu0 0.0
        %6085 = vmatprep.subr.mxu0 0.0
        %6086 = vmatpush1.msra.mxu0 0.0
        %6087 = vmatprep.subr.mxu0 0.0
        %6088 = vmatpush1.msra.mxu0 0.0
        %6089 = vmatprep.subr.mxu0 0.0
        %6090 = vmatpush1.msra.mxu0 0.0
        %6091 = vmatprep.subr.mxu0 0.0
        %6092 = vmatpush1.msra.mxu0 0.0
        %6093 = vmatprep.subr.mxu0 0.0
        %6094 = vmatpush1.msra.mxu0 0.0
        %6095 = vmatprep.subr.mxu0 0.0
        %6096 = vmatpush1.msra.mxu0 0.0
        %6097 = vmatprep.subr.mxu0 0.0
        %6098 = vmatpush1.msra.mxu0 0.0
        %6099 = vmatprep.subr.mxu0 0.0
        %6100 = vmatpush1.msra.mxu0 0.0
        %6101 = vmatprep.subr.mxu0 0.0
        %6102 = vmatpush1.msra.mxu0 0.0
        %6103 = vmatprep.subr.mxu0 0.0
        %6104 = vmatpush1.msra.mxu0 0.0
        %6105 = vmatprep.subr.mxu0 0.0
        %6106 = vmatpush1.msra.mxu0 0.0
        %6107 = vmatprep.subr.mxu0 0.0
        %6108 = vmatpush1.msra.mxu0 0.0
        %6109 = vmatprep.subr.mxu0 0.0
        %6110 = vmatpush1.msra.mxu0 0.0
        %6111 = vmatprep.subr.mxu0 0.0
        %6112 = vmatpush1.msra.mxu0 0.0
        %6113 = vmatprep.subr.mxu0 0.0
        %6114 = vmatpush1.msra.mxu0 0.0
        %6115 = vmatprep.subr.mxu0 0.0
        %6116 = vmatpush1.msra.mxu0 0.0
        %6117 = vmatprep.subr.mxu0 0.0
        %6118 = vmatpush1.msra.mxu0 0.0
        %6119 = vmatprep.subr.mxu0 0.0
        %6120 = vmatpush1.msra.mxu0 0.0
        %6121 = vmatprep.subr.mxu0 0.0
        %6122 = vmatpush1.msra.mxu0 0.0
        %6123 = vmatprep.subr.mxu0 0.0
        %6124 = vmatpush1.msra.mxu0 0.0
        %6125 = vmatprep.subr.mxu0 0.0
        %6126 = vmatpush1.msra.mxu0 0.0
        %6127 = vmatprep.subr.mxu0 0.0
        %6128 = vmatpush1.msra.mxu0 0.0
        %6129 = vmatprep.subr.mxu0 0.0
        %6130 = vmatpush1.msra.mxu0 0.0
        %6131 = vmatprep.subr.mxu0 0.0
        %6132 = vmatpush1.msra.mxu0 0.0
        %6133 = vmatprep.subr.mxu0 0.0
        %6134 = vmatpush1.msra.mxu0 0.0
        %6135 = vmatprep.subr.mxu0 0.0
        %6136 = vmatpush1.msra.mxu0 0.0
        %6137 = vmatprep.subr.mxu0 0.0
        %6138 = vmatpush1.msra.mxu0 0.0
        %6139 = vmatprep.subr.mxu0 0.0
        %6140 = vmatpush1.msra.mxu0 0.0
        %6141 = vmatprep.mubr.f32.mxu0 0.0
        %6142 = vmatmul.mubr.f32.gmra.mrb[0].mxu0 %v6075
        %v6143 = vpop.f32.mrb[0].mxu0
        %v6144 = vadd.f32 0.0, %v6143
        %v6145 = vpop.f32.mrb[0].mxu0
        %6146 = vdwg.mxu0
        %v6147 = vld [vmem:[#allocation2] sm:$0xff]
        %v6148 = vld [vmem:[#allocation2 + $0x8] sm:$0xff]
        %v6149 = vld [vmem:[#allocation2 + $0x10] sm:$0xff]
        %v6150 = vld [vmem:[#allocation2 + $0x18] sm:$0xff]
        %v6151 = vld [vmem:[#allocation2 + $0x20] sm:$0xff]
        %v6152 = vld [vmem:[#allocation2 + $0x28] sm:$0xff]
        %v6153 = vld [vmem:[#allocation2 + $0x30] sm:$0xff]
        %v6154 = vld [vmem:[#allocation2 + $0x38] sm:$0xff]
        %v6155 = vld [vmem:[#allocation2 + $0x40] sm:$0xff]
        %v6156 = vld [vmem:[#allocation2 + $0x48] sm:$0xff]
        %v6157 = vld [vmem:[#allocation2 + $0x50] sm:$0xff]
        %v6158 = vld [vmem:[#allocation2 + $0x58] sm:$0xff]
        %v6159 = vld [vmem:[#allocation2 + $0x60] sm:$0xff]
        %v6160 = vld [vmem:[#allocation2 + $0x68] sm:$0xff]
        %v6161 = vld [vmem:[#allocation2 + $0x70] sm:$0xff]
        %v6162 = vld [vmem:[#allocation2 + $0x78] sm:$0xff]
        %s6163 = scalar_lea.vmem %s4, 16
        %v6164 = vld [vmem:[%s6163] sm:$0xff]
        %v6165 = vld [vmem:[%s6163 + $0x8] sm:$0xff]
        %v6167 = vsel %vm358, %v5049, 0
        %v6170 = vsel %vm358, %v5122, 0
        %v6173 = vsel %vm358, %v5195, 0
        %v6176 = vsel %vm358, %v5268, 0
        %v6179 = vsel %vm358, %v5341, 0
        %v6182 = vsel %vm358, %v5414, 0
        %v6185 = vsel %vm358, %v5487, 0
        %v6188 = vsel %vm358, %v5560, 0
        %v6191 = vsel %vm358, %v5633, 0
        %v6194 = vsel %vm358, %v5706, 0
        %v6197 = vsel %vm358, %v5779, 0
        %v6200 = vsel %vm358, %v5852, 0
        %v6203 = vsel %vm358, %v5925, 0
        %v6206 = vsel %vm358, %v5998, 0
        %v6209 = vsel %vm358, %v6071, 0
        %v6212 = vsel %vm358, %v6144, 0
        %6214 = vmatprep.subr.mxu0 0.0
        %6215 = vmatpush1.msra.mxu0 %v6164
        %6216 = vmatprep.subr.mxu0 0.0
        %6217 = vmatpush1.msra.mxu0 %v6165
        %6218 = vmatprep.subr.mxu0 0.0
        %6219 = vmatpush1.msra.mxu0 0.0
        %6220 = vmatprep.subr.mxu0 0.0
        %6221 = vmatpush1.msra.mxu0 0.0
        %6222 = vmatprep.subr.mxu0 0.0
        %6223 = vmatpush1.msra.mxu0 0.0
        %6224 = vmatprep.subr.mxu0 0.0
        %6225 = vmatpush1.msra.mxu0 0.0
        %6226 = vmatprep.subr.mxu0 0.0
        %6227 = vmatpush1.msra.mxu0 0.0
        %6228 = vmatprep.subr.mxu0 0.0
        %6229 = vmatpush1.msra.mxu0 0.0
        %6230 = vmatprep.subr.mxu0 0.0
        %6231 = vmatpush1.msra.mxu0 0.0
        %6232 = vmatprep.subr.mxu0 0.0
        %6233 = vmatpush1.msra.mxu0 0.0
        %6234 = vmatprep.subr.mxu0 0.0
        %6235 = vmatpush1.msra.mxu0 0.0
        %6236 = vmatprep.subr.mxu0 0.0
        %6237 = vmatpush1.msra.mxu0 0.0
        %6238 = vmatprep.subr.mxu0 0.0
        %6239 = vmatpush1.msra.mxu0 0.0
        %6240 = vmatprep.subr.mxu0 0.0
        %6241 = vmatpush1.msra.mxu0 0.0
        %6242 = vmatprep.subr.mxu0 0.0
        %6243 = vmatpush1.msra.mxu0 0.0
        %6244 = vmatprep.subr.mxu0 0.0
        %6245 = vmatpush1.msra.mxu0 0.0
        %6246 = vmatprep.subr.mxu0 0.0
        %6247 = vmatpush1.msra.mxu0 0.0
        %6248 = vmatprep.subr.mxu0 0.0
        %6249 = vmatpush1.msra.mxu0 0.0
        %6250 = vmatprep.subr.mxu0 0.0
        %6251 = vmatpush1.msra.mxu0 0.0
        %6252 = vmatprep.subr.mxu0 0.0
        %6253 = vmatpush1.msra.mxu0 0.0
        %6254 = vmatprep.subr.mxu0 0.0
        %6255 = vmatpush1.msra.mxu0 0.0
        %6256 = vmatprep.subr.mxu0 0.0
        %6257 = vmatpush1.msra.mxu0 0.0
        %6258 = vmatprep.subr.mxu0 0.0
        %6259 = vmatpush1.msra.mxu0 0.0
        %6260 = vmatprep.subr.mxu0 0.0
        %6261 = vmatpush1.msra.mxu0 0.0
        %6262 = vmatprep.subr.mxu0 0.0
        %6263 = vmatpush1.msra.mxu0 0.0
        %6264 = vmatprep.subr.mxu0 0.0
        %6265 = vmatpush1.msra.mxu0 0.0
        %6266 = vmatprep.subr.mxu0 0.0
        %6267 = vmatpush1.msra.mxu0 0.0
        %6268 = vmatprep.subr.mxu0 0.0
        %6269 = vmatpush1.msra.mxu0 0.0
        %6270 = vmatprep.subr.mxu0 0.0
        %6271 = vmatpush1.msra.mxu0 0.0
        %6272 = vmatprep.subr.mxu0 0.0
        %6273 = vmatpush1.msra.mxu0 0.0
        %6274 = vmatprep.subr.mxu0 0.0
        %6275 = vmatpush1.msra.mxu0 0.0
        %6276 = vmatprep.subr.mxu0 0.0
        %6277 = vmatpush1.msra.mxu0 0.0
        %6278 = vmatprep.mubr.f32.mxu0 0.0
        %6279 = vmatmul.mubr.f32.gmra.mrb[0].mxu0 %v6167
        %v6280 = vpop.f32.mrb[0].mxu0
        %v6281 = vadd.f32 0.0, %v6280
        %v6282 = vpop.f32.mrb[0].mxu0
        %6283 = vmatprep.mubr.f32.mxu0 0.0
        %6284 = vmatmul.mubr.f32.gmra.mrb[0].mxu0 %v6170
        %v6285 = vpop.f32.mrb[0].mxu0
        %v6286 = vadd.f32 0.0, %v6285
        %v6287 = vpop.f32.mrb[0].mxu0
        %6288 = vmatprep.mubr.f32.mxu0 0.0
        %6289 = vmatmul.mubr.f32.gmra.mrb[0].mxu0 %v6173
        %v6290 = vpop.f32.mrb[0].mxu0
        %v6291 = vadd.f32 0.0, %v6290
        %v6292 = vpop.f32.mrb[0].mxu0
        %6293 = vmatprep.mubr.f32.mxu0 0.0
        %6294 = vmatmul.mubr.f32.gmra.mrb[0].mxu0 %v6176
        %v6295 = vpop.f32.mrb[0].mxu0
        %v6296 = vadd.f32 0.0, %v6295
        %v6297 = vpop.f32.mrb[0].mxu0
        %6298 = vmatprep.mubr.f32.mxu0 0.0
        %6299 = vmatmul.mubr.f32.gmra.mrb[0].mxu0 %v6179
        %v6300 = vpop.f32.mrb[0].mxu0
        %v6301 = vadd.f32 0.0, %v6300
        %v6302 = vpop.f32.mrb[0].mxu0
        %6303 = vmatprep.mubr.f32.mxu0 0.0
        %6304 = vmatmul.mubr.f32.gmra.mrb[0].mxu0 %v6182
        %v6305 = vpop.f32.mrb[0].mxu0
        %v6306 = vadd.f32 0.0, %v6305
        %v6307 = vpop.f32.mrb[0].mxu0
        %6308 = vmatprep.mubr.f32.mxu0 0.0
        %6309 = vmatmul.mubr.f32.gmra.mrb[0].mxu0 %v6185
        %v6310 = vpop.f32.mrb[0].mxu0
        %v6311 = vadd.f32 0.0, %v6310
        %v6312 = vpop.f32.mrb[0].mxu0
        %6313 = vmatprep.mubr.f32.mxu0 0.0
        %6314 = vmatmul.mubr.f32.gmra.mrb[0].mxu0 %v6188
        %v6315 = vpop.f32.mrb[0].mxu0
        %v6316 = vadd.f32 0.0, %v6315
        %v6317 = vpop.f32.mrb[0].mxu0
        %6318 = vmatprep.mubr.f32.mxu0 0.0
        %6319 = vmatmul.mubr.f32.gmra.mrb[0].mxu0 %v6191
        %v6320 = vpop.f32.mrb[0].mxu0
        %v6321 = vadd.f32 0.0, %v6320
        %v6322 = vpop.f32.mrb[0].mxu0
        %6323 = vmatprep.mubr.f32.mxu0 0.0
        %6324 = vmatmul.mubr.f32.gmra.mrb[0].mxu0 %v6194
        %v6325 = vpop.f32.mrb[0].mxu0
        %v6326 = vadd.f32 0.0, %v6325
        %v6327 = vpop.f32.mrb[0].mxu0
        %6328 = vmatprep.mubr.f32.mxu0 0.0
        %6329 = vmatmul.mubr.f32.gmra.mrb[0].mxu0 %v6197
        %v6330 = vpop.f32.mrb[0].mxu0
        %v6331 = vadd.f32 0.0, %v6330
        %v6332 = vpop.f32.mrb[0].mxu0
        %6333 = vmatprep.mubr.f32.mxu0 0.0
        %6334 = vmatmul.mubr.f32.gmra.mrb[0].mxu0 %v6200
        %v6335 = vpop.f32.mrb[0].mxu0
        %v6336 = vadd.f32 0.0, %v6335
        %v6337 = vpop.f32.mrb[0].mxu0
        %6338 = vmatprep.mubr.f32.mxu0 0.0
        %6339 = vmatmul.mubr.f32.gmra.mrb[0].mxu0 %v6203
        %v6340 = vpop.f32.mrb[0].mxu0
        %v6341 = vadd.f32 0.0, %v6340
        %v6342 = vpop.f32.mrb[0].mxu0
        %6343 = vmatprep.mubr.f32.mxu0 0.0
        %6344 = vmatmul.mubr.f32.gmra.mrb[0].mxu0 %v6206
        %v6345 = vpop.f32.mrb[0].mxu0
        %v6346 = vadd.f32 0.0, %v6345
        %v6347 = vpop.f32.mrb[0].mxu0
        %6348 = vmatprep.mubr.f32.mxu0 0.0
        %6349 = vmatmul.mubr.f32.gmra.mrb[0].mxu0 %v6209
        %v6350 = vpop.f32.mrb[0].mxu0
        %v6351 = vadd.f32 0.0, %v6350
        %v6352 = vpop.f32.mrb[0].mxu0
        %6353 = vmatprep.mubr.f32.mxu0 0.0
        %6354 = vmatmul.mubr.f32.gmra.mrb[0].mxu0 %v6212
        %v6355 = vpop.f32.mrb[0].mxu0
        %v6356 = vadd.f32 0.0, %v6355
        %v6357 = vpop.f32.mrb[0].mxu0
        %6358 = vdwg.mxu0
        %v6359 = vadd.f32 %v6147, %v6281
        %v6360 = vadd.f32 %v6148, %v6286
        %v6361 = vadd.f32 %v6149, %v6291
        %v6362 = vadd.f32 %v6150, %v6296
        %v6363 = vadd.f32 %v6151, %v6301
        %v6364 = vadd.f32 %v6152, %v6306
        %v6365 = vadd.f32 %v6153, %v6311
        %v6366 = vadd.f32 %v6154, %v6316
        %v6367 = vadd.f32 %v6155, %v6321
        %v6368 = vadd.f32 %v6156, %v6326
        %v6369 = vadd.f32 %v6157, %v6331
        %v6370 = vadd.f32 %v6158, %v6336
        %v6371 = vadd.f32 %v6159, %v6341
        %v6372 = vadd.f32 %v6160, %v6346
        %v6373 = vadd.f32 %v6161, %v6351
        %v6374 = vadd.f32 %v6162, %v6356
        %6375 = vst.msk [vmem:[#allocation2] sm:$0xff] %vm358, %v6359
        %6376 = vst.msk [vmem:[#allocation2 + $0x8] sm:$0xff] %vm358, %v6360
        %6377 = vst.msk [vmem:[#allocation2 + $0x10] sm:$0xff] %vm358, %v6361
        %6378 = vst.msk [vmem:[#allocation2 + $0x18] sm:$0xff] %vm358, %v6362
        %6379 = vst.msk [vmem:[#allocation2 + $0x20] sm:$0xff] %vm358, %v6363
        %6380 = vst.msk [vmem:[#allocation2 + $0x28] sm:$0xff] %vm358, %v6364
        %6381 = vst.msk [vmem:[#allocation2 + $0x30] sm:$0xff] %vm358, %v6365
        %6382 = vst.msk [vmem:[#allocation2 + $0x38] sm:$0xff] %vm358, %v6366
        %6383 = vst.msk [vmem:[#allocation2 + $0x40] sm:$0xff] %vm358, %v6367
        %6384 = vst.msk [vmem:[#allocation2 + $0x48] sm:$0xff] %vm358, %v6368
        %6385 = vst.msk [vmem:[#allocation2 + $0x50] sm:$0xff] %vm358, %v6369
        %6386 = vst.msk [vmem:[#allocation2 + $0x58] sm:$0xff] %vm358, %v6370
        %6387 = vst.msk [vmem:[#allocation2 + $0x60] sm:$0xff] %vm358, %v6371
        %6388 = vst.msk [vmem:[#allocation2 + $0x68] sm:$0xff] %vm358, %v6372
        %6389 = vst.msk [vmem:[#allocation2 + $0x70] sm:$0xff] %vm358, %v6373
        %6390 = vst.msk [vmem:[#allocation2 + $0x78] sm:$0xff] %vm358, %v6374
        %v6391 = vld [vmem:[#allocation2] sm:$0xff]
        %6392 = vst.msk [vmem:[%s294] sm:$0xff] %vm358, %v6391
        %v6393 = vld [vmem:[#allocation2 + $0x8] sm:$0xff]
        %6395 = vrot.lane.b32.xlu0 %v6393, 16
        %v6396 = vpop.permute.xlu0 %6395
        %vm6398 = vcmask 261248
        %6399 = vst.msk [vmem:[%s294] sm:$0xff] %vm6398, %v6396
        %v6400 = vld [vmem:[#allocation2 + $0x10] sm:$0xff]
        %6402 = vrot.lane.b32.xlu0 %v6400, 32
        %v6403 = vpop.permute.xlu0 %6402
        %vm6405 = vcmask 392448
        %6406 = vst.msk [vmem:[%s294] sm:$0xff] %vm6405, %v6403
        %v6407 = vld [vmem:[#allocation2 + $0x18] sm:$0xff]
        %6409 = vrot.lane.b32.xlu0 %v6407, 48
        %v6410 = vpop.permute.xlu0 %6409
        %vm6412 = vcmask 523648
        %6413 = vst.msk [vmem:[%s294] sm:$0xff] %vm6412, %v6410
        %v6414 = vld [vmem:[#allocation2 + $0x20] sm:$0xff]
        %6416 = vrot.lane.b32.xlu0 %v6414, 64
        %v6417 = vpop.permute.xlu0 %6416
        %vm6419 = vcmask 654848
        %6420 = vst.msk [vmem:[%s294] sm:$0xff] %vm6419, %v6417
        %v6421 = vld [vmem:[#allocation2 + $0x28] sm:$0xff]
        %6423 = vrot.lane.b32.xlu0 %v6421, 80
        %v6424 = vpop.permute.xlu0 %6423
        %vm6426 = vcmask 786048
        %6427 = vst.msk [vmem:[%s294] sm:$0xff] %vm6426, %v6424
        %v6428 = vld [vmem:[#allocation2 + $0x30] sm:$0xff]
        %6430 = vrot.lane.b32.xlu0 %v6428, 96
        %v6431 = vpop.permute.xlu0 %6430
        %vm6433 = vcmask 917248
        %6434 = vst.msk [vmem:[%s294] sm:$0xff] %vm6433, %v6431
        %v6435 = vld [vmem:[#allocation2 + $0x38] sm:$0xff]
        %6437 = vrot.lane.b32.xlu0 %v6435, 112
        %v6438 = vpop.permute.xlu0 %6437
        %vm6440 = vcmask 1048448
        %6441 = vst.msk [vmem:[%s294] sm:$0xff] %vm6440, %v6438
        %v6442 = vld [vmem:[#allocation2 + $0x40] sm:$0xff]
        %6443 = vst.msk [vmem:[%s294 + $0x8] sm:$0xff] %vm358, %v6442
        %v6444 = vld [vmem:[#allocation2 + $0x48] sm:$0xff]
        %6446 = vrot.lane.b32.xlu0 %v6444, 16
        %v6447 = vpop.permute.xlu0 %6446
        %6449 = vst.msk [vmem:[%s294 + $0x8] sm:$0xff] %vm6398, %v6447
        %v6450 = vld [vmem:[#allocation2 + $0x50] sm:$0xff]
        %6452 = vrot.lane.b32.xlu0 %v6450, 32
        %v6453 = vpop.permute.xlu0 %6452
        %6455 = vst.msk [vmem:[%s294 + $0x8] sm:$0xff] %vm6405, %v6453
        %v6456 = vld [vmem:[#allocation2 + $0x58] sm:$0xff]
        %6458 = vrot.lane.b32.xlu0 %v6456, 48
        %v6459 = vpop.permute.xlu0 %6458
        %6461 = vst.msk [vmem:[%s294 + $0x8] sm:$0xff] %vm6412, %v6459
        %v6462 = vld [vmem:[#allocation2 + $0x60] sm:$0xff]
        %6464 = vrot.lane.b32.xlu0 %v6462, 64
        %v6465 = vpop.permute.xlu0 %6464
        %6467 = vst.msk [vmem:[%s294 + $0x8] sm:$0xff] %vm6419, %v6465
        %v6468 = vld [vmem:[#allocation2 + $0x68] sm:$0xff]
        %6470 = vrot.lane.b32.xlu0 %v6468, 80
        %v6471 = vpop.permute.xlu0 %6470
        %6473 = vst.msk [vmem:[%s294 + $0x8] sm:$0xff] %vm6426, %v6471
        %v6474 = vld [vmem:[#allocation2 + $0x70] sm:$0xff]
        %6476 = vrot.lane.b32.xlu0 %v6474, 96
        %v6477 = vpop.permute.xlu0 %6476
        %6479 = vst.msk [vmem:[%s294 + $0x8] sm:$0xff] %vm6433, %v6477
        %v6480 = vld [vmem:[#allocation2 + $0x78] sm:$0xff]
        %6482 = vrot.lane.b32.xlu0 %v6480, 112
        %v6483 = vpop.permute.xlu0 %6482
        %6485 = vst.msk [vmem:[%s294 + $0x8] sm:$0xff] %vm6440, %v6483
        %6486 = vst.msk [vmem:[%s301] sm:$0xff] %vm3176, %v3466
        %6487 = vrot.lane.b32.xlu0 %v3498, 8
        %v6488 = vpop.permute.xlu0 %6487
        %vm6490 = vcmask 130112
        %6491 = vst.msk [vmem:[%s301] sm:$0xff] %vm6490, %v6488
        %6492 = vrot.lane.b32.xlu0 %v3468, 16
        %v6493 = vpop.permute.xlu0 %6492
        %vm6495 = vcmask 195712
        %6496 = vst.msk [vmem:[%s301] sm:$0xff] %vm6495, %v6493
        %6497 = vrot.lane.b32.xlu0 %v3500, 24
        %v6498 = vpop.permute.xlu0 %6497
        %vm6500 = vcmask 261312
        %6501 = vst.msk [vmem:[%s301] sm:$0xff] %vm6500, %v6498
        %6502 = vrot.lane.b32.xlu0 %v3470, 32
        %v6503 = vpop.permute.xlu0 %6502
        %vm6505 = vcmask 326912
        %6506 = vst.msk [vmem:[%s301] sm:$0xff] %vm6505, %v6503
        %6507 = vrot.lane.b32.xlu0 %v3502, 40
        %v6508 = vpop.permute.xlu0 %6507
        %vm6510 = vcmask 392512
        %6511 = vst.msk [vmem:[%s301] sm:$0xff] %vm6510, %v6508
        %6512 = vrot.lane.b32.xlu0 %v3472, 48
        %v6513 = vpop.permute.xlu0 %6512
        %vm6515 = vcmask 458112
        %6516 = vst.msk [vmem:[%s301] sm:$0xff] %vm6515, %v6513
        %6517 = vrot.lane.b32.xlu0 %v3504, 56
        %v6518 = vpop.permute.xlu0 %6517
        %vm6520 = vcmask 523712
        %6521 = vst.msk [vmem:[%s301] sm:$0xff] %vm6520, %v6518
        %6522 = vrot.lane.b32.xlu0 %v3474, 64
        %v6523 = vpop.permute.xlu0 %6522
        %vm6525 = vcmask 589312
        %6526 = vst.msk [vmem:[%s301] sm:$0xff] %vm6525, %v6523
        %6527 = vrot.lane.b32.xlu0 %v3506, 72
        %v6528 = vpop.permute.xlu0 %6527
        %vm6530 = vcmask 654912
        %6531 = vst.msk [vmem:[%s301] sm:$0xff] %vm6530, %v6528
        %6532 = vrot.lane.b32.xlu0 %v3476, 80
        %v6533 = vpop.permute.xlu0 %6532
        %vm6535 = vcmask 720512
        %6536 = vst.msk [vmem:[%s301] sm:$0xff] %vm6535, %v6533
        %6537 = vrot.lane.b32.xlu0 %v3508, 88
        %v6538 = vpop.permute.xlu0 %6537
        %vm6540 = vcmask 786112
        %6541 = vst.msk [vmem:[%s301] sm:$0xff] %vm6540, %v6538
        %6542 = vrot.lane.b32.xlu0 %v3478, 96
        %v6543 = vpop.permute.xlu0 %6542
        %vm6545 = vcmask 851712
        %6546 = vst.msk [vmem:[%s301] sm:$0xff] %vm6545, %v6543
        %6547 = vrot.lane.b32.xlu0 %v3510, 104
        %v6548 = vpop.permute.xlu0 %6547
        %vm6550 = vcmask 917312
        %6551 = vst.msk [vmem:[%s301] sm:$0xff] %vm6550, %v6548
        %6552 = vrot.lane.b32.xlu0 %v3480, 112
        %v6553 = vpop.permute.xlu0 %6552
        %vm6555 = vcmask 982912
        %6556 = vst.msk [vmem:[%s301] sm:$0xff] %vm6555, %v6553
        %6557 = vrot.lane.b32.xlu0 %v3512, 120
        %v6558 = vpop.permute.xlu0 %6557
        %vm6560 = vcmask 1048512
        %6561 = vst.msk [vmem:[%s301] sm:$0xff] %vm6560, %v6558
        %6562 = vst.msk [vmem:[%s301 + $0x8] sm:$0xff] %vm3176, %v3482
        %6563 = vrot.lane.b32.xlu0 %v3514, 8
        %v6564 = vpop.permute.xlu0 %6563
        %6566 = vst.msk [vmem:[%s301 + $0x8] sm:$0xff] %vm6490, %v6564
        %6567 = vrot.lane.b32.xlu0 %v3484, 16
        %v6568 = vpop.permute.xlu0 %6567
        %6570 = vst.msk [vmem:[%s301 + $0x8] sm:$0xff] %vm6495, %v6568
        %6571 = vrot.lane.b32.xlu0 %v3516, 24
        %v6572 = vpop.permute.xlu0 %6571
        %6574 = vst.msk [vmem:[%s301 + $0x8] sm:$0xff] %vm6500, %v6572
        %6575 = vrot.lane.b32.xlu0 %v3486, 32
        %v6576 = vpop.permute.xlu0 %6575
        %6578 = vst.msk [vmem:[%s301 + $0x8] sm:$0xff] %vm6505, %v6576
        %6579 = vrot.lane.b32.xlu0 %v3518, 40
        %v6580 = vpop.permute.xlu0 %6579
        %6582 = vst.msk [vmem:[%s301 + $0x8] sm:$0xff] %vm6510, %v6580
        %6583 = vrot.lane.b32.xlu0 %v3488, 48
        %v6584 = vpop.permute.xlu0 %6583
        %6586 = vst.msk [vmem:[%s301 + $0x8] sm:$0xff] %vm6515, %v6584
        %6587 = vrot.lane.b32.xlu0 %v3520, 56
        %v6588 = vpop.permute.xlu0 %6587
        %6590 = vst.msk [vmem:[%s301 + $0x8] sm:$0xff] %vm6520, %v6588
        %6591 = vrot.lane.b32.xlu0 %v3490, 64
        %v6592 = vpop.permute.xlu0 %6591
        %6594 = vst.msk [vmem:[%s301 + $0x8] sm:$0xff] %vm6525, %v6592
        %6595 = vrot.lane.b32.xlu0 %v3522, 72
        %v6596 = vpop.permute.xlu0 %6595
        %6598 = vst.msk [vmem:[%s301 + $0x8] sm:$0xff] %vm6530, %v6596
        %6599 = vrot.lane.b32.xlu0 %v3492, 80
        %v6600 = vpop.permute.xlu0 %6599
        %6602 = vst.msk [vmem:[%s301 + $0x8] sm:$0xff] %vm6535, %v6600
        %6603 = vrot.lane.b32.xlu0 %v3524, 88
        %v6604 = vpop.permute.xlu0 %6603
        %6606 = vst.msk [vmem:[%s301 + $0x8] sm:$0xff] %vm6540, %v6604
        %6607 = vrot.lane.b32.xlu0 %v3494, 96
        %v6608 = vpop.permute.xlu0 %6607
        %6610 = vst.msk [vmem:[%s301 + $0x8] sm:$0xff] %vm6545, %v6608
        %6611 = vrot.lane.b32.xlu0 %v3526, 104
        %v6612 = vpop.permute.xlu0 %6611
        %6614 = vst.msk [vmem:[%s301 + $0x8] sm:$0xff] %vm6550, %v6612
        %6615 = vrot.lane.b32.xlu0 %v3496, 112
        %v6616 = vpop.permute.xlu0 %6615
        %6618 = vst.msk [vmem:[%s301 + $0x8] sm:$0xff] %vm6555, %v6616
        %6619 = vrot.lane.b32.xlu0 %v3528, 120
        %v6620 = vpop.permute.xlu0 %6619
        %6622 = vst.msk [vmem:[%s301 + $0x8] sm:$0xff] %vm6560, %v6620
        %s6623 = sand.u32 %s169, 1
        %s6624 = scalar_lea.sflag [#allocation4], %s6623
        %s6625 = sand.u32 %s169, 1
        %s6626 = smul.addr %s6625, 16
        %s6627 = scalar_lea.vmem [#allocation3], %s6626
        %s6628 = sand.u32 %s195, 1
        %s6629 = scalar_lea.sflag [#allocation6], %s6628
        %s6630 = sand.u32 %s195, 1
        %s6631 = smul.addr %s6630, 16
        %s6632 = scalar_lea.vmem [#allocation5], %s6631
        // Predicated region
        $region45: #{tpu_custom_call.1} parent=43 // pred_check
          %p6633 = pneg %p179
        $region46: #{tpu_custom_call.1} parent=43 // pred_check_branch
          %6635 = sbr.rel (%p6633) target = $region48
        $region47: #{tpu_custom_call.1} parent=43 // pred_region
          %s6636 = smul.u32 2, %s25
          %s6638 = ssub.s32 256, 256
          %6639 = vsyncadd %s6624, %s6638
          %s6640 = smul.addr %s6636, 128
          %s6641 = scalar_lea.hbm %s6, %s6640
          %s6643 = sshll.u32 %s6627, 4
          %s6644 = int_to_ptr.vmem [resolvable:$true] %s6643
          %6646 = dma.vmem_to_hbm [thread:$0]  %s6644, 256, %s6641, %s6624
        $region48: #{tpu_custom_call.1} parent=43 // pred_fallthru
          _
        // Predicated region
        $region49: #{tpu_custom_call.1} parent=43 // pred_check
          %p6647 = pneg %p205
        $region50: #{tpu_custom_call.1} parent=43 // pred_check_branch
          %6649 = sbr.rel (%p6647) target = $region52
        $region51: #{tpu_custom_call.1} parent=43 // pred_region
          %s6650 = smul.u32 2, %s25
          %s6652 = ssub.s32 256, 256
          %6653 = vsyncadd %s6629, %s6652
          %s6654 = smul.addr %s6650, 128
          %s6655 = scalar_lea.hbm %s7, %s6654
          %s6657 = sshll.u32 %s6632, 4
          %s6658 = int_to_ptr.vmem [resolvable:$true] %s6657
          %6660 = dma.vmem_to_hbm [thread:$0]  %s6658, 256, %s6655, %s6629
        $region52: #{tpu_custom_call.1} parent=43 // pred_fallthru
          _
      $region44: #{tpu_custom_call.1} parent=5 // pred_fallthru
        _
      %p6661 = scmp.le.s32.totalorder 2, %s20
      // Predicated region
      $region53: #{tpu_custom_call.1} parent=5 // pred_check
        %p6662 = pneg %p6661
      $region54: #{tpu_custom_call.1} parent=5 // pred_check_branch
        %6664 = sbr.rel (%p6662) target = $region56
      $region55: #{tpu_custom_call.1} parent=5 // pred_region
        %s6665 = ssub.s32 %s20, 2
        // Predicated region
        $region57: #{tpu_custom_call.1} parent=55 // pred_check
          %p6666 = pneg %p185
        $region58: #{tpu_custom_call.1} parent=55 // pred_check_branch
          %6668 = sbr.rel (%p6666) target = $region60
        $region59: #{tpu_custom_call.1} parent=55 // pred_region
          %s6669 = sand.u32 %s170, 1
          %s6670 = scalar_lea.sflag [#allocation4], %s6669
          %s6671 = sand.u32 %s170, 1
          %s6672 = smul.addr %s6671, 16
          %s6673 = scalar_lea.vmem [#allocation3], %s6672
          %6674 = dma.done %s6670, 256
        $region60: #{tpu_custom_call.1} parent=55 // pred_fallthru
          _
        // Predicated region
        $region61: #{tpu_custom_call.1} parent=55 // pred_check
          %p6675 = pneg %p211
        $region62: #{tpu_custom_call.1} parent=55 // pred_check_branch
          %6677 = sbr.rel (%p6675) target = $region64
        $region63: #{tpu_custom_call.1} parent=55 // pred_region
          %s6678 = sand.u32 %s196, 1
          %s6679 = scalar_lea.sflag [#allocation6], %s6678
          %s6680 = sand.u32 %s196, 1
          %s6681 = smul.addr %s6680, 16
          %s6682 = scalar_lea.vmem [#allocation5], %s6681
          %6683 = dma.done %s6679, 256
        $region64: #{tpu_custom_call.1} parent=55 // pred_fallthru
          _
      $region56: #{tpu_custom_call.1} parent=5 // pred_fallthru
        _
    $region6: #{tpu_custom_call.1} parent=1 // loop_footer
      %s24 = sadd.s32 1, %s20
    $region7: #{tpu_custom_call.1} parent=1 // loop_footer_branch
      %19 = sbr.rel target = $region3
    $region8: #{tpu_custom_call.1} parent=1 // loop_exit
      _
    %6684 = vsyncpa [#allocation4], 1
    %s6685 = scalar_lea.sflag [#allocation4], 1
    %6686 = vsyncpa %s6685, 1
    %6687 = vsyncpa [#allocation6], 1
    %s6688 = scalar_lea.sflag [#allocation6], 1
    %6689 = vsyncpa %s6688, 1

</llo_original>
